<compile_context>
chip_gen: v6e
topology: v6e:2x2x1
jax: 0.10.0
libtpu: 0.0.40
codegen_flags: <defaults>
</compile_context>

<pallas_src>
import functools

import numpy as np
import jax
import jax.numpy as jnp
from jax import lax
from jax.experimental import pallas as pl
from jax.experimental.pallas import tpu as pltpu

# ----------------------------- configuration ------------------------------
N = 16            # nodes per graph
HIDDEN = 32       # hidden_dim
NUM_HEADS = 4
HEAD_DIM = HIDDEN // NUM_HEADS
RESIDUAL = True
SCALING = HIDDEN ** (-0.5)   # PyTorch scales q by hidden_dim**-0.5
EPS = 1e-5
BATCH = 8         # number of independent graphs handled in one pallas_call


# ------------------------------ Pallas kernel -----------------------------
def gt_layer_kernel(A_ref, h_ref, wqkvo_ref, w1_ref, w2_ref, bn_ref, out_ref,
                    *, residual, gb):
    h0 = h_ref[...]                          # (gb*N, HIDDEN)
    bn = bn_ref[...]                         # (4, HIDDEN): bn1_w, bn1_b, bn2_w, bn2_b

    # --- fused projection over ALL graphs at once: [q*scale | k | v@Wo per head] ---
    proj = jnp.dot(h0, wqkvo_ref[...], preferred_element_type=jnp.float32)  # (gb*N, 192)
    q = proj[:, :HIDDEN]                     # scaled, head-grouped lanes
    k = proj[:, HIDDEN:2 * HIDDEN]
    vo = proj[:, 2 * HIDDEN:]                # (gb*N, NUM_HEADS*HIDDEN): per-head v_h @ Wo_h

    # --- per-graph masked multi-head attention + residual + BatchNorm1 ---
    bn1_rows = []
    for g in range(gb):
        r0 = g * N
        A_g = A_ref[g]                       # (N, N)
        mha = None
        for hd in range(NUM_HEADS):
            lo = hd * HEAD_DIM
            q_gh = q[r0:r0 + N, lo:lo + HEAD_DIM]            # (N, d)
            k_gh = k[r0:r0 + N, lo:lo + HEAD_DIM]            # (N, d)
            # scores = q_gh @ k_gh.T without an explicit transpose (contract d vs d)
            s = A_g * lax.dot_general(q_gh, k_gh, (((1,), (1,)), ((), ())),
                                      preferred_element_type=jnp.float32)   # (N, N)
            s = s - jnp.max(s, axis=-1, keepdims=True)
            p = jnp.exp(s)
            denom = jnp.sum(p, axis=-1, keepdims=True)
            inv = pl.reciprocal(denom, approx=True)          # EUP slot
            inv = inv * (2.0 - denom * inv)                  # one Newton step -> ~f32 accurate
            p = p * inv
            # (p @ v_h) @ Wo_h == p @ (v_h @ Wo_h); Wo pre-folded into vo.
            contrib = jnp.dot(p, vo[r0:r0 + N, hd * HIDDEN:(hd + 1) * HIDDEN],
                              preferred_element_type=jnp.float32)           # (N, HIDDEN)
            mha = contrib if mha is None else mha + contrib

        hg = mha + h0[r0:r0 + N, :] if residual else mha
        # BatchNorm1d #1: training-mode batch stats over this graph's N nodes,
        # biased variance, one pass (E[x^2] - E[x]^2).
        m1 = jnp.mean(hg, axis=0, keepdims=True)
        v1 = jnp.mean(hg * hg, axis=0, keepdims=True) - m1 * m1
        bn1_rows.append((hg - m1) * lax.rsqrt(v1 + EPS) * bn[0:1, :] + bn[1:2, :])

    hb = jnp.concatenate(bn1_rows, axis=0)   # (gb*N, HIDDEN) post-BN1 slab

    # --- FFN over the whole slab: Linear(H->2H) -> ReLU -> Linear(2H->H) ---
    f = jnp.maximum(jnp.dot(hb, w1_ref[...], preferred_element_type=jnp.float32), 0.0)
    f = jnp.dot(f, w2_ref[...], preferred_element_type=jnp.float32)
    hf = hb + f if residual else f

    # --- per-graph BatchNorm2, assembled into one slab store ---
    out_rows = []
    for g in range(gb):
        xg = hf[g * N:(g + 1) * N, :]
        m2 = jnp.mean(xg, axis=0, keepdims=True)
        v2 = jnp.mean(xg * xg, axis=0, keepdims=True) - m2 * m2
        out_rows.append((xg - m2) * lax.rsqrt(v2 + EPS) * bn[2:3, :] + bn[3:4, :])
    out_ref[...] = jnp.concatenate(out_rows, axis=0)


# -------------------- one-time weight preprocessing ------------------------
def prepare_params(params):
    """Run ONCE (outside the per-call path).

    Converts PyTorch-convention weights (Linear weight = (out, in)) into
    kernel-ready packed arrays:
      * fused, head-grouped [Wq*scale | Wk | Wv_h@Wo_h per head]  -> (H, 2H + nh*H)
      * transposed FFN weights
      * the four BN vectors packed into a single (4, HIDDEN) array.
    """
    # grouped index hd*HEAD_DIM + d  <-  PyTorch split index d*NUM_HEADS + hd
    perm = np.array(
        [d * NUM_HEADS + hd for hd in range(NUM_HEADS) for d in range(HEAD_DIM)],
        dtype=np.int32)

    wq = params["Wq"].T[:, perm] * SCALING      # (H, H), scaling folded in
    wk = params["Wk"].T[:, perm]                # (H, H)
    wv = params["Wv"].T[:, perm]                # (H, H)
    wo = params["Wo"].T[perm, :]                # (H, H), rows grouped by head
    # Fold Wo into Wv per head (exact-precision fold outside the hot path).
    wvo_blocks = [
        jnp.matmul(wv[:, hd * HEAD_DIM:(hd + 1) * HEAD_DIM],
                   wo[hd * HEAD_DIM:(hd + 1) * HEAD_DIM, :],
                   precision=lax.Precision.HIGHEST)          # (H, H) per head
        for hd in range(NUM_HEADS)]
    w_qkvo = jnp.concatenate([wq, wk] + wvo_blocks, axis=1)  # (H, 2H + nh*H) = (32, 192)

    w1 = params["W1"].T                                      # (H, 2H)
    w2 = params["W2"].T                                      # (2H, H)
    bn = jnp.stack([params["bn1_w"], params["bn1_b"],
                    params["bn2_w"], params["bn2_b"]], axis=0)   # (4, H)
    return {"w_qkvo": w_qkvo, "w1": w1, "w2": w2, "bn": bn}


# ------------------------------ wrapper / glue -----------------------------
def _default_graphs_per_block(batch):
    """One block per TensorCore: B/2 on dual-TC v7x, whole batch elsewhere."""
    try:
        kind = jax.devices()[0].device_kind.lower()
    except Exception:
        kind = ""
    if "v7" in kind and batch % 2 == 0:
        return batch // 2
    return batch


def gt_layer(A, h, packed, *, residual=RESIDUAL, graphs_per_block=None):
    """A: (B, N, N), h: (B, N, HIDDEN), packed: output of prepare_params."""
    B = A.shape[0]
    gb = graphs_per_block if graphs_per_block is not None else _default_graphs_per_block(B)
    assert B % gb == 0, "graphs_per_block must divide the batch"
    num_blocks = B // gb

    h_flat = h.reshape(B * N, HIDDEN)                  # contiguous, free reshape
    kernel = functools.partial(gt_layer_kernel, residual=residual, gb=gb)

    out_flat = pl.pallas_call(
        kernel,
        out_shape=jax.ShapeDtypeStruct((B * N, HIDDEN), jnp.float32),
        grid=(num_blocks,),
        in_specs=[
            pl.BlockSpec((gb, N, N), lambda b: (b, 0, 0)),                      # A block
            pl.BlockSpec((gb * N, HIDDEN), lambda b: (b, 0)),                   # h block
            pl.BlockSpec((HIDDEN, 2 * HIDDEN + NUM_HEADS * HIDDEN),
                         lambda b: (0, 0)),                                     # fused W
            pl.BlockSpec((HIDDEN, 2 * HIDDEN), lambda b: (0, 0)),               # W1
            pl.BlockSpec((2 * HIDDEN, HIDDEN), lambda b: (0, 0)),               # W2
            pl.BlockSpec((4, HIDDEN), lambda b: (0, 0)),                        # BN params
        ],
        out_specs=pl.BlockSpec((gb * N, HIDDEN), lambda b: (b, 0)),
        compiler_params=pltpu.CompilerParams(
            dimension_semantics=("parallel",)),
    )(A, h_flat, packed["w_qkvo"], packed["w1"], packed["w2"], packed["bn"])
    return out_flat.reshape(B, N, HIDDEN)


gt_layer_jit = jax.jit(gt_layer, static_argnames=("residual", "graphs_per_block"))


# --------------------------- pure-JAX reference ----------------------------
def gt_layer_ref(A, h, params, *, residual=RESIDUAL):
    """Direct transcription of the PyTorch forward for ONE graph (train-mode BN)."""
    q = (h @ params["Wq"].T).reshape(N, HEAD_DIM, NUM_HEADS) * SCALING
    k = (h @ params["Wk"].T).reshape(N, HEAD_DIM, NUM_HEADS)
    v = (h @ params["Wv"].T).reshape(N, HEAD_DIM, NUM_HEADS)
    qh = jnp.transpose(q, (2, 0, 1))                      # (nh, N, d)
    kh = jnp.transpose(k, (2, 1, 0))                      # (nh, d, N)
    attn = A * jnp.einsum("hnd,hdm->hnm", qh, kh)
    attn = jax.nn.softmax(attn, axis=2)
    vh = jnp.transpose(v, (2, 0, 1))                      # (nh, N, d)
    out = jnp.einsum("hnm,hmd->hnd", attn, vh)            # (nh, N, d)
    out = jnp.transpose(out, (1, 2, 0)).reshape(N, -1)    # column = d*nh + hd
    hx = out @ params["Wo"].T
    if residual:
        hx = hx + h
    m1, v1 = hx.mean(0), hx.var(0)
    hx = (hx - m1) / jnp.sqrt(v1 + EPS) * params["bn1_w"] + params["bn1_b"]
    h2 = hx
    f = jnp.maximum(hx @ params["W1"].T, 0.0) @ params["W2"].T
    hx = h2 + f if residual else f
    m2, v2 = hx.mean(0), hx.var(0)
    hx = (hx - m2) / jnp.sqrt(v2 + EPS) * params["bn2_w"] + params["bn2_b"]
    return hx


# ----------------------------------- main ----------------------------------
if __name__ == "__main__":
    key = jax.random.PRNGKey(0)
    keys = jax.random.split(key, 12)

    A = jax.random.uniform(keys[0], (BATCH, N, N), dtype=jnp.float32)
    h = jax.random.normal(keys[1], (BATCH, N, HIDDEN), dtype=jnp.float32)

    def w(k, shape, scale=0.2):
        return scale * jax.random.normal(k, shape, dtype=jnp.float32)

    params = {
        "Wq": w(keys[2], (HIDDEN, HIDDEN)),
        "Wk": w(keys[3], (HIDDEN, HIDDEN)),
        "Wv": w(keys[4], (HIDDEN, HIDDEN)),
        "Wo": w(keys[5], (HIDDEN, HIDDEN)),
        "W1": w(keys[6], (2 * HIDDEN, HIDDEN)),
        "W2": w(keys[7], (HIDDEN, 2 * HIDDEN)),
        "bn1_w": 1.0 + 0.1 * jax.random.normal(keys[8], (HIDDEN,), dtype=jnp.float32),
        "bn1_b": 0.1 * jax.random.normal(keys[9], (HIDDEN,), dtype=jnp.float32),
        "bn2_w": 1.0 + 0.1 * jax.random.normal(keys[10], (HIDDEN,), dtype=jnp.float32),
        "bn2_b": 0.1 * jax.random.normal(keys[11], (HIDDEN,), dtype=jnp.float32),
    }

    # Weight prep (QKV fusion + Wo fold + BN packing) runs exactly once.
    packed = prepare_params(params)

    out = jax.block_until_ready(gt_layer_jit(A, h, packed, residual=RESIDUAL))
    ref = jax.block_until_ready(
        jax.vmap(lambda a_, h_: gt_layer_ref(a_, h_, params, residual=RESIDUAL))(A, h))

    assert out.shape == (BATCH, N, HIDDEN)
    # Tolerance covers the approx-reciprocal (Newton-refined) softmax path and the
    # Wo-into-Wv reassociation; MXU operands are kept f32 so 1e-3 holds.
    assert jnp.allclose(out, ref, rtol=1e-3, atol=1e-3), (
        f"max abs err {jnp.max(jnp.abs(out - ref))}")

    print("KERNEL_OK")
</pallas_src>

<mosaic_0001>
module attributes {stable_mosaic.version = 11 : i64} {
  func.func @gt_layer_kernel(%arg0: i32, %arg1: memref<8x16x16xf32, #tpu.memory_space<vmem>>, %arg2: memref<128x32xf32, #tpu.memory_space<vmem>>, %arg3: memref<32x192xf32, #tpu.memory_space<vmem>>, %arg4: memref<32x64xf32, #tpu.memory_space<vmem>>, %arg5: memref<64x32xf32, #tpu.memory_space<vmem>>, %arg6: memref<4x32xf32, #tpu.memory_space<vmem>>, %arg7: memref<128x32xf32, #tpu.memory_space<vmem>>) attributes {dimension_semantics = [#tpu.dimension_semantics<parallel>], iteration_bounds = array<i64: 1>, scalar_prefetch = 0 : i64, scratch_operands = 0 : i64, tpu.core_type = #tpu.core_type<tc>, window_params = [{transform_indices = @transform_0, window_bounds = array<i64: 8, 16, 16>}, {transform_indices = @transform_1, window_bounds = array<i64: 128, 32>}, {pipeline_mode = #tpu.pipeline_mode<synchronous>, transform_indices = @transform_2, window_bounds = array<i64: 32, 192>}, {pipeline_mode = #tpu.pipeline_mode<synchronous>, transform_indices = @transform_3, window_bounds = array<i64: 32, 64>}, {pipeline_mode = #tpu.pipeline_mode<synchronous>, transform_indices = @transform_4, window_bounds = array<i64: 64, 32>}, {pipeline_mode = #tpu.pipeline_mode<synchronous>, transform_indices = @transform_5, window_bounds = array<i64: 4, 32>}, {transform_indices = @transform_6, window_bounds = array<i64: 128, 32>}]} {
    %c0 = arith.constant 0 : index
    %c0_0 = arith.constant 0 : index
    %0 = vector.load %arg2[%c0, %c0_0] : memref<128x32xf32, #tpu.memory_space<vmem>>, vector<128x32xf32>
    %c0_1 = arith.constant 0 : index
    %c0_2 = arith.constant 0 : index
    %1 = vector.load %arg6[%c0_1, %c0_2] : memref<4x32xf32, #tpu.memory_space<vmem>>, vector<4x32xf32>
    %c0_3 = arith.constant 0 : index
    %c0_4 = arith.constant 0 : index
    %2 = vector.load %arg3[%c0_3, %c0_4] : memref<32x192xf32, #tpu.memory_space<vmem>>, vector<32x192xf32>
    %cst = arith.constant dense<0.000000e+00> : vector<128x192xf32>
    %3 = tpu.matmul %0, %2, %cst {dimension_numbers = #tpu.dot_dimension_numbers<[1], [0], [0], [1], [0, 0, 1, 1], [], []>} : vector<128x32xf32>, vector<32x192xf32>, vector<128x192xf32> -> vector<128x192xf32>
    %4 = vector.extract_strided_slice %3 {offsets = [0, 0], sizes = [128, 32], strides = [1, 1]} : vector<128x192xf32> to vector<128x32xf32>
    %5 = vector.extract_strided_slice %3 {offsets = [0, 32], sizes = [128, 32], strides = [1, 1]} : vector<128x192xf32> to vector<128x32xf32>
    %6 = vector.extract_strided_slice %3 {offsets = [0, 64], sizes = [128, 128], strides = [1, 1]} : vector<128x192xf32> to vector<128x128xf32>
    %c0_5 = arith.constant 0 : index
    %c0_6 = arith.constant 0 : index
    %c0_7 = arith.constant 0 : index
    %7 = vector.load %arg1[%c0_5, %c0_6, %c0_7] : memref<8x16x16xf32, #tpu.memory_space<vmem>>, vector<1x16x16xf32>
    %8 = vector.shape_cast %7 : vector<1x16x16xf32> to vector<16x16xf32>
    %9 = vector.extract_strided_slice %4 {offsets = [0, 0], sizes = [16, 8], strides = [1, 1]} : vector<128x32xf32> to vector<16x8xf32>
    %10 = vector.extract_strided_slice %5 {offsets = [0, 0], sizes = [16, 8], strides = [1, 1]} : vector<128x32xf32> to vector<16x8xf32>
    %cst_8 = arith.constant dense<0.000000e+00> : vector<16x16xf32>
    %11 = tpu.matmul %9, %10, %cst_8 {dimension_numbers = #tpu.dot_dimension_numbers<[1], [1], [0], [0], [0, 0, 1, 0], [], []>} : vector<16x8xf32>, vector<16x8xf32>, vector<16x16xf32> -> vector<16x16xf32>
    %12 = arith.mulf %8, %11 : vector<16x16xf32>
    %cst_9 = arith.constant dense<0xFF800000> : vector<16xf32>
    %13 = vector.multi_reduction <maximumf>, %12, %cst_9 [1] : vector<16x16xf32> to vector<16xf32>
    %14 = vector.shape_cast %13 : vector<16xf32> to vector<16x1xf32>
    %15 = vector.broadcast %14 : vector<16x1xf32> to vector<16x16xf32>
    %16 = arith.subf %12, %15 : vector<16x16xf32>
    %17 = math.exp %16 : vector<16x16xf32>
    %cst_10 = arith.constant dense<0.000000e+00> : vector<16xf32>
    %18 = vector.multi_reduction <add>, %17, %cst_10 [1] : vector<16x16xf32> to vector<16xf32>
    %19 = vector.shape_cast %18 : vector<16xf32> to vector<16x1xf32>
    %20 = tpu.reciprocal %19 {approx = true} : vector<16x1xf32> -> vector<16x1xf32>
    %21 = arith.mulf %19, %20 : vector<16x1xf32>
    %cst_11 = arith.constant 2.000000e+00 : f32
    %22 = vector.broadcast %cst_11 : f32 to vector<16x1xf32>
    %23 = arith.subf %22, %21 : vector<16x1xf32>
    %24 = arith.mulf %20, %23 : vector<16x1xf32>
    %25 = vector.broadcast %24 : vector<16x1xf32> to vector<16x16xf32>
    %26 = arith.mulf %17, %25 : vector<16x16xf32>
    %27 = vector.extract_strided_slice %6 {offsets = [0, 0], sizes = [16, 32], strides = [1, 1]} : vector<128x128xf32> to vector<16x32xf32>
    %cst_12 = arith.constant dense<0.000000e+00> : vector<16x32xf32>
    %28 = tpu.matmul %26, %27, %cst_12 {dimension_numbers = #tpu.dot_dimension_numbers<[1], [0], [0], [1], [0, 0, 1, 1], [], []>} : vector<16x16xf32>, vector<16x32xf32>, vector<16x32xf32> -> vector<16x32xf32>
    %29 = vector.extract_strided_slice %4 {offsets = [0, 8], sizes = [16, 8], strides = [1, 1]} : vector<128x32xf32> to vector<16x8xf32>
    %30 = vector.extract_strided_slice %5 {offsets = [0, 8], sizes = [16, 8], strides = [1, 1]} : vector<128x32xf32> to vector<16x8xf32>
    %cst_13 = arith.constant dense<0.000000e+00> : vector<16x16xf32>
    %31 = tpu.matmul %29, %30, %cst_13 {dimension_numbers = #tpu.dot_dimension_numbers<[1], [1], [0], [0], [0, 0, 1, 0], [], []>} : vector<16x8xf32>, vector<16x8xf32>, vector<16x16xf32> -> vector<16x16xf32>
    %32 = arith.mulf %8, %31 : vector<16x16xf32>
    %cst_14 = arith.constant dense<0xFF800000> : vector<16xf32>
    %33 = vector.multi_reduction <maximumf>, %32, %cst_14 [1] : vector<16x16xf32> to vector<16xf32>
    %34 = vector.shape_cast %33 : vector<16xf32> to vector<16x1xf32>
    %35 = vector.broadcast %34 : vector<16x1xf32> to vector<16x16xf32>
    %36 = arith.subf %32, %35 : vector<16x16xf32>
    %37 = math.exp %36 : vector<16x16xf32>
    %cst_15 = arith.constant dense<0.000000e+00> : vector<16xf32>
    %38 = vector.multi_reduction <add>, %37, %cst_15 [1] : vector<16x16xf32> to vector<16xf32>
    %39 = vector.shape_cast %38 : vector<16xf32> to vector<16x1xf32>
    %40 = tpu.reciprocal %39 {approx = true} : vector<16x1xf32> -> vector<16x1xf32>
    %41 = arith.mulf %39, %40 : vector<16x1xf32>
    %cst_16 = arith.constant 2.000000e+00 : f32
    %42 = vector.broadcast %cst_16 : f32 to vector<16x1xf32>
    %43 = arith.subf %42, %41 : vector<16x1xf32>
    %44 = arith.mulf %40, %43 : vector<16x1xf32>
    %45 = vector.broadcast %44 : vector<16x1xf32> to vector<16x16xf32>
    %46 = arith.mulf %37, %45 : vector<16x16xf32>
    %47 = vector.extract_strided_slice %6 {offsets = [0, 32], sizes = [16, 32], strides = [1, 1]} : vector<128x128xf32> to vector<16x32xf32>
    %cst_17 = arith.constant dense<0.000000e+00> : vector<16x32xf32>
    %48 = tpu.matmul %46, %47, %cst_17 {dimension_numbers = #tpu.dot_dimension_numbers<[1], [0], [0], [1], [0, 0, 1, 1], [], []>} : vector<16x16xf32>, vector<16x32xf32>, vector<16x32xf32> -> vector<16x32xf32>
    %49 = arith.addf %28, %48 : vector<16x32xf32>
    %50 = vector.extract_strided_slice %4 {offsets = [0, 16], sizes = [16, 8], strides = [1, 1]} : vector<128x32xf32> to vector<16x8xf32>
    %51 = vector.extract_strided_slice %5 {offsets = [0, 16], sizes = [16, 8], strides = [1, 1]} : vector<128x32xf32> to vector<16x8xf32>
    %cst_18 = arith.constant dense<0.000000e+00> : vector<16x16xf32>
    %52 = tpu.matmul %50, %51, %cst_18 {dimension_numbers = #tpu.dot_dimension_numbers<[1], [1], [0], [0], [0, 0, 1, 0], [], []>} : vector<16x8xf32>, vector<16x8xf32>, vector<16x16xf32> -> vector<16x16xf32>
    %53 = arith.mulf %8, %52 : vector<16x16xf32>
    %cst_19 = arith.constant dense<0xFF800000> : vector<16xf32>
    %54 = vector.multi_reduction <maximumf>, %53, %cst_19 [1] : vector<16x16xf32> to vector<16xf32>
    %55 = vector.shape_cast %54 : vector<16xf32> to vector<16x1xf32>
    %56 = vector.broadcast %55 : vector<16x1xf32> to vector<16x16xf32>
    %57 = arith.subf %53, %56 : vector<16x16xf32>
    %58 = math.exp %57 : vector<16x16xf32>
    %cst_20 = arith.constant dense<0.000000e+00> : vector<16xf32>
    %59 = vector.multi_reduction <add>, %58, %cst_20 [1] : vector<16x16xf32> to vector<16xf32>
    %60 = vector.shape_cast %59 : vector<16xf32> to vector<16x1xf32>
    %61 = tpu.reciprocal %60 {approx = true} : vector<16x1xf32> -> vector<16x1xf32>
    %62 = arith.mulf %60, %61 : vector<16x1xf32>
    %cst_21 = arith.constant 2.000000e+00 : f32
    %63 = vector.broadcast %cst_21 : f32 to vector<16x1xf32>
    %64 = arith.subf %63, %62 : vector<16x1xf32>
    %65 = arith.mulf %61, %64 : vector<16x1xf32>
    %66 = vector.broadcast %65 : vector<16x1xf32> to vector<16x16xf32>
    %67 = arith.mulf %58, %66 : vector<16x16xf32>
    %68 = vector.extract_strided_slice %6 {offsets = [0, 64], sizes = [16, 32], strides = [1, 1]} : vector<128x128xf32> to vector<16x32xf32>
    %cst_22 = arith.constant dense<0.000000e+00> : vector<16x32xf32>
    %69 = tpu.matmul %67, %68, %cst_22 {dimension_numbers = #tpu.dot_dimension_numbers<[1], [0], [0], [1], [0, 0, 1, 1], [], []>} : vector<16x16xf32>, vector<16x32xf32>, vector<16x32xf32> -> vector<16x32xf32>
    %70 = arith.addf %49, %69 : vector<16x32xf32>
    %71 = vector.extract_strided_slice %4 {offsets = [0, 24], sizes = [16, 8], strides = [1, 1]} : vector<128x32xf32> to vector<16x8xf32>
    %72 = vector.extract_strided_slice %5 {offsets = [0, 24], sizes = [16, 8], strides = [1, 1]} : vector<128x32xf32> to vector<16x8xf32>
    %cst_23 = arith.constant dense<0.000000e+00> : vector<16x16xf32>
    %73 = tpu.matmul %71, %72, %cst_23 {dimension_numbers = #tpu.dot_dimension_numbers<[1], [1], [0], [0], [0, 0, 1, 0], [], []>} : vector<16x8xf32>, vector<16x8xf32>, vector<16x16xf32> -> vector<16x16xf32>
    %74 = arith.mulf %8, %73 : vector<16x16xf32>
    %cst_24 = arith.constant dense<0xFF800000> : vector<16xf32>
    %75 = vector.multi_reduction <maximumf>, %74, %cst_24 [1] : vector<16x16xf32> to vector<16xf32>
    %76 = vector.shape_cast %75 : vector<16xf32> to vector<16x1xf32>
    %77 = vector.broadcast %76 : vector<16x1xf32> to vector<16x16xf32>
    %78 = arith.subf %74, %77 : vector<16x16xf32>
    %79 = math.exp %78 : vector<16x16xf32>
    %cst_25 = arith.constant dense<0.000000e+00> : vector<16xf32>
    %80 = vector.multi_reduction <add>, %79, %cst_25 [1] : vector<16x16xf32> to vector<16xf32>
    %81 = vector.shape_cast %80 : vector<16xf32> to vector<16x1xf32>
    %82 = tpu.reciprocal %81 {approx = true} : vector<16x1xf32> -> vector<16x1xf32>
    %83 = arith.mulf %81, %82 : vector<16x1xf32>
    %cst_26 = arith.constant 2.000000e+00 : f32
    %84 = vector.broadcast %cst_26 : f32 to vector<16x1xf32>
    %85 = arith.subf %84, %83 : vector<16x1xf32>
    %86 = arith.mulf %82, %85 : vector<16x1xf32>
    %87 = vector.broadcast %86 : vector<16x1xf32> to vector<16x16xf32>
    %88 = arith.mulf %79, %87 : vector<16x16xf32>
    %89 = vector.extract_strided_slice %6 {offsets = [0, 96], sizes = [16, 32], strides = [1, 1]} : vector<128x128xf32> to vector<16x32xf32>
    %cst_27 = arith.constant dense<0.000000e+00> : vector<16x32xf32>
    %90 = tpu.matmul %88, %89, %cst_27 {dimension_numbers = #tpu.dot_dimension_numbers<[1], [0], [0], [1], [0, 0, 1, 1], [], []>} : vector<16x16xf32>, vector<16x32xf32>, vector<16x32xf32> -> vector<16x32xf32>
    %91 = arith.addf %70, %90 : vector<16x32xf32>
    %92 = vector.extract_strided_slice %0 {offsets = [0, 0], sizes = [16, 32], strides = [1, 1]} : vector<128x32xf32> to vector<16x32xf32>
    %93 = arith.addf %91, %92 : vector<16x32xf32>
    %cst_28 = arith.constant dense<0.000000e+00> : vector<32xf32>
    %94 = vector.multi_reduction <add>, %93, %cst_28 [0] : vector<16x32xf32> to vector<32xf32>
    %95 = vector.shape_cast %94 : vector<32xf32> to vector<1x32xf32>
    %cst_29 = arith.constant 1.600000e+01 : f32
    %96 = vector.broadcast %cst_29 : f32 to vector<1x32xf32>
    %97 = arith.divf %95, %96 : vector<1x32xf32>
    %98 = arith.mulf %93, %93 : vector<16x32xf32>
    %cst_30 = arith.constant dense<0.000000e+00> : vector<32xf32>
    %99 = vector.multi_reduction <add>, %98, %cst_30 [0] : vector<16x32xf32> to vector<32xf32>
    %100 = vector.shape_cast %99 : vector<32xf32> to vector<1x32xf32>
    %cst_31 = arith.constant 1.600000e+01 : f32
    %101 = vector.broadcast %cst_31 : f32 to vector<1x32xf32>
    %102 = arith.divf %100, %101 : vector<1x32xf32>
    %103 = arith.mulf %97, %97 : vector<1x32xf32>
    %104 = arith.subf %102, %103 : vector<1x32xf32>
    %105 = vector.broadcast %97 : vector<1x32xf32> to vector<16x32xf32>
    %106 = arith.subf %93, %105 : vector<16x32xf32>
    %cst_32 = arith.constant 9.99999974E-6 : f32
    %107 = vector.broadcast %cst_32 : f32 to vector<1x32xf32>
    %108 = arith.addf %104, %107 : vector<1x32xf32>
    %109 = math.rsqrt %108 : vector<1x32xf32>
    %110 = vector.broadcast %109 : vector<1x32xf32> to vector<16x32xf32>
    %111 = arith.mulf %106, %110 : vector<16x32xf32>
    %112 = vector.extract_strided_slice %1 {offsets = [0, 0], sizes = [1, 32], strides = [1, 1]} : vector<4x32xf32> to vector<1x32xf32>
    %113 = vector.broadcast %112 : vector<1x32xf32> to vector<16x32xf32>
    %114 = arith.mulf %111, %113 : vector<16x32xf32>
    %115 = vector.extract_strided_slice %1 {offsets = [1, 0], sizes = [1, 32], strides = [1, 1]} : vector<4x32xf32> to vector<1x32xf32>
    %116 = vector.broadcast %115 : vector<1x32xf32> to vector<16x32xf32>
    %117 = arith.addf %114, %116 : vector<16x32xf32>
    %c1 = arith.constant 1 : index
    %c0_33 = arith.constant 0 : index
    %c0_34 = arith.constant 0 : index
    %118 = vector.load %arg1[%c1, %c0_33, %c0_34] : memref<8x16x16xf32, #tpu.memory_space<vmem>>, vector<1x16x16xf32>
    %119 = vector.shape_cast %118 : vector<1x16x16xf32> to vector<16x16xf32>
    %120 = vector.extract_strided_slice %4 {offsets = [16, 0], sizes = [16, 8], strides = [1, 1]} : vector<128x32xf32> to vector<16x8xf32>
    %121 = vector.extract_strided_slice %5 {offsets = [16, 0], sizes = [16, 8], strides = [1, 1]} : vector<128x32xf32> to vector<16x8xf32>
    %cst_35 = arith.constant dense<0.000000e+00> : vector<16x16xf32>
    %122 = tpu.matmul %120, %121, %cst_35 {dimension_numbers = #tpu.dot_dimension_numbers<[1], [1], [0], [0], [0, 0, 1, 0], [], []>} : vector<16x8xf32>, vector<16x8xf32>, vector<16x16xf32> -> vector<16x16xf32>
    %123 = arith.mulf %119, %122 : vector<16x16xf32>
    %cst_36 = arith.constant dense<0xFF800000> : vector<16xf32>
    %124 = vector.multi_reduction <maximumf>, %123, %cst_36 [1] : vector<16x16xf32> to vector<16xf32>
    %125 = vector.shape_cast %124 : vector<16xf32> to vector<16x1xf32>
    %126 = vector.broadcast %125 : vector<16x1xf32> to vector<16x16xf32>
    %127 = arith.subf %123, %126 : vector<16x16xf32>
    %128 = math.exp %127 : vector<16x16xf32>
    %cst_37 = arith.constant dense<0.000000e+00> : vector<16xf32>
    %129 = vector.multi_reduction <add>, %128, %cst_37 [1] : vector<16x16xf32> to vector<16xf32>
    %130 = vector.shape_cast %129 : vector<16xf32> to vector<16x1xf32>
    %131 = tpu.reciprocal %130 {approx = true} : vector<16x1xf32> -> vector<16x1xf32>
    %132 = arith.mulf %130, %131 : vector<16x1xf32>
    %cst_38 = arith.constant 2.000000e+00 : f32
    %133 = vector.broadcast %cst_38 : f32 to vector<16x1xf32>
    %134 = arith.subf %133, %132 : vector<16x1xf32>
    %135 = arith.mulf %131, %134 : vector<16x1xf32>
    %136 = vector.broadcast %135 : vector<16x1xf32> to vector<16x16xf32>
    %137 = arith.mulf %128, %136 : vector<16x16xf32>
    %138 = vector.extract_strided_slice %6 {offsets = [16, 0], sizes = [16, 32], strides = [1, 1]} : vector<128x128xf32> to vector<16x32xf32>
    %cst_39 = arith.constant dense<0.000000e+00> : vector<16x32xf32>
    %139 = tpu.matmul %137, %138, %cst_39 {dimension_numbers = #tpu.dot_dimension_numbers<[1], [0], [0], [1], [0, 0, 1, 1], [], []>} : vector<16x16xf32>, vector<16x32xf32>, vector<16x32xf32> -> vector<16x32xf32>
    %140 = vector.extract_strided_slice %4 {offsets = [16, 8], sizes = [16, 8], strides = [1, 1]} : vector<128x32xf32> to vector<16x8xf32>
    %141 = vector.extract_strided_slice %5 {offsets = [16, 8], sizes = [16, 8], strides = [1, 1]} : vector<128x32xf32> to vector<16x8xf32>
    %cst_40 = arith.constant dense<0.000000e+00> : vector<16x16xf32>
    %142 = tpu.matmul %140, %141, %cst_40 {dimension_numbers = #tpu.dot_dimension_numbers<[1], [1], [0], [0], [0, 0, 1, 0], [], []>} : vector<16x8xf32>, vector<16x8xf32>, vector<16x16xf32> -> vector<16x16xf32>
    %143 = arith.mulf %119, %142 : vector<16x16xf32>
    %cst_41 = arith.constant dense<0xFF800000> : vector<16xf32>
    %144 = vector.multi_reduction <maximumf>, %143, %cst_41 [1] : vector<16x16xf32> to vector<16xf32>
    %145 = vector.shape_cast %144 : vector<16xf32> to vector<16x1xf32>
    %146 = vector.broadcast %145 : vector<16x1xf32> to vector<16x16xf32>
    %147 = arith.subf %143, %146 : vector<16x16xf32>
    %148 = math.exp %147 : vector<16x16xf32>
    %cst_42 = arith.constant dense<0.000000e+00> : vector<16xf32>
    %149 = vector.multi_reduction <add>, %148, %cst_42 [1] : vector<16x16xf32> to vector<16xf32>
    %150 = vector.shape_cast %149 : vector<16xf32> to vector<16x1xf32>
    %151 = tpu.reciprocal %150 {approx = true} : vector<16x1xf32> -> vector<16x1xf32>
    %152 = arith.mulf %150, %151 : vector<16x1xf32>
    %cst_43 = arith.constant 2.000000e+00 : f32
    %153 = vector.broadcast %cst_43 : f32 to vector<16x1xf32>
    %154 = arith.subf %153, %152 : vector<16x1xf32>
    %155 = arith.mulf %151, %154 : vector<16x1xf32>
    %156 = vector.broadcast %155 : vector<16x1xf32> to vector<16x16xf32>
    %157 = arith.mulf %148, %156 : vector<16x16xf32>
    %158 = vector.extract_strided_slice %6 {offsets = [16, 32], sizes = [16, 32], strides = [1, 1]} : vector<128x128xf32> to vector<16x32xf32>
    %cst_44 = arith.constant dense<0.000000e+00> : vector<16x32xf32>
    %159 = tpu.matmul %157, %158, %cst_44 {dimension_numbers = #tpu.dot_dimension_numbers<[1], [0], [0], [1], [0, 0, 1, 1], [], []>} : vector<16x16xf32>, vector<16x32xf32>, vector<16x32xf32> -> vector<16x32xf32>
    %160 = arith.addf %139, %159 : vector<16x32xf32>
    %161 = vector.extract_strided_slice %4 {offsets = [16, 16], sizes = [16, 8], strides = [1, 1]} : vector<128x32xf32> to vector<16x8xf32>
    %162 = vector.extract_strided_slice %5 {offsets = [16, 16], sizes = [16, 8], strides = [1, 1]} : vector<128x32xf32> to vector<16x8xf32>
    %cst_45 = arith.constant dense<0.000000e+00> : vector<16x16xf32>
    %163 = tpu.matmul %161, %162, %cst_45 {dimension_numbers = #tpu.dot_dimension_numbers<[1], [1], [0], [0], [0, 0, 1, 0], [], []>} : vector<16x8xf32>, vector<16x8xf32>, vector<16x16xf32> -> vector<16x16xf32>
    %164 = arith.mulf %119, %163 : vector<16x16xf32>
    %cst_46 = arith.constant dense<0xFF800000> : vector<16xf32>
    %165 = vector.multi_reduction <maximumf>, %164, %cst_46 [1] : vector<16x16xf32> to vector<16xf32>
    %166 = vector.shape_cast %165 : vector<16xf32> to vector<16x1xf32>
    %167 = vector.broadcast %166 : vector<16x1xf32> to vector<16x16xf32>
    %168 = arith.subf %164, %167 : vector<16x16xf32>
    %169 = math.exp %168 : vector<16x16xf32>
    %cst_47 = arith.constant dense<0.000000e+00> : vector<16xf32>
    %170 = vector.multi_reduction <add>, %169, %cst_47 [1] : vector<16x16xf32> to vector<16xf32>
    %171 = vector.shape_cast %170 : vector<16xf32> to vector<16x1xf32>
    %172 = tpu.reciprocal %171 {approx = true} : vector<16x1xf32> -> vector<16x1xf32>
    %173 = arith.mulf %171, %172 : vector<16x1xf32>
    %cst_48 = arith.constant 2.000000e+00 : f32
    %174 = vector.broadcast %cst_48 : f32 to vector<16x1xf32>
    %175 = arith.subf %174, %173 : vector<16x1xf32>
    %176 = arith.mulf %172, %175 : vector<16x1xf32>
    %177 = vector.broadcast %176 : vector<16x1xf32> to vector<16x16xf32>
    %178 = arith.mulf %169, %177 : vector<16x16xf32>
    %179 = vector.extract_strided_slice %6 {offsets = [16, 64], sizes = [16, 32], strides = [1, 1]} : vector<128x128xf32> to vector<16x32xf32>
    %cst_49 = arith.constant dense<0.000000e+00> : vector<16x32xf32>
    %180 = tpu.matmul %178, %179, %cst_49 {dimension_numbers = #tpu.dot_dimension_numbers<[1], [0], [0], [1], [0, 0, 1, 1], [], []>} : vector<16x16xf32>, vector<16x32xf32>, vector<16x32xf32> -> vector<16x32xf32>
    %181 = arith.addf %160, %180 : vector<16x32xf32>
    %182 = vector.extract_strided_slice %4 {offsets = [16, 24], sizes = [16, 8], strides = [1, 1]} : vector<128x32xf32> to vector<16x8xf32>
    %183 = vector.extract_strided_slice %5 {offsets = [16, 24], sizes = [16, 8], strides = [1, 1]} : vector<128x32xf32> to vector<16x8xf32>
    %cst_50 = arith.constant dense<0.000000e+00> : vector<16x16xf32>
    %184 = tpu.matmul %182, %183, %cst_50 {dimension_numbers = #tpu.dot_dimension_numbers<[1], [1], [0], [0], [0, 0, 1, 0], [], []>} : vector<16x8xf32>, vector<16x8xf32>, vector<16x16xf32> -> vector<16x16xf32>
    %185 = arith.mulf %119, %184 : vector<16x16xf32>
    %cst_51 = arith.constant dense<0xFF800000> : vector<16xf32>
    %186 = vector.multi_reduction <maximumf>, %185, %cst_51 [1] : vector<16x16xf32> to vector<16xf32>
    %187 = vector.shape_cast %186 : vector<16xf32> to vector<16x1xf32>
    %188 = vector.broadcast %187 : vector<16x1xf32> to vector<16x16xf32>
    %189 = arith.subf %185, %188 : vector<16x16xf32>
    %190 = math.exp %189 : vector<16x16xf32>
    %cst_52 = arith.constant dense<0.000000e+00> : vector<16xf32>
    %191 = vector.multi_reduction <add>, %190, %cst_52 [1] : vector<16x16xf32> to vector<16xf32>
    %192 = vector.shape_cast %191 : vector<16xf32> to vector<16x1xf32>
    %193 = tpu.reciprocal %192 {approx = true} : vector<16x1xf32> -> vector<16x1xf32>
    %194 = arith.mulf %192, %193 : vector<16x1xf32>
    %cst_53 = arith.constant 2.000000e+00 : f32
    %195 = vector.broadcast %cst_53 : f32 to vector<16x1xf32>
    %196 = arith.subf %195, %194 : vector<16x1xf32>
    %197 = arith.mulf %193, %196 : vector<16x1xf32>
    %198 = vector.broadcast %197 : vector<16x1xf32> to vector<16x16xf32>
    %199 = arith.mulf %190, %198 : vector<16x16xf32>
    %200 = vector.extract_strided_slice %6 {offsets = [16, 96], sizes = [16, 32], strides = [1, 1]} : vector<128x128xf32> to vector<16x32xf32>
    %cst_54 = arith.constant dense<0.000000e+00> : vector<16x32xf32>
    %201 = tpu.matmul %199, %200, %cst_54 {dimension_numbers = #tpu.dot_dimension_numbers<[1], [0], [0], [1], [0, 0, 1, 1], [], []>} : vector<16x16xf32>, vector<16x32xf32>, vector<16x32xf32> -> vector<16x32xf32>
    %202 = arith.addf %181, %201 : vector<16x32xf32>
    %203 = vector.extract_strided_slice %0 {offsets = [16, 0], sizes = [16, 32], strides = [1, 1]} : vector<128x32xf32> to vector<16x32xf32>
    %204 = arith.addf %202, %203 : vector<16x32xf32>
    %cst_55 = arith.constant dense<0.000000e+00> : vector<32xf32>
    %205 = vector.multi_reduction <add>, %204, %cst_55 [0] : vector<16x32xf32> to vector<32xf32>
    %206 = vector.shape_cast %205 : vector<32xf32> to vector<1x32xf32>
    %cst_56 = arith.constant 1.600000e+01 : f32
    %207 = vector.broadcast %cst_56 : f32 to vector<1x32xf32>
    %208 = arith.divf %206, %207 : vector<1x32xf32>
    %209 = arith.mulf %204, %204 : vector<16x32xf32>
    %cst_57 = arith.constant dense<0.000000e+00> : vector<32xf32>
    %210 = vector.multi_reduction <add>, %209, %cst_57 [0] : vector<16x32xf32> to vector<32xf32>
    %211 = vector.shape_cast %210 : vector<32xf32> to vector<1x32xf32>
    %cst_58 = arith.constant 1.600000e+01 : f32
    %212 = vector.broadcast %cst_58 : f32 to vector<1x32xf32>
    %213 = arith.divf %211, %212 : vector<1x32xf32>
    %214 = arith.mulf %208, %208 : vector<1x32xf32>
    %215 = arith.subf %213, %214 : vector<1x32xf32>
    %216 = vector.broadcast %208 : vector<1x32xf32> to vector<16x32xf32>
    %217 = arith.subf %204, %216 : vector<16x32xf32>
    %cst_59 = arith.constant 9.99999974E-6 : f32
    %218 = vector.broadcast %cst_59 : f32 to vector<1x32xf32>
    %219 = arith.addf %215, %218 : vector<1x32xf32>
    %220 = math.rsqrt %219 : vector<1x32xf32>
    %221 = vector.broadcast %220 : vector<1x32xf32> to vector<16x32xf32>
    %222 = arith.mulf %217, %221 : vector<16x32xf32>
    %223 = vector.extract_strided_slice %1 {offsets = [0, 0], sizes = [1, 32], strides = [1, 1]} : vector<4x32xf32> to vector<1x32xf32>
    %224 = vector.broadcast %223 : vector<1x32xf32> to vector<16x32xf32>
    %225 = arith.mulf %222, %224 : vector<16x32xf32>
    %226 = vector.extract_strided_slice %1 {offsets = [1, 0], sizes = [1, 32], strides = [1, 1]} : vector<4x32xf32> to vector<1x32xf32>
    %227 = vector.broadcast %226 : vector<1x32xf32> to vector<16x32xf32>
    %228 = arith.addf %225, %227 : vector<16x32xf32>
    %c2 = arith.constant 2 : index
    %c0_60 = arith.constant 0 : index
    %c0_61 = arith.constant 0 : index
    %229 = vector.load %arg1[%c2, %c0_60, %c0_61] : memref<8x16x16xf32, #tpu.memory_space<vmem>>, vector<1x16x16xf32>
    %230 = vector.shape_cast %229 : vector<1x16x16xf32> to vector<16x16xf32>
    %231 = vector.extract_strided_slice %4 {offsets = [32, 0], sizes = [16, 8], strides = [1, 1]} : vector<128x32xf32> to vector<16x8xf32>
    %232 = vector.extract_strided_slice %5 {offsets = [32, 0], sizes = [16, 8], strides = [1, 1]} : vector<128x32xf32> to vector<16x8xf32>
    %cst_62 = arith.constant dense<0.000000e+00> : vector<16x16xf32>
    %233 = tpu.matmul %231, %232, %cst_62 {dimension_numbers = #tpu.dot_dimension_numbers<[1], [1], [0], [0], [0, 0, 1, 0], [], []>} : vector<16x8xf32>, vector<16x8xf32>, vector<16x16xf32> -> vector<16x16xf32>
    %234 = arith.mulf %230, %233 : vector<16x16xf32>
    %cst_63 = arith.constant dense<0xFF800000> : vector<16xf32>
    %235 = vector.multi_reduction <maximumf>, %234, %cst_63 [1] : vector<16x16xf32> to vector<16xf32>
    %236 = vector.shape_cast %235 : vector<16xf32> to vector<16x1xf32>
    %237 = vector.broadcast %236 : vector<16x1xf32> to vector<16x16xf32>
    %238 = arith.subf %234, %237 : vector<16x16xf32>
    %239 = math.exp %238 : vector<16x16xf32>
    %cst_64 = arith.constant dense<0.000000e+00> : vector<16xf32>
    %240 = vector.multi_reduction <add>, %239, %cst_64 [1] : vector<16x16xf32> to vector<16xf32>
    %241 = vector.shape_cast %240 : vector<16xf32> to vector<16x1xf32>
    %242 = tpu.reciprocal %241 {approx = true} : vector<16x1xf32> -> vector<16x1xf32>
    %243 = arith.mulf %241, %242 : vector<16x1xf32>
    %cst_65 = arith.constant 2.000000e+00 : f32
    %244 = vector.broadcast %cst_65 : f32 to vector<16x1xf32>
    %245 = arith.subf %244, %243 : vector<16x1xf32>
    %246 = arith.mulf %242, %245 : vector<16x1xf32>
    %247 = vector.broadcast %246 : vector<16x1xf32> to vector<16x16xf32>
    %248 = arith.mulf %239, %247 : vector<16x16xf32>
    %249 = vector.extract_strided_slice %6 {offsets = [32, 0], sizes = [16, 32], strides = [1, 1]} : vector<128x128xf32> to vector<16x32xf32>
    %cst_66 = arith.constant dense<0.000000e+00> : vector<16x32xf32>
    %250 = tpu.matmul %248, %249, %cst_66 {dimension_numbers = #tpu.dot_dimension_numbers<[1], [0], [0], [1], [0, 0, 1, 1], [], []>} : vector<16x16xf32>, vector<16x32xf32>, vector<16x32xf32> -> vector<16x32xf32>
    %251 = vector.extract_strided_slice %4 {offsets = [32, 8], sizes = [16, 8], strides = [1, 1]} : vector<128x32xf32> to vector<16x8xf32>
    %252 = vector.extract_strided_slice %5 {offsets = [32, 8], sizes = [16, 8], strides = [1, 1]} : vector<128x32xf32> to vector<16x8xf32>
    %cst_67 = arith.constant dense<0.000000e+00> : vector<16x16xf32>
    %253 = tpu.matmul %251, %252, %cst_67 {dimension_numbers = #tpu.dot_dimension_numbers<[1], [1], [0], [0], [0, 0, 1, 0], [], []>} : vector<16x8xf32>, vector<16x8xf32>, vector<16x16xf32> -> vector<16x16xf32>
    %254 = arith.mulf %230, %253 : vector<16x16xf32>
    %cst_68 = arith.constant dense<0xFF800000> : vector<16xf32>
    %255 = vector.multi_reduction <maximumf>, %254, %cst_68 [1] : vector<16x16xf32> to vector<16xf32>
    %256 = vector.shape_cast %255 : vector<16xf32> to vector<16x1xf32>
    %257 = vector.broadcast %256 : vector<16x1xf32> to vector<16x16xf32>
    %258 = arith.subf %254, %257 : vector<16x16xf32>
    %259 = math.exp %258 : vector<16x16xf32>
    %cst_69 = arith.constant dense<0.000000e+00> : vector<16xf32>
    %260 = vector.multi_reduction <add>, %259, %cst_69 [1] : vector<16x16xf32> to vector<16xf32>
    %261 = vector.shape_cast %260 : vector<16xf32> to vector<16x1xf32>
    %262 = tpu.reciprocal %261 {approx = true} : vector<16x1xf32> -> vector<16x1xf32>
    %263 = arith.mulf %261, %262 : vector<16x1xf32>
    %cst_70 = arith.constant 2.000000e+00 : f32
    %264 = vector.broadcast %cst_70 : f32 to vector<16x1xf32>
    %265 = arith.subf %264, %263 : vector<16x1xf32>
    %266 = arith.mulf %262, %265 : vector<16x1xf32>
    %267 = vector.broadcast %266 : vector<16x1xf32> to vector<16x16xf32>
    %268 = arith.mulf %259, %267 : vector<16x16xf32>
    %269 = vector.extract_strided_slice %6 {offsets = [32, 32], sizes = [16, 32], strides = [1, 1]} : vector<128x128xf32> to vector<16x32xf32>
    %cst_71 = arith.constant dense<0.000000e+00> : vector<16x32xf32>
    %270 = tpu.matmul %268, %269, %cst_71 {dimension_numbers = #tpu.dot_dimension_numbers<[1], [0], [0], [1], [0, 0, 1, 1], [], []>} : vector<16x16xf32>, vector<16x32xf32>, vector<16x32xf32> -> vector<16x32xf32>
    %271 = arith.addf %250, %270 : vector<16x32xf32>
    %272 = vector.extract_strided_slice %4 {offsets = [32, 16], sizes = [16, 8], strides = [1, 1]} : vector<128x32xf32> to vector<16x8xf32>
    %273 = vector.extract_strided_slice %5 {offsets = [32, 16], sizes = [16, 8], strides = [1, 1]} : vector<128x32xf32> to vector<16x8xf32>
    %cst_72 = arith.constant dense<0.000000e+00> : vector<16x16xf32>
    %274 = tpu.matmul %272, %273, %cst_72 {dimension_numbers = #tpu.dot_dimension_numbers<[1], [1], [0], [0], [0, 0, 1, 0], [], []>} : vector<16x8xf32>, vector<16x8xf32>, vector<16x16xf32> -> vector<16x16xf32>
    %275 = arith.mulf %230, %274 : vector<16x16xf32>
    %cst_73 = arith.constant dense<0xFF800000> : vector<16xf32>
    %276 = vector.multi_reduction <maximumf>, %275, %cst_73 [1] : vector<16x16xf32> to vector<16xf32>
    %277 = vector.shape_cast %276 : vector<16xf32> to vector<16x1xf32>
    %278 = vector.broadcast %277 : vector<16x1xf32> to vector<16x16xf32>
    %279 = arith.subf %275, %278 : vector<16x16xf32>
    %280 = math.exp %279 : vector<16x16xf32>
    %cst_74 = arith.constant dense<0.000000e+00> : vector<16xf32>
    %281 = vector.multi_reduction <add>, %280, %cst_74 [1] : vector<16x16xf32> to vector<16xf32>
    %282 = vector.shape_cast %281 : vector<16xf32> to vector<16x1xf32>
    %283 = tpu.reciprocal %282 {approx = true} : vector<16x1xf32> -> vector<16x1xf32>
    %284 = arith.mulf %282, %283 : vector<16x1xf32>
    %cst_75 = arith.constant 2.000000e+00 : f32
    %285 = vector.broadcast %cst_75 : f32 to vector<16x1xf32>
    %286 = arith.subf %285, %284 : vector<16x1xf32>
    %287 = arith.mulf %283, %286 : vector<16x1xf32>
    %288 = vector.broadcast %287 : vector<16x1xf32> to vector<16x16xf32>
    %289 = arith.mulf %280, %288 : vector<16x16xf32>
    %290 = vector.extract_strided_slice %6 {offsets = [32, 64], sizes = [16, 32], strides = [1, 1]} : vector<128x128xf32> to vector<16x32xf32>
    %cst_76 = arith.constant dense<0.000000e+00> : vector<16x32xf32>
    %291 = tpu.matmul %289, %290, %cst_76 {dimension_numbers = #tpu.dot_dimension_numbers<[1], [0], [0], [1], [0, 0, 1, 1], [], []>} : vector<16x16xf32>, vector<16x32xf32>, vector<16x32xf32> -> vector<16x32xf32>
    %292 = arith.addf %271, %291 : vector<16x32xf32>
    %293 = vector.extract_strided_slice %4 {offsets = [32, 24], sizes = [16, 8], strides = [1, 1]} : vector<128x32xf32> to vector<16x8xf32>
    %294 = vector.extract_strided_slice %5 {offsets = [32, 24], sizes = [16, 8], strides = [1, 1]} : vector<128x32xf32> to vector<16x8xf32>
    %cst_77 = arith.constant dense<0.000000e+00> : vector<16x16xf32>
    %295 = tpu.matmul %293, %294, %cst_77 {dimension_numbers = #tpu.dot_dimension_numbers<[1], [1], [0], [0], [0, 0, 1, 0], [], []>} : vector<16x8xf32>, vector<16x8xf32>, vector<16x16xf32> -> vector<16x16xf32>
    %296 = arith.mulf %230, %295 : vector<16x16xf32>
    %cst_78 = arith.constant dense<0xFF800000> : vector<16xf32>
    %297 = vector.multi_reduction <maximumf>, %296, %cst_78 [1] : vector<16x16xf32> to vector<16xf32>
    %298 = vector.shape_cast %297 : vector<16xf32> to vector<16x1xf32>
    %299 = vector.broadcast %298 : vector<16x1xf32> to vector<16x16xf32>
    %300 = arith.subf %296, %299 : vector<16x16xf32>
    %301 = math.exp %300 : vector<16x16xf32>
    %cst_79 = arith.constant dense<0.000000e+00> : vector<16xf32>
    %302 = vector.multi_reduction <add>, %301, %cst_79 [1] : vector<16x16xf32> to vector<16xf32>
    %303 = vector.shape_cast %302 : vector<16xf32> to vector<16x1xf32>
    %304 = tpu.reciprocal %303 {approx = true} : vector<16x1xf32> -> vector<16x1xf32>
    %305 = arith.mulf %303, %304 : vector<16x1xf32>
    %cst_80 = arith.constant 2.000000e+00 : f32
    %306 = vector.broadcast %cst_80 : f32 to vector<16x1xf32>
    %307 = arith.subf %306, %305 : vector<16x1xf32>
    %308 = arith.mulf %304, %307 : vector<16x1xf32>
    %309 = vector.broadcast %308 : vector<16x1xf32> to vector<16x16xf32>
    %310 = arith.mulf %301, %309 : vector<16x16xf32>
    %311 = vector.extract_strided_slice %6 {offsets = [32, 96], sizes = [16, 32], strides = [1, 1]} : vector<128x128xf32> to vector<16x32xf32>
    %cst_81 = arith.constant dense<0.000000e+00> : vector<16x32xf32>
    %312 = tpu.matmul %310, %311, %cst_81 {dimension_numbers = #tpu.dot_dimension_numbers<[1], [0], [0], [1], [0, 0, 1, 1], [], []>} : vector<16x16xf32>, vector<16x32xf32>, vector<16x32xf32> -> vector<16x32xf32>
    %313 = arith.addf %292, %312 : vector<16x32xf32>
    %314 = vector.extract_strided_slice %0 {offsets = [32, 0], sizes = [16, 32], strides = [1, 1]} : vector<128x32xf32> to vector<16x32xf32>
    %315 = arith.addf %313, %314 : vector<16x32xf32>
    %cst_82 = arith.constant dense<0.000000e+00> : vector<32xf32>
    %316 = vector.multi_reduction <add>, %315, %cst_82 [0] : vector<16x32xf32> to vector<32xf32>
    %317 = vector.shape_cast %316 : vector<32xf32> to vector<1x32xf32>
    %cst_83 = arith.constant 1.600000e+01 : f32
    %318 = vector.broadcast %cst_83 : f32 to vector<1x32xf32>
    %319 = arith.divf %317, %318 : vector<1x32xf32>
    %320 = arith.mulf %315, %315 : vector<16x32xf32>
    %cst_84 = arith.constant dense<0.000000e+00> : vector<32xf32>
    %321 = vector.multi_reduction <add>, %320, %cst_84 [0] : vector<16x32xf32> to vector<32xf32>
    %322 = vector.shape_cast %321 : vector<32xf32> to vector<1x32xf32>
    %cst_85 = arith.constant 1.600000e+01 : f32
    %323 = vector.broadcast %cst_85 : f32 to vector<1x32xf32>
    %324 = arith.divf %322, %323 : vector<1x32xf32>
    %325 = arith.mulf %319, %319 : vector<1x32xf32>
    %326 = arith.subf %324, %325 : vector<1x32xf32>
    %327 = vector.broadcast %319 : vector<1x32xf32> to vector<16x32xf32>
    %328 = arith.subf %315, %327 : vector<16x32xf32>
    %cst_86 = arith.constant 9.99999974E-6 : f32
    %329 = vector.broadcast %cst_86 : f32 to vector<1x32xf32>
    %330 = arith.addf %326, %329 : vector<1x32xf32>
    %331 = math.rsqrt %330 : vector<1x32xf32>
    %332 = vector.broadcast %331 : vector<1x32xf32> to vector<16x32xf32>
    %333 = arith.mulf %328, %332 : vector<16x32xf32>
    %334 = vector.extract_strided_slice %1 {offsets = [0, 0], sizes = [1, 32], strides = [1, 1]} : vector<4x32xf32> to vector<1x32xf32>
    %335 = vector.broadcast %334 : vector<1x32xf32> to vector<16x32xf32>
    %336 = arith.mulf %333, %335 : vector<16x32xf32>
    %337 = vector.extract_strided_slice %1 {offsets = [1, 0], sizes = [1, 32], strides = [1, 1]} : vector<4x32xf32> to vector<1x32xf32>
    %338 = vector.broadcast %337 : vector<1x32xf32> to vector<16x32xf32>
    %339 = arith.addf %336, %338 : vector<16x32xf32>
    %c3 = arith.constant 3 : index
    %c0_87 = arith.constant 0 : index
    %c0_88 = arith.constant 0 : index
    %340 = vector.load %arg1[%c3, %c0_87, %c0_88] : memref<8x16x16xf32, #tpu.memory_space<vmem>>, vector<1x16x16xf32>
    %341 = vector.shape_cast %340 : vector<1x16x16xf32> to vector<16x16xf32>
    %342 = vector.extract_strided_slice %4 {offsets = [48, 0], sizes = [16, 8], strides = [1, 1]} : vector<128x32xf32> to vector<16x8xf32>
    %343 = vector.extract_strided_slice %5 {offsets = [48, 0], sizes = [16, 8], strides = [1, 1]} : vector<128x32xf32> to vector<16x8xf32>
    %cst_89 = arith.constant dense<0.000000e+00> : vector<16x16xf32>
    %344 = tpu.matmul %342, %343, %cst_89 {dimension_numbers = #tpu.dot_dimension_numbers<[1], [1], [0], [0], [0, 0, 1, 0], [], []>} : vector<16x8xf32>, vector<16x8xf32>, vector<16x16xf32> -> vector<16x16xf32>
    %345 = arith.mulf %341, %344 : vector<16x16xf32>
    %cst_90 = arith.constant dense<0xFF800000> : vector<16xf32>
    %346 = vector.multi_reduction <maximumf>, %345, %cst_90 [1] : vector<16x16xf32> to vector<16xf32>
    %347 = vector.shape_cast %346 : vector<16xf32> to vector<16x1xf32>
    %348 = vector.broadcast %347 : vector<16x1xf32> to vector<16x16xf32>
    %349 = arith.subf %345, %348 : vector<16x16xf32>
    %350 = math.exp %349 : vector<16x16xf32>
    %cst_91 = arith.constant dense<0.000000e+00> : vector<16xf32>
    %351 = vector.multi_reduction <add>, %350, %cst_91 [1] : vector<16x16xf32> to vector<16xf32>
    %352 = vector.shape_cast %351 : vector<16xf32> to vector<16x1xf32>
    %353 = tpu.reciprocal %352 {approx = true} : vector<16x1xf32> -> vector<16x1xf32>
    %354 = arith.mulf %352, %353 : vector<16x1xf32>
    %cst_92 = arith.constant 2.000000e+00 : f32
    %355 = vector.broadcast %cst_92 : f32 to vector<16x1xf32>
    %356 = arith.subf %355, %354 : vector<16x1xf32>
    %357 = arith.mulf %353, %356 : vector<16x1xf32>
    %358 = vector.broadcast %357 : vector<16x1xf32> to vector<16x16xf32>
    %359 = arith.mulf %350, %358 : vector<16x16xf32>
    %360 = vector.extract_strided_slice %6 {offsets = [48, 0], sizes = [16, 32], strides = [1, 1]} : vector<128x128xf32> to vector<16x32xf32>
    %cst_93 = arith.constant dense<0.000000e+00> : vector<16x32xf32>
    %361 = tpu.matmul %359, %360, %cst_93 {dimension_numbers = #tpu.dot_dimension_numbers<[1], [0], [0], [1], [0, 0, 1, 1], [], []>} : vector<16x16xf32>, vector<16x32xf32>, vector<16x32xf32> -> vector<16x32xf32>
    %362 = vector.extract_strided_slice %4 {offsets = [48, 8], sizes = [16, 8], strides = [1, 1]} : vector<128x32xf32> to vector<16x8xf32>
    %363 = vector.extract_strided_slice %5 {offsets = [48, 8], sizes = [16, 8], strides = [1, 1]} : vector<128x32xf32> to vector<16x8xf32>
    %cst_94 = arith.constant dense<0.000000e+00> : vector<16x16xf32>
    %364 = tpu.matmul %362, %363, %cst_94 {dimension_numbers = #tpu.dot_dimension_numbers<[1], [1], [0], [0], [0, 0, 1, 0], [], []>} : vector<16x8xf32>, vector<16x8xf32>, vector<16x16xf32> -> vector<16x16xf32>
    %365 = arith.mulf %341, %364 : vector<16x16xf32>
    %cst_95 = arith.constant dense<0xFF800000> : vector<16xf32>
    %366 = vector.multi_reduction <maximumf>, %365, %cst_95 [1] : vector<16x16xf32> to vector<16xf32>
    %367 = vector.shape_cast %366 : vector<16xf32> to vector<16x1xf32>
    %368 = vector.broadcast %367 : vector<16x1xf32> to vector<16x16xf32>
    %369 = arith.subf %365, %368 : vector<16x16xf32>
    %370 = math.exp %369 : vector<16x16xf32>
    %cst_96 = arith.constant dense<0.000000e+00> : vector<16xf32>
    %371 = vector.multi_reduction <add>, %370, %cst_96 [1] : vector<16x16xf32> to vector<16xf32>
    %372 = vector.shape_cast %371 : vector<16xf32> to vector<16x1xf32>
    %373 = tpu.reciprocal %372 {approx = true} : vector<16x1xf32> -> vector<16x1xf32>
    %374 = arith.mulf %372, %373 : vector<16x1xf32>
    %cst_97 = arith.constant 2.000000e+00 : f32
    %375 = vector.broadcast %cst_97 : f32 to vector<16x1xf32>
    %376 = arith.subf %375, %374 : vector<16x1xf32>
    %377 = arith.mulf %373, %376 : vector<16x1xf32>
    %378 = vector.broadcast %377 : vector<16x1xf32> to vector<16x16xf32>
    %379 = arith.mulf %370, %378 : vector<16x16xf32>
    %380 = vector.extract_strided_slice %6 {offsets = [48, 32], sizes = [16, 32], strides = [1, 1]} : vector<128x128xf32> to vector<16x32xf32>
    %cst_98 = arith.constant dense<0.000000e+00> : vector<16x32xf32>
    %381 = tpu.matmul %379, %380, %cst_98 {dimension_numbers = #tpu.dot_dimension_numbers<[1], [0], [0], [1], [0, 0, 1, 1], [], []>} : vector<16x16xf32>, vector<16x32xf32>, vector<16x32xf32> -> vector<16x32xf32>
    %382 = arith.addf %361, %381 : vector<16x32xf32>
    %383 = vector.extract_strided_slice %4 {offsets = [48, 16], sizes = [16, 8], strides = [1, 1]} : vector<128x32xf32> to vector<16x8xf32>
    %384 = vector.extract_strided_slice %5 {offsets = [48, 16], sizes = [16, 8], strides = [1, 1]} : vector<128x32xf32> to vector<16x8xf32>
    %cst_99 = arith.constant dense<0.000000e+00> : vector<16x16xf32>
    %385 = tpu.matmul %383, %384, %cst_99 {dimension_numbers = #tpu.dot_dimension_numbers<[1], [1], [0], [0], [0, 0, 1, 0], [], []>} : vector<16x8xf32>, vector<16x8xf32>, vector<16x16xf32> -> vector<16x16xf32>
    %386 = arith.mulf %341, %385 : vector<16x16xf32>
    %cst_100 = arith.constant dense<0xFF800000> : vector<16xf32>
    %387 = vector.multi_reduction <maximumf>, %386, %cst_100 [1] : vector<16x16xf32> to vector<16xf32>
    %388 = vector.shape_cast %387 : vector<16xf32> to vector<16x1xf32>
    %389 = vector.broadcast %388 : vector<16x1xf32> to vector<16x16xf32>
    %390 = arith.subf %386, %389 : vector<16x16xf32>
    %391 = math.exp %390 : vector<16x16xf32>
    %cst_101 = arith.constant dense<0.000000e+00> : vector<16xf32>
    %392 = vector.multi_reduction <add>, %391, %cst_101 [1] : vector<16x16xf32> to vector<16xf32>
    %393 = vector.shape_cast %392 : vector<16xf32> to vector<16x1xf32>
    %394 = tpu.reciprocal %393 {approx = true} : vector<16x1xf32> -> vector<16x1xf32>
    %395 = arith.mulf %393, %394 : vector<16x1xf32>
    %cst_102 = arith.constant 2.000000e+00 : f32
    %396 = vector.broadcast %cst_102 : f32 to vector<16x1xf32>
    %397 = arith.subf %396, %395 : vector<16x1xf32>
    %398 = arith.mulf %394, %397 : vector<16x1xf32>
    %399 = vector.broadcast %398 : vector<16x1xf32> to vector<16x16xf32>
    %400 = arith.mulf %391, %399 : vector<16x16xf32>
    %401 = vector.extract_strided_slice %6 {offsets = [48, 64], sizes = [16, 32], strides = [1, 1]} : vector<128x128xf32> to vector<16x32xf32>
    %cst_103 = arith.constant dense<0.000000e+00> : vector<16x32xf32>
    %402 = tpu.matmul %400, %401, %cst_103 {dimension_numbers = #tpu.dot_dimension_numbers<[1], [0], [0], [1], [0, 0, 1, 1], [], []>} : vector<16x16xf32>, vector<16x32xf32>, vector<16x32xf32> -> vector<16x32xf32>
    %403 = arith.addf %382, %402 : vector<16x32xf32>
    %404 = vector.extract_strided_slice %4 {offsets = [48, 24], sizes = [16, 8], strides = [1, 1]} : vector<128x32xf32> to vector<16x8xf32>
    %405 = vector.extract_strided_slice %5 {offsets = [48, 24], sizes = [16, 8], strides = [1, 1]} : vector<128x32xf32> to vector<16x8xf32>
    %cst_104 = arith.constant dense<0.000000e+00> : vector<16x16xf32>
    %406 = tpu.matmul %404, %405, %cst_104 {dimension_numbers = #tpu.dot_dimension_numbers<[1], [1], [0], [0], [0, 0, 1, 0], [], []>} : vector<16x8xf32>, vector<16x8xf32>, vector<16x16xf32> -> vector<16x16xf32>
    %407 = arith.mulf %341, %406 : vector<16x16xf32>
    %cst_105 = arith.constant dense<0xFF800000> : vector<16xf32>
    %408 = vector.multi_reduction <maximumf>, %407, %cst_105 [1] : vector<16x16xf32> to vector<16xf32>
    %409 = vector.shape_cast %408 : vector<16xf32> to vector<16x1xf32>
    %410 = vector.broadcast %409 : vector<16x1xf32> to vector<16x16xf32>
    %411 = arith.subf %407, %410 : vector<16x16xf32>
    %412 = math.exp %411 : vector<16x16xf32>
    %cst_106 = arith.constant dense<0.000000e+00> : vector<16xf32>
    %413 = vector.multi_reduction <add>, %412, %cst_106 [1] : vector<16x16xf32> to vector<16xf32>
    %414 = vector.shape_cast %413 : vector<16xf32> to vector<16x1xf32>
    %415 = tpu.reciprocal %414 {approx = true} : vector<16x1xf32> -> vector<16x1xf32>
    %416 = arith.mulf %414, %415 : vector<16x1xf32>
    %cst_107 = arith.constant 2.000000e+00 : f32
    %417 = vector.broadcast %cst_107 : f32 to vector<16x1xf32>
    %418 = arith.subf %417, %416 : vector<16x1xf32>
    %419 = arith.mulf %415, %418 : vector<16x1xf32>
    %420 = vector.broadcast %419 : vector<16x1xf32> to vector<16x16xf32>
    %421 = arith.mulf %412, %420 : vector<16x16xf32>
    %422 = vector.extract_strided_slice %6 {offsets = [48, 96], sizes = [16, 32], strides = [1, 1]} : vector<128x128xf32> to vector<16x32xf32>
    %cst_108 = arith.constant dense<0.000000e+00> : vector<16x32xf32>
    %423 = tpu.matmul %421, %422, %cst_108 {dimension_numbers = #tpu.dot_dimension_numbers<[1], [0], [0], [1], [0, 0, 1, 1], [], []>} : vector<16x16xf32>, vector<16x32xf32>, vector<16x32xf32> -> vector<16x32xf32>
    %424 = arith.addf %403, %423 : vector<16x32xf32>
    %425 = vector.extract_strided_slice %0 {offsets = [48, 0], sizes = [16, 32], strides = [1, 1]} : vector<128x32xf32> to vector<16x32xf32>
    %426 = arith.addf %424, %425 : vector<16x32xf32>
    %cst_109 = arith.constant dense<0.000000e+00> : vector<32xf32>
    %427 = vector.multi_reduction <add>, %426, %cst_109 [0] : vector<16x32xf32> to vector<32xf32>
    %428 = vector.shape_cast %427 : vector<32xf32> to vector<1x32xf32>
    %cst_110 = arith.constant 1.600000e+01 : f32
    %429 = vector.broadcast %cst_110 : f32 to vector<1x32xf32>
    %430 = arith.divf %428, %429 : vector<1x32xf32>
    %431 = arith.mulf %426, %426 : vector<16x32xf32>
    %cst_111 = arith.constant dense<0.000000e+00> : vector<32xf32>
    %432 = vector.multi_reduction <add>, %431, %cst_111 [0] : vector<16x32xf32> to vector<32xf32>
    %433 = vector.shape_cast %432 : vector<32xf32> to vector<1x32xf32>
    %cst_112 = arith.constant 1.600000e+01 : f32
    %434 = vector.broadcast %cst_112 : f32 to vector<1x32xf32>
    %435 = arith.divf %433, %434 : vector<1x32xf32>
    %436 = arith.mulf %430, %430 : vector<1x32xf32>
    %437 = arith.subf %435, %436 : vector<1x32xf32>
    %438 = vector.broadcast %430 : vector<1x32xf32> to vector<16x32xf32>
    %439 = arith.subf %426, %438 : vector<16x32xf32>
    %cst_113 = arith.constant 9.99999974E-6 : f32
    %440 = vector.broadcast %cst_113 : f32 to vector<1x32xf32>
    %441 = arith.addf %437, %440 : vector<1x32xf32>
    %442 = math.rsqrt %441 : vector<1x32xf32>
    %443 = vector.broadcast %442 : vector<1x32xf32> to vector<16x32xf32>
    %444 = arith.mulf %439, %443 : vector<16x32xf32>
    %445 = vector.extract_strided_slice %1 {offsets = [0, 0], sizes = [1, 32], strides = [1, 1]} : vector<4x32xf32> to vector<1x32xf32>
    %446 = vector.broadcast %445 : vector<1x32xf32> to vector<16x32xf32>
    %447 = arith.mulf %444, %446 : vector<16x32xf32>
    %448 = vector.extract_strided_slice %1 {offsets = [1, 0], sizes = [1, 32], strides = [1, 1]} : vector<4x32xf32> to vector<1x32xf32>
    %449 = vector.broadcast %448 : vector<1x32xf32> to vector<16x32xf32>
    %450 = arith.addf %447, %449 : vector<16x32xf32>
    %c4 = arith.constant 4 : index
    %c0_114 = arith.constant 0 : index
    %c0_115 = arith.constant 0 : index
    %451 = vector.load %arg1[%c4, %c0_114, %c0_115] : memref<8x16x16xf32, #tpu.memory_space<vmem>>, vector<1x16x16xf32>
    %452 = vector.shape_cast %451 : vector<1x16x16xf32> to vector<16x16xf32>
    %453 = vector.extract_strided_slice %4 {offsets = [64, 0], sizes = [16, 8], strides = [1, 1]} : vector<128x32xf32> to vector<16x8xf32>
    %454 = vector.extract_strided_slice %5 {offsets = [64, 0], sizes = [16, 8], strides = [1, 1]} : vector<128x32xf32> to vector<16x8xf32>
    %cst_116 = arith.constant dense<0.000000e+00> : vector<16x16xf32>
    %455 = tpu.matmul %453, %454, %cst_116 {dimension_numbers = #tpu.dot_dimension_numbers<[1], [1], [0], [0], [0, 0, 1, 0], [], []>} : vector<16x8xf32>, vector<16x8xf32>, vector<16x16xf32> -> vector<16x16xf32>
    %456 = arith.mulf %452, %455 : vector<16x16xf32>
    %cst_117 = arith.constant dense<0xFF800000> : vector<16xf32>
    %457 = vector.multi_reduction <maximumf>, %456, %cst_117 [1] : vector<16x16xf32> to vector<16xf32>
    %458 = vector.shape_cast %457 : vector<16xf32> to vector<16x1xf32>
    %459 = vector.broadcast %458 : vector<16x1xf32> to vector<16x16xf32>
    %460 = arith.subf %456, %459 : vector<16x16xf32>
    %461 = math.exp %460 : vector<16x16xf32>
    %cst_118 = arith.constant dense<0.000000e+00> : vector<16xf32>
    %462 = vector.multi_reduction <add>, %461, %cst_118 [1] : vector<16x16xf32> to vector<16xf32>
    %463 = vector.shape_cast %462 : vector<16xf32> to vector<16x1xf32>
    %464 = tpu.reciprocal %463 {approx = true} : vector<16x1xf32> -> vector<16x1xf32>
    %465 = arith.mulf %463, %464 : vector<16x1xf32>
    %cst_119 = arith.constant 2.000000e+00 : f32
    %466 = vector.broadcast %cst_119 : f32 to vector<16x1xf32>
    %467 = arith.subf %466, %465 : vector<16x1xf32>
    %468 = arith.mulf %464, %467 : vector<16x1xf32>
    %469 = vector.broadcast %468 : vector<16x1xf32> to vector<16x16xf32>
    %470 = arith.mulf %461, %469 : vector<16x16xf32>
    %471 = vector.extract_strided_slice %6 {offsets = [64, 0], sizes = [16, 32], strides = [1, 1]} : vector<128x128xf32> to vector<16x32xf32>
    %cst_120 = arith.constant dense<0.000000e+00> : vector<16x32xf32>
    %472 = tpu.matmul %470, %471, %cst_120 {dimension_numbers = #tpu.dot_dimension_numbers<[1], [0], [0], [1], [0, 0, 1, 1], [], []>} : vector<16x16xf32>, vector<16x32xf32>, vector<16x32xf32> -> vector<16x32xf32>
    %473 = vector.extract_strided_slice %4 {offsets = [64, 8], sizes = [16, 8], strides = [1, 1]} : vector<128x32xf32> to vector<16x8xf32>
    %474 = vector.extract_strided_slice %5 {offsets = [64, 8], sizes = [16, 8], strides = [1, 1]} : vector<128x32xf32> to vector<16x8xf32>
    %cst_121 = arith.constant dense<0.000000e+00> : vector<16x16xf32>
    %475 = tpu.matmul %473, %474, %cst_121 {dimension_numbers = #tpu.dot_dimension_numbers<[1], [1], [0], [0], [0, 0, 1, 0], [], []>} : vector<16x8xf32>, vector<16x8xf32>, vector<16x16xf32> -> vector<16x16xf32>
    %476 = arith.mulf %452, %475 : vector<16x16xf32>
    %cst_122 = arith.constant dense<0xFF800000> : vector<16xf32>
    %477 = vector.multi_reduction <maximumf>, %476, %cst_122 [1] : vector<16x16xf32> to vector<16xf32>
    %478 = vector.shape_cast %477 : vector<16xf32> to vector<16x1xf32>
    %479 = vector.broadcast %478 : vector<16x1xf32> to vector<16x16xf32>
    %480 = arith.subf %476, %479 : vector<16x16xf32>
    %481 = math.exp %480 : vector<16x16xf32>
    %cst_123 = arith.constant dense<0.000000e+00> : vector<16xf32>
    %482 = vector.multi_reduction <add>, %481, %cst_123 [1] : vector<16x16xf32> to vector<16xf32>
    %483 = vector.shape_cast %482 : vector<16xf32> to vector<16x1xf32>
    %484 = tpu.reciprocal %483 {approx = true} : vector<16x1xf32> -> vector<16x1xf32>
    %485 = arith.mulf %483, %484 : vector<16x1xf32>
    %cst_124 = arith.constant 2.000000e+00 : f32
    %486 = vector.broadcast %cst_124 : f32 to vector<16x1xf32>
    %487 = arith.subf %486, %485 : vector<16x1xf32>
    %488 = arith.mulf %484, %487 : vector<16x1xf32>
    %489 = vector.broadcast %488 : vector<16x1xf32> to vector<16x16xf32>
    %490 = arith.mulf %481, %489 : vector<16x16xf32>
    %491 = vector.extract_strided_slice %6 {offsets = [64, 32], sizes = [16, 32], strides = [1, 1]} : vector<128x128xf32> to vector<16x32xf32>
    %cst_125 = arith.constant dense<0.000000e+00> : vector<16x32xf32>
    %492 = tpu.matmul %490, %491, %cst_125 {dimension_numbers = #tpu.dot_dimension_numbers<[1], [0], [0], [1], [0, 0, 1, 1], [], []>} : vector<16x16xf32>, vector<16x32xf32>, vector<16x32xf32> -> vector<16x32xf32>
    %493 = arith.addf %472, %492 : vector<16x32xf32>
    %494 = vector.extract_strided_slice %4 {offsets = [64, 16], sizes = [16, 8], strides = [1, 1]} : vector<128x32xf32> to vector<16x8xf32>
    %495 = vector.extract_strided_slice %5 {offsets = [64, 16], sizes = [16, 8], strides = [1, 1]} : vector<128x32xf32> to vector<16x8xf32>
    %cst_126 = arith.constant dense<0.000000e+00> : vector<16x16xf32>
    %496 = tpu.matmul %494, %495, %cst_126 {dimension_numbers = #tpu.dot_dimension_numbers<[1], [1], [0], [0], [0, 0, 1, 0], [], []>} : vector<16x8xf32>, vector<16x8xf32>, vector<16x16xf32> -> vector<16x16xf32>
    %497 = arith.mulf %452, %496 : vector<16x16xf32>
    %cst_127 = arith.constant dense<0xFF800000> : vector<16xf32>
    %498 = vector.multi_reduction <maximumf>, %497, %cst_127 [1] : vector<16x16xf32> to vector<16xf32>
    %499 = vector.shape_cast %498 : vector<16xf32> to vector<16x1xf32>
    %500 = vector.broadcast %499 : vector<16x1xf32> to vector<16x16xf32>
    %501 = arith.subf %497, %500 : vector<16x16xf32>
    %502 = math.exp %501 : vector<16x16xf32>
    %cst_128 = arith.constant dense<0.000000e+00> : vector<16xf32>
    %503 = vector.multi_reduction <add>, %502, %cst_128 [1] : vector<16x16xf32> to vector<16xf32>
    %504 = vector.shape_cast %503 : vector<16xf32> to vector<16x1xf32>
    %505 = tpu.reciprocal %504 {approx = true} : vector<16x1xf32> -> vector<16x1xf32>
    %506 = arith.mulf %504, %505 : vector<16x1xf32>
    %cst_129 = arith.constant 2.000000e+00 : f32
    %507 = vector.broadcast %cst_129 : f32 to vector<16x1xf32>
    %508 = arith.subf %507, %506 : vector<16x1xf32>
    %509 = arith.mulf %505, %508 : vector<16x1xf32>
    %510 = vector.broadcast %509 : vector<16x1xf32> to vector<16x16xf32>
    %511 = arith.mulf %502, %510 : vector<16x16xf32>
    %512 = vector.extract_strided_slice %6 {offsets = [64, 64], sizes = [16, 32], strides = [1, 1]} : vector<128x128xf32> to vector<16x32xf32>
    %cst_130 = arith.constant dense<0.000000e+00> : vector<16x32xf32>
    %513 = tpu.matmul %511, %512, %cst_130 {dimension_numbers = #tpu.dot_dimension_numbers<[1], [0], [0], [1], [0, 0, 1, 1], [], []>} : vector<16x16xf32>, vector<16x32xf32>, vector<16x32xf32> -> vector<16x32xf32>
    %514 = arith.addf %493, %513 : vector<16x32xf32>
    %515 = vector.extract_strided_slice %4 {offsets = [64, 24], sizes = [16, 8], strides = [1, 1]} : vector<128x32xf32> to vector<16x8xf32>
    %516 = vector.extract_strided_slice %5 {offsets = [64, 24], sizes = [16, 8], strides = [1, 1]} : vector<128x32xf32> to vector<16x8xf32>
    %cst_131 = arith.constant dense<0.000000e+00> : vector<16x16xf32>
    %517 = tpu.matmul %515, %516, %cst_131 {dimension_numbers = #tpu.dot_dimension_numbers<[1], [1], [0], [0], [0, 0, 1, 0], [], []>} : vector<16x8xf32>, vector<16x8xf32>, vector<16x16xf32> -> vector<16x16xf32>
    %518 = arith.mulf %452, %517 : vector<16x16xf32>
    %cst_132 = arith.constant dense<0xFF800000> : vector<16xf32>
    %519 = vector.multi_reduction <maximumf>, %518, %cst_132 [1] : vector<16x16xf32> to vector<16xf32>
    %520 = vector.shape_cast %519 : vector<16xf32> to vector<16x1xf32>
    %521 = vector.broadcast %520 : vector<16x1xf32> to vector<16x16xf32>
    %522 = arith.subf %518, %521 : vector<16x16xf32>
    %523 = math.exp %522 : vector<16x16xf32>
    %cst_133 = arith.constant dense<0.000000e+00> : vector<16xf32>
    %524 = vector.multi_reduction <add>, %523, %cst_133 [1] : vector<16x16xf32> to vector<16xf32>
    %525 = vector.shape_cast %524 : vector<16xf32> to vector<16x1xf32>
    %526 = tpu.reciprocal %525 {approx = true} : vector<16x1xf32> -> vector<16x1xf32>
    %527 = arith.mulf %525, %526 : vector<16x1xf32>
    %cst_134 = arith.constant 2.000000e+00 : f32
    %528 = vector.broadcast %cst_134 : f32 to vector<16x1xf32>
    %529 = arith.subf %528, %527 : vector<16x1xf32>
    %530 = arith.mulf %526, %529 : vector<16x1xf32>
    %531 = vector.broadcast %530 : vector<16x1xf32> to vector<16x16xf32>
    %532 = arith.mulf %523, %531 : vector<16x16xf32>
    %533 = vector.extract_strided_slice %6 {offsets = [64, 96], sizes = [16, 32], strides = [1, 1]} : vector<128x128xf32> to vector<16x32xf32>
    %cst_135 = arith.constant dense<0.000000e+00> : vector<16x32xf32>
    %534 = tpu.matmul %532, %533, %cst_135 {dimension_numbers = #tpu.dot_dimension_numbers<[1], [0], [0], [1], [0, 0, 1, 1], [], []>} : vector<16x16xf32>, vector<16x32xf32>, vector<16x32xf32> -> vector<16x32xf32>
    %535 = arith.addf %514, %534 : vector<16x32xf32>
    %536 = vector.extract_strided_slice %0 {offsets = [64, 0], sizes = [16, 32], strides = [1, 1]} : vector<128x32xf32> to vector<16x32xf32>
    %537 = arith.addf %535, %536 : vector<16x32xf32>
    %cst_136 = arith.constant dense<0.000000e+00> : vector<32xf32>
    %538 = vector.multi_reduction <add>, %537, %cst_136 [0] : vector<16x32xf32> to vector<32xf32>
    %539 = vector.shape_cast %538 : vector<32xf32> to vector<1x32xf32>
    %cst_137 = arith.constant 1.600000e+01 : f32
    %540 = vector.broadcast %cst_137 : f32 to vector<1x32xf32>
    %541 = arith.divf %539, %540 : vector<1x32xf32>
    %542 = arith.mulf %537, %537 : vector<16x32xf32>
    %cst_138 = arith.constant dense<0.000000e+00> : vector<32xf32>
    %543 = vector.multi_reduction <add>, %542, %cst_138 [0] : vector<16x32xf32> to vector<32xf32>
    %544 = vector.shape_cast %543 : vector<32xf32> to vector<1x32xf32>
    %cst_139 = arith.constant 1.600000e+01 : f32
    %545 = vector.broadcast %cst_139 : f32 to vector<1x32xf32>
    %546 = arith.divf %544, %545 : vector<1x32xf32>
    %547 = arith.mulf %541, %541 : vector<1x32xf32>
    %548 = arith.subf %546, %547 : vector<1x32xf32>
    %549 = vector.broadcast %541 : vector<1x32xf32> to vector<16x32xf32>
    %550 = arith.subf %537, %549 : vector<16x32xf32>
    %cst_140 = arith.constant 9.99999974E-6 : f32
    %551 = vector.broadcast %cst_140 : f32 to vector<1x32xf32>
    %552 = arith.addf %548, %551 : vector<1x32xf32>
    %553 = math.rsqrt %552 : vector<1x32xf32>
    %554 = vector.broadcast %553 : vector<1x32xf32> to vector<16x32xf32>
    %555 = arith.mulf %550, %554 : vector<16x32xf32>
    %556 = vector.extract_strided_slice %1 {offsets = [0, 0], sizes = [1, 32], strides = [1, 1]} : vector<4x32xf32> to vector<1x32xf32>
    %557 = vector.broadcast %556 : vector<1x32xf32> to vector<16x32xf32>
    %558 = arith.mulf %555, %557 : vector<16x32xf32>
    %559 = vector.extract_strided_slice %1 {offsets = [1, 0], sizes = [1, 32], strides = [1, 1]} : vector<4x32xf32> to vector<1x32xf32>
    %560 = vector.broadcast %559 : vector<1x32xf32> to vector<16x32xf32>
    %561 = arith.addf %558, %560 : vector<16x32xf32>
    %c5 = arith.constant 5 : index
    %c0_141 = arith.constant 0 : index
    %c0_142 = arith.constant 0 : index
    %562 = vector.load %arg1[%c5, %c0_141, %c0_142] : memref<8x16x16xf32, #tpu.memory_space<vmem>>, vector<1x16x16xf32>
    %563 = vector.shape_cast %562 : vector<1x16x16xf32> to vector<16x16xf32>
    %564 = vector.extract_strided_slice %4 {offsets = [80, 0], sizes = [16, 8], strides = [1, 1]} : vector<128x32xf32> to vector<16x8xf32>
    %565 = vector.extract_strided_slice %5 {offsets = [80, 0], sizes = [16, 8], strides = [1, 1]} : vector<128x32xf32> to vector<16x8xf32>
    %cst_143 = arith.constant dense<0.000000e+00> : vector<16x16xf32>
    %566 = tpu.matmul %564, %565, %cst_143 {dimension_numbers = #tpu.dot_dimension_numbers<[1], [1], [0], [0], [0, 0, 1, 0], [], []>} : vector<16x8xf32>, vector<16x8xf32>, vector<16x16xf32> -> vector<16x16xf32>
    %567 = arith.mulf %563, %566 : vector<16x16xf32>
    %cst_144 = arith.constant dense<0xFF800000> : vector<16xf32>
    %568 = vector.multi_reduction <maximumf>, %567, %cst_144 [1] : vector<16x16xf32> to vector<16xf32>
    %569 = vector.shape_cast %568 : vector<16xf32> to vector<16x1xf32>
    %570 = vector.broadcast %569 : vector<16x1xf32> to vector<16x16xf32>
    %571 = arith.subf %567, %570 : vector<16x16xf32>
    %572 = math.exp %571 : vector<16x16xf32>
    %cst_145 = arith.constant dense<0.000000e+00> : vector<16xf32>
    %573 = vector.multi_reduction <add>, %572, %cst_145 [1] : vector<16x16xf32> to vector<16xf32>
    %574 = vector.shape_cast %573 : vector<16xf32> to vector<16x1xf32>
    %575 = tpu.reciprocal %574 {approx = true} : vector<16x1xf32> -> vector<16x1xf32>
    %576 = arith.mulf %574, %575 : vector<16x1xf32>
    %cst_146 = arith.constant 2.000000e+00 : f32
    %577 = vector.broadcast %cst_146 : f32 to vector<16x1xf32>
    %578 = arith.subf %577, %576 : vector<16x1xf32>
    %579 = arith.mulf %575, %578 : vector<16x1xf32>
    %580 = vector.broadcast %579 : vector<16x1xf32> to vector<16x16xf32>
    %581 = arith.mulf %572, %580 : vector<16x16xf32>
    %582 = vector.extract_strided_slice %6 {offsets = [80, 0], sizes = [16, 32], strides = [1, 1]} : vector<128x128xf32> to vector<16x32xf32>
    %cst_147 = arith.constant dense<0.000000e+00> : vector<16x32xf32>
    %583 = tpu.matmul %581, %582, %cst_147 {dimension_numbers = #tpu.dot_dimension_numbers<[1], [0], [0], [1], [0, 0, 1, 1], [], []>} : vector<16x16xf32>, vector<16x32xf32>, vector<16x32xf32> -> vector<16x32xf32>
    %584 = vector.extract_strided_slice %4 {offsets = [80, 8], sizes = [16, 8], strides = [1, 1]} : vector<128x32xf32> to vector<16x8xf32>
    %585 = vector.extract_strided_slice %5 {offsets = [80, 8], sizes = [16, 8], strides = [1, 1]} : vector<128x32xf32> to vector<16x8xf32>
    %cst_148 = arith.constant dense<0.000000e+00> : vector<16x16xf32>
    %586 = tpu.matmul %584, %585, %cst_148 {dimension_numbers = #tpu.dot_dimension_numbers<[1], [1], [0], [0], [0, 0, 1, 0], [], []>} : vector<16x8xf32>, vector<16x8xf32>, vector<16x16xf32> -> vector<16x16xf32>
    %587 = arith.mulf %563, %586 : vector<16x16xf32>
    %cst_149 = arith.constant dense<0xFF800000> : vector<16xf32>
    %588 = vector.multi_reduction <maximumf>, %587, %cst_149 [1] : vector<16x16xf32> to vector<16xf32>
    %589 = vector.shape_cast %588 : vector<16xf32> to vector<16x1xf32>
    %590 = vector.broadcast %589 : vector<16x1xf32> to vector<16x16xf32>
    %591 = arith.subf %587, %590 : vector<16x16xf32>
    %592 = math.exp %591 : vector<16x16xf32>
    %cst_150 = arith.constant dense<0.000000e+00> : vector<16xf32>
    %593 = vector.multi_reduction <add>, %592, %cst_150 [1] : vector<16x16xf32> to vector<16xf32>
    %594 = vector.shape_cast %593 : vector<16xf32> to vector<16x1xf32>
    %595 = tpu.reciprocal %594 {approx = true} : vector<16x1xf32> -> vector<16x1xf32>
    %596 = arith.mulf %594, %595 : vector<16x1xf32>
    %cst_151 = arith.constant 2.000000e+00 : f32
    %597 = vector.broadcast %cst_151 : f32 to vector<16x1xf32>
    %598 = arith.subf %597, %596 : vector<16x1xf32>
    %599 = arith.mulf %595, %598 : vector<16x1xf32>
    %600 = vector.broadcast %599 : vector<16x1xf32> to vector<16x16xf32>
    %601 = arith.mulf %592, %600 : vector<16x16xf32>
    %602 = vector.extract_strided_slice %6 {offsets = [80, 32], sizes = [16, 32], strides = [1, 1]} : vector<128x128xf32> to vector<16x32xf32>
    %cst_152 = arith.constant dense<0.000000e+00> : vector<16x32xf32>
    %603 = tpu.matmul %601, %602, %cst_152 {dimension_numbers = #tpu.dot_dimension_numbers<[1], [0], [0], [1], [0, 0, 1, 1], [], []>} : vector<16x16xf32>, vector<16x32xf32>, vector<16x32xf32> -> vector<16x32xf32>
    %604 = arith.addf %583, %603 : vector<16x32xf32>
    %605 = vector.extract_strided_slice %4 {offsets = [80, 16], sizes = [16, 8], strides = [1, 1]} : vector<128x32xf32> to vector<16x8xf32>
    %606 = vector.extract_strided_slice %5 {offsets = [80, 16], sizes = [16, 8], strides = [1, 1]} : vector<128x32xf32> to vector<16x8xf32>
    %cst_153 = arith.constant dense<0.000000e+00> : vector<16x16xf32>
    %607 = tpu.matmul %605, %606, %cst_153 {dimension_numbers = #tpu.dot_dimension_numbers<[1], [1], [0], [0], [0, 0, 1, 0], [], []>} : vector<16x8xf32>, vector<16x8xf32>, vector<16x16xf32> -> vector<16x16xf32>
    %608 = arith.mulf %563, %607 : vector<16x16xf32>
    %cst_154 = arith.constant dense<0xFF800000> : vector<16xf32>
    %609 = vector.multi_reduction <maximumf>, %608, %cst_154 [1] : vector<16x16xf32> to vector<16xf32>
    %610 = vector.shape_cast %609 : vector<16xf32> to vector<16x1xf32>
    %611 = vector.broadcast %610 : vector<16x1xf32> to vector<16x16xf32>
    %612 = arith.subf %608, %611 : vector<16x16xf32>
    %613 = math.exp %612 : vector<16x16xf32>
    %cst_155 = arith.constant dense<0.000000e+00> : vector<16xf32>
    %614 = vector.multi_reduction <add>, %613, %cst_155 [1] : vector<16x16xf32> to vector<16xf32>
    %615 = vector.shape_cast %614 : vector<16xf32> to vector<16x1xf32>
    %616 = tpu.reciprocal %615 {approx = true} : vector<16x1xf32> -> vector<16x1xf32>
    %617 = arith.mulf %615, %616 : vector<16x1xf32>
    %cst_156 = arith.constant 2.000000e+00 : f32
    %618 = vector.broadcast %cst_156 : f32 to vector<16x1xf32>
    %619 = arith.subf %618, %617 : vector<16x1xf32>
    %620 = arith.mulf %616, %619 : vector<16x1xf32>
    %621 = vector.broadcast %620 : vector<16x1xf32> to vector<16x16xf32>
    %622 = arith.mulf %613, %621 : vector<16x16xf32>
    %623 = vector.extract_strided_slice %6 {offsets = [80, 64], sizes = [16, 32], strides = [1, 1]} : vector<128x128xf32> to vector<16x32xf32>
    %cst_157 = arith.constant dense<0.000000e+00> : vector<16x32xf32>
    %624 = tpu.matmul %622, %623, %cst_157 {dimension_numbers = #tpu.dot_dimension_numbers<[1], [0], [0], [1], [0, 0, 1, 1], [], []>} : vector<16x16xf32>, vector<16x32xf32>, vector<16x32xf32> -> vector<16x32xf32>
    %625 = arith.addf %604, %624 : vector<16x32xf32>
    %626 = vector.extract_strided_slice %4 {offsets = [80, 24], sizes = [16, 8], strides = [1, 1]} : vector<128x32xf32> to vector<16x8xf32>
    %627 = vector.extract_strided_slice %5 {offsets = [80, 24], sizes = [16, 8], strides = [1, 1]} : vector<128x32xf32> to vector<16x8xf32>
    %cst_158 = arith.constant dense<0.000000e+00> : vector<16x16xf32>
    %628 = tpu.matmul %626, %627, %cst_158 {dimension_numbers = #tpu.dot_dimension_numbers<[1], [1], [0], [0], [0, 0, 1, 0], [], []>} : vector<16x8xf32>, vector<16x8xf32>, vector<16x16xf32> -> vector<16x16xf32>
    %629 = arith.mulf %563, %628 : vector<16x16xf32>
    %cst_159 = arith.constant dense<0xFF800000> : vector<16xf32>
    %630 = vector.multi_reduction <maximumf>, %629, %cst_159 [1] : vector<16x16xf32> to vector<16xf32>
    %631 = vector.shape_cast %630 : vector<16xf32> to vector<16x1xf32>
    %632 = vector.broadcast %631 : vector<16x1xf32> to vector<16x16xf32>
    %633 = arith.subf %629, %632 : vector<16x16xf32>
    %634 = math.exp %633 : vector<16x16xf32>
    %cst_160 = arith.constant dense<0.000000e+00> : vector<16xf32>
    %635 = vector.multi_reduction <add>, %634, %cst_160 [1] : vector<16x16xf32> to vector<16xf32>
    %636 = vector.shape_cast %635 : vector<16xf32> to vector<16x1xf32>
    %637 = tpu.reciprocal %636 {approx = true} : vector<16x1xf32> -> vector<16x1xf32>
    %638 = arith.mulf %636, %637 : vector<16x1xf32>
    %cst_161 = arith.constant 2.000000e+00 : f32
    %639 = vector.broadcast %cst_161 : f32 to vector<16x1xf32>
    %640 = arith.subf %639, %638 : vector<16x1xf32>
    %641 = arith.mulf %637, %640 : vector<16x1xf32>
    %642 = vector.broadcast %641 : vector<16x1xf32> to vector<16x16xf32>
    %643 = arith.mulf %634, %642 : vector<16x16xf32>
    %644 = vector.extract_strided_slice %6 {offsets = [80, 96], sizes = [16, 32], strides = [1, 1]} : vector<128x128xf32> to vector<16x32xf32>
    %cst_162 = arith.constant dense<0.000000e+00> : vector<16x32xf32>
    %645 = tpu.matmul %643, %644, %cst_162 {dimension_numbers = #tpu.dot_dimension_numbers<[1], [0], [0], [1], [0, 0, 1, 1], [], []>} : vector<16x16xf32>, vector<16x32xf32>, vector<16x32xf32> -> vector<16x32xf32>
    %646 = arith.addf %625, %645 : vector<16x32xf32>
    %647 = vector.extract_strided_slice %0 {offsets = [80, 0], sizes = [16, 32], strides = [1, 1]} : vector<128x32xf32> to vector<16x32xf32>
    %648 = arith.addf %646, %647 : vector<16x32xf32>
    %cst_163 = arith.constant dense<0.000000e+00> : vector<32xf32>
    %649 = vector.multi_reduction <add>, %648, %cst_163 [0] : vector<16x32xf32> to vector<32xf32>
    %650 = vector.shape_cast %649 : vector<32xf32> to vector<1x32xf32>
    %cst_164 = arith.constant 1.600000e+01 : f32
    %651 = vector.broadcast %cst_164 : f32 to vector<1x32xf32>
    %652 = arith.divf %650, %651 : vector<1x32xf32>
    %653 = arith.mulf %648, %648 : vector<16x32xf32>
    %cst_165 = arith.constant dense<0.000000e+00> : vector<32xf32>
    %654 = vector.multi_reduction <add>, %653, %cst_165 [0] : vector<16x32xf32> to vector<32xf32>
    %655 = vector.shape_cast %654 : vector<32xf32> to vector<1x32xf32>
    %cst_166 = arith.constant 1.600000e+01 : f32
    %656 = vector.broadcast %cst_166 : f32 to vector<1x32xf32>
    %657 = arith.divf %655, %656 : vector<1x32xf32>
    %658 = arith.mulf %652, %652 : vector<1x32xf32>
    %659 = arith.subf %657, %658 : vector<1x32xf32>
    %660 = vector.broadcast %652 : vector<1x32xf32> to vector<16x32xf32>
    %661 = arith.subf %648, %660 : vector<16x32xf32>
    %cst_167 = arith.constant 9.99999974E-6 : f32
    %662 = vector.broadcast %cst_167 : f32 to vector<1x32xf32>
    %663 = arith.addf %659, %662 : vector<1x32xf32>
    %664 = math.rsqrt %663 : vector<1x32xf32>
    %665 = vector.broadcast %664 : vector<1x32xf32> to vector<16x32xf32>
    %666 = arith.mulf %661, %665 : vector<16x32xf32>
    %667 = vector.extract_strided_slice %1 {offsets = [0, 0], sizes = [1, 32], strides = [1, 1]} : vector<4x32xf32> to vector<1x32xf32>
    %668 = vector.broadcast %667 : vector<1x32xf32> to vector<16x32xf32>
    %669 = arith.mulf %666, %668 : vector<16x32xf32>
    %670 = vector.extract_strided_slice %1 {offsets = [1, 0], sizes = [1, 32], strides = [1, 1]} : vector<4x32xf32> to vector<1x32xf32>
    %671 = vector.broadcast %670 : vector<1x32xf32> to vector<16x32xf32>
    %672 = arith.addf %669, %671 : vector<16x32xf32>
    %c6 = arith.constant 6 : index
    %c0_168 = arith.constant 0 : index
    %c0_169 = arith.constant 0 : index
    %673 = vector.load %arg1[%c6, %c0_168, %c0_169] : memref<8x16x16xf32, #tpu.memory_space<vmem>>, vector<1x16x16xf32>
    %674 = vector.shape_cast %673 : vector<1x16x16xf32> to vector<16x16xf32>
    %675 = vector.extract_strided_slice %4 {offsets = [96, 0], sizes = [16, 8], strides = [1, 1]} : vector<128x32xf32> to vector<16x8xf32>
    %676 = vector.extract_strided_slice %5 {offsets = [96, 0], sizes = [16, 8], strides = [1, 1]} : vector<128x32xf32> to vector<16x8xf32>
    %cst_170 = arith.constant dense<0.000000e+00> : vector<16x16xf32>
    %677 = tpu.matmul %675, %676, %cst_170 {dimension_numbers = #tpu.dot_dimension_numbers<[1], [1], [0], [0], [0, 0, 1, 0], [], []>} : vector<16x8xf32>, vector<16x8xf32>, vector<16x16xf32> -> vector<16x16xf32>
    %678 = arith.mulf %674, %677 : vector<16x16xf32>
    %cst_171 = arith.constant dense<0xFF800000> : vector<16xf32>
    %679 = vector.multi_reduction <maximumf>, %678, %cst_171 [1] : vector<16x16xf32> to vector<16xf32>
    %680 = vector.shape_cast %679 : vector<16xf32> to vector<16x1xf32>
    %681 = vector.broadcast %680 : vector<16x1xf32> to vector<16x16xf32>
    %682 = arith.subf %678, %681 : vector<16x16xf32>
    %683 = math.exp %682 : vector<16x16xf32>
    %cst_172 = arith.constant dense<0.000000e+00> : vector<16xf32>
    %684 = vector.multi_reduction <add>, %683, %cst_172 [1] : vector<16x16xf32> to vector<16xf32>
    %685 = vector.shape_cast %684 : vector<16xf32> to vector<16x1xf32>
    %686 = tpu.reciprocal %685 {approx = true} : vector<16x1xf32> -> vector<16x1xf32>
    %687 = arith.mulf %685, %686 : vector<16x1xf32>
    %cst_173 = arith.constant 2.000000e+00 : f32
    %688 = vector.broadcast %cst_173 : f32 to vector<16x1xf32>
    %689 = arith.subf %688, %687 : vector<16x1xf32>
    %690 = arith.mulf %686, %689 : vector<16x1xf32>
    %691 = vector.broadcast %690 : vector<16x1xf32> to vector<16x16xf32>
    %692 = arith.mulf %683, %691 : vector<16x16xf32>
    %693 = vector.extract_strided_slice %6 {offsets = [96, 0], sizes = [16, 32], strides = [1, 1]} : vector<128x128xf32> to vector<16x32xf32>
    %cst_174 = arith.constant dense<0.000000e+00> : vector<16x32xf32>
    %694 = tpu.matmul %692, %693, %cst_174 {dimension_numbers = #tpu.dot_dimension_numbers<[1], [0], [0], [1], [0, 0, 1, 1], [], []>} : vector<16x16xf32>, vector<16x32xf32>, vector<16x32xf32> -> vector<16x32xf32>
    %695 = vector.extract_strided_slice %4 {offsets = [96, 8], sizes = [16, 8], strides = [1, 1]} : vector<128x32xf32> to vector<16x8xf32>
    %696 = vector.extract_strided_slice %5 {offsets = [96, 8], sizes = [16, 8], strides = [1, 1]} : vector<128x32xf32> to vector<16x8xf32>
    %cst_175 = arith.constant dense<0.000000e+00> : vector<16x16xf32>
    %697 = tpu.matmul %695, %696, %cst_175 {dimension_numbers = #tpu.dot_dimension_numbers<[1], [1], [0], [0], [0, 0, 1, 0], [], []>} : vector<16x8xf32>, vector<16x8xf32>, vector<16x16xf32> -> vector<16x16xf32>
    %698 = arith.mulf %674, %697 : vector<16x16xf32>
    %cst_176 = arith.constant dense<0xFF800000> : vector<16xf32>
    %699 = vector.multi_reduction <maximumf>, %698, %cst_176 [1] : vector<16x16xf32> to vector<16xf32>
    %700 = vector.shape_cast %699 : vector<16xf32> to vector<16x1xf32>
    %701 = vector.broadcast %700 : vector<16x1xf32> to vector<16x16xf32>
    %702 = arith.subf %698, %701 : vector<16x16xf32>
    %703 = math.exp %702 : vector<16x16xf32>
    %cst_177 = arith.constant dense<0.000000e+00> : vector<16xf32>
    %704 = vector.multi_reduction <add>, %703, %cst_177 [1] : vector<16x16xf32> to vector<16xf32>
    %705 = vector.shape_cast %704 : vector<16xf32> to vector<16x1xf32>
    %706 = tpu.reciprocal %705 {approx = true} : vector<16x1xf32> -> vector<16x1xf32>
    %707 = arith.mulf %705, %706 : vector<16x1xf32>
    %cst_178 = arith.constant 2.000000e+00 : f32
    %708 = vector.broadcast %cst_178 : f32 to vector<16x1xf32>
    %709 = arith.subf %708, %707 : vector<16x1xf32>
    %710 = arith.mulf %706, %709 : vector<16x1xf32>
    %711 = vector.broadcast %710 : vector<16x1xf32> to vector<16x16xf32>
    %712 = arith.mulf %703, %711 : vector<16x16xf32>
    %713 = vector.extract_strided_slice %6 {offsets = [96, 32], sizes = [16, 32], strides = [1, 1]} : vector<128x128xf32> to vector<16x32xf32>
    %cst_179 = arith.constant dense<0.000000e+00> : vector<16x32xf32>
    %714 = tpu.matmul %712, %713, %cst_179 {dimension_numbers = #tpu.dot_dimension_numbers<[1], [0], [0], [1], [0, 0, 1, 1], [], []>} : vector<16x16xf32>, vector<16x32xf32>, vector<16x32xf32> -> vector<16x32xf32>
    %715 = arith.addf %694, %714 : vector<16x32xf32>
    %716 = vector.extract_strided_slice %4 {offsets = [96, 16], sizes = [16, 8], strides = [1, 1]} : vector<128x32xf32> to vector<16x8xf32>
    %717 = vector.extract_strided_slice %5 {offsets = [96, 16], sizes = [16, 8], strides = [1, 1]} : vector<128x32xf32> to vector<16x8xf32>
    %cst_180 = arith.constant dense<0.000000e+00> : vector<16x16xf32>
    %718 = tpu.matmul %716, %717, %cst_180 {dimension_numbers = #tpu.dot_dimension_numbers<[1], [1], [0], [0], [0, 0, 1, 0], [], []>} : vector<16x8xf32>, vector<16x8xf32>, vector<16x16xf32> -> vector<16x16xf32>
    %719 = arith.mulf %674, %718 : vector<16x16xf32>
    %cst_181 = arith.constant dense<0xFF800000> : vector<16xf32>
    %720 = vector.multi_reduction <maximumf>, %719, %cst_181 [1] : vector<16x16xf32> to vector<16xf32>
    %721 = vector.shape_cast %720 : vector<16xf32> to vector<16x1xf32>
    %722 = vector.broadcast %721 : vector<16x1xf32> to vector<16x16xf32>
    %723 = arith.subf %719, %722 : vector<16x16xf32>
    %724 = math.exp %723 : vector<16x16xf32>
    %cst_182 = arith.constant dense<0.000000e+00> : vector<16xf32>
    %725 = vector.multi_reduction <add>, %724, %cst_182 [1] : vector<16x16xf32> to vector<16xf32>
    %726 = vector.shape_cast %725 : vector<16xf32> to vector<16x1xf32>
    %727 = tpu.reciprocal %726 {approx = true} : vector<16x1xf32> -> vector<16x1xf32>
    %728 = arith.mulf %726, %727 : vector<16x1xf32>
    %cst_183 = arith.constant 2.000000e+00 : f32
    %729 = vector.broadcast %cst_183 : f32 to vector<16x1xf32>
    %730 = arith.subf %729, %728 : vector<16x1xf32>
    %731 = arith.mulf %727, %730 : vector<16x1xf32>
    %732 = vector.broadcast %731 : vector<16x1xf32> to vector<16x16xf32>
    %733 = arith.mulf %724, %732 : vector<16x16xf32>
    %734 = vector.extract_strided_slice %6 {offsets = [96, 64], sizes = [16, 32], strides = [1, 1]} : vector<128x128xf32> to vector<16x32xf32>
    %cst_184 = arith.constant dense<0.000000e+00> : vector<16x32xf32>
    %735 = tpu.matmul %733, %734, %cst_184 {dimension_numbers = #tpu.dot_dimension_numbers<[1], [0], [0], [1], [0, 0, 1, 1], [], []>} : vector<16x16xf32>, vector<16x32xf32>, vector<16x32xf32> -> vector<16x32xf32>
    %736 = arith.addf %715, %735 : vector<16x32xf32>
    %737 = vector.extract_strided_slice %4 {offsets = [96, 24], sizes = [16, 8], strides = [1, 1]} : vector<128x32xf32> to vector<16x8xf32>
    %738 = vector.extract_strided_slice %5 {offsets = [96, 24], sizes = [16, 8], strides = [1, 1]} : vector<128x32xf32> to vector<16x8xf32>
    %cst_185 = arith.constant dense<0.000000e+00> : vector<16x16xf32>
    %739 = tpu.matmul %737, %738, %cst_185 {dimension_numbers = #tpu.dot_dimension_numbers<[1], [1], [0], [0], [0, 0, 1, 0], [], []>} : vector<16x8xf32>, vector<16x8xf32>, vector<16x16xf32> -> vector<16x16xf32>
    %740 = arith.mulf %674, %739 : vector<16x16xf32>
    %cst_186 = arith.constant dense<0xFF800000> : vector<16xf32>
    %741 = vector.multi_reduction <maximumf>, %740, %cst_186 [1] : vector<16x16xf32> to vector<16xf32>
    %742 = vector.shape_cast %741 : vector<16xf32> to vector<16x1xf32>
    %743 = vector.broadcast %742 : vector<16x1xf32> to vector<16x16xf32>
    %744 = arith.subf %740, %743 : vector<16x16xf32>
    %745 = math.exp %744 : vector<16x16xf32>
    %cst_187 = arith.constant dense<0.000000e+00> : vector<16xf32>
    %746 = vector.multi_reduction <add>, %745, %cst_187 [1] : vector<16x16xf32> to vector<16xf32>
    %747 = vector.shape_cast %746 : vector<16xf32> to vector<16x1xf32>
    %748 = tpu.reciprocal %747 {approx = true} : vector<16x1xf32> -> vector<16x1xf32>
    %749 = arith.mulf %747, %748 : vector<16x1xf32>
    %cst_188 = arith.constant 2.000000e+00 : f32
    %750 = vector.broadcast %cst_188 : f32 to vector<16x1xf32>
    %751 = arith.subf %750, %749 : vector<16x1xf32>
    %752 = arith.mulf %748, %751 : vector<16x1xf32>
    %753 = vector.broadcast %752 : vector<16x1xf32> to vector<16x16xf32>
    %754 = arith.mulf %745, %753 : vector<16x16xf32>
    %755 = vector.extract_strided_slice %6 {offsets = [96, 96], sizes = [16, 32], strides = [1, 1]} : vector<128x128xf32> to vector<16x32xf32>
    %cst_189 = arith.constant dense<0.000000e+00> : vector<16x32xf32>
    %756 = tpu.matmul %754, %755, %cst_189 {dimension_numbers = #tpu.dot_dimension_numbers<[1], [0], [0], [1], [0, 0, 1, 1], [], []>} : vector<16x16xf32>, vector<16x32xf32>, vector<16x32xf32> -> vector<16x32xf32>
    %757 = arith.addf %736, %756 : vector<16x32xf32>
    %758 = vector.extract_strided_slice %0 {offsets = [96, 0], sizes = [16, 32], strides = [1, 1]} : vector<128x32xf32> to vector<16x32xf32>
    %759 = arith.addf %757, %758 : vector<16x32xf32>
    %cst_190 = arith.constant dense<0.000000e+00> : vector<32xf32>
    %760 = vector.multi_reduction <add>, %759, %cst_190 [0] : vector<16x32xf32> to vector<32xf32>
    %761 = vector.shape_cast %760 : vector<32xf32> to vector<1x32xf32>
    %cst_191 = arith.constant 1.600000e+01 : f32
    %762 = vector.broadcast %cst_191 : f32 to vector<1x32xf32>
    %763 = arith.divf %761, %762 : vector<1x32xf32>
    %764 = arith.mulf %759, %759 : vector<16x32xf32>
    %cst_192 = arith.constant dense<0.000000e+00> : vector<32xf32>
    %765 = vector.multi_reduction <add>, %764, %cst_192 [0] : vector<16x32xf32> to vector<32xf32>
    %766 = vector.shape_cast %765 : vector<32xf32> to vector<1x32xf32>
    %cst_193 = arith.constant 1.600000e+01 : f32
    %767 = vector.broadcast %cst_193 : f32 to vector<1x32xf32>
    %768 = arith.divf %766, %767 : vector<1x32xf32>
    %769 = arith.mulf %763, %763 : vector<1x32xf32>
    %770 = arith.subf %768, %769 : vector<1x32xf32>
    %771 = vector.broadcast %763 : vector<1x32xf32> to vector<16x32xf32>
    %772 = arith.subf %759, %771 : vector<16x32xf32>
    %cst_194 = arith.constant 9.99999974E-6 : f32
    %773 = vector.broadcast %cst_194 : f32 to vector<1x32xf32>
    %774 = arith.addf %770, %773 : vector<1x32xf32>
    %775 = math.rsqrt %774 : vector<1x32xf32>
    %776 = vector.broadcast %775 : vector<1x32xf32> to vector<16x32xf32>
    %777 = arith.mulf %772, %776 : vector<16x32xf32>
    %778 = vector.extract_strided_slice %1 {offsets = [0, 0], sizes = [1, 32], strides = [1, 1]} : vector<4x32xf32> to vector<1x32xf32>
    %779 = vector.broadcast %778 : vector<1x32xf32> to vector<16x32xf32>
    %780 = arith.mulf %777, %779 : vector<16x32xf32>
    %781 = vector.extract_strided_slice %1 {offsets = [1, 0], sizes = [1, 32], strides = [1, 1]} : vector<4x32xf32> to vector<1x32xf32>
    %782 = vector.broadcast %781 : vector<1x32xf32> to vector<16x32xf32>
    %783 = arith.addf %780, %782 : vector<16x32xf32>
    %c7 = arith.constant 7 : index
    %c0_195 = arith.constant 0 : index
    %c0_196 = arith.constant 0 : index
    %784 = vector.load %arg1[%c7, %c0_195, %c0_196] : memref<8x16x16xf32, #tpu.memory_space<vmem>>, vector<1x16x16xf32>
    %785 = vector.shape_cast %784 : vector<1x16x16xf32> to vector<16x16xf32>
    %786 = vector.extract_strided_slice %4 {offsets = [112, 0], sizes = [16, 8], strides = [1, 1]} : vector<128x32xf32> to vector<16x8xf32>
    %787 = vector.extract_strided_slice %5 {offsets = [112, 0], sizes = [16, 8], strides = [1, 1]} : vector<128x32xf32> to vector<16x8xf32>
    %cst_197 = arith.constant dense<0.000000e+00> : vector<16x16xf32>
    %788 = tpu.matmul %786, %787, %cst_197 {dimension_numbers = #tpu.dot_dimension_numbers<[1], [1], [0], [0], [0, 0, 1, 0], [], []>} : vector<16x8xf32>, vector<16x8xf32>, vector<16x16xf32> -> vector<16x16xf32>
    %789 = arith.mulf %785, %788 : vector<16x16xf32>
    %cst_198 = arith.constant dense<0xFF800000> : vector<16xf32>
    %790 = vector.multi_reduction <maximumf>, %789, %cst_198 [1] : vector<16x16xf32> to vector<16xf32>
    %791 = vector.shape_cast %790 : vector<16xf32> to vector<16x1xf32>
    %792 = vector.broadcast %791 : vector<16x1xf32> to vector<16x16xf32>
    %793 = arith.subf %789, %792 : vector<16x16xf32>
    %794 = math.exp %793 : vector<16x16xf32>
    %cst_199 = arith.constant dense<0.000000e+00> : vector<16xf32>
    %795 = vector.multi_reduction <add>, %794, %cst_199 [1] : vector<16x16xf32> to vector<16xf32>
    %796 = vector.shape_cast %795 : vector<16xf32> to vector<16x1xf32>
    %797 = tpu.reciprocal %796 {approx = true} : vector<16x1xf32> -> vector<16x1xf32>
    %798 = arith.mulf %796, %797 : vector<16x1xf32>
    %cst_200 = arith.constant 2.000000e+00 : f32
    %799 = vector.broadcast %cst_200 : f32 to vector<16x1xf32>
    %800 = arith.subf %799, %798 : vector<16x1xf32>
    %801 = arith.mulf %797, %800 : vector<16x1xf32>
    %802 = vector.broadcast %801 : vector<16x1xf32> to vector<16x16xf32>
    %803 = arith.mulf %794, %802 : vector<16x16xf32>
    %804 = vector.extract_strided_slice %6 {offsets = [112, 0], sizes = [16, 32], strides = [1, 1]} : vector<128x128xf32> to vector<16x32xf32>
    %cst_201 = arith.constant dense<0.000000e+00> : vector<16x32xf32>
    %805 = tpu.matmul %803, %804, %cst_201 {dimension_numbers = #tpu.dot_dimension_numbers<[1], [0], [0], [1], [0, 0, 1, 1], [], []>} : vector<16x16xf32>, vector<16x32xf32>, vector<16x32xf32> -> vector<16x32xf32>
    %806 = vector.extract_strided_slice %4 {offsets = [112, 8], sizes = [16, 8], strides = [1, 1]} : vector<128x32xf32> to vector<16x8xf32>
    %807 = vector.extract_strided_slice %5 {offsets = [112, 8], sizes = [16, 8], strides = [1, 1]} : vector<128x32xf32> to vector<16x8xf32>
    %cst_202 = arith.constant dense<0.000000e+00> : vector<16x16xf32>
    %808 = tpu.matmul %806, %807, %cst_202 {dimension_numbers = #tpu.dot_dimension_numbers<[1], [1], [0], [0], [0, 0, 1, 0], [], []>} : vector<16x8xf32>, vector<16x8xf32>, vector<16x16xf32> -> vector<16x16xf32>
    %809 = arith.mulf %785, %808 : vector<16x16xf32>
    %cst_203 = arith.constant dense<0xFF800000> : vector<16xf32>
    %810 = vector.multi_reduction <maximumf>, %809, %cst_203 [1] : vector<16x16xf32> to vector<16xf32>
    %811 = vector.shape_cast %810 : vector<16xf32> to vector<16x1xf32>
    %812 = vector.broadcast %811 : vector<16x1xf32> to vector<16x16xf32>
    %813 = arith.subf %809, %812 : vector<16x16xf32>
    %814 = math.exp %813 : vector<16x16xf32>
    %cst_204 = arith.constant dense<0.000000e+00> : vector<16xf32>
    %815 = vector.multi_reduction <add>, %814, %cst_204 [1] : vector<16x16xf32> to vector<16xf32>
    %816 = vector.shape_cast %815 : vector<16xf32> to vector<16x1xf32>
    %817 = tpu.reciprocal %816 {approx = true} : vector<16x1xf32> -> vector<16x1xf32>
    %818 = arith.mulf %816, %817 : vector<16x1xf32>
    %cst_205 = arith.constant 2.000000e+00 : f32
    %819 = vector.broadcast %cst_205 : f32 to vector<16x1xf32>
    %820 = arith.subf %819, %818 : vector<16x1xf32>
    %821 = arith.mulf %817, %820 : vector<16x1xf32>
    %822 = vector.broadcast %821 : vector<16x1xf32> to vector<16x16xf32>
    %823 = arith.mulf %814, %822 : vector<16x16xf32>
    %824 = vector.extract_strided_slice %6 {offsets = [112, 32], sizes = [16, 32], strides = [1, 1]} : vector<128x128xf32> to vector<16x32xf32>
    %cst_206 = arith.constant dense<0.000000e+00> : vector<16x32xf32>
    %825 = tpu.matmul %823, %824, %cst_206 {dimension_numbers = #tpu.dot_dimension_numbers<[1], [0], [0], [1], [0, 0, 1, 1], [], []>} : vector<16x16xf32>, vector<16x32xf32>, vector<16x32xf32> -> vector<16x32xf32>
    %826 = arith.addf %805, %825 : vector<16x32xf32>
    %827 = vector.extract_strided_slice %4 {offsets = [112, 16], sizes = [16, 8], strides = [1, 1]} : vector<128x32xf32> to vector<16x8xf32>
    %828 = vector.extract_strided_slice %5 {offsets = [112, 16], sizes = [16, 8], strides = [1, 1]} : vector<128x32xf32> to vector<16x8xf32>
    %cst_207 = arith.constant dense<0.000000e+00> : vector<16x16xf32>
    %829 = tpu.matmul %827, %828, %cst_207 {dimension_numbers = #tpu.dot_dimension_numbers<[1], [1], [0], [0], [0, 0, 1, 0], [], []>} : vector<16x8xf32>, vector<16x8xf32>, vector<16x16xf32> -> vector<16x16xf32>
    %830 = arith.mulf %785, %829 : vector<16x16xf32>
    %cst_208 = arith.constant dense<0xFF800000> : vector<16xf32>
    %831 = vector.multi_reduction <maximumf>, %830, %cst_208 [1] : vector<16x16xf32> to vector<16xf32>
    %832 = vector.shape_cast %831 : vector<16xf32> to vector<16x1xf32>
    %833 = vector.broadcast %832 : vector<16x1xf32> to vector<16x16xf32>
    %834 = arith.subf %830, %833 : vector<16x16xf32>
    %835 = math.exp %834 : vector<16x16xf32>
    %cst_209 = arith.constant dense<0.000000e+00> : vector<16xf32>
    %836 = vector.multi_reduction <add>, %835, %cst_209 [1] : vector<16x16xf32> to vector<16xf32>
    %837 = vector.shape_cast %836 : vector<16xf32> to vector<16x1xf32>
    %838 = tpu.reciprocal %837 {approx = true} : vector<16x1xf32> -> vector<16x1xf32>
    %839 = arith.mulf %837, %838 : vector<16x1xf32>
    %cst_210 = arith.constant 2.000000e+00 : f32
    %840 = vector.broadcast %cst_210 : f32 to vector<16x1xf32>
    %841 = arith.subf %840, %839 : vector<16x1xf32>
    %842 = arith.mulf %838, %841 : vector<16x1xf32>
    %843 = vector.broadcast %842 : vector<16x1xf32> to vector<16x16xf32>
    %844 = arith.mulf %835, %843 : vector<16x16xf32>
    %845 = vector.extract_strided_slice %6 {offsets = [112, 64], sizes = [16, 32], strides = [1, 1]} : vector<128x128xf32> to vector<16x32xf32>
    %cst_211 = arith.constant dense<0.000000e+00> : vector<16x32xf32>
    %846 = tpu.matmul %844, %845, %cst_211 {dimension_numbers = #tpu.dot_dimension_numbers<[1], [0], [0], [1], [0, 0, 1, 1], [], []>} : vector<16x16xf32>, vector<16x32xf32>, vector<16x32xf32> -> vector<16x32xf32>
    %847 = arith.addf %826, %846 : vector<16x32xf32>
    %848 = vector.extract_strided_slice %4 {offsets = [112, 24], sizes = [16, 8], strides = [1, 1]} : vector<128x32xf32> to vector<16x8xf32>
    %849 = vector.extract_strided_slice %5 {offsets = [112, 24], sizes = [16, 8], strides = [1, 1]} : vector<128x32xf32> to vector<16x8xf32>
    %cst_212 = arith.constant dense<0.000000e+00> : vector<16x16xf32>
    %850 = tpu.matmul %848, %849, %cst_212 {dimension_numbers = #tpu.dot_dimension_numbers<[1], [1], [0], [0], [0, 0, 1, 0], [], []>} : vector<16x8xf32>, vector<16x8xf32>, vector<16x16xf32> -> vector<16x16xf32>
    %851 = arith.mulf %785, %850 : vector<16x16xf32>
    %cst_213 = arith.constant dense<0xFF800000> : vector<16xf32>
    %852 = vector.multi_reduction <maximumf>, %851, %cst_213 [1] : vector<16x16xf32> to vector<16xf32>
    %853 = vector.shape_cast %852 : vector<16xf32> to vector<16x1xf32>
    %854 = vector.broadcast %853 : vector<16x1xf32> to vector<16x16xf32>
    %855 = arith.subf %851, %854 : vector<16x16xf32>
    %856 = math.exp %855 : vector<16x16xf32>
    %cst_214 = arith.constant dense<0.000000e+00> : vector<16xf32>
    %857 = vector.multi_reduction <add>, %856, %cst_214 [1] : vector<16x16xf32> to vector<16xf32>
    %858 = vector.shape_cast %857 : vector<16xf32> to vector<16x1xf32>
    %859 = tpu.reciprocal %858 {approx = true} : vector<16x1xf32> -> vector<16x1xf32>
    %860 = arith.mulf %858, %859 : vector<16x1xf32>
    %cst_215 = arith.constant 2.000000e+00 : f32
    %861 = vector.broadcast %cst_215 : f32 to vector<16x1xf32>
    %862 = arith.subf %861, %860 : vector<16x1xf32>
    %863 = arith.mulf %859, %862 : vector<16x1xf32>
    %864 = vector.broadcast %863 : vector<16x1xf32> to vector<16x16xf32>
    %865 = arith.mulf %856, %864 : vector<16x16xf32>
    %866 = vector.extract_strided_slice %6 {offsets = [112, 96], sizes = [16, 32], strides = [1, 1]} : vector<128x128xf32> to vector<16x32xf32>
    %cst_216 = arith.constant dense<0.000000e+00> : vector<16x32xf32>
    %867 = tpu.matmul %865, %866, %cst_216 {dimension_numbers = #tpu.dot_dimension_numbers<[1], [0], [0], [1], [0, 0, 1, 1], [], []>} : vector<16x16xf32>, vector<16x32xf32>, vector<16x32xf32> -> vector<16x32xf32>
    %868 = arith.addf %847, %867 : vector<16x32xf32>
    %869 = vector.extract_strided_slice %0 {offsets = [112, 0], sizes = [16, 32], strides = [1, 1]} : vector<128x32xf32> to vector<16x32xf32>
    %870 = arith.addf %868, %869 : vector<16x32xf32>
    %cst_217 = arith.constant dense<0.000000e+00> : vector<32xf32>
    %871 = vector.multi_reduction <add>, %870, %cst_217 [0] : vector<16x32xf32> to vector<32xf32>
    %872 = vector.shape_cast %871 : vector<32xf32> to vector<1x32xf32>
    %cst_218 = arith.constant 1.600000e+01 : f32
    %873 = vector.broadcast %cst_218 : f32 to vector<1x32xf32>
    %874 = arith.divf %872, %873 : vector<1x32xf32>
    %875 = arith.mulf %870, %870 : vector<16x32xf32>
    %cst_219 = arith.constant dense<0.000000e+00> : vector<32xf32>
    %876 = vector.multi_reduction <add>, %875, %cst_219 [0] : vector<16x32xf32> to vector<32xf32>
    %877 = vector.shape_cast %876 : vector<32xf32> to vector<1x32xf32>
    %cst_220 = arith.constant 1.600000e+01 : f32
    %878 = vector.broadcast %cst_220 : f32 to vector<1x32xf32>
    %879 = arith.divf %877, %878 : vector<1x32xf32>
    %880 = arith.mulf %874, %874 : vector<1x32xf32>
    %881 = arith.subf %879, %880 : vector<1x32xf32>
    %882 = vector.broadcast %874 : vector<1x32xf32> to vector<16x32xf32>
    %883 = arith.subf %870, %882 : vector<16x32xf32>
    %cst_221 = arith.constant 9.99999974E-6 : f32
    %884 = vector.broadcast %cst_221 : f32 to vector<1x32xf32>
    %885 = arith.addf %881, %884 : vector<1x32xf32>
    %886 = math.rsqrt %885 : vector<1x32xf32>
    %887 = vector.broadcast %886 : vector<1x32xf32> to vector<16x32xf32>
    %888 = arith.mulf %883, %887 : vector<16x32xf32>
    %889 = vector.extract_strided_slice %1 {offsets = [0, 0], sizes = [1, 32], strides = [1, 1]} : vector<4x32xf32> to vector<1x32xf32>
    %890 = vector.broadcast %889 : vector<1x32xf32> to vector<16x32xf32>
    %891 = arith.mulf %888, %890 : vector<16x32xf32>
    %892 = vector.extract_strided_slice %1 {offsets = [1, 0], sizes = [1, 32], strides = [1, 1]} : vector<4x32xf32> to vector<1x32xf32>
    %893 = vector.broadcast %892 : vector<1x32xf32> to vector<16x32xf32>
    %894 = arith.addf %891, %893 : vector<16x32xf32>
    %895 = tpu.concatenate %117, %228, %339, %450, %561, %672, %783, %894 in 0 : vector<16x32xf32>, vector<16x32xf32>, vector<16x32xf32>, vector<16x32xf32>, vector<16x32xf32>, vector<16x32xf32>, vector<16x32xf32>, vector<16x32xf32> -> vector<128x32xf32>
    %c0_222 = arith.constant 0 : index
    %c0_223 = arith.constant 0 : index
    %896 = vector.load %arg4[%c0_222, %c0_223] : memref<32x64xf32, #tpu.memory_space<vmem>>, vector<32x64xf32>
    %cst_224 = arith.constant dense<0.000000e+00> : vector<128x64xf32>
    %897 = tpu.matmul %895, %896, %cst_224 {dimension_numbers = #tpu.dot_dimension_numbers<[1], [0], [0], [1], [0, 0, 1, 1], [], []>} : vector<128x32xf32>, vector<32x64xf32>, vector<128x64xf32> -> vector<128x64xf32>
    %cst_225 = arith.constant 0.000000e+00 : f32
    %898 = vector.broadcast %cst_225 : f32 to vector<128x64xf32>
    %899 = arith.maximumf %897, %898 : vector<128x64xf32>
    %c0_226 = arith.constant 0 : index
    %c0_227 = arith.constant 0 : index
    %900 = vector.load %arg5[%c0_226, %c0_227] : memref<64x32xf32, #tpu.memory_space<vmem>>, vector<64x32xf32>
    %cst_228 = arith.constant dense<0.000000e+00> : vector<128x32xf32>
    %901 = tpu.matmul %899, %900, %cst_228 {dimension_numbers = #tpu.dot_dimension_numbers<[1], [0], [0], [1], [0, 0, 1, 1], [], []>} : vector<128x64xf32>, vector<64x32xf32>, vector<128x32xf32> -> vector<128x32xf32>
    %902 = arith.addf %895, %901 : vector<128x32xf32>
    %903 = vector.extract_strided_slice %902 {offsets = [0, 0], sizes = [16, 32], strides = [1, 1]} : vector<128x32xf32> to vector<16x32xf32>
    %cst_229 = arith.constant dense<0.000000e+00> : vector<32xf32>
    %904 = vector.multi_reduction <add>, %903, %cst_229 [0] : vector<16x32xf32> to vector<32xf32>
    %905 = vector.shape_cast %904 : vector<32xf32> to vector<1x32xf32>
    %cst_230 = arith.constant 1.600000e+01 : f32
    %906 = vector.broadcast %cst_230 : f32 to vector<1x32xf32>
    %907 = arith.divf %905, %906 : vector<1x32xf32>
    %908 = arith.mulf %903, %903 : vector<16x32xf32>
    %cst_231 = arith.constant dense<0.000000e+00> : vector<32xf32>
    %909 = vector.multi_reduction <add>, %908, %cst_231 [0] : vector<16x32xf32> to vector<32xf32>
    %910 = vector.shape_cast %909 : vector<32xf32> to vector<1x32xf32>
    %cst_232 = arith.constant 1.600000e+01 : f32
    %911 = vector.broadcast %cst_232 : f32 to vector<1x32xf32>
    %912 = arith.divf %910, %911 : vector<1x32xf32>
    %913 = arith.mulf %907, %907 : vector<1x32xf32>
    %914 = arith.subf %912, %913 : vector<1x32xf32>
    %915 = vector.broadcast %907 : vector<1x32xf32> to vector<16x32xf32>
    %916 = arith.subf %903, %915 : vector<16x32xf32>
    %cst_233 = arith.constant 9.99999974E-6 : f32
    %917 = vector.broadcast %cst_233 : f32 to vector<1x32xf32>
    %918 = arith.addf %914, %917 : vector<1x32xf32>
    %919 = math.rsqrt %918 : vector<1x32xf32>
    %920 = vector.broadcast %919 : vector<1x32xf32> to vector<16x32xf32>
    %921 = arith.mulf %916, %920 : vector<16x32xf32>
    %922 = vector.extract_strided_slice %1 {offsets = [2, 0], sizes = [1, 32], strides = [1, 1]} : vector<4x32xf32> to vector<1x32xf32>
    %923 = vector.broadcast %922 : vector<1x32xf32> to vector<16x32xf32>
    %924 = arith.mulf %921, %923 : vector<16x32xf32>
    %925 = vector.extract_strided_slice %1 {offsets = [3, 0], sizes = [1, 32], strides = [1, 1]} : vector<4x32xf32> to vector<1x32xf32>
    %926 = vector.broadcast %925 : vector<1x32xf32> to vector<16x32xf32>
    %927 = arith.addf %924, %926 : vector<16x32xf32>
    %928 = vector.extract_strided_slice %902 {offsets = [16, 0], sizes = [16, 32], strides = [1, 1]} : vector<128x32xf32> to vector<16x32xf32>
    %cst_234 = arith.constant dense<0.000000e+00> : vector<32xf32>
    %929 = vector.multi_reduction <add>, %928, %cst_234 [0] : vector<16x32xf32> to vector<32xf32>
    %930 = vector.shape_cast %929 : vector<32xf32> to vector<1x32xf32>
    %cst_235 = arith.constant 1.600000e+01 : f32
    %931 = vector.broadcast %cst_235 : f32 to vector<1x32xf32>
    %932 = arith.divf %930, %931 : vector<1x32xf32>
    %933 = arith.mulf %928, %928 : vector<16x32xf32>
    %cst_236 = arith.constant dense<0.000000e+00> : vector<32xf32>
    %934 = vector.multi_reduction <add>, %933, %cst_236 [0] : vector<16x32xf32> to vector<32xf32>
    %935 = vector.shape_cast %934 : vector<32xf32> to vector<1x32xf32>
    %cst_237 = arith.constant 1.600000e+01 : f32
    %936 = vector.broadcast %cst_237 : f32 to vector<1x32xf32>
    %937 = arith.divf %935, %936 : vector<1x32xf32>
    %938 = arith.mulf %932, %932 : vector<1x32xf32>
    %939 = arith.subf %937, %938 : vector<1x32xf32>
    %940 = vector.broadcast %932 : vector<1x32xf32> to vector<16x32xf32>
    %941 = arith.subf %928, %940 : vector<16x32xf32>
    %cst_238 = arith.constant 9.99999974E-6 : f32
    %942 = vector.broadcast %cst_238 : f32 to vector<1x32xf32>
    %943 = arith.addf %939, %942 : vector<1x32xf32>
    %944 = math.rsqrt %943 : vector<1x32xf32>
    %945 = vector.broadcast %944 : vector<1x32xf32> to vector<16x32xf32>
    %946 = arith.mulf %941, %945 : vector<16x32xf32>
    %947 = vector.extract_strided_slice %1 {offsets = [2, 0], sizes = [1, 32], strides = [1, 1]} : vector<4x32xf32> to vector<1x32xf32>
    %948 = vector.broadcast %947 : vector<1x32xf32> to vector<16x32xf32>
    %949 = arith.mulf %946, %948 : vector<16x32xf32>
    %950 = vector.extract_strided_slice %1 {offsets = [3, 0], sizes = [1, 32], strides = [1, 1]} : vector<4x32xf32> to vector<1x32xf32>
    %951 = vector.broadcast %950 : vector<1x32xf32> to vector<16x32xf32>
    %952 = arith.addf %949, %951 : vector<16x32xf32>
    %953 = vector.extract_strided_slice %902 {offsets = [32, 0], sizes = [16, 32], strides = [1, 1]} : vector<128x32xf32> to vector<16x32xf32>
    %cst_239 = arith.constant dense<0.000000e+00> : vector<32xf32>
    %954 = vector.multi_reduction <add>, %953, %cst_239 [0] : vector<16x32xf32> to vector<32xf32>
    %955 = vector.shape_cast %954 : vector<32xf32> to vector<1x32xf32>
    %cst_240 = arith.constant 1.600000e+01 : f32
    %956 = vector.broadcast %cst_240 : f32 to vector<1x32xf32>
    %957 = arith.divf %955, %956 : vector<1x32xf32>
    %958 = arith.mulf %953, %953 : vector<16x32xf32>
    %cst_241 = arith.constant dense<0.000000e+00> : vector<32xf32>
    %959 = vector.multi_reduction <add>, %958, %cst_241 [0] : vector<16x32xf32> to vector<32xf32>
    %960 = vector.shape_cast %959 : vector<32xf32> to vector<1x32xf32>
    %cst_242 = arith.constant 1.600000e+01 : f32
    %961 = vector.broadcast %cst_242 : f32 to vector<1x32xf32>
    %962 = arith.divf %960, %961 : vector<1x32xf32>
    %963 = arith.mulf %957, %957 : vector<1x32xf32>
    %964 = arith.subf %962, %963 : vector<1x32xf32>
    %965 = vector.broadcast %957 : vector<1x32xf32> to vector<16x32xf32>
    %966 = arith.subf %953, %965 : vector<16x32xf32>
    %cst_243 = arith.constant 9.99999974E-6 : f32
    %967 = vector.broadcast %cst_243 : f32 to vector<1x32xf32>
    %968 = arith.addf %964, %967 : vector<1x32xf32>
    %969 = math.rsqrt %968 : vector<1x32xf32>
    %970 = vector.broadcast %969 : vector<1x32xf32> to vector<16x32xf32>
    %971 = arith.mulf %966, %970 : vector<16x32xf32>
    %972 = vector.extract_strided_slice %1 {offsets = [2, 0], sizes = [1, 32], strides = [1, 1]} : vector<4x32xf32> to vector<1x32xf32>
    %973 = vector.broadcast %972 : vector<1x32xf32> to vector<16x32xf32>
    %974 = arith.mulf %971, %973 : vector<16x32xf32>
    %975 = vector.extract_strided_slice %1 {offsets = [3, 0], sizes = [1, 32], strides = [1, 1]} : vector<4x32xf32> to vector<1x32xf32>
    %976 = vector.broadcast %975 : vector<1x32xf32> to vector<16x32xf32>
    %977 = arith.addf %974, %976 : vector<16x32xf32>
    %978 = vector.extract_strided_slice %902 {offsets = [48, 0], sizes = [16, 32], strides = [1, 1]} : vector<128x32xf32> to vector<16x32xf32>
    %cst_244 = arith.constant dense<0.000000e+00> : vector<32xf32>
    %979 = vector.multi_reduction <add>, %978, %cst_244 [0] : vector<16x32xf32> to vector<32xf32>
    %980 = vector.shape_cast %979 : vector<32xf32> to vector<1x32xf32>
    %cst_245 = arith.constant 1.600000e+01 : f32
    %981 = vector.broadcast %cst_245 : f32 to vector<1x32xf32>
    %982 = arith.divf %980, %981 : vector<1x32xf32>
    %983 = arith.mulf %978, %978 : vector<16x32xf32>
    %cst_246 = arith.constant dense<0.000000e+00> : vector<32xf32>
    %984 = vector.multi_reduction <add>, %983, %cst_246 [0] : vector<16x32xf32> to vector<32xf32>
    %985 = vector.shape_cast %984 : vector<32xf32> to vector<1x32xf32>
    %cst_247 = arith.constant 1.600000e+01 : f32
    %986 = vector.broadcast %cst_247 : f32 to vector<1x32xf32>
    %987 = arith.divf %985, %986 : vector<1x32xf32>
    %988 = arith.mulf %982, %982 : vector<1x32xf32>
    %989 = arith.subf %987, %988 : vector<1x32xf32>
    %990 = vector.broadcast %982 : vector<1x32xf32> to vector<16x32xf32>
    %991 = arith.subf %978, %990 : vector<16x32xf32>
    %cst_248 = arith.constant 9.99999974E-6 : f32
    %992 = vector.broadcast %cst_248 : f32 to vector<1x32xf32>
    %993 = arith.addf %989, %992 : vector<1x32xf32>
    %994 = math.rsqrt %993 : vector<1x32xf32>
    %995 = vector.broadcast %994 : vector<1x32xf32> to vector<16x32xf32>
    %996 = arith.mulf %991, %995 : vector<16x32xf32>
    %997 = vector.extract_strided_slice %1 {offsets = [2, 0], sizes = [1, 32], strides = [1, 1]} : vector<4x32xf32> to vector<1x32xf32>
    %998 = vector.broadcast %997 : vector<1x32xf32> to vector<16x32xf32>
    %999 = arith.mulf %996, %998 : vector<16x32xf32>
    %1000 = vector.extract_strided_slice %1 {offsets = [3, 0], sizes = [1, 32], strides = [1, 1]} : vector<4x32xf32> to vector<1x32xf32>
    %1001 = vector.broadcast %1000 : vector<1x32xf32> to vector<16x32xf32>
    %1002 = arith.addf %999, %1001 : vector<16x32xf32>
    %1003 = vector.extract_strided_slice %902 {offsets = [64, 0], sizes = [16, 32], strides = [1, 1]} : vector<128x32xf32> to vector<16x32xf32>
    %cst_249 = arith.constant dense<0.000000e+00> : vector<32xf32>
    %1004 = vector.multi_reduction <add>, %1003, %cst_249 [0] : vector<16x32xf32> to vector<32xf32>
    %1005 = vector.shape_cast %1004 : vector<32xf32> to vector<1x32xf32>
    %cst_250 = arith.constant 1.600000e+01 : f32
    %1006 = vector.broadcast %cst_250 : f32 to vector<1x32xf32>
    %1007 = arith.divf %1005, %1006 : vector<1x32xf32>
    %1008 = arith.mulf %1003, %1003 : vector<16x32xf32>
    %cst_251 = arith.constant dense<0.000000e+00> : vector<32xf32>
    %1009 = vector.multi_reduction <add>, %1008, %cst_251 [0] : vector<16x32xf32> to vector<32xf32>
    %1010 = vector.shape_cast %1009 : vector<32xf32> to vector<1x32xf32>
    %cst_252 = arith.constant 1.600000e+01 : f32
    %1011 = vector.broadcast %cst_252 : f32 to vector<1x32xf32>
    %1012 = arith.divf %1010, %1011 : vector<1x32xf32>
    %1013 = arith.mulf %1007, %1007 : vector<1x32xf32>
    %1014 = arith.subf %1012, %1013 : vector<1x32xf32>
    %1015 = vector.broadcast %1007 : vector<1x32xf32> to vector<16x32xf32>
    %1016 = arith.subf %1003, %1015 : vector<16x32xf32>
    %cst_253 = arith.constant 9.99999974E-6 : f32
    %1017 = vector.broadcast %cst_253 : f32 to vector<1x32xf32>
    %1018 = arith.addf %1014, %1017 : vector<1x32xf32>
    %1019 = math.rsqrt %1018 : vector<1x32xf32>
    %1020 = vector.broadcast %1019 : vector<1x32xf32> to vector<16x32xf32>
    %1021 = arith.mulf %1016, %1020 : vector<16x32xf32>
    %1022 = vector.extract_strided_slice %1 {offsets = [2, 0], sizes = [1, 32], strides = [1, 1]} : vector<4x32xf32> to vector<1x32xf32>
    %1023 = vector.broadcast %1022 : vector<1x32xf32> to vector<16x32xf32>
    %1024 = arith.mulf %1021, %1023 : vector<16x32xf32>
    %1025 = vector.extract_strided_slice %1 {offsets = [3, 0], sizes = [1, 32], strides = [1, 1]} : vector<4x32xf32> to vector<1x32xf32>
    %1026 = vector.broadcast %1025 : vector<1x32xf32> to vector<16x32xf32>
    %1027 = arith.addf %1024, %1026 : vector<16x32xf32>
    %1028 = vector.extract_strided_slice %902 {offsets = [80, 0], sizes = [16, 32], strides = [1, 1]} : vector<128x32xf32> to vector<16x32xf32>
    %cst_254 = arith.constant dense<0.000000e+00> : vector<32xf32>
    %1029 = vector.multi_reduction <add>, %1028, %cst_254 [0] : vector<16x32xf32> to vector<32xf32>
    %1030 = vector.shape_cast %1029 : vector<32xf32> to vector<1x32xf32>
    %cst_255 = arith.constant 1.600000e+01 : f32
    %1031 = vector.broadcast %cst_255 : f32 to vector<1x32xf32>
    %1032 = arith.divf %1030, %1031 : vector<1x32xf32>
    %1033 = arith.mulf %1028, %1028 : vector<16x32xf32>
    %cst_256 = arith.constant dense<0.000000e+00> : vector<32xf32>
    %1034 = vector.multi_reduction <add>, %1033, %cst_256 [0] : vector<16x32xf32> to vector<32xf32>
    %1035 = vector.shape_cast %1034 : vector<32xf32> to vector<1x32xf32>
    %cst_257 = arith.constant 1.600000e+01 : f32
    %1036 = vector.broadcast %cst_257 : f32 to vector<1x32xf32>
    %1037 = arith.divf %1035, %1036 : vector<1x32xf32>
    %1038 = arith.mulf %1032, %1032 : vector<1x32xf32>
    %1039 = arith.subf %1037, %1038 : vector<1x32xf32>
    %1040 = vector.broadcast %1032 : vector<1x32xf32> to vector<16x32xf32>
    %1041 = arith.subf %1028, %1040 : vector<16x32xf32>
    %cst_258 = arith.constant 9.99999974E-6 : f32
    %1042 = vector.broadcast %cst_258 : f32 to vector<1x32xf32>
    %1043 = arith.addf %1039, %1042 : vector<1x32xf32>
    %1044 = math.rsqrt %1043 : vector<1x32xf32>
    %1045 = vector.broadcast %1044 : vector<1x32xf32> to vector<16x32xf32>
    %1046 = arith.mulf %1041, %1045 : vector<16x32xf32>
    %1047 = vector.extract_strided_slice %1 {offsets = [2, 0], sizes = [1, 32], strides = [1, 1]} : vector<4x32xf32> to vector<1x32xf32>
    %1048 = vector.broadcast %1047 : vector<1x32xf32> to vector<16x32xf32>
    %1049 = arith.mulf %1046, %1048 : vector<16x32xf32>
    %1050 = vector.extract_strided_slice %1 {offsets = [3, 0], sizes = [1, 32], strides = [1, 1]} : vector<4x32xf32> to vector<1x32xf32>
    %1051 = vector.broadcast %1050 : vector<1x32xf32> to vector<16x32xf32>
    %1052 = arith.addf %1049, %1051 : vector<16x32xf32>
    %1053 = vector.extract_strided_slice %902 {offsets = [96, 0], sizes = [16, 32], strides = [1, 1]} : vector<128x32xf32> to vector<16x32xf32>
    %cst_259 = arith.constant dense<0.000000e+00> : vector<32xf32>
    %1054 = vector.multi_reduction <add>, %1053, %cst_259 [0] : vector<16x32xf32> to vector<32xf32>
    %1055 = vector.shape_cast %1054 : vector<32xf32> to vector<1x32xf32>
    %cst_260 = arith.constant 1.600000e+01 : f32
    %1056 = vector.broadcast %cst_260 : f32 to vector<1x32xf32>
    %1057 = arith.divf %1055, %1056 : vector<1x32xf32>
    %1058 = arith.mulf %1053, %1053 : vector<16x32xf32>
    %cst_261 = arith.constant dense<0.000000e+00> : vector<32xf32>
    %1059 = vector.multi_reduction <add>, %1058, %cst_261 [0] : vector<16x32xf32> to vector<32xf32>
    %1060 = vector.shape_cast %1059 : vector<32xf32> to vector<1x32xf32>
    %cst_262 = arith.constant 1.600000e+01 : f32
    %1061 = vector.broadcast %cst_262 : f32 to vector<1x32xf32>
    %1062 = arith.divf %1060, %1061 : vector<1x32xf32>
    %1063 = arith.mulf %1057, %1057 : vector<1x32xf32>
    %1064 = arith.subf %1062, %1063 : vector<1x32xf32>
    %1065 = vector.broadcast %1057 : vector<1x32xf32> to vector<16x32xf32>
    %1066 = arith.subf %1053, %1065 : vector<16x32xf32>
    %cst_263 = arith.constant 9.99999974E-6 : f32
    %1067 = vector.broadcast %cst_263 : f32 to vector<1x32xf32>
    %1068 = arith.addf %1064, %1067 : vector<1x32xf32>
    %1069 = math.rsqrt %1068 : vector<1x32xf32>
    %1070 = vector.broadcast %1069 : vector<1x32xf32> to vector<16x32xf32>
    %1071 = arith.mulf %1066, %1070 : vector<16x32xf32>
    %1072 = vector.extract_strided_slice %1 {offsets = [2, 0], sizes = [1, 32], strides = [1, 1]} : vector<4x32xf32> to vector<1x32xf32>
    %1073 = vector.broadcast %1072 : vector<1x32xf32> to vector<16x32xf32>
    %1074 = arith.mulf %1071, %1073 : vector<16x32xf32>
    %1075 = vector.extract_strided_slice %1 {offsets = [3, 0], sizes = [1, 32], strides = [1, 1]} : vector<4x32xf32> to vector<1x32xf32>
    %1076 = vector.broadcast %1075 : vector<1x32xf32> to vector<16x32xf32>
    %1077 = arith.addf %1074, %1076 : vector<16x32xf32>
    %1078 = vector.extract_strided_slice %902 {offsets = [112, 0], sizes = [16, 32], strides = [1, 1]} : vector<128x32xf32> to vector<16x32xf32>
    %cst_264 = arith.constant dense<0.000000e+00> : vector<32xf32>
    %1079 = vector.multi_reduction <add>, %1078, %cst_264 [0] : vector<16x32xf32> to vector<32xf32>
    %1080 = vector.shape_cast %1079 : vector<32xf32> to vector<1x32xf32>
    %cst_265 = arith.constant 1.600000e+01 : f32
    %1081 = vector.broadcast %cst_265 : f32 to vector<1x32xf32>
    %1082 = arith.divf %1080, %1081 : vector<1x32xf32>
    %1083 = arith.mulf %1078, %1078 : vector<16x32xf32>
    %cst_266 = arith.constant dense<0.000000e+00> : vector<32xf32>
    %1084 = vector.multi_reduction <add>, %1083, %cst_266 [0] : vector<16x32xf32> to vector<32xf32>
    %1085 = vector.shape_cast %1084 : vector<32xf32> to vector<1x32xf32>
    %cst_267 = arith.constant 1.600000e+01 : f32
    %1086 = vector.broadcast %cst_267 : f32 to vector<1x32xf32>
    %1087 = arith.divf %1085, %1086 : vector<1x32xf32>
    %1088 = arith.mulf %1082, %1082 : vector<1x32xf32>
    %1089 = arith.subf %1087, %1088 : vector<1x32xf32>
    %1090 = vector.broadcast %1082 : vector<1x32xf32> to vector<16x32xf32>
    %1091 = arith.subf %1078, %1090 : vector<16x32xf32>
    %cst_268 = arith.constant 9.99999974E-6 : f32
    %1092 = vector.broadcast %cst_268 : f32 to vector<1x32xf32>
    %1093 = arith.addf %1089, %1092 : vector<1x32xf32>
    %1094 = math.rsqrt %1093 : vector<1x32xf32>
    %1095 = vector.broadcast %1094 : vector<1x32xf32> to vector<16x32xf32>
    %1096 = arith.mulf %1091, %1095 : vector<16x32xf32>
    %1097 = vector.extract_strided_slice %1 {offsets = [2, 0], sizes = [1, 32], strides = [1, 1]} : vector<4x32xf32> to vector<1x32xf32>
    %1098 = vector.broadcast %1097 : vector<1x32xf32> to vector<16x32xf32>
    %1099 = arith.mulf %1096, %1098 : vector<16x32xf32>
    %1100 = vector.extract_strided_slice %1 {offsets = [3, 0], sizes = [1, 32], strides = [1, 1]} : vector<4x32xf32> to vector<1x32xf32>
    %1101 = vector.broadcast %1100 : vector<1x32xf32> to vector<16x32xf32>
    %1102 = arith.addf %1099, %1101 : vector<16x32xf32>
    %1103 = tpu.concatenate %927, %952, %977, %1002, %1027, %1052, %1077, %1102 in 0 : vector<16x32xf32>, vector<16x32xf32>, vector<16x32xf32>, vector<16x32xf32>, vector<16x32xf32>, vector<16x32xf32>, vector<16x32xf32>, vector<16x32xf32> -> vector<128x32xf32>
    %c0_269 = arith.constant 0 : index
    %c0_270 = arith.constant 0 : index
    %1104 = vector.load %arg7[%c0_269, %c0_270] : memref<128x32xf32, #tpu.memory_space<vmem>>, vector<128x32xf32>
    tpu.vector_store %arg7[%c0_269, %c0_270], %1103 {strides = array<i32>} : memref<128x32xf32, #tpu.memory_space<vmem>>, vector<128x32xf32>,
    return
  }
  func.func @transform_0(%arg0: i32) -> (i32, i32, i32) {
    %c0_i32 = arith.constant 0 : i32
    %c0_i32_0 = arith.constant 0 : i32
    %c0_i32_1 = arith.constant 0 : i32
    return %arg0, %c0_i32, %c0_i32_0 : i32, i32, i32
  }
  func.func @transform_1(%arg0: i32) -> (i32, i32) {
    %c0_i32 = arith.constant 0 : i32
    %c0_i32_0 = arith.constant 0 : i32
    return %arg0, %c0_i32 : i32, i32
  }
  func.func @transform_2(%arg0: i32) -> (i32, i32) {
    %c0_i32 = arith.constant 0 : i32
    %c0_i32_0 = arith.constant 0 : i32
    %c0_i32_1 = arith.constant 0 : i32
    return %c0_i32, %c0_i32_0 : i32, i32
  }
  func.func @transform_3(%arg0: i32) -> (i32, i32) {
    %c0_i32 = arith.constant 0 : i32
    %c0_i32_0 = arith.constant 0 : i32
    %c0_i32_1 = arith.constant 0 : i32
    return %c0_i32, %c0_i32_0 : i32, i32
  }
  func.func @transform_4(%arg0: i32) -> (i32, i32) {
    %c0_i32 = arith.constant 0 : i32
    %c0_i32_0 = arith.constant 0 : i32
    %c0_i32_1 = arith.constant 0 : i32
    return %c0_i32, %c0_i32_0 : i32, i32
  }
  func.func @transform_5(%arg0: i32) -> (i32, i32) {
    %c0_i32 = arith.constant 0 : i32
    %c0_i32_0 = arith.constant 0 : i32
    %c0_i32_1 = arith.constant 0 : i32
    return %c0_i32, %c0_i32_0 : i32, i32
  }
  func.func @transform_6(%arg0: i32) -> (i32, i32) {
    %c0_i32 = arith.constant 0 : i32
    %c0_i32_0 = arith.constant 0 : i32
    return %arg0, %c0_i32 : i32, i32
  }
}

</mosaic_0001>

<llo_original>
// kernel: gt_layer.1
$region0: #{gt_layer.1}
  #allocation0 [shape = 'u32[]', space=smem, size = 0x4, offset = 0x4, fixed_abs, tag = 'smem constant byte address 0x4 - core index']
  #allocation1 [shape = 'u32[144,128]{1,0:T(1,128)}', space=vmem, size = 0x12000, scoped, tag = 'internal scratch']
  %s0 = inlined_call_operand.hbm [shape: f32[8,16,16], index: 0, kind: input, shape index: {}]
  %s1 = inlined_call_operand.hbm [shape: f32[128,32], index: 1, kind: input, shape index: {}]
  %s2 = inlined_call_operand.vmem [shape: f32[32,192], index: 2, kind: input, shape index: {}]
  %s3 = inlined_call_operand.vmem [shape: f32[32,64], index: 3, kind: input, shape index: {}]
  %s4 = inlined_call_operand.vmem [shape: f32[64,32], index: 4, kind: input, shape index: {}]
  %s5 = inlined_call_operand.vmem [shape: f32[4,32], index: 5, kind: input, shape index: {}]
  %s6 = inlined_call_operand.hbm [shape: f32[128,32], index: 6, kind: output, shape index: {}]
  %s7 = sld [smem:[#allocation0]]
  $region42: #{gt_layer.1} parent=0
    _
  %s9 = ssub.s32 1, %s7
  %s10 = scalar_select 0, %s9, %s7
  $region1: #{gt_layer.1} parent=0
    #allocation2 [shape = 'u8[65536]{0}', space=vmem, size = 0x10000, scoped, tag = 'input window, operand 0, single buffered']
    #allocation3 [shape = 's32[1]{0}', space=sflag, size = 0x4, scoped, tag = 'scoped memory for gt_layer.1']
    #allocation4 [shape = 's32[1]{0}', space=sflag, size = 0x4, scoped, tag = 'scoped memory for gt_layer.1']
    #allocation5 [shape = 'u8[65536]{0}', space=vmem, size = 0x10000, scoped, tag = 'input window, operand 1, single buffered']
    #allocation6 [shape = 's32[1]{0}', space=sflag, size = 0x4, scoped, tag = 'scoped memory for gt_layer.1']
    #allocation7 [shape = 'u8[65536]{0}', space=vmem, size = 0x10000, scoped, tag = 'output window, operand 0, single buffered']
    %11 = vsyncpa [#allocation3], 0
    %12 = vsyncpa [#allocation6], 0
    %13 = vsyncpa [#allocation4], 0
    // Predicated region
    $region2: #{gt_layer.1} parent=1 // pred_check
      _
    $region3: #{gt_layer.1} parent=1 // pred_check_branch
      %15 = sbr.rel (0) target = $region5
    $region4: #{gt_layer.1} parent=1 // pred_region
      %s17 = ssub.s32 2048, 2048
      %18 = vsyncadd [#allocation3], %s17
      %s19 = sshll.u32 [#allocation2], 4
      %s20 = int_to_ptr.vmem [resolvable:$true] %s19
      %25 = dma.hbm_to_vmem [thread:$0]  %s0, 2048, %s20, [#allocation3], 128, 128, 8
    $region5: #{gt_layer.1} parent=1 // pred_fallthru
      _
    // Predicated region
    $region6: #{gt_layer.1} parent=1 // pred_check
      _
    $region7: #{gt_layer.1} parent=1 // pred_check_branch
      %27 = sbr.rel (0) target = $region9
    $region8: #{gt_layer.1} parent=1 // pred_region
      %s29 = ssub.s32 2048, 2048
      %30 = vsyncadd [#allocation6], %s29
      %s31 = sshll.u32 [#allocation5], 4
      %s32 = int_to_ptr.vmem [resolvable:$true] %s31
      %37 = dma.hbm_to_vmem [thread:$0]  %s1, 2048, %s32, [#allocation6], 128, 128, 8
    $region9: #{gt_layer.1} parent=1 // pred_fallthru
      _
    // Predicated region
    $region10: #{gt_layer.1} parent=1 // pred_check
      _
    $region11: #{gt_layer.1} parent=1 // pred_check_branch
      %39 = sbr.rel (0) target = $region13
    $region12: #{gt_layer.1} parent=1 // pred_region
      _
    $region13: #{gt_layer.1} parent=1 // pred_fallthru
      _
    // Predicated region
    $region14: #{gt_layer.1} parent=1 // pred_check
      _
    $region15: #{gt_layer.1} parent=1 // pred_check_branch
      %41 = sbr.rel (0) target = $region17
    $region16: #{gt_layer.1} parent=1 // pred_region
      _
    $region17: #{gt_layer.1} parent=1 // pred_fallthru
      _
    // Predicated region
    $region18: #{gt_layer.1} parent=1 // pred_check
      _
    $region19: #{gt_layer.1} parent=1 // pred_check_branch
      %43 = sbr.rel (0) target = $region21
    $region20: #{gt_layer.1} parent=1 // pred_region
      _
    $region21: #{gt_layer.1} parent=1 // pred_fallthru
      _
    // Predicated region
    $region22: #{gt_layer.1} parent=1 // pred_check
      _
    $region23: #{gt_layer.1} parent=1 // pred_check_branch
      %45 = sbr.rel (0) target = $region25
    $region24: #{gt_layer.1} parent=1 // pred_region
      _
    $region25: #{gt_layer.1} parent=1 // pred_fallthru
      _
    // Predicated region
    $region26: #{gt_layer.1} parent=1 // pred_check
      _
    $region27: #{gt_layer.1} parent=1 // pred_check_branch
      %47 = sbr.rel (0) target = $region29
    $region28: #{gt_layer.1} parent=1 // pred_region
      %48 = dma.done [#allocation3], 2048
    $region29: #{gt_layer.1} parent=1 // pred_fallthru
      _
    // Predicated region
    $region30: #{gt_layer.1} parent=1 // pred_check
      _
    $region31: #{gt_layer.1} parent=1 // pred_check_branch
      %50 = sbr.rel (0) target = $region33
    $region32: #{gt_layer.1} parent=1 // pred_region
      %51 = dma.done [#allocation6], 2048
    $region33: #{gt_layer.1} parent=1 // pred_fallthru
      _
    %v52 = vld [vmem:[#allocation5] sm:$0xff]
    %v53 = vld [vmem:[#allocation5 + $0x8] sm:$0xff]
    %v54 = vld [vmem:[#allocation5 + $0x10] sm:$0xff]
    %v55 = vld [vmem:[#allocation5 + $0x18] sm:$0xff]
    %v56 = vld [vmem:[#allocation5 + $0x20] sm:$0xff]
    %v57 = vld [vmem:[#allocation5 + $0x28] sm:$0xff]
    %v58 = vld [vmem:[#allocation5 + $0x30] sm:$0xff]
    %v59 = vld [vmem:[#allocation5 + $0x38] sm:$0xff]
    %v60 = vld [vmem:[#allocation5 + $0x40] sm:$0xff]
    %v61 = vld [vmem:[#allocation5 + $0x48] sm:$0xff]
    %v62 = vld [vmem:[#allocation5 + $0x50] sm:$0xff]
    %v63 = vld [vmem:[#allocation5 + $0x58] sm:$0xff]
    %v64 = vld [vmem:[#allocation5 + $0x60] sm:$0xff]
    %v65 = vld [vmem:[#allocation5 + $0x68] sm:$0xff]
    %v66 = vld [vmem:[#allocation5 + $0x70] sm:$0xff]
    %v67 = vld [vmem:[#allocation5 + $0x78] sm:$0xff]
    %v68 = vld [vmem:[%s5] sm:$0xf]
    %v69 = vld [vmem:[%s2] sm:$0xff]
    %v70 = vld [vmem:[%s2 + $0x8] sm:$0xff]
    %v71 = vld [vmem:[%s2 + $0x10] sm:$0xff]
    %v72 = vld [vmem:[%s2 + $0x18] sm:$0xff]
    %v73 = vld [vmem:[%s2 + $0x20] sm:$0xff]
    %v74 = vld [vmem:[%s2 + $0x28] sm:$0xff]
    %v75 = vld [vmem:[%s2 + $0x30] sm:$0xff]
    %v76 = vld [vmem:[%s2 + $0x38] sm:$0xff]
    %vm77 = vcmask 261120
    %v79 = vsel %vm77, %v52, 0
    %v82 = vsel %vm77, %v53, 0
    %v85 = vsel %vm77, %v54, 0
    %v88 = vsel %vm77, %v55, 0
    %v91 = vsel %vm77, %v56, 0
    %v94 = vsel %vm77, %v57, 0
    %v97 = vsel %vm77, %v58, 0
    %v100 = vsel %vm77, %v59, 0
    %v103 = vsel %vm77, %v60, 0
    %v106 = vsel %vm77, %v61, 0
    %v109 = vsel %vm77, %v62, 0
    %v112 = vsel %vm77, %v63, 0
    %v115 = vsel %vm77, %v64, 0
    %v118 = vsel %vm77, %v65, 0
    %v121 = vsel %vm77, %v66, 0
    %v124 = vsel %vm77, %v67, 0
    %126 = vmatprep.subr.mxu0 0.0
    %127 = vmatpush1.msra.mxu0 0.0
    %128 = vmatprep.subr.mxu0 0.0
    %129 = vmatpush1.msra.mxu0 0.0
    %130 = vmatprep.subr.mxu0 0.0
    %131 = vmatpush1.msra.mxu0 0.0
    %132 = vmatprep.subr.mxu0 0.0
    %133 = vmatpush1.msra.mxu0 0.0
    %134 = vmatprep.subr.mxu0 0.0
    %135 = vmatpush1.msra.mxu0 0.0
    %136 = vmatprep.subr.mxu0 0.0
    %137 = vmatpush1.msra.mxu0 0.0
    %138 = vmatprep.subr.mxu0 0.0
    %139 = vmatpush1.msra.mxu0 0.0
    %140 = vmatprep.subr.mxu0 0.0
    %141 = vmatpush1.msra.mxu0 0.0
    %142 = vmatprep.subr.mxu0 0.0
    %143 = vmatpush1.msra.mxu0 0.0
    %144 = vmatprep.subr.mxu0 0.0
    %145 = vmatpush1.msra.mxu0 0.0
    %146 = vmatprep.subr.mxu0 0.0
    %147 = vmatpush1.msra.mxu0 0.0
    %148 = vmatprep.subr.mxu0 0.0
    %149 = vmatpush1.msra.mxu0 0.0
    %150 = vmatprep.subr.mxu0 %v76
    %151 = vmatpush1.msra.mxu0 %v75
    %152 = vmatprep.subr.mxu0 %v74
    %153 = vmatpush1.msra.mxu0 %v73
    %154 = vmatprep.subr.mxu0 %v72
    %155 = vmatpush1.msra.mxu0 %v71
    %156 = vmatprep.subr.mxu0 %v70
    %157 = vmatpush1.msra.mxu0 %v69
    %158 = vmatprep.subr.mxu0 0.0
    %159 = vmatpush2.msra.mxu0 0.0
    %160 = vmatprep.subr.mxu0 0.0
    %161 = vmatpush2.msra.mxu0 0.0
    %162 = vmatprep.subr.mxu0 0.0
    %163 = vmatpush2.msra.mxu0 0.0
    %164 = vmatprep.subr.mxu0 0.0
    %165 = vmatpush2.msra.mxu0 0.0
    %166 = vmatprep.subr.mxu0 0.0
    %167 = vmatpush2.msra.mxu0 0.0
    %168 = vmatprep.subr.mxu0 0.0
    %169 = vmatpush2.msra.mxu0 0.0
    %170 = vmatprep.subr.mxu0 0.0
    %171 = vmatpush2.msra.mxu0 0.0
    %172 = vmatprep.subr.mxu0 0.0
    %173 = vmatpush2.msra.mxu0 0.0
    %174 = vmatprep.subr.mxu0 0.0
    %175 = vmatpush2.msra.mxu0 0.0
    %176 = vmatprep.subr.mxu0 0.0
    %177 = vmatpush2.msra.mxu0 0.0
    %178 = vmatprep.subr.mxu0 0.0
    %179 = vmatpush2.msra.mxu0 0.0
    %180 = vmatprep.subr.mxu0 0.0
    %181 = vmatpush2.msra.mxu0 0.0
    %182 = vmatprep.subr.mxu0 0.0
    %183 = vmatpush2.msra.mxu0 0.0
    %184 = vmatprep.subr.mxu0 0.0
    %185 = vmatpush2.msra.mxu0 0.0
    %186 = vmatprep.subr.mxu0 0.0
    %187 = vmatpush2.msra.mxu0 0.0
    %188 = vmatprep.subr.mxu0 0.0
    %189 = vmatpush2.msra.mxu0 0.0
    %190 = vmatprep.mubr.f32.mxu0 0.0
    %191 = vmatmul.mubr.f32.gmra.mxu0 %v79
    %v192 = vpop.f32.mrf.mxu0
    %v193 = vadd.f32 0.0, %v192
    %v194 = vpop.f32.mrf.mxu0
    %v195 = vadd.f32 0.0, %v194
    %196 = vmatprep.mubr.f32.mxu0 0.0
    %197 = vmatmul.mubr.f32.gmra.mxu0 %v82
    %v198 = vpop.f32.mrf.mxu0
    %v199 = vadd.f32 0.0, %v198
    %v200 = vpop.f32.mrf.mxu0
    %v201 = vadd.f32 0.0, %v200
    %202 = vmatprep.mubr.f32.mxu0 0.0
    %203 = vmatmul.mubr.f32.gmra.mxu0 %v85
    %v204 = vpop.f32.mrf.mxu0
    %v205 = vadd.f32 0.0, %v204
    %v206 = vpop.f32.mrf.mxu0
    %v207 = vadd.f32 0.0, %v206
    %208 = vmatprep.mubr.f32.mxu0 0.0
    %209 = vmatmul.mubr.f32.gmra.mxu0 %v88
    %v210 = vpop.f32.mrf.mxu0
    %v211 = vadd.f32 0.0, %v210
    %v212 = vpop.f32.mrf.mxu0
    %v213 = vadd.f32 0.0, %v212
    %214 = vmatprep.mubr.f32.mxu0 0.0
    %215 = vmatmul.mubr.f32.gmra.mxu0 %v91
    %v216 = vpop.f32.mrf.mxu0
    %v217 = vadd.f32 0.0, %v216
    %v218 = vpop.f32.mrf.mxu0
    %v219 = vadd.f32 0.0, %v218
    %220 = vmatprep.mubr.f32.mxu0 0.0
    %221 = vmatmul.mubr.f32.gmra.mxu0 %v94
    %v222 = vpop.f32.mrf.mxu0
    %v223 = vadd.f32 0.0, %v222
    %v224 = vpop.f32.mrf.mxu0
    %v225 = vadd.f32 0.0, %v224
    %226 = vmatprep.mubr.f32.mxu0 0.0
    %227 = vmatmul.mubr.f32.gmra.mxu0 %v97
    %v228 = vpop.f32.mrf.mxu0
    %v229 = vadd.f32 0.0, %v228
    %v230 = vpop.f32.mrf.mxu0
    %v231 = vadd.f32 0.0, %v230
    %232 = vmatprep.mubr.f32.mxu0 0.0
    %233 = vmatmul.mubr.f32.gmra.mxu0 %v100
    %v234 = vpop.f32.mrf.mxu0
    %v235 = vadd.f32 0.0, %v234
    %v236 = vpop.f32.mrf.mxu0
    %v237 = vadd.f32 0.0, %v236
    %238 = vmatprep.mubr.f32.mxu0 0.0
    %239 = vmatmul.mubr.f32.gmra.mxu0 %v103
    %v240 = vpop.f32.mrf.mxu0
    %v241 = vadd.f32 0.0, %v240
    %v242 = vpop.f32.mrf.mxu0
    %v243 = vadd.f32 0.0, %v242
    %244 = vmatprep.mubr.f32.mxu0 0.0
    %245 = vmatmul.mubr.f32.gmra.mxu0 %v106
    %v246 = vpop.f32.mrf.mxu0
    %v247 = vadd.f32 0.0, %v246
    %v248 = vpop.f32.mrf.mxu0
    %v249 = vadd.f32 0.0, %v248
    %250 = vmatprep.mubr.f32.mxu0 0.0
    %251 = vmatmul.mubr.f32.gmra.mxu0 %v109
    %v252 = vpop.f32.mrf.mxu0
    %v253 = vadd.f32 0.0, %v252
    %v254 = vpop.f32.mrf.mxu0
    %v255 = vadd.f32 0.0, %v254
    %256 = vmatprep.mubr.f32.mxu0 0.0
    %257 = vmatmul.mubr.f32.gmra.mxu0 %v112
    %v258 = vpop.f32.mrf.mxu0
    %v259 = vadd.f32 0.0, %v258
    %v260 = vpop.f32.mrf.mxu0
    %v261 = vadd.f32 0.0, %v260
    %262 = vmatprep.mubr.f32.mxu0 0.0
    %263 = vmatmul.mubr.f32.gmra.mxu0 %v115
    %v264 = vpop.f32.mrf.mxu0
    %v265 = vadd.f32 0.0, %v264
    %v266 = vpop.f32.mrf.mxu0
    %v267 = vadd.f32 0.0, %v266
    %268 = vmatprep.mubr.f32.mxu0 0.0
    %269 = vmatmul.mubr.f32.gmra.mxu0 %v118
    %v270 = vpop.f32.mrf.mxu0
    %v271 = vadd.f32 0.0, %v270
    %v272 = vpop.f32.mrf.mxu0
    %v273 = vadd.f32 0.0, %v272
    %274 = vmatprep.mubr.f32.mxu0 0.0
    %275 = vmatmul.mubr.f32.gmra.mxu0 %v121
    %v276 = vpop.f32.mrf.mxu0
    %v277 = vadd.f32 0.0, %v276
    %v278 = vpop.f32.mrf.mxu0
    %v279 = vadd.f32 0.0, %v278
    %280 = vmatprep.mubr.f32.mxu0 0.0
    %281 = vmatmul.mubr.f32.gmra.mxu0 %v124
    %v282 = vpop.f32.mrf.mxu0
    %v283 = vadd.f32 0.0, %v282
    %v284 = vpop.f32.mrf.mxu0
    %v285 = vadd.f32 0.0, %v284
    %286 = vdwg.mxu0
    %v287 = vld [vmem:[#allocation2] sm:$0xff]
    %v288 = vld [vmem:[#allocation2 + $0x8] sm:$0xff]
    %291 = vrot.lane.b32.xlu0 %v193, 96
    %v292 = vpop.permute.xlu0 %291
    %293 = vrot.lane.b32.xlu0 %v199, 96
    %v294 = vpop.permute.xlu0 %293
    %vm295 = vcmask 64512
    %v296 = vsel %vm295, %v193, 0
    %v298 = vsel %vm295, %v199, 0
    %v300 = vsel %vm295, %v292, 0
    %v302 = vsel %vm295, %v294, 0
    %304 = vmatprep.subr.mxu0 0.0
    %305 = vmatpush1.xpose.msra.mxu0 0.0
    %306 = vmatprep.subr.mxu0 0.0
    %307 = vmatpush1.xpose.msra.mxu0 0.0
    %308 = vmatprep.subr.mxu0 0.0
    %309 = vmatpush1.xpose.msra.mxu0 0.0
    %310 = vmatprep.subr.mxu0 0.0
    %311 = vmatpush1.xpose.msra.mxu0 0.0
    %312 = vmatprep.subr.mxu0 0.0
    %313 = vmatpush1.xpose.msra.mxu0 0.0
    %314 = vmatprep.subr.mxu0 0.0
    %315 = vmatpush1.xpose.msra.mxu0 0.0
    %316 = vmatprep.subr.mxu0 0.0
    %317 = vmatpush1.xpose.msra.mxu0 0.0
    %318 = vmatprep.subr.mxu0 0.0
    %319 = vmatpush1.xpose.msra.mxu0 0.0
    %320 = vmatprep.subr.mxu0 0.0
    %321 = vmatpush1.xpose.msra.mxu0 0.0
    %322 = vmatprep.subr.mxu0 0.0
    %323 = vmatpush1.xpose.msra.mxu0 0.0
    %324 = vmatprep.subr.mxu0 0.0
    %325 = vmatpush1.xpose.msra.mxu0 0.0
    %326 = vmatprep.subr.mxu0 0.0
    %327 = vmatpush1.xpose.msra.mxu0 0.0
    %328 = vmatprep.subr.mxu0 0.0
    %329 = vmatpush1.xpose.msra.mxu0 0.0
    %330 = vmatprep.subr.mxu0 0.0
    %331 = vmatpush1.xpose.msra.mxu0 0.0
    %332 = vmatprep.subr.mxu0 0.0
    %333 = vmatpush1.xpose.msra.mxu0 %v302
    %334 = vmatprep.subr.mxu0 0.0
    %335 = vmatpush1.xpose.msra.mxu0 %v300
    %336 = vmatprep.subr.mxu0 0.0
    %337 = vmatpush2.xpose.msra.mxu0 0.0
    %338 = vmatprep.subr.mxu0 0.0
    %339 = vmatpush2.xpose.msra.mxu0 0.0
    %340 = vmatprep.subr.mxu0 0.0
    %341 = vmatpush2.xpose.msra.mxu0 0.0
    %342 = vmatprep.subr.mxu0 0.0
    %343 = vmatpush2.xpose.msra.mxu0 0.0
    %344 = vmatprep.subr.mxu0 0.0
    %345 = vmatpush2.xpose.msra.mxu0 0.0
    %346 = vmatprep.subr.mxu0 0.0
    %347 = vmatpush2.xpose.msra.mxu0 0.0
    %348 = vmatprep.subr.mxu0 0.0
    %349 = vmatpush2.xpose.msra.mxu0 0.0
    %350 = vmatprep.subr.mxu0 0.0
    %351 = vmatpush2.xpose.msra.mxu0 0.0
    %352 = vmatprep.subr.mxu0 0.0
    %353 = vmatpush2.xpose.msra.mxu0 0.0
    %354 = vmatprep.subr.mxu0 0.0
    %355 = vmatpush2.xpose.msra.mxu0 0.0
    %356 = vmatprep.subr.mxu0 0.0
    %357 = vmatpush2.xpose.msra.mxu0 0.0
    %358 = vmatprep.subr.mxu0 0.0
    %359 = vmatpush2.xpose.msra.mxu0 0.0
    %360 = vmatprep.subr.mxu0 0.0
    %361 = vmatpush2.xpose.msra.mxu0 0.0
    %362 = vmatprep.subr.mxu0 0.0
    %363 = vmatpush2.xpose.msra.mxu0 0.0
    %364 = vmatprep.subr.mxu0 0.0
    %365 = vmatpush2.xpose.msra.mxu0 0.0
    %366 = vmatprep.subr.mxu0 0.0
    %367 = vmatpush2.xpose.msra.mxu0 0.0
    %368 = vmatprep.mubr.f32.mxu0 0.0
    %369 = vmatmul.mubr.f32.gmra.mxu0 %v296
    %v370 = vpop.f32.mrf.mxu0
    %v371 = vadd.f32 0.0, %v370
    %v372 = vpop.f32.mrf.mxu0
    %373 = vmatprep.mubr.f32.mxu0 0.0
    %374 = vmatmul.mubr.f32.gmra.mxu0 %v298
    %v375 = vpop.f32.mrf.mxu0
    %v376 = vadd.f32 0.0, %v375
    %v377 = vpop.f32.mrf.mxu0
    %378 = vdwg.mxu0
    %v379 = vmul.f32 %v287, %v371
    %v380 = vmul.f32 %v288, %v376
    %vm381 = vcmask 130048
    %v382 = vsel %vm381, %v379, -inf
    %383 = vmax.xlane.f32.xlu0 %v382
    %v384 = vpop.xlane.xlu0 %383
    %v385 = vsel %vm381, %v380, -inf
    %386 = vmax.xlane.f32.xlu0 %v385
    %v387 = vpop.xlane.xlu0 %386
    %v388 = vsub.f32 %v379, %v384
    %v389 = vsub.f32 %v380, %v387
    %v390 = vmul.f32 %v388, 1.442695
    %v391 = vpow.pop %v390
    %v392 = vmul.f32 %v389, 1.442695
    %v393 = vpow.pop %v392
    %v394 = vsel %vm381, %v391, 0.0
    %395 = vadd.xlane.f32.xlu0 %v394
    %v396 = vpop.xlane.xlu0 %395
    %v397 = vsel %vm381, %v393, 0.0
    %398 = vadd.xlane.f32.xlu0 %v397
    %v399 = vpop.xlane.xlu0 %398
    %v400 = vrcp.pop %v396
    %v401 = vrcp.pop %v399
    %v402 = vmul.f32 %v396, %v400
    %v403 = vmul.f32 %v399, %v401
    %v404 = vsub.f32 2.0, %v402
    %v405 = vsub.f32 2.0, %v403
    %v406 = vmul.f32 %v400, %v404
    %v407 = vmul.f32 %v401, %v405
    %v408 = vmul.f32 %v391, %v406
    %v409 = vmul.f32 %v393, %v407
    %410 = vrot.lane.b32.xlu0 %v193, 120
    %v411 = vpop.permute.xlu0 %410
    %412 = vrot.lane.b32.xlu0 %v199, 120
    %v413 = vpop.permute.xlu0 %412
    %414 = vrot.lane.b32.xlu0 %v193, 88
    %v415 = vpop.permute.xlu0 %414
    %416 = vrot.lane.b32.xlu0 %v199, 88
    %v417 = vpop.permute.xlu0 %416
    %v418 = vsel %vm295, %v411, 0
    %v420 = vsel %vm295, %v413, 0
    %v422 = vsel %vm295, %v415, 0
    %v424 = vsel %vm295, %v417, 0
    %426 = vmatprep.subr.mxu0 0.0
    %427 = vmatpush1.xpose.msra.mxu0 0.0
    %428 = vmatprep.subr.mxu0 0.0
    %429 = vmatpush1.xpose.msra.mxu0 0.0
    %430 = vmatprep.subr.mxu0 0.0
    %431 = vmatpush1.xpose.msra.mxu0 0.0
    %432 = vmatprep.subr.mxu0 0.0
    %433 = vmatpush1.xpose.msra.mxu0 0.0
    %434 = vmatprep.subr.mxu0 0.0
    %435 = vmatpush1.xpose.msra.mxu0 0.0
    %436 = vmatprep.subr.mxu0 0.0
    %437 = vmatpush1.xpose.msra.mxu0 0.0
    %438 = vmatprep.subr.mxu0 0.0
    %439 = vmatpush1.xpose.msra.mxu0 0.0
    %440 = vmatprep.subr.mxu0 0.0
    %441 = vmatpush1.xpose.msra.mxu0 0.0
    %442 = vmatprep.subr.mxu0 0.0
    %443 = vmatpush1.xpose.msra.mxu0 0.0
    %444 = vmatprep.subr.mxu0 0.0
    %445 = vmatpush1.xpose.msra.mxu0 0.0
    %446 = vmatprep.subr.mxu0 0.0
    %447 = vmatpush1.xpose.msra.mxu0 0.0
    %448 = vmatprep.subr.mxu0 0.0
    %449 = vmatpush1.xpose.msra.mxu0 0.0
    %450 = vmatprep.subr.mxu0 0.0
    %451 = vmatpush1.xpose.msra.mxu0 0.0
    %452 = vmatprep.subr.mxu0 0.0
    %453 = vmatpush1.xpose.msra.mxu0 0.0
    %454 = vmatprep.subr.mxu0 0.0
    %455 = vmatpush1.xpose.msra.mxu0 %v424
    %456 = vmatprep.subr.mxu0 0.0
    %457 = vmatpush1.xpose.msra.mxu0 %v422
    %458 = vmatprep.subr.mxu0 0.0
    %459 = vmatpush2.xpose.msra.mxu0 0.0
    %460 = vmatprep.subr.mxu0 0.0
    %461 = vmatpush2.xpose.msra.mxu0 0.0
    %462 = vmatprep.subr.mxu0 0.0
    %463 = vmatpush2.xpose.msra.mxu0 0.0
    %464 = vmatprep.subr.mxu0 0.0
    %465 = vmatpush2.xpose.msra.mxu0 0.0
    %466 = vmatprep.subr.mxu0 0.0
    %467 = vmatpush2.xpose.msra.mxu0 0.0
    %468 = vmatprep.subr.mxu0 0.0
    %469 = vmatpush2.xpose.msra.mxu0 0.0
    %470 = vmatprep.subr.mxu0 0.0
    %471 = vmatpush2.xpose.msra.mxu0 0.0
    %472 = vmatprep.subr.mxu0 0.0
    %473 = vmatpush2.xpose.msra.mxu0 0.0
    %474 = vmatprep.subr.mxu0 0.0
    %475 = vmatpush2.xpose.msra.mxu0 0.0
    %476 = vmatprep.subr.mxu0 0.0
    %477 = vmatpush2.xpose.msra.mxu0 0.0
    %478 = vmatprep.subr.mxu0 0.0
    %479 = vmatpush2.xpose.msra.mxu0 0.0
    %480 = vmatprep.subr.mxu0 0.0
    %481 = vmatpush2.xpose.msra.mxu0 0.0
    %482 = vmatprep.subr.mxu0 0.0
    %483 = vmatpush2.xpose.msra.mxu0 0.0
    %484 = vmatprep.subr.mxu0 0.0
    %485 = vmatpush2.xpose.msra.mxu0 0.0
    %486 = vmatprep.subr.mxu0 0.0
    %487 = vmatpush2.xpose.msra.mxu0 0.0
    %488 = vmatprep.subr.mxu0 0.0
    %489 = vmatpush2.xpose.msra.mxu0 0.0
    %490 = vmatprep.mubr.f32.mxu0 0.0
    %491 = vmatmul.mubr.f32.gmra.mxu0 %v418
    %v492 = vpop.f32.mrf.mxu0
    %v493 = vadd.f32 0.0, %v492
    %v494 = vpop.f32.mrf.mxu0
    %495 = vmatprep.mubr.f32.mxu0 0.0
    %496 = vmatmul.mubr.f32.gmra.mxu0 %v420
    %v497 = vpop.f32.mrf.mxu0
    %v498 = vadd.f32 0.0, %v497
    %v499 = vpop.f32.mrf.mxu0
    %500 = vdwg.mxu0
    %v501 = vmul.f32 %v287, %v493
    %v502 = vmul.f32 %v288, %v498
    %v503 = vsel %vm381, %v501, -inf
    %504 = vmax.xlane.f32.xlu0 %v503
    %v505 = vpop.xlane.xlu0 %504
    %v506 = vsel %vm381, %v502, -inf
    %507 = vmax.xlane.f32.xlu0 %v506
    %v508 = vpop.xlane.xlu0 %507
    %v509 = vsub.f32 %v501, %v505
    %v510 = vsub.f32 %v502, %v508
    %v511 = vmul.f32 %v509, 1.442695
    %v512 = vpow.pop %v511
    %v513 = vmul.f32 %v510, 1.442695
    %v514 = vpow.pop %v513
    %v515 = vsel %vm381, %v512, 0.0
    %516 = vadd.xlane.f32.xlu0 %v515
    %v517 = vpop.xlane.xlu0 %516
    %v518 = vsel %vm381, %v514, 0.0
    %519 = vadd.xlane.f32.xlu0 %v518
    %v520 = vpop.xlane.xlu0 %519
    %v521 = vrcp.pop %v517
    %v522 = vrcp.pop %v520
    %v523 = vmul.f32 %v517, %v521
    %v524 = vmul.f32 %v520, %v522
    %v525 = vsub.f32 2.0, %v523
    %v526 = vsub.f32 2.0, %v524
    %v527 = vmul.f32 %v521, %v525
    %v528 = vmul.f32 %v522, %v526
    %v529 = vmul.f32 %v512, %v527
    %v530 = vmul.f32 %v514, %v528
    %531 = vrot.lane.b32.xlu0 %v193, 32
    %v532 = vpop.permute.xlu0 %531
    %533 = vrot.lane.b32.xlu0 %v199, 32
    %v534 = vpop.permute.xlu0 %533
    %v538 = vsel %vm381, %v529, 0
    %v541 = vsel %vm381, %v530, 0
    %543 = vmatprep.subr.mxu0 0.0
    %544 = vmatpush1.msra.mxu0 0.0
    %545 = vmatprep.subr.mxu0 0.0
    %546 = vmatpush1.msra.mxu0 0.0
    %547 = vmatprep.subr.mxu0 0.0
    %548 = vmatpush1.msra.mxu0 0.0
    %549 = vmatprep.subr.mxu0 0.0
    %550 = vmatpush1.msra.mxu0 0.0
    %551 = vmatprep.subr.mxu0 0.0
    %552 = vmatpush1.msra.mxu0 0.0
    %553 = vmatprep.subr.mxu0 0.0
    %554 = vmatpush1.msra.mxu0 0.0
    %555 = vmatprep.subr.mxu0 0.0
    %556 = vmatpush1.msra.mxu0 0.0
    %557 = vmatprep.subr.mxu0 0.0
    %558 = vmatpush1.msra.mxu0 0.0
    %559 = vmatprep.subr.mxu0 0.0
    %560 = vmatpush1.msra.mxu0 0.0
    %561 = vmatprep.subr.mxu0 0.0
    %562 = vmatpush1.msra.mxu0 0.0
    %563 = vmatprep.subr.mxu0 0.0
    %564 = vmatpush1.msra.mxu0 0.0
    %565 = vmatprep.subr.mxu0 0.0
    %566 = vmatpush1.msra.mxu0 0.0
    %567 = vmatprep.subr.mxu0 0.0
    %568 = vmatpush1.msra.mxu0 0.0
    %569 = vmatprep.subr.mxu0 0.0
    %570 = vmatpush1.msra.mxu0 0.0
    %571 = vmatprep.subr.mxu0 0.0
    %572 = vmatpush1.msra.mxu0 %v534
    %573 = vmatprep.subr.mxu0 0.0
    %574 = vmatpush1.msra.mxu0 %v532
    %575 = vmatprep.subr.mxu0 0.0
    %576 = vmatpush2.msra.mxu0 0.0
    %577 = vmatprep.subr.mxu0 0.0
    %578 = vmatpush2.msra.mxu0 0.0
    %579 = vmatprep.subr.mxu0 0.0
    %580 = vmatpush2.msra.mxu0 0.0
    %581 = vmatprep.subr.mxu0 0.0
    %582 = vmatpush2.msra.mxu0 0.0
    %583 = vmatprep.subr.mxu0 0.0
    %584 = vmatpush2.msra.mxu0 0.0
    %585 = vmatprep.subr.mxu0 0.0
    %586 = vmatpush2.msra.mxu0 0.0
    %587 = vmatprep.subr.mxu0 0.0
    %588 = vmatpush2.msra.mxu0 0.0
    %589 = vmatprep.subr.mxu0 0.0
    %590 = vmatpush2.msra.mxu0 0.0
    %591 = vmatprep.subr.mxu0 0.0
    %592 = vmatpush2.msra.mxu0 0.0
    %593 = vmatprep.subr.mxu0 0.0
    %594 = vmatpush2.msra.mxu0 0.0
    %595 = vmatprep.subr.mxu0 0.0
    %596 = vmatpush2.msra.mxu0 0.0
    %597 = vmatprep.subr.mxu0 0.0
    %598 = vmatpush2.msra.mxu0 0.0
    %599 = vmatprep.subr.mxu0 0.0
    %600 = vmatpush2.msra.mxu0 0.0
    %601 = vmatprep.subr.mxu0 0.0
    %602 = vmatpush2.msra.mxu0 0.0
    %603 = vmatprep.subr.mxu0 0.0
    %604 = vmatpush2.msra.mxu0 0.0
    %605 = vmatprep.subr.mxu0 0.0
    %606 = vmatpush2.msra.mxu0 0.0
    %607 = vmatprep.mubr.f32.mxu0 0.0
    %608 = vmatmul.mubr.f32.gmra.mxu0 %v538
    %v609 = vpop.f32.mrf.mxu0
    %v610 = vadd.f32 0.0, %v609
    %v611 = vpop.f32.mrf.mxu0
    %612 = vmatprep.mubr.f32.mxu0 0.0
    %613 = vmatmul.mubr.f32.gmra.mxu0 %v541
    %v614 = vpop.f32.mrf.mxu0
    %v615 = vadd.f32 0.0, %v614
    %v616 = vpop.f32.mrf.mxu0
    %617 = vdwg.mxu0
    %618 = vrot.lane.b32.xlu0 %v193, 64
    %v619 = vpop.permute.xlu0 %618
    %620 = vrot.lane.b32.xlu0 %v199, 64
    %v621 = vpop.permute.xlu0 %620
    %v625 = vsel %vm381, %v408, 0
    %v628 = vsel %vm381, %v409, 0
    %630 = vmatprep.subr.mxu0 0.0
    %631 = vmatpush1.msra.mxu0 0.0
    %632 = vmatprep.subr.mxu0 0.0
    %633 = vmatpush1.msra.mxu0 0.0
    %634 = vmatprep.subr.mxu0 0.0
    %635 = vmatpush1.msra.mxu0 0.0
    %636 = vmatprep.subr.mxu0 0.0
    %637 = vmatpush1.msra.mxu0 0.0
    %638 = vmatprep.subr.mxu0 0.0
    %639 = vmatpush1.msra.mxu0 0.0
    %640 = vmatprep.subr.mxu0 0.0
    %641 = vmatpush1.msra.mxu0 0.0
    %642 = vmatprep.subr.mxu0 0.0
    %643 = vmatpush1.msra.mxu0 0.0
    %644 = vmatprep.subr.mxu0 0.0
    %645 = vmatpush1.msra.mxu0 0.0
    %646 = vmatprep.subr.mxu0 0.0
    %647 = vmatpush1.msra.mxu0 0.0
    %648 = vmatprep.subr.mxu0 0.0
    %649 = vmatpush1.msra.mxu0 0.0
    %650 = vmatprep.subr.mxu0 0.0
    %651 = vmatpush1.msra.mxu0 0.0
    %652 = vmatprep.subr.mxu0 0.0
    %653 = vmatpush1.msra.mxu0 0.0
    %654 = vmatprep.subr.mxu0 0.0
    %655 = vmatpush1.msra.mxu0 0.0
    %656 = vmatprep.subr.mxu0 0.0
    %657 = vmatpush1.msra.mxu0 0.0
    %658 = vmatprep.subr.mxu0 0.0
    %659 = vmatpush1.msra.mxu0 %v621
    %660 = vmatprep.subr.mxu0 0.0
    %661 = vmatpush1.msra.mxu0 %v619
    %662 = vmatprep.subr.mxu0 0.0
    %663 = vmatpush2.msra.mxu0 0.0
    %664 = vmatprep.subr.mxu0 0.0
    %665 = vmatpush2.msra.mxu0 0.0
    %666 = vmatprep.subr.mxu0 0.0
    %667 = vmatpush2.msra.mxu0 0.0
    %668 = vmatprep.subr.mxu0 0.0
    %669 = vmatpush2.msra.mxu0 0.0
    %670 = vmatprep.subr.mxu0 0.0
    %671 = vmatpush2.msra.mxu0 0.0
    %672 = vmatprep.subr.mxu0 0.0
    %673 = vmatpush2.msra.mxu0 0.0
    %674 = vmatprep.subr.mxu0 0.0
    %675 = vmatpush2.msra.mxu0 0.0
    %676 = vmatprep.subr.mxu0 0.0
    %677 = vmatpush2.msra.mxu0 0.0
    %678 = vmatprep.subr.mxu0 0.0
    %679 = vmatpush2.msra.mxu0 0.0
    %680 = vmatprep.subr.mxu0 0.0
    %681 = vmatpush2.msra.mxu0 0.0
    %682 = vmatprep.subr.mxu0 0.0
    %683 = vmatpush2.msra.mxu0 0.0
    %684 = vmatprep.subr.mxu0 0.0
    %685 = vmatpush2.msra.mxu0 0.0
    %686 = vmatprep.subr.mxu0 0.0
    %687 = vmatpush2.msra.mxu0 0.0
    %688 = vmatprep.subr.mxu0 0.0
    %689 = vmatpush2.msra.mxu0 0.0
    %690 = vmatprep.subr.mxu0 0.0
    %691 = vmatpush2.msra.mxu0 0.0
    %692 = vmatprep.subr.mxu0 0.0
    %693 = vmatpush2.msra.mxu0 0.0
    %694 = vmatprep.mubr.f32.mxu0 0.0
    %695 = vmatmul.mubr.f32.gmra.mxu0 %v625
    %v696 = vpop.f32.mrf.mxu0
    %v697 = vadd.f32 %v610, %v696
    %v698 = vpop.f32.mrf.mxu0
    %699 = vmatprep.mubr.f32.mxu0 0.0
    %700 = vmatmul.mubr.f32.gmra.mxu0 %v628
    %v701 = vpop.f32.mrf.mxu0
    %v702 = vadd.f32 %v615, %v701
    %v703 = vpop.f32.mrf.mxu0
    %704 = vdwg.mxu0
    %705 = vrot.lane.b32.xlu0 %v193, 112
    %v706 = vpop.permute.xlu0 %705
    %707 = vrot.lane.b32.xlu0 %v199, 112
    %v708 = vpop.permute.xlu0 %707
    %709 = vrot.lane.b32.xlu0 %v193, 80
    %v710 = vpop.permute.xlu0 %709
    %711 = vrot.lane.b32.xlu0 %v199, 80
    %v712 = vpop.permute.xlu0 %711
    %v713 = vsel %vm295, %v706, 0
    %v715 = vsel %vm295, %v708, 0
    %v717 = vsel %vm295, %v710, 0
    %v719 = vsel %vm295, %v712, 0
    %721 = vmatprep.subr.mxu0 0.0
    %722 = vmatpush1.xpose.msra.mxu0 0.0
    %723 = vmatprep.subr.mxu0 0.0
    %724 = vmatpush1.xpose.msra.mxu0 0.0
    %725 = vmatprep.subr.mxu0 0.0
    %726 = vmatpush1.xpose.msra.mxu0 0.0
    %727 = vmatprep.subr.mxu0 0.0
    %728 = vmatpush1.xpose.msra.mxu0 0.0
    %729 = vmatprep.subr.mxu0 0.0
    %730 = vmatpush1.xpose.msra.mxu0 0.0
    %731 = vmatprep.subr.mxu0 0.0
    %732 = vmatpush1.xpose.msra.mxu0 0.0
    %733 = vmatprep.subr.mxu0 0.0
    %734 = vmatpush1.xpose.msra.mxu0 0.0
    %735 = vmatprep.subr.mxu0 0.0
    %736 = vmatpush1.xpose.msra.mxu0 0.0
    %737 = vmatprep.subr.mxu0 0.0
    %738 = vmatpush1.xpose.msra.mxu0 0.0
    %739 = vmatprep.subr.mxu0 0.0
    %740 = vmatpush1.xpose.msra.mxu0 0.0
    %741 = vmatprep.subr.mxu0 0.0
    %742 = vmatpush1.xpose.msra.mxu0 0.0
    %743 = vmatprep.subr.mxu0 0.0
    %744 = vmatpush1.xpose.msra.mxu0 0.0
    %745 = vmatprep.subr.mxu0 0.0
    %746 = vmatpush1.xpose.msra.mxu0 0.0
    %747 = vmatprep.subr.mxu0 0.0
    %748 = vmatpush1.xpose.msra.mxu0 0.0
    %749 = vmatprep.subr.mxu0 0.0
    %750 = vmatpush1.xpose.msra.mxu0 %v719
    %751 = vmatprep.subr.mxu0 0.0
    %752 = vmatpush1.xpose.msra.mxu0 %v717
    %753 = vmatprep.subr.mxu0 0.0
    %754 = vmatpush2.xpose.msra.mxu0 0.0
    %755 = vmatprep.subr.mxu0 0.0
    %756 = vmatpush2.xpose.msra.mxu0 0.0
    %757 = vmatprep.subr.mxu0 0.0
    %758 = vmatpush2.xpose.msra.mxu0 0.0
    %759 = vmatprep.subr.mxu0 0.0
    %760 = vmatpush2.xpose.msra.mxu0 0.0
    %761 = vmatprep.subr.mxu0 0.0
    %762 = vmatpush2.xpose.msra.mxu0 0.0
    %763 = vmatprep.subr.mxu0 0.0
    %764 = vmatpush2.xpose.msra.mxu0 0.0
    %765 = vmatprep.subr.mxu0 0.0
    %766 = vmatpush2.xpose.msra.mxu0 0.0
    %767 = vmatprep.subr.mxu0 0.0
    %768 = vmatpush2.xpose.msra.mxu0 0.0
    %769 = vmatprep.subr.mxu0 0.0
    %770 = vmatpush2.xpose.msra.mxu0 0.0
    %771 = vmatprep.subr.mxu0 0.0
    %772 = vmatpush2.xpose.msra.mxu0 0.0
    %773 = vmatprep.subr.mxu0 0.0
    %774 = vmatpush2.xpose.msra.mxu0 0.0
    %775 = vmatprep.subr.mxu0 0.0
    %776 = vmatpush2.xpose.msra.mxu0 0.0
    %777 = vmatprep.subr.mxu0 0.0
    %778 = vmatpush2.xpose.msra.mxu0 0.0
    %779 = vmatprep.subr.mxu0 0.0
    %780 = vmatpush2.xpose.msra.mxu0 0.0
    %781 = vmatprep.subr.mxu0 0.0
    %782 = vmatpush2.xpose.msra.mxu0 0.0
    %783 = vmatprep.subr.mxu0 0.0
    %784 = vmatpush2.xpose.msra.mxu0 0.0
    %785 = vmatprep.mubr.f32.mxu0 0.0
    %786 = vmatmul.mubr.f32.gmra.mxu0 %v713
    %v787 = vpop.f32.mrf.mxu0
    %v788 = vadd.f32 0.0, %v787
    %v789 = vpop.f32.mrf.mxu0
    %790 = vmatprep.mubr.f32.mxu0 0.0
    %791 = vmatmul.mubr.f32.gmra.mxu0 %v715
    %v792 = vpop.f32.mrf.mxu0
    %v793 = vadd.f32 0.0, %v792
    %v794 = vpop.f32.mrf.mxu0
    %795 = vdwg.mxu0
    %v796 = vmul.f32 %v287, %v788
    %v797 = vmul.f32 %v288, %v793
    %v798 = vsel %vm381, %v796, -inf
    %799 = vmax.xlane.f32.xlu0 %v798
    %v800 = vpop.xlane.xlu0 %799
    %v801 = vsel %vm381, %v797, -inf
    %802 = vmax.xlane.f32.xlu0 %v801
    %v803 = vpop.xlane.xlu0 %802
    %v804 = vsub.f32 %v796, %v800
    %v805 = vsub.f32 %v797, %v803
    %v806 = vmul.f32 %v804, 1.442695
    %v807 = vpow.pop %v806
    %v808 = vmul.f32 %v805, 1.442695
    %v809 = vpow.pop %v808
    %v810 = vsel %vm381, %v807, 0.0
    %811 = vadd.xlane.f32.xlu0 %v810
    %v812 = vpop.xlane.xlu0 %811
    %v813 = vsel %vm381, %v809, 0.0
    %814 = vadd.xlane.f32.xlu0 %v813
    %v815 = vpop.xlane.xlu0 %814
    %v816 = vrcp.pop %v812
    %v817 = vrcp.pop %v815
    %v818 = vmul.f32 %v812, %v816
    %v819 = vmul.f32 %v815, %v817
    %v820 = vsub.f32 2.0, %v818
    %v821 = vsub.f32 2.0, %v819
    %v822 = vmul.f32 %v816, %v820
    %v823 = vmul.f32 %v817, %v821
    %v824 = vmul.f32 %v807, %v822
    %v825 = vmul.f32 %v809, %v823
    %v827 = vsel %vm381, %v824, 0
    %v830 = vsel %vm381, %v825, 0
    %832 = vmatprep.subr.mxu0 0.0
    %833 = vmatpush1.msra.mxu0 0.0
    %834 = vmatprep.subr.mxu0 0.0
    %835 = vmatpush1.msra.mxu0 0.0
    %836 = vmatprep.subr.mxu0 0.0
    %837 = vmatpush1.msra.mxu0 0.0
    %838 = vmatprep.subr.mxu0 0.0
    %839 = vmatpush1.msra.mxu0 0.0
    %840 = vmatprep.subr.mxu0 0.0
    %841 = vmatpush1.msra.mxu0 0.0
    %842 = vmatprep.subr.mxu0 0.0
    %843 = vmatpush1.msra.mxu0 0.0
    %844 = vmatprep.subr.mxu0 0.0
    %845 = vmatpush1.msra.mxu0 0.0
    %846 = vmatprep.subr.mxu0 0.0
    %847 = vmatpush1.msra.mxu0 0.0
    %848 = vmatprep.subr.mxu0 0.0
    %849 = vmatpush1.msra.mxu0 0.0
    %850 = vmatprep.subr.mxu0 0.0
    %851 = vmatpush1.msra.mxu0 0.0
    %852 = vmatprep.subr.mxu0 0.0
    %853 = vmatpush1.msra.mxu0 0.0
    %854 = vmatprep.subr.mxu0 0.0
    %855 = vmatpush1.msra.mxu0 0.0
    %856 = vmatprep.subr.mxu0 0.0
    %857 = vmatpush1.msra.mxu0 0.0
    %858 = vmatprep.subr.mxu0 0.0
    %859 = vmatpush1.msra.mxu0 0.0
    %860 = vmatprep.subr.mxu0 0.0
    %861 = vmatpush1.msra.mxu0 %v201
    %862 = vmatprep.subr.mxu0 0.0
    %863 = vmatpush1.msra.mxu0 %v195
    %864 = vmatprep.subr.mxu0 0.0
    %865 = vmatpush2.msra.mxu0 0.0
    %866 = vmatprep.subr.mxu0 0.0
    %867 = vmatpush2.msra.mxu0 0.0
    %868 = vmatprep.subr.mxu0 0.0
    %869 = vmatpush2.msra.mxu0 0.0
    %870 = vmatprep.subr.mxu0 0.0
    %871 = vmatpush2.msra.mxu0 0.0
    %872 = vmatprep.subr.mxu0 0.0
    %873 = vmatpush2.msra.mxu0 0.0
    %874 = vmatprep.subr.mxu0 0.0
    %875 = vmatpush2.msra.mxu0 0.0
    %876 = vmatprep.subr.mxu0 0.0
    %877 = vmatpush2.msra.mxu0 0.0
    %878 = vmatprep.subr.mxu0 0.0
    %879 = vmatpush2.msra.mxu0 0.0
    %880 = vmatprep.subr.mxu0 0.0
    %881 = vmatpush2.msra.mxu0 0.0
    %882 = vmatprep.subr.mxu0 0.0
    %883 = vmatpush2.msra.mxu0 0.0
    %884 = vmatprep.subr.mxu0 0.0
    %885 = vmatpush2.msra.mxu0 0.0
    %886 = vmatprep.subr.mxu0 0.0
    %887 = vmatpush2.msra.mxu0 0.0
    %888 = vmatprep.subr.mxu0 0.0
    %889 = vmatpush2.msra.mxu0 0.0
    %890 = vmatprep.subr.mxu0 0.0
    %891 = vmatpush2.msra.mxu0 0.0
    %892 = vmatprep.subr.mxu0 0.0
    %893 = vmatpush2.msra.mxu0 0.0
    %894 = vmatprep.subr.mxu0 0.0
    %895 = vmatpush2.msra.mxu0 0.0
    %896 = vmatprep.mubr.f32.mxu0 0.0
    %897 = vmatmul.mubr.f32.gmra.mxu0 %v827
    %v898 = vpop.f32.mrf.mxu0
    %v899 = vadd.f32 0.0, %v898
    %v900 = vpop.f32.mrf.mxu0
    %901 = vmatprep.mubr.f32.mxu0 0.0
    %902 = vmatmul.mubr.f32.gmra.mxu0 %v830
    %v903 = vpop.f32.mrf.mxu0
    %v904 = vadd.f32 0.0, %v903
    %v905 = vpop.f32.mrf.mxu0
    %906 = vdwg.mxu0
    %v907 = vadd.f32 %v697, %v899
    %v908 = vadd.f32 %v702, %v904
    %909 = vrot.lane.b32.xlu0 %v193, 104
    %v910 = vpop.permute.xlu0 %909
    %911 = vrot.lane.b32.xlu0 %v199, 104
    %v912 = vpop.permute.xlu0 %911
    %913 = vrot.lane.b32.xlu0 %v193, 72
    %v914 = vpop.permute.xlu0 %913
    %915 = vrot.lane.b32.xlu0 %v199, 72
    %v916 = vpop.permute.xlu0 %915
    %v917 = vsel %vm295, %v910, 0
    %v919 = vsel %vm295, %v912, 0
    %v921 = vsel %vm295, %v914, 0
    %v923 = vsel %vm295, %v916, 0
    %925 = vmatprep.subr.mxu0 0.0
    %926 = vmatpush1.xpose.msra.mxu0 0.0
    %927 = vmatprep.subr.mxu0 0.0
    %928 = vmatpush1.xpose.msra.mxu0 0.0
    %929 = vmatprep.subr.mxu0 0.0
    %930 = vmatpush1.xpose.msra.mxu0 0.0
    %931 = vmatprep.subr.mxu0 0.0
    %932 = vmatpush1.xpose.msra.mxu0 0.0
    %933 = vmatprep.subr.mxu0 0.0
    %934 = vmatpush1.xpose.msra.mxu0 0.0
    %935 = vmatprep.subr.mxu0 0.0
    %936 = vmatpush1.xpose.msra.mxu0 0.0
    %937 = vmatprep.subr.mxu0 0.0
    %938 = vmatpush1.xpose.msra.mxu0 0.0
    %939 = vmatprep.subr.mxu0 0.0
    %940 = vmatpush1.xpose.msra.mxu0 0.0
    %941 = vmatprep.subr.mxu0 0.0
    %942 = vmatpush1.xpose.msra.mxu0 0.0
    %943 = vmatprep.subr.mxu0 0.0
    %944 = vmatpush1.xpose.msra.mxu0 0.0
    %945 = vmatprep.subr.mxu0 0.0
    %946 = vmatpush1.xpose.msra.mxu0 0.0
    %947 = vmatprep.subr.mxu0 0.0
    %948 = vmatpush1.xpose.msra.mxu0 0.0
    %949 = vmatprep.subr.mxu0 0.0
    %950 = vmatpush1.xpose.msra.mxu0 0.0
    %951 = vmatprep.subr.mxu0 0.0
    %952 = vmatpush1.xpose.msra.mxu0 0.0
    %953 = vmatprep.subr.mxu0 0.0
    %954 = vmatpush1.xpose.msra.mxu0 %v923
    %955 = vmatprep.subr.mxu0 0.0
    %956 = vmatpush1.xpose.msra.mxu0 %v921
    %957 = vmatprep.subr.mxu0 0.0
    %958 = vmatpush2.xpose.msra.mxu0 0.0
    %959 = vmatprep.subr.mxu0 0.0
    %960 = vmatpush2.xpose.msra.mxu0 0.0
    %961 = vmatprep.subr.mxu0 0.0
    %962 = vmatpush2.xpose.msra.mxu0 0.0
    %963 = vmatprep.subr.mxu0 0.0
    %964 = vmatpush2.xpose.msra.mxu0 0.0
    %965 = vmatprep.subr.mxu0 0.0
    %966 = vmatpush2.xpose.msra.mxu0 0.0
    %967 = vmatprep.subr.mxu0 0.0
    %968 = vmatpush2.xpose.msra.mxu0 0.0
    %969 = vmatprep.subr.mxu0 0.0
    %970 = vmatpush2.xpose.msra.mxu0 0.0
    %971 = vmatprep.subr.mxu0 0.0
    %972 = vmatpush2.xpose.msra.mxu0 0.0
    %973 = vmatprep.subr.mxu0 0.0
    %974 = vmatpush2.xpose.msra.mxu0 0.0
    %975 = vmatprep.subr.mxu0 0.0
    %976 = vmatpush2.xpose.msra.mxu0 0.0
    %977 = vmatprep.subr.mxu0 0.0
    %978 = vmatpush2.xpose.msra.mxu0 0.0
    %979 = vmatprep.subr.mxu0 0.0
    %980 = vmatpush2.xpose.msra.mxu0 0.0
    %981 = vmatprep.subr.mxu0 0.0
    %982 = vmatpush2.xpose.msra.mxu0 0.0
    %983 = vmatprep.subr.mxu0 0.0
    %984 = vmatpush2.xpose.msra.mxu0 0.0
    %985 = vmatprep.subr.mxu0 0.0
    %986 = vmatpush2.xpose.msra.mxu0 0.0
    %987 = vmatprep.subr.mxu0 0.0
    %988 = vmatpush2.xpose.msra.mxu0 0.0
    %989 = vmatprep.mubr.f32.mxu0 0.0
    %990 = vmatmul.mubr.f32.gmra.mxu0 %v917
    %v991 = vpop.f32.mrf.mxu0
    %v992 = vadd.f32 0.0, %v991
    %v993 = vpop.f32.mrf.mxu0
    %994 = vmatprep.mubr.f32.mxu0 0.0
    %995 = vmatmul.mubr.f32.gmra.mxu0 %v919
    %v996 = vpop.f32.mrf.mxu0
    %v997 = vadd.f32 0.0, %v996
    %v998 = vpop.f32.mrf.mxu0
    %999 = vdwg.mxu0
    %v1000 = vmul.f32 %v287, %v992
    %v1001 = vmul.f32 %v288, %v997
    %v1002 = vsel %vm381, %v1000, -inf
    %1003 = vmax.xlane.f32.xlu0 %v1002
    %v1004 = vpop.xlane.xlu0 %1003
    %v1005 = vsel %vm381, %v1001, -inf
    %1006 = vmax.xlane.f32.xlu0 %v1005
    %v1007 = vpop.xlane.xlu0 %1006
    %v1008 = vsub.f32 %v1000, %v1004
    %v1009 = vsub.f32 %v1001, %v1007
    %v1010 = vmul.f32 %v1008, 1.442695
    %v1011 = vpow.pop %v1010
    %v1012 = vmul.f32 %v1009, 1.442695
    %v1013 = vpow.pop %v1012
    %v1014 = vsel %vm381, %v1011, 0.0
    %1015 = vadd.xlane.f32.xlu0 %v1014
    %v1016 = vpop.xlane.xlu0 %1015
    %v1017 = vsel %vm381, %v1013, 0.0
    %1018 = vadd.xlane.f32.xlu0 %v1017
    %v1019 = vpop.xlane.xlu0 %1018
    %v1020 = vrcp.pop %v1016
    %v1021 = vrcp.pop %v1019
    %v1022 = vmul.f32 %v1016, %v1020
    %v1023 = vmul.f32 %v1019, %v1021
    %v1024 = vsub.f32 2.0, %v1022
    %v1025 = vsub.f32 2.0, %v1023
    %v1026 = vmul.f32 %v1020, %v1024
    %v1027 = vmul.f32 %v1021, %v1025
    %v1028 = vmul.f32 %v1011, %v1026
    %v1029 = vmul.f32 %v1013, %v1027
    %1032 = vrot.lane.b32.xlu0 %v195, 96
    %v1033 = vpop.permute.xlu0 %1032
    %1034 = vrot.lane.b32.xlu0 %v201, 96
    %v1035 = vpop.permute.xlu0 %1034
    %v1039 = vsel %vm381, %v1028, 0
    %v1042 = vsel %vm381, %v1029, 0
    %1044 = vmatprep.subr.mxu0 0.0
    %1045 = vmatpush1.msra.mxu0 0.0
    %1046 = vmatprep.subr.mxu0 0.0
    %1047 = vmatpush1.msra.mxu0 0.0
    %1048 = vmatprep.subr.mxu0 0.0
    %1049 = vmatpush1.msra.mxu0 0.0
    %1050 = vmatprep.subr.mxu0 0.0
    %1051 = vmatpush1.msra.mxu0 0.0
    %1052 = vmatprep.subr.mxu0 0.0
    %1053 = vmatpush1.msra.mxu0 0.0
    %1054 = vmatprep.subr.mxu0 0.0
    %1055 = vmatpush1.msra.mxu0 0.0
    %1056 = vmatprep.subr.mxu0 0.0
    %1057 = vmatpush1.msra.mxu0 0.0
    %1058 = vmatprep.subr.mxu0 0.0
    %1059 = vmatpush1.msra.mxu0 0.0
    %1060 = vmatprep.subr.mxu0 0.0
    %1061 = vmatpush1.msra.mxu0 0.0
    %1062 = vmatprep.subr.mxu0 0.0
    %1063 = vmatpush1.msra.mxu0 0.0
    %1064 = vmatprep.subr.mxu0 0.0
    %1065 = vmatpush1.msra.mxu0 0.0
    %1066 = vmatprep.subr.mxu0 0.0
    %1067 = vmatpush1.msra.mxu0 0.0
    %1068 = vmatprep.subr.mxu0 0.0
    %1069 = vmatpush1.msra.mxu0 0.0
    %1070 = vmatprep.subr.mxu0 0.0
    %1071 = vmatpush1.msra.mxu0 0.0
    %1072 = vmatprep.subr.mxu0 0.0
    %1073 = vmatpush1.msra.mxu0 %v1035
    %1074 = vmatprep.subr.mxu0 0.0
    %1075 = vmatpush1.msra.mxu0 %v1033
    %1076 = vmatprep.subr.mxu0 0.0
    %1077 = vmatpush2.msra.mxu0 0.0
    %1078 = vmatprep.subr.mxu0 0.0
    %1079 = vmatpush2.msra.mxu0 0.0
    %1080 = vmatprep.subr.mxu0 0.0
    %1081 = vmatpush2.msra.mxu0 0.0
    %1082 = vmatprep.subr.mxu0 0.0
    %1083 = vmatpush2.msra.mxu0 0.0
    %1084 = vmatprep.subr.mxu0 0.0
    %1085 = vmatpush2.msra.mxu0 0.0
    %1086 = vmatprep.subr.mxu0 0.0
    %1087 = vmatpush2.msra.mxu0 0.0
    %1088 = vmatprep.subr.mxu0 0.0
    %1089 = vmatpush2.msra.mxu0 0.0
    %1090 = vmatprep.subr.mxu0 0.0
    %1091 = vmatpush2.msra.mxu0 0.0
    %1092 = vmatprep.subr.mxu0 0.0
    %1093 = vmatpush2.msra.mxu0 0.0
    %1094 = vmatprep.subr.mxu0 0.0
    %1095 = vmatpush2.msra.mxu0 0.0
    %1096 = vmatprep.subr.mxu0 0.0
    %1097 = vmatpush2.msra.mxu0 0.0
    %1098 = vmatprep.subr.mxu0 0.0
    %1099 = vmatpush2.msra.mxu0 0.0
    %1100 = vmatprep.subr.mxu0 0.0
    %1101 = vmatpush2.msra.mxu0 0.0
    %1102 = vmatprep.subr.mxu0 0.0
    %1103 = vmatpush2.msra.mxu0 0.0
    %1104 = vmatprep.subr.mxu0 0.0
    %1105 = vmatpush2.msra.mxu0 0.0
    %1106 = vmatprep.subr.mxu0 0.0
    %1107 = vmatpush2.msra.mxu0 0.0
    %1108 = vmatprep.mubr.f32.mxu0 0.0
    %1109 = vmatmul.mubr.f32.gmra.mxu0 %v1039
    %v1110 = vpop.f32.mrf.mxu0
    %v1111 = vadd.f32 0.0, %v1110
    %v1112 = vpop.f32.mrf.mxu0
    %1113 = vmatprep.mubr.f32.mxu0 0.0
    %1114 = vmatmul.mubr.f32.gmra.mxu0 %v1042
    %v1115 = vpop.f32.mrf.mxu0
    %v1116 = vadd.f32 0.0, %v1115
    %v1117 = vpop.f32.mrf.mxu0
    %1118 = vdwg.mxu0
    %v1119 = vadd.f32 %v907, %v1111
    %v1120 = vadd.f32 %v908, %v1116
    %v1121 = vadd.f32 %v1119, %v52
    %v1122 = vadd.f32 %v1120, %v53
    %v1123 = vsel %vm77, %v1121, 0.0
    %v1124 = vsel %vm77, %v1122, 0.0
    %v1125 = vadd.f32 %v1123, %v1124
    %v1126 = vrot.slane %v1125, 4
    %v1127 = vadd.f32 %v1125, %v1126
    %v1128 = vrot.slane %v1127, 2
    %v1129 = vadd.f32 %v1127, %v1128
    %v1130 = vrot.slane %v1129, 1
    %v1131 = vadd.f32 %v1129, %v1130
    %v1132 = vrcp.pop 16.0
    %v1133 = vmul.f32 %v1131, %v1132
    %v1134 = vmul.f32 %v1121, %v1121
    %v1135 = vmul.f32 %v1122, %v1122
    %v1136 = vsel %vm77, %v1134, 0.0
    %v1137 = vsel %vm77, %v1135, 0.0
    %v1138 = vadd.f32 %v1136, %v1137
    %v1139 = vrot.slane %v1138, 4
    %v1140 = vadd.f32 %v1138, %v1139
    %v1141 = vrot.slane %v1140, 2
    %v1142 = vadd.f32 %v1140, %v1141
    %v1143 = vrot.slane %v1142, 1
    %v1144 = vadd.f32 %v1142, %v1143
    %v1145 = vmul.f32 %v1144, %v1132
    %v1146 = vmul.f32 %v1133, %v1133
    %v1147 = vsub.f32 %v1145, %v1146
    %v1148 = vsub.f32 %v1121, %v1133
    %v1149 = vsub.f32 %v1122, %v1133
    %v1150 = vadd.f32 %v1147, 1e-05
    %v1151 = vrsqrt.pop %v1150
    %v1152 = vmul.f32 %v1148, %v1151
    %v1153 = vmul.f32 %v1149, %v1151
    %v1154 = vlaneseq
    %v1155 = vshrl.u32 %v1154, 7
    %v1156 = vsub.s32 0, %v1155
    %v1157 = vrot.slane %v68, %v1156
    %v1158 = vmul.f32 %v1152, %v1157
    %v1159 = vmul.f32 %v1153, %v1157
    %v1160 = vlaneseq
    %v1161 = vshrl.u32 %v1160, 7
    %v1162 = vsub.s32 1, %v1161
    %v1163 = vrot.slane %v68, %v1162
    %v1164 = vadd.f32 %v1158, %v1163
    %v1165 = vadd.f32 %v1159, %v1163
    %s1166 = scalar_lea.vmem [#allocation2], 16
    %v1167 = vld [vmem:[%s1166] sm:$0xff]
    %v1168 = vld [vmem:[%s1166 + $0x8] sm:$0xff]
    %1171 = vrot.lane.b32.xlu0 %v205, 96
    %v1172 = vpop.permute.xlu0 %1171
    %1173 = vrot.lane.b32.xlu0 %v211, 96
    %v1174 = vpop.permute.xlu0 %1173
    %v1175 = vsel %vm295, %v205, 0
    %v1177 = vsel %vm295, %v211, 0
    %v1179 = vsel %vm295, %v1172, 0
    %v1181 = vsel %vm295, %v1174, 0
    %1183 = vmatprep.subr.mxu0 0.0
    %1184 = vmatpush1.xpose.msra.mxu0 0.0
    %1185 = vmatprep.subr.mxu0 0.0
    %1186 = vmatpush1.xpose.msra.mxu0 0.0
    %1187 = vmatprep.subr.mxu0 0.0
    %1188 = vmatpush1.xpose.msra.mxu0 0.0
    %1189 = vmatprep.subr.mxu0 0.0
    %1190 = vmatpush1.xpose.msra.mxu0 0.0
    %1191 = vmatprep.subr.mxu0 0.0
    %1192 = vmatpush1.xpose.msra.mxu0 0.0
    %1193 = vmatprep.subr.mxu0 0.0
    %1194 = vmatpush1.xpose.msra.mxu0 0.0
    %1195 = vmatprep.subr.mxu0 0.0
    %1196 = vmatpush1.xpose.msra.mxu0 0.0
    %1197 = vmatprep.subr.mxu0 0.0
    %1198 = vmatpush1.xpose.msra.mxu0 0.0
    %1199 = vmatprep.subr.mxu0 0.0
    %1200 = vmatpush1.xpose.msra.mxu0 0.0
    %1201 = vmatprep.subr.mxu0 0.0
    %1202 = vmatpush1.xpose.msra.mxu0 0.0
    %1203 = vmatprep.subr.mxu0 0.0
    %1204 = vmatpush1.xpose.msra.mxu0 0.0
    %1205 = vmatprep.subr.mxu0 0.0
    %1206 = vmatpush1.xpose.msra.mxu0 0.0
    %1207 = vmatprep.subr.mxu0 0.0
    %1208 = vmatpush1.xpose.msra.mxu0 0.0
    %1209 = vmatprep.subr.mxu0 0.0
    %1210 = vmatpush1.xpose.msra.mxu0 0.0
    %1211 = vmatprep.subr.mxu0 0.0
    %1212 = vmatpush1.xpose.msra.mxu0 %v1181
    %1213 = vmatprep.subr.mxu0 0.0
    %1214 = vmatpush1.xpose.msra.mxu0 %v1179
    %1215 = vmatprep.subr.mxu0 0.0
    %1216 = vmatpush2.xpose.msra.mxu0 0.0
    %1217 = vmatprep.subr.mxu0 0.0
    %1218 = vmatpush2.xpose.msra.mxu0 0.0
    %1219 = vmatprep.subr.mxu0 0.0
    %1220 = vmatpush2.xpose.msra.mxu0 0.0
    %1221 = vmatprep.subr.mxu0 0.0
    %1222 = vmatpush2.xpose.msra.mxu0 0.0
    %1223 = vmatprep.subr.mxu0 0.0
    %1224 = vmatpush2.xpose.msra.mxu0 0.0
    %1225 = vmatprep.subr.mxu0 0.0
    %1226 = vmatpush2.xpose.msra.mxu0 0.0
    %1227 = vmatprep.subr.mxu0 0.0
    %1228 = vmatpush2.xpose.msra.mxu0 0.0
    %1229 = vmatprep.subr.mxu0 0.0
    %1230 = vmatpush2.xpose.msra.mxu0 0.0
    %1231 = vmatprep.subr.mxu0 0.0
    %1232 = vmatpush2.xpose.msra.mxu0 0.0
    %1233 = vmatprep.subr.mxu0 0.0
    %1234 = vmatpush2.xpose.msra.mxu0 0.0
    %1235 = vmatprep.subr.mxu0 0.0
    %1236 = vmatpush2.xpose.msra.mxu0 0.0
    %1237 = vmatprep.subr.mxu0 0.0
    %1238 = vmatpush2.xpose.msra.mxu0 0.0
    %1239 = vmatprep.subr.mxu0 0.0
    %1240 = vmatpush2.xpose.msra.mxu0 0.0
    %1241 = vmatprep.subr.mxu0 0.0
    %1242 = vmatpush2.xpose.msra.mxu0 0.0
    %1243 = vmatprep.subr.mxu0 0.0
    %1244 = vmatpush2.xpose.msra.mxu0 0.0
    %1245 = vmatprep.subr.mxu0 0.0
    %1246 = vmatpush2.xpose.msra.mxu0 0.0
    %1247 = vmatprep.mubr.f32.mxu0 0.0
    %1248 = vmatmul.mubr.f32.gmra.mxu0 %v1175
    %v1249 = vpop.f32.mrf.mxu0
    %v1250 = vadd.f32 0.0, %v1249
    %v1251 = vpop.f32.mrf.mxu0
    %1252 = vmatprep.mubr.f32.mxu0 0.0
    %1253 = vmatmul.mubr.f32.gmra.mxu0 %v1177
    %v1254 = vpop.f32.mrf.mxu0
    %v1255 = vadd.f32 0.0, %v1254
    %v1256 = vpop.f32.mrf.mxu0
    %1257 = vdwg.mxu0
    %v1258 = vmul.f32 %v1167, %v1250
    %v1259 = vmul.f32 %v1168, %v1255
    %v1260 = vsel %vm381, %v1258, -inf
    %1261 = vmax.xlane.f32.xlu0 %v1260
    %v1262 = vpop.xlane.xlu0 %1261
    %v1263 = vsel %vm381, %v1259, -inf
    %1264 = vmax.xlane.f32.xlu0 %v1263
    %v1265 = vpop.xlane.xlu0 %1264
    %v1266 = vsub.f32 %v1258, %v1262
    %v1267 = vsub.f32 %v1259, %v1265
    %v1268 = vmul.f32 %v1266, 1.442695
    %v1269 = vpow.pop %v1268
    %v1270 = vmul.f32 %v1267, 1.442695
    %v1271 = vpow.pop %v1270
    %v1272 = vsel %vm381, %v1269, 0.0
    %1273 = vadd.xlane.f32.xlu0 %v1272
    %v1274 = vpop.xlane.xlu0 %1273
    %v1275 = vsel %vm381, %v1271, 0.0
    %1276 = vadd.xlane.f32.xlu0 %v1275
    %v1277 = vpop.xlane.xlu0 %1276
    %v1278 = vrcp.pop %v1274
    %v1279 = vrcp.pop %v1277
    %v1280 = vmul.f32 %v1274, %v1278
    %v1281 = vmul.f32 %v1277, %v1279
    %v1282 = vsub.f32 2.0, %v1280
    %v1283 = vsub.f32 2.0, %v1281
    %v1284 = vmul.f32 %v1278, %v1282
    %v1285 = vmul.f32 %v1279, %v1283
    %v1286 = vmul.f32 %v1269, %v1284
    %v1287 = vmul.f32 %v1271, %v1285
    %1288 = vrot.lane.b32.xlu0 %v205, 120
    %v1289 = vpop.permute.xlu0 %1288
    %1290 = vrot.lane.b32.xlu0 %v211, 120
    %v1291 = vpop.permute.xlu0 %1290
    %1292 = vrot.lane.b32.xlu0 %v205, 88
    %v1293 = vpop.permute.xlu0 %1292
    %1294 = vrot.lane.b32.xlu0 %v211, 88
    %v1295 = vpop.permute.xlu0 %1294
    %v1296 = vsel %vm295, %v1289, 0
    %v1298 = vsel %vm295, %v1291, 0
    %v1300 = vsel %vm295, %v1293, 0
    %v1302 = vsel %vm295, %v1295, 0
    %1304 = vmatprep.subr.mxu0 0.0
    %1305 = vmatpush1.xpose.msra.mxu0 0.0
    %1306 = vmatprep.subr.mxu0 0.0
    %1307 = vmatpush1.xpose.msra.mxu0 0.0
    %1308 = vmatprep.subr.mxu0 0.0
    %1309 = vmatpush1.xpose.msra.mxu0 0.0
    %1310 = vmatprep.subr.mxu0 0.0
    %1311 = vmatpush1.xpose.msra.mxu0 0.0
    %1312 = vmatprep.subr.mxu0 0.0
    %1313 = vmatpush1.xpose.msra.mxu0 0.0
    %1314 = vmatprep.subr.mxu0 0.0
    %1315 = vmatpush1.xpose.msra.mxu0 0.0
    %1316 = vmatprep.subr.mxu0 0.0
    %1317 = vmatpush1.xpose.msra.mxu0 0.0
    %1318 = vmatprep.subr.mxu0 0.0
    %1319 = vmatpush1.xpose.msra.mxu0 0.0
    %1320 = vmatprep.subr.mxu0 0.0
    %1321 = vmatpush1.xpose.msra.mxu0 0.0
    %1322 = vmatprep.subr.mxu0 0.0
    %1323 = vmatpush1.xpose.msra.mxu0 0.0
    %1324 = vmatprep.subr.mxu0 0.0
    %1325 = vmatpush1.xpose.msra.mxu0 0.0
    %1326 = vmatprep.subr.mxu0 0.0
    %1327 = vmatpush1.xpose.msra.mxu0 0.0
    %1328 = vmatprep.subr.mxu0 0.0
    %1329 = vmatpush1.xpose.msra.mxu0 0.0
    %1330 = vmatprep.subr.mxu0 0.0
    %1331 = vmatpush1.xpose.msra.mxu0 0.0
    %1332 = vmatprep.subr.mxu0 0.0
    %1333 = vmatpush1.xpose.msra.mxu0 %v1302
    %1334 = vmatprep.subr.mxu0 0.0
    %1335 = vmatpush1.xpose.msra.mxu0 %v1300
    %1336 = vmatprep.subr.mxu0 0.0
    %1337 = vmatpush2.xpose.msra.mxu0 0.0
    %1338 = vmatprep.subr.mxu0 0.0
    %1339 = vmatpush2.xpose.msra.mxu0 0.0
    %1340 = vmatprep.subr.mxu0 0.0
    %1341 = vmatpush2.xpose.msra.mxu0 0.0
    %1342 = vmatprep.subr.mxu0 0.0
    %1343 = vmatpush2.xpose.msra.mxu0 0.0
    %1344 = vmatprep.subr.mxu0 0.0
    %1345 = vmatpush2.xpose.msra.mxu0 0.0
    %1346 = vmatprep.subr.mxu0 0.0
    %1347 = vmatpush2.xpose.msra.mxu0 0.0
    %1348 = vmatprep.subr.mxu0 0.0
    %1349 = vmatpush2.xpose.msra.mxu0 0.0
    %1350 = vmatprep.subr.mxu0 0.0
    %1351 = vmatpush2.xpose.msra.mxu0 0.0
    %1352 = vmatprep.subr.mxu0 0.0
    %1353 = vmatpush2.xpose.msra.mxu0 0.0
    %1354 = vmatprep.subr.mxu0 0.0
    %1355 = vmatpush2.xpose.msra.mxu0 0.0
    %1356 = vmatprep.subr.mxu0 0.0
    %1357 = vmatpush2.xpose.msra.mxu0 0.0
    %1358 = vmatprep.subr.mxu0 0.0
    %1359 = vmatpush2.xpose.msra.mxu0 0.0
    %1360 = vmatprep.subr.mxu0 0.0
    %1361 = vmatpush2.xpose.msra.mxu0 0.0
    %1362 = vmatprep.subr.mxu0 0.0
    %1363 = vmatpush2.xpose.msra.mxu0 0.0
    %1364 = vmatprep.subr.mxu0 0.0
    %1365 = vmatpush2.xpose.msra.mxu0 0.0
    %1366 = vmatprep.subr.mxu0 0.0
    %1367 = vmatpush2.xpose.msra.mxu0 0.0
    %1368 = vmatprep.mubr.f32.mxu0 0.0
    %1369 = vmatmul.mubr.f32.gmra.mxu0 %v1296
    %v1370 = vpop.f32.mrf.mxu0
    %v1371 = vadd.f32 0.0, %v1370
    %v1372 = vpop.f32.mrf.mxu0
    %1373 = vmatprep.mubr.f32.mxu0 0.0
    %1374 = vmatmul.mubr.f32.gmra.mxu0 %v1298
    %v1375 = vpop.f32.mrf.mxu0
    %v1376 = vadd.f32 0.0, %v1375
    %v1377 = vpop.f32.mrf.mxu0
    %1378 = vdwg.mxu0
    %v1379 = vmul.f32 %v1167, %v1371
    %v1380 = vmul.f32 %v1168, %v1376
    %v1381 = vsel %vm381, %v1379, -inf
    %1382 = vmax.xlane.f32.xlu0 %v1381
    %v1383 = vpop.xlane.xlu0 %1382
    %v1384 = vsel %vm381, %v1380, -inf
    %1385 = vmax.xlane.f32.xlu0 %v1384
    %v1386 = vpop.xlane.xlu0 %1385
    %v1387 = vsub.f32 %v1379, %v1383
    %v1388 = vsub.f32 %v1380, %v1386
    %v1389 = vmul.f32 %v1387, 1.442695
    %v1390 = vpow.pop %v1389
    %v1391 = vmul.f32 %v1388, 1.442695
    %v1392 = vpow.pop %v1391
    %v1393 = vsel %vm381, %v1390, 0.0
    %1394 = vadd.xlane.f32.xlu0 %v1393
    %v1395 = vpop.xlane.xlu0 %1394
    %v1396 = vsel %vm381, %v1392, 0.0
    %1397 = vadd.xlane.f32.xlu0 %v1396
    %v1398 = vpop.xlane.xlu0 %1397
    %v1399 = vrcp.pop %v1395
    %v1400 = vrcp.pop %v1398
    %v1401 = vmul.f32 %v1395, %v1399
    %v1402 = vmul.f32 %v1398, %v1400
    %v1403 = vsub.f32 2.0, %v1401
    %v1404 = vsub.f32 2.0, %v1402
    %v1405 = vmul.f32 %v1399, %v1403
    %v1406 = vmul.f32 %v1400, %v1404
    %v1407 = vmul.f32 %v1390, %v1405
    %v1408 = vmul.f32 %v1392, %v1406
    %1409 = vrot.lane.b32.xlu0 %v205, 32
    %v1410 = vpop.permute.xlu0 %1409
    %1411 = vrot.lane.b32.xlu0 %v211, 32
    %v1412 = vpop.permute.xlu0 %1411
    %v1416 = vsel %vm381, %v1407, 0
    %v1419 = vsel %vm381, %v1408, 0
    %1421 = vmatprep.subr.mxu0 0.0
    %1422 = vmatpush1.msra.mxu0 0.0
    %1423 = vmatprep.subr.mxu0 0.0
    %1424 = vmatpush1.msra.mxu0 0.0
    %1425 = vmatprep.subr.mxu0 0.0
    %1426 = vmatpush1.msra.mxu0 0.0
    %1427 = vmatprep.subr.mxu0 0.0
    %1428 = vmatpush1.msra.mxu0 0.0
    %1429 = vmatprep.subr.mxu0 0.0
    %1430 = vmatpush1.msra.mxu0 0.0
    %1431 = vmatprep.subr.mxu0 0.0
    %1432 = vmatpush1.msra.mxu0 0.0
    %1433 = vmatprep.subr.mxu0 0.0
    %1434 = vmatpush1.msra.mxu0 0.0
    %1435 = vmatprep.subr.mxu0 0.0
    %1436 = vmatpush1.msra.mxu0 0.0
    %1437 = vmatprep.subr.mxu0 0.0
    %1438 = vmatpush1.msra.mxu0 0.0
    %1439 = vmatprep.subr.mxu0 0.0
    %1440 = vmatpush1.msra.mxu0 0.0
    %1441 = vmatprep.subr.mxu0 0.0
    %1442 = vmatpush1.msra.mxu0 0.0
    %1443 = vmatprep.subr.mxu0 0.0
    %1444 = vmatpush1.msra.mxu0 0.0
    %1445 = vmatprep.subr.mxu0 0.0
    %1446 = vmatpush1.msra.mxu0 0.0
    %1447 = vmatprep.subr.mxu0 0.0
    %1448 = vmatpush1.msra.mxu0 0.0
    %1449 = vmatprep.subr.mxu0 0.0
    %1450 = vmatpush1.msra.mxu0 %v1412
    %1451 = vmatprep.subr.mxu0 0.0
    %1452 = vmatpush1.msra.mxu0 %v1410
    %1453 = vmatprep.subr.mxu0 0.0
    %1454 = vmatpush2.msra.mxu0 0.0
    %1455 = vmatprep.subr.mxu0 0.0
    %1456 = vmatpush2.msra.mxu0 0.0
    %1457 = vmatprep.subr.mxu0 0.0
    %1458 = vmatpush2.msra.mxu0 0.0
    %1459 = vmatprep.subr.mxu0 0.0
    %1460 = vmatpush2.msra.mxu0 0.0
    %1461 = vmatprep.subr.mxu0 0.0
    %1462 = vmatpush2.msra.mxu0 0.0
    %1463 = vmatprep.subr.mxu0 0.0
    %1464 = vmatpush2.msra.mxu0 0.0
    %1465 = vmatprep.subr.mxu0 0.0
    %1466 = vmatpush2.msra.mxu0 0.0
    %1467 = vmatprep.subr.mxu0 0.0
    %1468 = vmatpush2.msra.mxu0 0.0
    %1469 = vmatprep.subr.mxu0 0.0
    %1470 = vmatpush2.msra.mxu0 0.0
    %1471 = vmatprep.subr.mxu0 0.0
    %1472 = vmatpush2.msra.mxu0 0.0
    %1473 = vmatprep.subr.mxu0 0.0
    %1474 = vmatpush2.msra.mxu0 0.0
    %1475 = vmatprep.subr.mxu0 0.0
    %1476 = vmatpush2.msra.mxu0 0.0
    %1477 = vmatprep.subr.mxu0 0.0
    %1478 = vmatpush2.msra.mxu0 0.0
    %1479 = vmatprep.subr.mxu0 0.0
    %1480 = vmatpush2.msra.mxu0 0.0
    %1481 = vmatprep.subr.mxu0 0.0
    %1482 = vmatpush2.msra.mxu0 0.0
    %1483 = vmatprep.subr.mxu0 0.0
    %1484 = vmatpush2.msra.mxu0 0.0
    %1485 = vmatprep.mubr.f32.mxu0 0.0
    %1486 = vmatmul.mubr.f32.gmra.mxu0 %v1416
    %v1487 = vpop.f32.mrf.mxu0
    %v1488 = vadd.f32 0.0, %v1487
    %v1489 = vpop.f32.mrf.mxu0
    %1490 = vmatprep.mubr.f32.mxu0 0.0
    %1491 = vmatmul.mubr.f32.gmra.mxu0 %v1419
    %v1492 = vpop.f32.mrf.mxu0
    %v1493 = vadd.f32 0.0, %v1492
    %v1494 = vpop.f32.mrf.mxu0
    %1495 = vdwg.mxu0
    %1496 = vrot.lane.b32.xlu0 %v205, 64
    %v1497 = vpop.permute.xlu0 %1496
    %1498 = vrot.lane.b32.xlu0 %v211, 64
    %v1499 = vpop.permute.xlu0 %1498
    %v1503 = vsel %vm381, %v1286, 0
    %v1506 = vsel %vm381, %v1287, 0
    %1508 = vmatprep.subr.mxu0 0.0
    %1509 = vmatpush1.msra.mxu0 0.0
    %1510 = vmatprep.subr.mxu0 0.0
    %1511 = vmatpush1.msra.mxu0 0.0
    %1512 = vmatprep.subr.mxu0 0.0
    %1513 = vmatpush1.msra.mxu0 0.0
    %1514 = vmatprep.subr.mxu0 0.0
    %1515 = vmatpush1.msra.mxu0 0.0
    %1516 = vmatprep.subr.mxu0 0.0
    %1517 = vmatpush1.msra.mxu0 0.0
    %1518 = vmatprep.subr.mxu0 0.0
    %1519 = vmatpush1.msra.mxu0 0.0
    %1520 = vmatprep.subr.mxu0 0.0
    %1521 = vmatpush1.msra.mxu0 0.0
    %1522 = vmatprep.subr.mxu0 0.0
    %1523 = vmatpush1.msra.mxu0 0.0
    %1524 = vmatprep.subr.mxu0 0.0
    %1525 = vmatpush1.msra.mxu0 0.0
    %1526 = vmatprep.subr.mxu0 0.0
    %1527 = vmatpush1.msra.mxu0 0.0
    %1528 = vmatprep.subr.mxu0 0.0
    %1529 = vmatpush1.msra.mxu0 0.0
    %1530 = vmatprep.subr.mxu0 0.0
    %1531 = vmatpush1.msra.mxu0 0.0
    %1532 = vmatprep.subr.mxu0 0.0
    %1533 = vmatpush1.msra.mxu0 0.0
    %1534 = vmatprep.subr.mxu0 0.0
    %1535 = vmatpush1.msra.mxu0 0.0
    %1536 = vmatprep.subr.mxu0 0.0
    %1537 = vmatpush1.msra.mxu0 %v1499
    %1538 = vmatprep.subr.mxu0 0.0
    %1539 = vmatpush1.msra.mxu0 %v1497
    %1540 = vmatprep.subr.mxu0 0.0
    %1541 = vmatpush2.msra.mxu0 0.0
    %1542 = vmatprep.subr.mxu0 0.0
    %1543 = vmatpush2.msra.mxu0 0.0
    %1544 = vmatprep.subr.mxu0 0.0
    %1545 = vmatpush2.msra.mxu0 0.0
    %1546 = vmatprep.subr.mxu0 0.0
    %1547 = vmatpush2.msra.mxu0 0.0
    %1548 = vmatprep.subr.mxu0 0.0
    %1549 = vmatpush2.msra.mxu0 0.0
    %1550 = vmatprep.subr.mxu0 0.0
    %1551 = vmatpush2.msra.mxu0 0.0
    %1552 = vmatprep.subr.mxu0 0.0
    %1553 = vmatpush2.msra.mxu0 0.0
    %1554 = vmatprep.subr.mxu0 0.0
    %1555 = vmatpush2.msra.mxu0 0.0
    %1556 = vmatprep.subr.mxu0 0.0
    %1557 = vmatpush2.msra.mxu0 0.0
    %1558 = vmatprep.subr.mxu0 0.0
    %1559 = vmatpush2.msra.mxu0 0.0
    %1560 = vmatprep.subr.mxu0 0.0
    %1561 = vmatpush2.msra.mxu0 0.0
    %1562 = vmatprep.subr.mxu0 0.0
    %1563 = vmatpush2.msra.mxu0 0.0
    %1564 = vmatprep.subr.mxu0 0.0
    %1565 = vmatpush2.msra.mxu0 0.0
    %1566 = vmatprep.subr.mxu0 0.0
    %1567 = vmatpush2.msra.mxu0 0.0
    %1568 = vmatprep.subr.mxu0 0.0
    %1569 = vmatpush2.msra.mxu0 0.0
    %1570 = vmatprep.subr.mxu0 0.0
    %1571 = vmatpush2.msra.mxu0 0.0
    %1572 = vmatprep.mubr.f32.mxu0 0.0
    %1573 = vmatmul.mubr.f32.gmra.mxu0 %v1503
    %v1574 = vpop.f32.mrf.mxu0
    %v1575 = vadd.f32 %v1488, %v1574
    %v1576 = vpop.f32.mrf.mxu0
    %1577 = vmatprep.mubr.f32.mxu0 0.0
    %1578 = vmatmul.mubr.f32.gmra.mxu0 %v1506
    %v1579 = vpop.f32.mrf.mxu0
    %v1580 = vadd.f32 %v1493, %v1579
    %v1581 = vpop.f32.mrf.mxu0
    %1582 = vdwg.mxu0
    %1583 = vrot.lane.b32.xlu0 %v205, 112
    %v1584 = vpop.permute.xlu0 %1583
    %1585 = vrot.lane.b32.xlu0 %v211, 112
    %v1586 = vpop.permute.xlu0 %1585
    %1587 = vrot.lane.b32.xlu0 %v205, 80
    %v1588 = vpop.permute.xlu0 %1587
    %1589 = vrot.lane.b32.xlu0 %v211, 80
    %v1590 = vpop.permute.xlu0 %1589
    %v1591 = vsel %vm295, %v1584, 0
    %v1593 = vsel %vm295, %v1586, 0
    %v1595 = vsel %vm295, %v1588, 0
    %v1597 = vsel %vm295, %v1590, 0
    %1599 = vmatprep.subr.mxu0 0.0
    %1600 = vmatpush1.xpose.msra.mxu0 0.0
    %1601 = vmatprep.subr.mxu0 0.0
    %1602 = vmatpush1.xpose.msra.mxu0 0.0
    %1603 = vmatprep.subr.mxu0 0.0
    %1604 = vmatpush1.xpose.msra.mxu0 0.0
    %1605 = vmatprep.subr.mxu0 0.0
    %1606 = vmatpush1.xpose.msra.mxu0 0.0
    %1607 = vmatprep.subr.mxu0 0.0
    %1608 = vmatpush1.xpose.msra.mxu0 0.0
    %1609 = vmatprep.subr.mxu0 0.0
    %1610 = vmatpush1.xpose.msra.mxu0 0.0
    %1611 = vmatprep.subr.mxu0 0.0
    %1612 = vmatpush1.xpose.msra.mxu0 0.0
    %1613 = vmatprep.subr.mxu0 0.0
    %1614 = vmatpush1.xpose.msra.mxu0 0.0
    %1615 = vmatprep.subr.mxu0 0.0
    %1616 = vmatpush1.xpose.msra.mxu0 0.0
    %1617 = vmatprep.subr.mxu0 0.0
    %1618 = vmatpush1.xpose.msra.mxu0 0.0
    %1619 = vmatprep.subr.mxu0 0.0
    %1620 = vmatpush1.xpose.msra.mxu0 0.0
    %1621 = vmatprep.subr.mxu0 0.0
    %1622 = vmatpush1.xpose.msra.mxu0 0.0
    %1623 = vmatprep.subr.mxu0 0.0
    %1624 = vmatpush1.xpose.msra.mxu0 0.0
    %1625 = vmatprep.subr.mxu0 0.0
    %1626 = vmatpush1.xpose.msra.mxu0 0.0
    %1627 = vmatprep.subr.mxu0 0.0
    %1628 = vmatpush1.xpose.msra.mxu0 %v1597
    %1629 = vmatprep.subr.mxu0 0.0
    %1630 = vmatpush1.xpose.msra.mxu0 %v1595
    %1631 = vmatprep.subr.mxu0 0.0
    %1632 = vmatpush2.xpose.msra.mxu0 0.0
    %1633 = vmatprep.subr.mxu0 0.0
    %1634 = vmatpush2.xpose.msra.mxu0 0.0
    %1635 = vmatprep.subr.mxu0 0.0
    %1636 = vmatpush2.xpose.msra.mxu0 0.0
    %1637 = vmatprep.subr.mxu0 0.0
    %1638 = vmatpush2.xpose.msra.mxu0 0.0
    %1639 = vmatprep.subr.mxu0 0.0
    %1640 = vmatpush2.xpose.msra.mxu0 0.0
    %1641 = vmatprep.subr.mxu0 0.0
    %1642 = vmatpush2.xpose.msra.mxu0 0.0
    %1643 = vmatprep.subr.mxu0 0.0
    %1644 = vmatpush2.xpose.msra.mxu0 0.0
    %1645 = vmatprep.subr.mxu0 0.0
    %1646 = vmatpush2.xpose.msra.mxu0 0.0
    %1647 = vmatprep.subr.mxu0 0.0
    %1648 = vmatpush2.xpose.msra.mxu0 0.0
    %1649 = vmatprep.subr.mxu0 0.0
    %1650 = vmatpush2.xpose.msra.mxu0 0.0
    %1651 = vmatprep.subr.mxu0 0.0
    %1652 = vmatpush2.xpose.msra.mxu0 0.0
    %1653 = vmatprep.subr.mxu0 0.0
    %1654 = vmatpush2.xpose.msra.mxu0 0.0
    %1655 = vmatprep.subr.mxu0 0.0
    %1656 = vmatpush2.xpose.msra.mxu0 0.0
    %1657 = vmatprep.subr.mxu0 0.0
    %1658 = vmatpush2.xpose.msra.mxu0 0.0
    %1659 = vmatprep.subr.mxu0 0.0
    %1660 = vmatpush2.xpose.msra.mxu0 0.0
    %1661 = vmatprep.subr.mxu0 0.0
    %1662 = vmatpush2.xpose.msra.mxu0 0.0
    %1663 = vmatprep.mubr.f32.mxu0 0.0
    %1664 = vmatmul.mubr.f32.gmra.mxu0 %v1591
    %v1665 = vpop.f32.mrf.mxu0
    %v1666 = vadd.f32 0.0, %v1665
    %v1667 = vpop.f32.mrf.mxu0
    %1668 = vmatprep.mubr.f32.mxu0 0.0
    %1669 = vmatmul.mubr.f32.gmra.mxu0 %v1593
    %v1670 = vpop.f32.mrf.mxu0
    %v1671 = vadd.f32 0.0, %v1670
    %v1672 = vpop.f32.mrf.mxu0
    %1673 = vdwg.mxu0
    %v1674 = vmul.f32 %v1167, %v1666
    %v1675 = vmul.f32 %v1168, %v1671
    %v1676 = vsel %vm381, %v1674, -inf
    %1677 = vmax.xlane.f32.xlu0 %v1676
    %v1678 = vpop.xlane.xlu0 %1677
    %v1679 = vsel %vm381, %v1675, -inf
    %1680 = vmax.xlane.f32.xlu0 %v1679
    %v1681 = vpop.xlane.xlu0 %1680
    %v1682 = vsub.f32 %v1674, %v1678
    %v1683 = vsub.f32 %v1675, %v1681
    %v1684 = vmul.f32 %v1682, 1.442695
    %v1685 = vpow.pop %v1684
    %v1686 = vmul.f32 %v1683, 1.442695
    %v1687 = vpow.pop %v1686
    %v1688 = vsel %vm381, %v1685, 0.0
    %1689 = vadd.xlane.f32.xlu0 %v1688
    %v1690 = vpop.xlane.xlu0 %1689
    %v1691 = vsel %vm381, %v1687, 0.0
    %1692 = vadd.xlane.f32.xlu0 %v1691
    %v1693 = vpop.xlane.xlu0 %1692
    %v1694 = vrcp.pop %v1690
    %v1695 = vrcp.pop %v1693
    %v1696 = vmul.f32 %v1690, %v1694
    %v1697 = vmul.f32 %v1693, %v1695
    %v1698 = vsub.f32 2.0, %v1696
    %v1699 = vsub.f32 2.0, %v1697
    %v1700 = vmul.f32 %v1694, %v1698
    %v1701 = vmul.f32 %v1695, %v1699
    %v1702 = vmul.f32 %v1685, %v1700
    %v1703 = vmul.f32 %v1687, %v1701
    %v1705 = vsel %vm381, %v1702, 0
    %v1708 = vsel %vm381, %v1703, 0
    %1710 = vmatprep.subr.mxu0 0.0
    %1711 = vmatpush1.msra.mxu0 0.0
    %1712 = vmatprep.subr.mxu0 0.0
    %1713 = vmatpush1.msra.mxu0 0.0
    %1714 = vmatprep.subr.mxu0 0.0
    %1715 = vmatpush1.msra.mxu0 0.0
    %1716 = vmatprep.subr.mxu0 0.0
    %1717 = vmatpush1.msra.mxu0 0.0
    %1718 = vmatprep.subr.mxu0 0.0
    %1719 = vmatpush1.msra.mxu0 0.0
    %1720 = vmatprep.subr.mxu0 0.0
    %1721 = vmatpush1.msra.mxu0 0.0
    %1722 = vmatprep.subr.mxu0 0.0
    %1723 = vmatpush1.msra.mxu0 0.0
    %1724 = vmatprep.subr.mxu0 0.0
    %1725 = vmatpush1.msra.mxu0 0.0
    %1726 = vmatprep.subr.mxu0 0.0
    %1727 = vmatpush1.msra.mxu0 0.0
    %1728 = vmatprep.subr.mxu0 0.0
    %1729 = vmatpush1.msra.mxu0 0.0
    %1730 = vmatprep.subr.mxu0 0.0
    %1731 = vmatpush1.msra.mxu0 0.0
    %1732 = vmatprep.subr.mxu0 0.0
    %1733 = vmatpush1.msra.mxu0 0.0
    %1734 = vmatprep.subr.mxu0 0.0
    %1735 = vmatpush1.msra.mxu0 0.0
    %1736 = vmatprep.subr.mxu0 0.0
    %1737 = vmatpush1.msra.mxu0 0.0
    %1738 = vmatprep.subr.mxu0 0.0
    %1739 = vmatpush1.msra.mxu0 %v213
    %1740 = vmatprep.subr.mxu0 0.0
    %1741 = vmatpush1.msra.mxu0 %v207
    %1742 = vmatprep.subr.mxu0 0.0
    %1743 = vmatpush2.msra.mxu0 0.0
    %1744 = vmatprep.subr.mxu0 0.0
    %1745 = vmatpush2.msra.mxu0 0.0
    %1746 = vmatprep.subr.mxu0 0.0
    %1747 = vmatpush2.msra.mxu0 0.0
    %1748 = vmatprep.subr.mxu0 0.0
    %1749 = vmatpush2.msra.mxu0 0.0
    %1750 = vmatprep.subr.mxu0 0.0
    %1751 = vmatpush2.msra.mxu0 0.0
    %1752 = vmatprep.subr.mxu0 0.0
    %1753 = vmatpush2.msra.mxu0 0.0
    %1754 = vmatprep.subr.mxu0 0.0
    %1755 = vmatpush2.msra.mxu0 0.0
    %1756 = vmatprep.subr.mxu0 0.0
    %1757 = vmatpush2.msra.mxu0 0.0
    %1758 = vmatprep.subr.mxu0 0.0
    %1759 = vmatpush2.msra.mxu0 0.0
    %1760 = vmatprep.subr.mxu0 0.0
    %1761 = vmatpush2.msra.mxu0 0.0
    %1762 = vmatprep.subr.mxu0 0.0
    %1763 = vmatpush2.msra.mxu0 0.0
    %1764 = vmatprep.subr.mxu0 0.0
    %1765 = vmatpush2.msra.mxu0 0.0
    %1766 = vmatprep.subr.mxu0 0.0
    %1767 = vmatpush2.msra.mxu0 0.0
    %1768 = vmatprep.subr.mxu0 0.0
    %1769 = vmatpush2.msra.mxu0 0.0
    %1770 = vmatprep.subr.mxu0 0.0
    %1771 = vmatpush2.msra.mxu0 0.0
    %1772 = vmatprep.subr.mxu0 0.0
    %1773 = vmatpush2.msra.mxu0 0.0
    %1774 = vmatprep.mubr.f32.mxu0 0.0
    %1775 = vmatmul.mubr.f32.gmra.mxu0 %v1705
    %v1776 = vpop.f32.mrf.mxu0
    %v1777 = vadd.f32 0.0, %v1776
    %v1778 = vpop.f32.mrf.mxu0
    %1779 = vmatprep.mubr.f32.mxu0 0.0
    %1780 = vmatmul.mubr.f32.gmra.mxu0 %v1708
    %v1781 = vpop.f32.mrf.mxu0
    %v1782 = vadd.f32 0.0, %v1781
    %v1783 = vpop.f32.mrf.mxu0
    %1784 = vdwg.mxu0
    %v1785 = vadd.f32 %v1575, %v1777
    %v1786 = vadd.f32 %v1580, %v1782
    %1787 = vrot.lane.b32.xlu0 %v205, 104
    %v1788 = vpop.permute.xlu0 %1787
    %1789 = vrot.lane.b32.xlu0 %v211, 104
    %v1790 = vpop.permute.xlu0 %1789
    %1791 = vrot.lane.b32.xlu0 %v205, 72
    %v1792 = vpop.permute.xlu0 %1791
    %1793 = vrot.lane.b32.xlu0 %v211, 72
    %v1794 = vpop.permute.xlu0 %1793
    %v1795 = vsel %vm295, %v1788, 0
    %v1797 = vsel %vm295, %v1790, 0
    %v1799 = vsel %vm295, %v1792, 0
    %v1801 = vsel %vm295, %v1794, 0
    %1803 = vmatprep.subr.mxu0 0.0
    %1804 = vmatpush1.xpose.msra.mxu0 0.0
    %1805 = vmatprep.subr.mxu0 0.0
    %1806 = vmatpush1.xpose.msra.mxu0 0.0
    %1807 = vmatprep.subr.mxu0 0.0
    %1808 = vmatpush1.xpose.msra.mxu0 0.0
    %1809 = vmatprep.subr.mxu0 0.0
    %1810 = vmatpush1.xpose.msra.mxu0 0.0
    %1811 = vmatprep.subr.mxu0 0.0
    %1812 = vmatpush1.xpose.msra.mxu0 0.0
    %1813 = vmatprep.subr.mxu0 0.0
    %1814 = vmatpush1.xpose.msra.mxu0 0.0
    %1815 = vmatprep.subr.mxu0 0.0
    %1816 = vmatpush1.xpose.msra.mxu0 0.0
    %1817 = vmatprep.subr.mxu0 0.0
    %1818 = vmatpush1.xpose.msra.mxu0 0.0
    %1819 = vmatprep.subr.mxu0 0.0
    %1820 = vmatpush1.xpose.msra.mxu0 0.0
    %1821 = vmatprep.subr.mxu0 0.0
    %1822 = vmatpush1.xpose.msra.mxu0 0.0
    %1823 = vmatprep.subr.mxu0 0.0
    %1824 = vmatpush1.xpose.msra.mxu0 0.0
    %1825 = vmatprep.subr.mxu0 0.0
    %1826 = vmatpush1.xpose.msra.mxu0 0.0
    %1827 = vmatprep.subr.mxu0 0.0
    %1828 = vmatpush1.xpose.msra.mxu0 0.0
    %1829 = vmatprep.subr.mxu0 0.0
    %1830 = vmatpush1.xpose.msra.mxu0 0.0
    %1831 = vmatprep.subr.mxu0 0.0
    %1832 = vmatpush1.xpose.msra.mxu0 %v1801
    %1833 = vmatprep.subr.mxu0 0.0
    %1834 = vmatpush1.xpose.msra.mxu0 %v1799
    %1835 = vmatprep.subr.mxu0 0.0
    %1836 = vmatpush2.xpose.msra.mxu0 0.0
    %1837 = vmatprep.subr.mxu0 0.0
    %1838 = vmatpush2.xpose.msra.mxu0 0.0
    %1839 = vmatprep.subr.mxu0 0.0
    %1840 = vmatpush2.xpose.msra.mxu0 0.0
    %1841 = vmatprep.subr.mxu0 0.0
    %1842 = vmatpush2.xpose.msra.mxu0 0.0
    %1843 = vmatprep.subr.mxu0 0.0
    %1844 = vmatpush2.xpose.msra.mxu0 0.0
    %1845 = vmatprep.subr.mxu0 0.0
    %1846 = vmatpush2.xpose.msra.mxu0 0.0
    %1847 = vmatprep.subr.mxu0 0.0
    %1848 = vmatpush2.xpose.msra.mxu0 0.0
    %1849 = vmatprep.subr.mxu0 0.0
    %1850 = vmatpush2.xpose.msra.mxu0 0.0
    %1851 = vmatprep.subr.mxu0 0.0
    %1852 = vmatpush2.xpose.msra.mxu0 0.0
    %1853 = vmatprep.subr.mxu0 0.0
    %1854 = vmatpush2.xpose.msra.mxu0 0.0
    %1855 = vmatprep.subr.mxu0 0.0
    %1856 = vmatpush2.xpose.msra.mxu0 0.0
    %1857 = vmatprep.subr.mxu0 0.0
    %1858 = vmatpush2.xpose.msra.mxu0 0.0
    %1859 = vmatprep.subr.mxu0 0.0
    %1860 = vmatpush2.xpose.msra.mxu0 0.0
    %1861 = vmatprep.subr.mxu0 0.0
    %1862 = vmatpush2.xpose.msra.mxu0 0.0
    %1863 = vmatprep.subr.mxu0 0.0
    %1864 = vmatpush2.xpose.msra.mxu0 0.0
    %1865 = vmatprep.subr.mxu0 0.0
    %1866 = vmatpush2.xpose.msra.mxu0 0.0
    %1867 = vmatprep.mubr.f32.mxu0 0.0
    %1868 = vmatmul.mubr.f32.gmra.mxu0 %v1795
    %v1869 = vpop.f32.mrf.mxu0
    %v1870 = vadd.f32 0.0, %v1869
    %v1871 = vpop.f32.mrf.mxu0
    %1872 = vmatprep.mubr.f32.mxu0 0.0
    %1873 = vmatmul.mubr.f32.gmra.mxu0 %v1797
    %v1874 = vpop.f32.mrf.mxu0
    %v1875 = vadd.f32 0.0, %v1874
    %v1876 = vpop.f32.mrf.mxu0
    %1877 = vdwg.mxu0
    %v1878 = vmul.f32 %v1167, %v1870
    %v1879 = vmul.f32 %v1168, %v1875
    %v1880 = vsel %vm381, %v1878, -inf
    %1881 = vmax.xlane.f32.xlu0 %v1880
    %v1882 = vpop.xlane.xlu0 %1881
    %v1883 = vsel %vm381, %v1879, -inf
    %1884 = vmax.xlane.f32.xlu0 %v1883
    %v1885 = vpop.xlane.xlu0 %1884
    %v1886 = vsub.f32 %v1878, %v1882
    %v1887 = vsub.f32 %v1879, %v1885
    %v1888 = vmul.f32 %v1886, 1.442695
    %v1889 = vpow.pop %v1888
    %v1890 = vmul.f32 %v1887, 1.442695
    %v1891 = vpow.pop %v1890
    %v1892 = vsel %vm381, %v1889, 0.0
    %1893 = vadd.xlane.f32.xlu0 %v1892
    %v1894 = vpop.xlane.xlu0 %1893
    %v1895 = vsel %vm381, %v1891, 0.0
    %1896 = vadd.xlane.f32.xlu0 %v1895
    %v1897 = vpop.xlane.xlu0 %1896
    %v1898 = vrcp.pop %v1894
    %v1899 = vrcp.pop %v1897
    %v1900 = vmul.f32 %v1894, %v1898
    %v1901 = vmul.f32 %v1897, %v1899
    %v1902 = vsub.f32 2.0, %v1900
    %v1903 = vsub.f32 2.0, %v1901
    %v1904 = vmul.f32 %v1898, %v1902
    %v1905 = vmul.f32 %v1899, %v1903
    %v1906 = vmul.f32 %v1889, %v1904
    %v1907 = vmul.f32 %v1891, %v1905
    %1910 = vrot.lane.b32.xlu0 %v207, 96
    %v1911 = vpop.permute.xlu0 %1910
    %1912 = vrot.lane.b32.xlu0 %v213, 96
    %v1913 = vpop.permute.xlu0 %1912
    %v1917 = vsel %vm381, %v1906, 0
    %v1920 = vsel %vm381, %v1907, 0
    %1922 = vmatprep.subr.mxu0 0.0
    %1923 = vmatpush1.msra.mxu0 0.0
    %1924 = vmatprep.subr.mxu0 0.0
    %1925 = vmatpush1.msra.mxu0 0.0
    %1926 = vmatprep.subr.mxu0 0.0
    %1927 = vmatpush1.msra.mxu0 0.0
    %1928 = vmatprep.subr.mxu0 0.0
    %1929 = vmatpush1.msra.mxu0 0.0
    %1930 = vmatprep.subr.mxu0 0.0
    %1931 = vmatpush1.msra.mxu0 0.0
    %1932 = vmatprep.subr.mxu0 0.0
    %1933 = vmatpush1.msra.mxu0 0.0
    %1934 = vmatprep.subr.mxu0 0.0
    %1935 = vmatpush1.msra.mxu0 0.0
    %1936 = vmatprep.subr.mxu0 0.0
    %1937 = vmatpush1.msra.mxu0 0.0
    %1938 = vmatprep.subr.mxu0 0.0
    %1939 = vmatpush1.msra.mxu0 0.0
    %1940 = vmatprep.subr.mxu0 0.0
    %1941 = vmatpush1.msra.mxu0 0.0
    %1942 = vmatprep.subr.mxu0 0.0
    %1943 = vmatpush1.msra.mxu0 0.0
    %1944 = vmatprep.subr.mxu0 0.0
    %1945 = vmatpush1.msra.mxu0 0.0
    %1946 = vmatprep.subr.mxu0 0.0
    %1947 = vmatpush1.msra.mxu0 0.0
    %1948 = vmatprep.subr.mxu0 0.0
    %1949 = vmatpush1.msra.mxu0 0.0
    %1950 = vmatprep.subr.mxu0 0.0
    %1951 = vmatpush1.msra.mxu0 %v1913
    %1952 = vmatprep.subr.mxu0 0.0
    %1953 = vmatpush1.msra.mxu0 %v1911
    %1954 = vmatprep.subr.mxu0 0.0
    %1955 = vmatpush2.msra.mxu0 0.0
    %1956 = vmatprep.subr.mxu0 0.0
    %1957 = vmatpush2.msra.mxu0 0.0
    %1958 = vmatprep.subr.mxu0 0.0
    %1959 = vmatpush2.msra.mxu0 0.0
    %1960 = vmatprep.subr.mxu0 0.0
    %1961 = vmatpush2.msra.mxu0 0.0
    %1962 = vmatprep.subr.mxu0 0.0
    %1963 = vmatpush2.msra.mxu0 0.0
    %1964 = vmatprep.subr.mxu0 0.0
    %1965 = vmatpush2.msra.mxu0 0.0
    %1966 = vmatprep.subr.mxu0 0.0
    %1967 = vmatpush2.msra.mxu0 0.0
    %1968 = vmatprep.subr.mxu0 0.0
    %1969 = vmatpush2.msra.mxu0 0.0
    %1970 = vmatprep.subr.mxu0 0.0
    %1971 = vmatpush2.msra.mxu0 0.0
    %1972 = vmatprep.subr.mxu0 0.0
    %1973 = vmatpush2.msra.mxu0 0.0
    %1974 = vmatprep.subr.mxu0 0.0
    %1975 = vmatpush2.msra.mxu0 0.0
    %1976 = vmatprep.subr.mxu0 0.0
    %1977 = vmatpush2.msra.mxu0 0.0
    %1978 = vmatprep.subr.mxu0 0.0
    %1979 = vmatpush2.msra.mxu0 0.0
    %1980 = vmatprep.subr.mxu0 0.0
    %1981 = vmatpush2.msra.mxu0 0.0
    %1982 = vmatprep.subr.mxu0 0.0
    %1983 = vmatpush2.msra.mxu0 0.0
    %1984 = vmatprep.subr.mxu0 0.0
    %1985 = vmatpush2.msra.mxu0 0.0
    %1986 = vmatprep.mubr.f32.mxu0 0.0
    %1987 = vmatmul.mubr.f32.gmra.mxu0 %v1917
    %v1988 = vpop.f32.mrf.mxu0
    %v1989 = vadd.f32 0.0, %v1988
    %v1990 = vpop.f32.mrf.mxu0
    %1991 = vmatprep.mubr.f32.mxu0 0.0
    %1992 = vmatmul.mubr.f32.gmra.mxu0 %v1920
    %v1993 = vpop.f32.mrf.mxu0
    %v1994 = vadd.f32 0.0, %v1993
    %v1995 = vpop.f32.mrf.mxu0
    %1996 = vdwg.mxu0
    %v1997 = vadd.f32 %v1785, %v1989
    %v1998 = vadd.f32 %v1786, %v1994
    %v1999 = vadd.f32 %v1997, %v54
    %v2000 = vadd.f32 %v1998, %v55
    %v2001 = vsel %vm77, %v1999, 0.0
    %v2002 = vsel %vm77, %v2000, 0.0
    %v2003 = vadd.f32 %v2001, %v2002
    %v2004 = vrot.slane %v2003, 4
    %v2005 = vadd.f32 %v2003, %v2004
    %v2006 = vrot.slane %v2005, 2
    %v2007 = vadd.f32 %v2005, %v2006
    %v2008 = vrot.slane %v2007, 1
    %v2009 = vadd.f32 %v2007, %v2008
    %v2010 = vmul.f32 %v2009, %v1132
    %v2011 = vmul.f32 %v1999, %v1999
    %v2012 = vmul.f32 %v2000, %v2000
    %v2013 = vsel %vm77, %v2011, 0.0
    %v2014 = vsel %vm77, %v2012, 0.0
    %v2015 = vadd.f32 %v2013, %v2014
    %v2016 = vrot.slane %v2015, 4
    %v2017 = vadd.f32 %v2015, %v2016
    %v2018 = vrot.slane %v2017, 2
    %v2019 = vadd.f32 %v2017, %v2018
    %v2020 = vrot.slane %v2019, 1
    %v2021 = vadd.f32 %v2019, %v2020
    %v2022 = vmul.f32 %v2021, %v1132
    %v2023 = vmul.f32 %v2010, %v2010
    %v2024 = vsub.f32 %v2022, %v2023
    %v2025 = vsub.f32 %v1999, %v2010
    %v2026 = vsub.f32 %v2000, %v2010
    %v2027 = vadd.f32 %v2024, 1e-05
    %v2028 = vrsqrt.pop %v2027
    %v2029 = vmul.f32 %v2025, %v2028
    %v2030 = vmul.f32 %v2026, %v2028
    %v2031 = vmul.f32 %v2029, %v1157
    %v2032 = vmul.f32 %v2030, %v1157
    %v2033 = vadd.f32 %v2031, %v1163
    %v2034 = vadd.f32 %v2032, %v1163
    %s2035 = scalar_lea.vmem [#allocation2], 32
    %v2036 = vld [vmem:[%s2035] sm:$0xff]
    %v2037 = vld [vmem:[%s2035 + $0x8] sm:$0xff]
    %2040 = vrot.lane.b32.xlu0 %v217, 96
    %v2041 = vpop.permute.xlu0 %2040
    %2042 = vrot.lane.b32.xlu0 %v223, 96
    %v2043 = vpop.permute.xlu0 %2042
    %v2044 = vsel %vm295, %v217, 0
    %v2046 = vsel %vm295, %v223, 0
    %v2048 = vsel %vm295, %v2041, 0
    %v2050 = vsel %vm295, %v2043, 0
    %2052 = vmatprep.subr.mxu0 0.0
    %2053 = vmatpush1.xpose.msra.mxu0 0.0
    %2054 = vmatprep.subr.mxu0 0.0
    %2055 = vmatpush1.xpose.msra.mxu0 0.0
    %2056 = vmatprep.subr.mxu0 0.0
    %2057 = vmatpush1.xpose.msra.mxu0 0.0
    %2058 = vmatprep.subr.mxu0 0.0
    %2059 = vmatpush1.xpose.msra.mxu0 0.0
    %2060 = vmatprep.subr.mxu0 0.0
    %2061 = vmatpush1.xpose.msra.mxu0 0.0
    %2062 = vmatprep.subr.mxu0 0.0
    %2063 = vmatpush1.xpose.msra.mxu0 0.0
    %2064 = vmatprep.subr.mxu0 0.0
    %2065 = vmatpush1.xpose.msra.mxu0 0.0
    %2066 = vmatprep.subr.mxu0 0.0
    %2067 = vmatpush1.xpose.msra.mxu0 0.0
    %2068 = vmatprep.subr.mxu0 0.0
    %2069 = vmatpush1.xpose.msra.mxu0 0.0
    %2070 = vmatprep.subr.mxu0 0.0
    %2071 = vmatpush1.xpose.msra.mxu0 0.0
    %2072 = vmatprep.subr.mxu0 0.0
    %2073 = vmatpush1.xpose.msra.mxu0 0.0
    %2074 = vmatprep.subr.mxu0 0.0
    %2075 = vmatpush1.xpose.msra.mxu0 0.0
    %2076 = vmatprep.subr.mxu0 0.0
    %2077 = vmatpush1.xpose.msra.mxu0 0.0
    %2078 = vmatprep.subr.mxu0 0.0
    %2079 = vmatpush1.xpose.msra.mxu0 0.0
    %2080 = vmatprep.subr.mxu0 0.0
    %2081 = vmatpush1.xpose.msra.mxu0 %v2050
    %2082 = vmatprep.subr.mxu0 0.0
    %2083 = vmatpush1.xpose.msra.mxu0 %v2048
    %2084 = vmatprep.subr.mxu0 0.0
    %2085 = vmatpush2.xpose.msra.mxu0 0.0
    %2086 = vmatprep.subr.mxu0 0.0
    %2087 = vmatpush2.xpose.msra.mxu0 0.0
    %2088 = vmatprep.subr.mxu0 0.0
    %2089 = vmatpush2.xpose.msra.mxu0 0.0
    %2090 = vmatprep.subr.mxu0 0.0
    %2091 = vmatpush2.xpose.msra.mxu0 0.0
    %2092 = vmatprep.subr.mxu0 0.0
    %2093 = vmatpush2.xpose.msra.mxu0 0.0
    %2094 = vmatprep.subr.mxu0 0.0
    %2095 = vmatpush2.xpose.msra.mxu0 0.0
    %2096 = vmatprep.subr.mxu0 0.0
    %2097 = vmatpush2.xpose.msra.mxu0 0.0
    %2098 = vmatprep.subr.mxu0 0.0
    %2099 = vmatpush2.xpose.msra.mxu0 0.0
    %2100 = vmatprep.subr.mxu0 0.0
    %2101 = vmatpush2.xpose.msra.mxu0 0.0
    %2102 = vmatprep.subr.mxu0 0.0
    %2103 = vmatpush2.xpose.msra.mxu0 0.0
    %2104 = vmatprep.subr.mxu0 0.0
    %2105 = vmatpush2.xpose.msra.mxu0 0.0
    %2106 = vmatprep.subr.mxu0 0.0
    %2107 = vmatpush2.xpose.msra.mxu0 0.0
    %2108 = vmatprep.subr.mxu0 0.0
    %2109 = vmatpush2.xpose.msra.mxu0 0.0
    %2110 = vmatprep.subr.mxu0 0.0
    %2111 = vmatpush2.xpose.msra.mxu0 0.0
    %2112 = vmatprep.subr.mxu0 0.0
    %2113 = vmatpush2.xpose.msra.mxu0 0.0
    %2114 = vmatprep.subr.mxu0 0.0
    %2115 = vmatpush2.xpose.msra.mxu0 0.0
    %2116 = vmatprep.mubr.f32.mxu0 0.0
    %2117 = vmatmul.mubr.f32.gmra.mxu0 %v2044
    %v2118 = vpop.f32.mrf.mxu0
    %v2119 = vadd.f32 0.0, %v2118
    %v2120 = vpop.f32.mrf.mxu0
    %2121 = vmatprep.mubr.f32.mxu0 0.0
    %2122 = vmatmul.mubr.f32.gmra.mxu0 %v2046
    %v2123 = vpop.f32.mrf.mxu0
    %v2124 = vadd.f32 0.0, %v2123
    %v2125 = vpop.f32.mrf.mxu0
    %2126 = vdwg.mxu0
    %v2127 = vmul.f32 %v2036, %v2119
    %v2128 = vmul.f32 %v2037, %v2124
    %v2129 = vsel %vm381, %v2127, -inf
    %2130 = vmax.xlane.f32.xlu0 %v2129
    %v2131 = vpop.xlane.xlu0 %2130
    %v2132 = vsel %vm381, %v2128, -inf
    %2133 = vmax.xlane.f32.xlu0 %v2132
    %v2134 = vpop.xlane.xlu0 %2133
    %v2135 = vsub.f32 %v2127, %v2131
    %v2136 = vsub.f32 %v2128, %v2134
    %v2137 = vmul.f32 %v2135, 1.442695
    %v2138 = vpow.pop %v2137
    %v2139 = vmul.f32 %v2136, 1.442695
    %v2140 = vpow.pop %v2139
    %v2141 = vsel %vm381, %v2138, 0.0
    %2142 = vadd.xlane.f32.xlu0 %v2141
    %v2143 = vpop.xlane.xlu0 %2142
    %v2144 = vsel %vm381, %v2140, 0.0
    %2145 = vadd.xlane.f32.xlu0 %v2144
    %v2146 = vpop.xlane.xlu0 %2145
    %v2147 = vrcp.pop %v2143
    %v2148 = vrcp.pop %v2146
    %v2149 = vmul.f32 %v2143, %v2147
    %v2150 = vmul.f32 %v2146, %v2148
    %v2151 = vsub.f32 2.0, %v2149
    %v2152 = vsub.f32 2.0, %v2150
    %v2153 = vmul.f32 %v2147, %v2151
    %v2154 = vmul.f32 %v2148, %v2152
    %v2155 = vmul.f32 %v2138, %v2153
    %v2156 = vmul.f32 %v2140, %v2154
    %2157 = vrot.lane.b32.xlu0 %v217, 120
    %v2158 = vpop.permute.xlu0 %2157
    %2159 = vrot.lane.b32.xlu0 %v223, 120
    %v2160 = vpop.permute.xlu0 %2159
    %2161 = vrot.lane.b32.xlu0 %v217, 88
    %v2162 = vpop.permute.xlu0 %2161
    %2163 = vrot.lane.b32.xlu0 %v223, 88
    %v2164 = vpop.permute.xlu0 %2163
    %v2165 = vsel %vm295, %v2158, 0
    %v2167 = vsel %vm295, %v2160, 0
    %v2169 = vsel %vm295, %v2162, 0
    %v2171 = vsel %vm295, %v2164, 0
    %2173 = vmatprep.subr.mxu0 0.0
    %2174 = vmatpush1.xpose.msra.mxu0 0.0
    %2175 = vmatprep.subr.mxu0 0.0
    %2176 = vmatpush1.xpose.msra.mxu0 0.0
    %2177 = vmatprep.subr.mxu0 0.0
    %2178 = vmatpush1.xpose.msra.mxu0 0.0
    %2179 = vmatprep.subr.mxu0 0.0
    %2180 = vmatpush1.xpose.msra.mxu0 0.0
    %2181 = vmatprep.subr.mxu0 0.0
    %2182 = vmatpush1.xpose.msra.mxu0 0.0
    %2183 = vmatprep.subr.mxu0 0.0
    %2184 = vmatpush1.xpose.msra.mxu0 0.0
    %2185 = vmatprep.subr.mxu0 0.0
    %2186 = vmatpush1.xpose.msra.mxu0 0.0
    %2187 = vmatprep.subr.mxu0 0.0
    %2188 = vmatpush1.xpose.msra.mxu0 0.0
    %2189 = vmatprep.subr.mxu0 0.0
    %2190 = vmatpush1.xpose.msra.mxu0 0.0
    %2191 = vmatprep.subr.mxu0 0.0
    %2192 = vmatpush1.xpose.msra.mxu0 0.0
    %2193 = vmatprep.subr.mxu0 0.0
    %2194 = vmatpush1.xpose.msra.mxu0 0.0
    %2195 = vmatprep.subr.mxu0 0.0
    %2196 = vmatpush1.xpose.msra.mxu0 0.0
    %2197 = vmatprep.subr.mxu0 0.0
    %2198 = vmatpush1.xpose.msra.mxu0 0.0
    %2199 = vmatprep.subr.mxu0 0.0
    %2200 = vmatpush1.xpose.msra.mxu0 0.0
    %2201 = vmatprep.subr.mxu0 0.0
    %2202 = vmatpush1.xpose.msra.mxu0 %v2171
    %2203 = vmatprep.subr.mxu0 0.0
    %2204 = vmatpush1.xpose.msra.mxu0 %v2169
    %2205 = vmatprep.subr.mxu0 0.0
    %2206 = vmatpush2.xpose.msra.mxu0 0.0
    %2207 = vmatprep.subr.mxu0 0.0
    %2208 = vmatpush2.xpose.msra.mxu0 0.0
    %2209 = vmatprep.subr.mxu0 0.0
    %2210 = vmatpush2.xpose.msra.mxu0 0.0
    %2211 = vmatprep.subr.mxu0 0.0
    %2212 = vmatpush2.xpose.msra.mxu0 0.0
    %2213 = vmatprep.subr.mxu0 0.0
    %2214 = vmatpush2.xpose.msra.mxu0 0.0
    %2215 = vmatprep.subr.mxu0 0.0
    %2216 = vmatpush2.xpose.msra.mxu0 0.0
    %2217 = vmatprep.subr.mxu0 0.0
    %2218 = vmatpush2.xpose.msra.mxu0 0.0
    %2219 = vmatprep.subr.mxu0 0.0
    %2220 = vmatpush2.xpose.msra.mxu0 0.0
    %2221 = vmatprep.subr.mxu0 0.0
    %2222 = vmatpush2.xpose.msra.mxu0 0.0
    %2223 = vmatprep.subr.mxu0 0.0
    %2224 = vmatpush2.xpose.msra.mxu0 0.0
    %2225 = vmatprep.subr.mxu0 0.0
    %2226 = vmatpush2.xpose.msra.mxu0 0.0
    %2227 = vmatprep.subr.mxu0 0.0
    %2228 = vmatpush2.xpose.msra.mxu0 0.0
    %2229 = vmatprep.subr.mxu0 0.0
    %2230 = vmatpush2.xpose.msra.mxu0 0.0
    %2231 = vmatprep.subr.mxu0 0.0
    %2232 = vmatpush2.xpose.msra.mxu0 0.0
    %2233 = vmatprep.subr.mxu0 0.0
    %2234 = vmatpush2.xpose.msra.mxu0 0.0
    %2235 = vmatprep.subr.mxu0 0.0
    %2236 = vmatpush2.xpose.msra.mxu0 0.0
    %2237 = vmatprep.mubr.f32.mxu0 0.0
    %2238 = vmatmul.mubr.f32.gmra.mxu0 %v2165
    %v2239 = vpop.f32.mrf.mxu0
    %v2240 = vadd.f32 0.0, %v2239
    %v2241 = vpop.f32.mrf.mxu0
    %2242 = vmatprep.mubr.f32.mxu0 0.0
    %2243 = vmatmul.mubr.f32.gmra.mxu0 %v2167
    %v2244 = vpop.f32.mrf.mxu0
    %v2245 = vadd.f32 0.0, %v2244
    %v2246 = vpop.f32.mrf.mxu0
    %2247 = vdwg.mxu0
    %v2248 = vmul.f32 %v2036, %v2240
    %v2249 = vmul.f32 %v2037, %v2245
    %v2250 = vsel %vm381, %v2248, -inf
    %2251 = vmax.xlane.f32.xlu0 %v2250
    %v2252 = vpop.xlane.xlu0 %2251
    %v2253 = vsel %vm381, %v2249, -inf
    %2254 = vmax.xlane.f32.xlu0 %v2253
    %v2255 = vpop.xlane.xlu0 %2254
    %v2256 = vsub.f32 %v2248, %v2252
    %v2257 = vsub.f32 %v2249, %v2255
    %v2258 = vmul.f32 %v2256, 1.442695
    %v2259 = vpow.pop %v2258
    %v2260 = vmul.f32 %v2257, 1.442695
    %v2261 = vpow.pop %v2260
    %v2262 = vsel %vm381, %v2259, 0.0
    %2263 = vadd.xlane.f32.xlu0 %v2262
    %v2264 = vpop.xlane.xlu0 %2263
    %v2265 = vsel %vm381, %v2261, 0.0
    %2266 = vadd.xlane.f32.xlu0 %v2265
    %v2267 = vpop.xlane.xlu0 %2266
    %v2268 = vrcp.pop %v2264
    %v2269 = vrcp.pop %v2267
    %v2270 = vmul.f32 %v2264, %v2268
    %v2271 = vmul.f32 %v2267, %v2269
    %v2272 = vsub.f32 2.0, %v2270
    %v2273 = vsub.f32 2.0, %v2271
    %v2274 = vmul.f32 %v2268, %v2272
    %v2275 = vmul.f32 %v2269, %v2273
    %v2276 = vmul.f32 %v2259, %v2274
    %v2277 = vmul.f32 %v2261, %v2275
    %2278 = vrot.lane.b32.xlu0 %v217, 32
    %v2279 = vpop.permute.xlu0 %2278
    %2280 = vrot.lane.b32.xlu0 %v223, 32
    %v2281 = vpop.permute.xlu0 %2280
    %v2285 = vsel %vm381, %v2276, 0
    %v2288 = vsel %vm381, %v2277, 0
    %2290 = vmatprep.subr.mxu0 0.0
    %2291 = vmatpush1.msra.mxu0 0.0
    %2292 = vmatprep.subr.mxu0 0.0
    %2293 = vmatpush1.msra.mxu0 0.0
    %2294 = vmatprep.subr.mxu0 0.0
    %2295 = vmatpush1.msra.mxu0 0.0
    %2296 = vmatprep.subr.mxu0 0.0
    %2297 = vmatpush1.msra.mxu0 0.0
    %2298 = vmatprep.subr.mxu0 0.0
    %2299 = vmatpush1.msra.mxu0 0.0
    %2300 = vmatprep.subr.mxu0 0.0
    %2301 = vmatpush1.msra.mxu0 0.0
    %2302 = vmatprep.subr.mxu0 0.0
    %2303 = vmatpush1.msra.mxu0 0.0
    %2304 = vmatprep.subr.mxu0 0.0
    %2305 = vmatpush1.msra.mxu0 0.0
    %2306 = vmatprep.subr.mxu0 0.0
    %2307 = vmatpush1.msra.mxu0 0.0
    %2308 = vmatprep.subr.mxu0 0.0
    %2309 = vmatpush1.msra.mxu0 0.0
    %2310 = vmatprep.subr.mxu0 0.0
    %2311 = vmatpush1.msra.mxu0 0.0
    %2312 = vmatprep.subr.mxu0 0.0
    %2313 = vmatpush1.msra.mxu0 0.0
    %2314 = vmatprep.subr.mxu0 0.0
    %2315 = vmatpush1.msra.mxu0 0.0
    %2316 = vmatprep.subr.mxu0 0.0
    %2317 = vmatpush1.msra.mxu0 0.0
    %2318 = vmatprep.subr.mxu0 0.0
    %2319 = vmatpush1.msra.mxu0 %v2281
    %2320 = vmatprep.subr.mxu0 0.0
    %2321 = vmatpush1.msra.mxu0 %v2279
    %2322 = vmatprep.subr.mxu0 0.0
    %2323 = vmatpush2.msra.mxu0 0.0
    %2324 = vmatprep.subr.mxu0 0.0
    %2325 = vmatpush2.msra.mxu0 0.0
    %2326 = vmatprep.subr.mxu0 0.0
    %2327 = vmatpush2.msra.mxu0 0.0
    %2328 = vmatprep.subr.mxu0 0.0
    %2329 = vmatpush2.msra.mxu0 0.0
    %2330 = vmatprep.subr.mxu0 0.0
    %2331 = vmatpush2.msra.mxu0 0.0
    %2332 = vmatprep.subr.mxu0 0.0
    %2333 = vmatpush2.msra.mxu0 0.0
    %2334 = vmatprep.subr.mxu0 0.0
    %2335 = vmatpush2.msra.mxu0 0.0
    %2336 = vmatprep.subr.mxu0 0.0
    %2337 = vmatpush2.msra.mxu0 0.0
    %2338 = vmatprep.subr.mxu0 0.0
    %2339 = vmatpush2.msra.mxu0 0.0
    %2340 = vmatprep.subr.mxu0 0.0
    %2341 = vmatpush2.msra.mxu0 0.0
    %2342 = vmatprep.subr.mxu0 0.0
    %2343 = vmatpush2.msra.mxu0 0.0
    %2344 = vmatprep.subr.mxu0 0.0
    %2345 = vmatpush2.msra.mxu0 0.0
    %2346 = vmatprep.subr.mxu0 0.0
    %2347 = vmatpush2.msra.mxu0 0.0
    %2348 = vmatprep.subr.mxu0 0.0
    %2349 = vmatpush2.msra.mxu0 0.0
    %2350 = vmatprep.subr.mxu0 0.0
    %2351 = vmatpush2.msra.mxu0 0.0
    %2352 = vmatprep.subr.mxu0 0.0
    %2353 = vmatpush2.msra.mxu0 0.0
    %2354 = vmatprep.mubr.f32.mxu0 0.0
    %2355 = vmatmul.mubr.f32.gmra.mxu0 %v2285
    %v2356 = vpop.f32.mrf.mxu0
    %v2357 = vadd.f32 0.0, %v2356
    %v2358 = vpop.f32.mrf.mxu0
    %2359 = vmatprep.mubr.f32.mxu0 0.0
    %2360 = vmatmul.mubr.f32.gmra.mxu0 %v2288
    %v2361 = vpop.f32.mrf.mxu0
    %v2362 = vadd.f32 0.0, %v2361
    %v2363 = vpop.f32.mrf.mxu0
    %2364 = vdwg.mxu0
    %2365 = vrot.lane.b32.xlu0 %v217, 64
    %v2366 = vpop.permute.xlu0 %2365
    %2367 = vrot.lane.b32.xlu0 %v223, 64
    %v2368 = vpop.permute.xlu0 %2367
    %v2372 = vsel %vm381, %v2155, 0
    %v2375 = vsel %vm381, %v2156, 0
    %2377 = vmatprep.subr.mxu0 0.0
    %2378 = vmatpush1.msra.mxu0 0.0
    %2379 = vmatprep.subr.mxu0 0.0
    %2380 = vmatpush1.msra.mxu0 0.0
    %2381 = vmatprep.subr.mxu0 0.0
    %2382 = vmatpush1.msra.mxu0 0.0
    %2383 = vmatprep.subr.mxu0 0.0
    %2384 = vmatpush1.msra.mxu0 0.0
    %2385 = vmatprep.subr.mxu0 0.0
    %2386 = vmatpush1.msra.mxu0 0.0
    %2387 = vmatprep.subr.mxu0 0.0
    %2388 = vmatpush1.msra.mxu0 0.0
    %2389 = vmatprep.subr.mxu0 0.0
    %2390 = vmatpush1.msra.mxu0 0.0
    %2391 = vmatprep.subr.mxu0 0.0
    %2392 = vmatpush1.msra.mxu0 0.0
    %2393 = vmatprep.subr.mxu0 0.0
    %2394 = vmatpush1.msra.mxu0 0.0
    %2395 = vmatprep.subr.mxu0 0.0
    %2396 = vmatpush1.msra.mxu0 0.0
    %2397 = vmatprep.subr.mxu0 0.0
    %2398 = vmatpush1.msra.mxu0 0.0
    %2399 = vmatprep.subr.mxu0 0.0
    %2400 = vmatpush1.msra.mxu0 0.0
    %2401 = vmatprep.subr.mxu0 0.0
    %2402 = vmatpush1.msra.mxu0 0.0
    %2403 = vmatprep.subr.mxu0 0.0
    %2404 = vmatpush1.msra.mxu0 0.0
    %2405 = vmatprep.subr.mxu0 0.0
    %2406 = vmatpush1.msra.mxu0 %v2368
    %2407 = vmatprep.subr.mxu0 0.0
    %2408 = vmatpush1.msra.mxu0 %v2366
    %2409 = vmatprep.subr.mxu0 0.0
    %2410 = vmatpush2.msra.mxu0 0.0
    %2411 = vmatprep.subr.mxu0 0.0
    %2412 = vmatpush2.msra.mxu0 0.0
    %2413 = vmatprep.subr.mxu0 0.0
    %2414 = vmatpush2.msra.mxu0 0.0
    %2415 = vmatprep.subr.mxu0 0.0
    %2416 = vmatpush2.msra.mxu0 0.0
    %2417 = vmatprep.subr.mxu0 0.0
    %2418 = vmatpush2.msra.mxu0 0.0
    %2419 = vmatprep.subr.mxu0 0.0
    %2420 = vmatpush2.msra.mxu0 0.0
    %2421 = vmatprep.subr.mxu0 0.0
    %2422 = vmatpush2.msra.mxu0 0.0
    %2423 = vmatprep.subr.mxu0 0.0
    %2424 = vmatpush2.msra.mxu0 0.0
    %2425 = vmatprep.subr.mxu0 0.0
    %2426 = vmatpush2.msra.mxu0 0.0
    %2427 = vmatprep.subr.mxu0 0.0
    %2428 = vmatpush2.msra.mxu0 0.0
    %2429 = vmatprep.subr.mxu0 0.0
    %2430 = vmatpush2.msra.mxu0 0.0
    %2431 = vmatprep.subr.mxu0 0.0
    %2432 = vmatpush2.msra.mxu0 0.0
    %2433 = vmatprep.subr.mxu0 0.0
    %2434 = vmatpush2.msra.mxu0 0.0
    %2435 = vmatprep.subr.mxu0 0.0
    %2436 = vmatpush2.msra.mxu0 0.0
    %2437 = vmatprep.subr.mxu0 0.0
    %2438 = vmatpush2.msra.mxu0 0.0
    %2439 = vmatprep.subr.mxu0 0.0
    %2440 = vmatpush2.msra.mxu0 0.0
    %2441 = vmatprep.mubr.f32.mxu0 0.0
    %2442 = vmatmul.mubr.f32.gmra.mxu0 %v2372
    %v2443 = vpop.f32.mrf.mxu0
    %v2444 = vadd.f32 %v2357, %v2443
    %v2445 = vpop.f32.mrf.mxu0
    %2446 = vmatprep.mubr.f32.mxu0 0.0
    %2447 = vmatmul.mubr.f32.gmra.mxu0 %v2375
    %v2448 = vpop.f32.mrf.mxu0
    %v2449 = vadd.f32 %v2362, %v2448
    %v2450 = vpop.f32.mrf.mxu0
    %2451 = vdwg.mxu0
    %2452 = vrot.lane.b32.xlu0 %v217, 112
    %v2453 = vpop.permute.xlu0 %2452
    %2454 = vrot.lane.b32.xlu0 %v223, 112
    %v2455 = vpop.permute.xlu0 %2454
    %2456 = vrot.lane.b32.xlu0 %v217, 80
    %v2457 = vpop.permute.xlu0 %2456
    %2458 = vrot.lane.b32.xlu0 %v223, 80
    %v2459 = vpop.permute.xlu0 %2458
    %v2460 = vsel %vm295, %v2453, 0
    %v2462 = vsel %vm295, %v2455, 0
    %v2464 = vsel %vm295, %v2457, 0
    %v2466 = vsel %vm295, %v2459, 0
    %2468 = vmatprep.subr.mxu0 0.0
    %2469 = vmatpush1.xpose.msra.mxu0 0.0
    %2470 = vmatprep.subr.mxu0 0.0
    %2471 = vmatpush1.xpose.msra.mxu0 0.0
    %2472 = vmatprep.subr.mxu0 0.0
    %2473 = vmatpush1.xpose.msra.mxu0 0.0
    %2474 = vmatprep.subr.mxu0 0.0
    %2475 = vmatpush1.xpose.msra.mxu0 0.0
    %2476 = vmatprep.subr.mxu0 0.0
    %2477 = vmatpush1.xpose.msra.mxu0 0.0
    %2478 = vmatprep.subr.mxu0 0.0
    %2479 = vmatpush1.xpose.msra.mxu0 0.0
    %2480 = vmatprep.subr.mxu0 0.0
    %2481 = vmatpush1.xpose.msra.mxu0 0.0
    %2482 = vmatprep.subr.mxu0 0.0
    %2483 = vmatpush1.xpose.msra.mxu0 0.0
    %2484 = vmatprep.subr.mxu0 0.0
    %2485 = vmatpush1.xpose.msra.mxu0 0.0
    %2486 = vmatprep.subr.mxu0 0.0
    %2487 = vmatpush1.xpose.msra.mxu0 0.0
    %2488 = vmatprep.subr.mxu0 0.0
    %2489 = vmatpush1.xpose.msra.mxu0 0.0
    %2490 = vmatprep.subr.mxu0 0.0
    %2491 = vmatpush1.xpose.msra.mxu0 0.0
    %2492 = vmatprep.subr.mxu0 0.0
    %2493 = vmatpush1.xpose.msra.mxu0 0.0
    %2494 = vmatprep.subr.mxu0 0.0
    %2495 = vmatpush1.xpose.msra.mxu0 0.0
    %2496 = vmatprep.subr.mxu0 0.0
    %2497 = vmatpush1.xpose.msra.mxu0 %v2466
    %2498 = vmatprep.subr.mxu0 0.0
    %2499 = vmatpush1.xpose.msra.mxu0 %v2464
    %2500 = vmatprep.subr.mxu0 0.0
    %2501 = vmatpush2.xpose.msra.mxu0 0.0
    %2502 = vmatprep.subr.mxu0 0.0
    %2503 = vmatpush2.xpose.msra.mxu0 0.0
    %2504 = vmatprep.subr.mxu0 0.0
    %2505 = vmatpush2.xpose.msra.mxu0 0.0
    %2506 = vmatprep.subr.mxu0 0.0
    %2507 = vmatpush2.xpose.msra.mxu0 0.0
    %2508 = vmatprep.subr.mxu0 0.0
    %2509 = vmatpush2.xpose.msra.mxu0 0.0
    %2510 = vmatprep.subr.mxu0 0.0
    %2511 = vmatpush2.xpose.msra.mxu0 0.0
    %2512 = vmatprep.subr.mxu0 0.0
    %2513 = vmatpush2.xpose.msra.mxu0 0.0
    %2514 = vmatprep.subr.mxu0 0.0
    %2515 = vmatpush2.xpose.msra.mxu0 0.0
    %2516 = vmatprep.subr.mxu0 0.0
    %2517 = vmatpush2.xpose.msra.mxu0 0.0
    %2518 = vmatprep.subr.mxu0 0.0
    %2519 = vmatpush2.xpose.msra.mxu0 0.0
    %2520 = vmatprep.subr.mxu0 0.0
    %2521 = vmatpush2.xpose.msra.mxu0 0.0
    %2522 = vmatprep.subr.mxu0 0.0
    %2523 = vmatpush2.xpose.msra.mxu0 0.0
    %2524 = vmatprep.subr.mxu0 0.0
    %2525 = vmatpush2.xpose.msra.mxu0 0.0
    %2526 = vmatprep.subr.mxu0 0.0
    %2527 = vmatpush2.xpose.msra.mxu0 0.0
    %2528 = vmatprep.subr.mxu0 0.0
    %2529 = vmatpush2.xpose.msra.mxu0 0.0
    %2530 = vmatprep.subr.mxu0 0.0
    %2531 = vmatpush2.xpose.msra.mxu0 0.0
    %2532 = vmatprep.mubr.f32.mxu0 0.0
    %2533 = vmatmul.mubr.f32.gmra.mxu0 %v2460
    %v2534 = vpop.f32.mrf.mxu0
    %v2535 = vadd.f32 0.0, %v2534
    %v2536 = vpop.f32.mrf.mxu0
    %2537 = vmatprep.mubr.f32.mxu0 0.0
    %2538 = vmatmul.mubr.f32.gmra.mxu0 %v2462
    %v2539 = vpop.f32.mrf.mxu0
    %v2540 = vadd.f32 0.0, %v2539
    %v2541 = vpop.f32.mrf.mxu0
    %2542 = vdwg.mxu0
    %v2543 = vmul.f32 %v2036, %v2535
    %v2544 = vmul.f32 %v2037, %v2540
    %v2545 = vsel %vm381, %v2543, -inf
    %2546 = vmax.xlane.f32.xlu0 %v2545
    %v2547 = vpop.xlane.xlu0 %2546
    %v2548 = vsel %vm381, %v2544, -inf
    %2549 = vmax.xlane.f32.xlu0 %v2548
    %v2550 = vpop.xlane.xlu0 %2549
    %v2551 = vsub.f32 %v2543, %v2547
    %v2552 = vsub.f32 %v2544, %v2550
    %v2553 = vmul.f32 %v2551, 1.442695
    %v2554 = vpow.pop %v2553
    %v2555 = vmul.f32 %v2552, 1.442695
    %v2556 = vpow.pop %v2555
    %v2557 = vsel %vm381, %v2554, 0.0
    %2558 = vadd.xlane.f32.xlu0 %v2557
    %v2559 = vpop.xlane.xlu0 %2558
    %v2560 = vsel %vm381, %v2556, 0.0
    %2561 = vadd.xlane.f32.xlu0 %v2560
    %v2562 = vpop.xlane.xlu0 %2561
    %v2563 = vrcp.pop %v2559
    %v2564 = vrcp.pop %v2562
    %v2565 = vmul.f32 %v2559, %v2563
    %v2566 = vmul.f32 %v2562, %v2564
    %v2567 = vsub.f32 2.0, %v2565
    %v2568 = vsub.f32 2.0, %v2566
    %v2569 = vmul.f32 %v2563, %v2567
    %v2570 = vmul.f32 %v2564, %v2568
    %v2571 = vmul.f32 %v2554, %v2569
    %v2572 = vmul.f32 %v2556, %v2570
    %v2574 = vsel %vm381, %v2571, 0
    %v2577 = vsel %vm381, %v2572, 0
    %2579 = vmatprep.subr.mxu0 0.0
    %2580 = vmatpush1.msra.mxu0 0.0
    %2581 = vmatprep.subr.mxu0 0.0
    %2582 = vmatpush1.msra.mxu0 0.0
    %2583 = vmatprep.subr.mxu0 0.0
    %2584 = vmatpush1.msra.mxu0 0.0
    %2585 = vmatprep.subr.mxu0 0.0
    %2586 = vmatpush1.msra.mxu0 0.0
    %2587 = vmatprep.subr.mxu0 0.0
    %2588 = vmatpush1.msra.mxu0 0.0
    %2589 = vmatprep.subr.mxu0 0.0
    %2590 = vmatpush1.msra.mxu0 0.0
    %2591 = vmatprep.subr.mxu0 0.0
    %2592 = vmatpush1.msra.mxu0 0.0
    %2593 = vmatprep.subr.mxu0 0.0
    %2594 = vmatpush1.msra.mxu0 0.0
    %2595 = vmatprep.subr.mxu0 0.0
    %2596 = vmatpush1.msra.mxu0 0.0
    %2597 = vmatprep.subr.mxu0 0.0
    %2598 = vmatpush1.msra.mxu0 0.0
    %2599 = vmatprep.subr.mxu0 0.0
    %2600 = vmatpush1.msra.mxu0 0.0
    %2601 = vmatprep.subr.mxu0 0.0
    %2602 = vmatpush1.msra.mxu0 0.0
    %2603 = vmatprep.subr.mxu0 0.0
    %2604 = vmatpush1.msra.mxu0 0.0
    %2605 = vmatprep.subr.mxu0 0.0
    %2606 = vmatpush1.msra.mxu0 0.0
    %2607 = vmatprep.subr.mxu0 0.0
    %2608 = vmatpush1.msra.mxu0 %v225
    %2609 = vmatprep.subr.mxu0 0.0
    %2610 = vmatpush1.msra.mxu0 %v219
    %2611 = vmatprep.subr.mxu0 0.0
    %2612 = vmatpush2.msra.mxu0 0.0
    %2613 = vmatprep.subr.mxu0 0.0
    %2614 = vmatpush2.msra.mxu0 0.0
    %2615 = vmatprep.subr.mxu0 0.0
    %2616 = vmatpush2.msra.mxu0 0.0
    %2617 = vmatprep.subr.mxu0 0.0
    %2618 = vmatpush2.msra.mxu0 0.0
    %2619 = vmatprep.subr.mxu0 0.0
    %2620 = vmatpush2.msra.mxu0 0.0
    %2621 = vmatprep.subr.mxu0 0.0
    %2622 = vmatpush2.msra.mxu0 0.0
    %2623 = vmatprep.subr.mxu0 0.0
    %2624 = vmatpush2.msra.mxu0 0.0
    %2625 = vmatprep.subr.mxu0 0.0
    %2626 = vmatpush2.msra.mxu0 0.0
    %2627 = vmatprep.subr.mxu0 0.0
    %2628 = vmatpush2.msra.mxu0 0.0
    %2629 = vmatprep.subr.mxu0 0.0
    %2630 = vmatpush2.msra.mxu0 0.0
    %2631 = vmatprep.subr.mxu0 0.0
    %2632 = vmatpush2.msra.mxu0 0.0
    %2633 = vmatprep.subr.mxu0 0.0
    %2634 = vmatpush2.msra.mxu0 0.0
    %2635 = vmatprep.subr.mxu0 0.0
    %2636 = vmatpush2.msra.mxu0 0.0
    %2637 = vmatprep.subr.mxu0 0.0
    %2638 = vmatpush2.msra.mxu0 0.0
    %2639 = vmatprep.subr.mxu0 0.0
    %2640 = vmatpush2.msra.mxu0 0.0
    %2641 = vmatprep.subr.mxu0 0.0
    %2642 = vmatpush2.msra.mxu0 0.0
    %2643 = vmatprep.mubr.f32.mxu0 0.0
    %2644 = vmatmul.mubr.f32.gmra.mxu0 %v2574
    %v2645 = vpop.f32.mrf.mxu0
    %v2646 = vadd.f32 0.0, %v2645
    %v2647 = vpop.f32.mrf.mxu0
    %2648 = vmatprep.mubr.f32.mxu0 0.0
    %2649 = vmatmul.mubr.f32.gmra.mxu0 %v2577
    %v2650 = vpop.f32.mrf.mxu0
    %v2651 = vadd.f32 0.0, %v2650
    %v2652 = vpop.f32.mrf.mxu0
    %2653 = vdwg.mxu0
    %v2654 = vadd.f32 %v2444, %v2646
    %v2655 = vadd.f32 %v2449, %v2651
    %2656 = vrot.lane.b32.xlu0 %v217, 104
    %v2657 = vpop.permute.xlu0 %2656
    %2658 = vrot.lane.b32.xlu0 %v223, 104
    %v2659 = vpop.permute.xlu0 %2658
    %2660 = vrot.lane.b32.xlu0 %v217, 72
    %v2661 = vpop.permute.xlu0 %2660
    %2662 = vrot.lane.b32.xlu0 %v223, 72
    %v2663 = vpop.permute.xlu0 %2662
    %v2664 = vsel %vm295, %v2657, 0
    %v2666 = vsel %vm295, %v2659, 0
    %v2668 = vsel %vm295, %v2661, 0
    %v2670 = vsel %vm295, %v2663, 0
    %2672 = vmatprep.subr.mxu0 0.0
    %2673 = vmatpush1.xpose.msra.mxu0 0.0
    %2674 = vmatprep.subr.mxu0 0.0
    %2675 = vmatpush1.xpose.msra.mxu0 0.0
    %2676 = vmatprep.subr.mxu0 0.0
    %2677 = vmatpush1.xpose.msra.mxu0 0.0
    %2678 = vmatprep.subr.mxu0 0.0
    %2679 = vmatpush1.xpose.msra.mxu0 0.0
    %2680 = vmatprep.subr.mxu0 0.0
    %2681 = vmatpush1.xpose.msra.mxu0 0.0
    %2682 = vmatprep.subr.mxu0 0.0
    %2683 = vmatpush1.xpose.msra.mxu0 0.0
    %2684 = vmatprep.subr.mxu0 0.0
    %2685 = vmatpush1.xpose.msra.mxu0 0.0
    %2686 = vmatprep.subr.mxu0 0.0
    %2687 = vmatpush1.xpose.msra.mxu0 0.0
    %2688 = vmatprep.subr.mxu0 0.0
    %2689 = vmatpush1.xpose.msra.mxu0 0.0
    %2690 = vmatprep.subr.mxu0 0.0
    %2691 = vmatpush1.xpose.msra.mxu0 0.0
    %2692 = vmatprep.subr.mxu0 0.0
    %2693 = vmatpush1.xpose.msra.mxu0 0.0
    %2694 = vmatprep.subr.mxu0 0.0
    %2695 = vmatpush1.xpose.msra.mxu0 0.0
    %2696 = vmatprep.subr.mxu0 0.0
    %2697 = vmatpush1.xpose.msra.mxu0 0.0
    %2698 = vmatprep.subr.mxu0 0.0
    %2699 = vmatpush1.xpose.msra.mxu0 0.0
    %2700 = vmatprep.subr.mxu0 0.0
    %2701 = vmatpush1.xpose.msra.mxu0 %v2670
    %2702 = vmatprep.subr.mxu0 0.0
    %2703 = vmatpush1.xpose.msra.mxu0 %v2668
    %2704 = vmatprep.subr.mxu0 0.0
    %2705 = vmatpush2.xpose.msra.mxu0 0.0
    %2706 = vmatprep.subr.mxu0 0.0
    %2707 = vmatpush2.xpose.msra.mxu0 0.0
    %2708 = vmatprep.subr.mxu0 0.0
    %2709 = vmatpush2.xpose.msra.mxu0 0.0
    %2710 = vmatprep.subr.mxu0 0.0
    %2711 = vmatpush2.xpose.msra.mxu0 0.0
    %2712 = vmatprep.subr.mxu0 0.0
    %2713 = vmatpush2.xpose.msra.mxu0 0.0
    %2714 = vmatprep.subr.mxu0 0.0
    %2715 = vmatpush2.xpose.msra.mxu0 0.0
    %2716 = vmatprep.subr.mxu0 0.0
    %2717 = vmatpush2.xpose.msra.mxu0 0.0
    %2718 = vmatprep.subr.mxu0 0.0
    %2719 = vmatpush2.xpose.msra.mxu0 0.0
    %2720 = vmatprep.subr.mxu0 0.0
    %2721 = vmatpush2.xpose.msra.mxu0 0.0
    %2722 = vmatprep.subr.mxu0 0.0
    %2723 = vmatpush2.xpose.msra.mxu0 0.0
    %2724 = vmatprep.subr.mxu0 0.0
    %2725 = vmatpush2.xpose.msra.mxu0 0.0
    %2726 = vmatprep.subr.mxu0 0.0
    %2727 = vmatpush2.xpose.msra.mxu0 0.0
    %2728 = vmatprep.subr.mxu0 0.0
    %2729 = vmatpush2.xpose.msra.mxu0 0.0
    %2730 = vmatprep.subr.mxu0 0.0
    %2731 = vmatpush2.xpose.msra.mxu0 0.0
    %2732 = vmatprep.subr.mxu0 0.0
    %2733 = vmatpush2.xpose.msra.mxu0 0.0
    %2734 = vmatprep.subr.mxu0 0.0
    %2735 = vmatpush2.xpose.msra.mxu0 0.0
    %2736 = vmatprep.mubr.f32.mxu0 0.0
    %2737 = vmatmul.mubr.f32.gmra.mxu0 %v2664
    %v2738 = vpop.f32.mrf.mxu0
    %v2739 = vadd.f32 0.0, %v2738
    %v2740 = vpop.f32.mrf.mxu0
    %2741 = vmatprep.mubr.f32.mxu0 0.0
    %2742 = vmatmul.mubr.f32.gmra.mxu0 %v2666
    %v2743 = vpop.f32.mrf.mxu0
    %v2744 = vadd.f32 0.0, %v2743
    %v2745 = vpop.f32.mrf.mxu0
    %2746 = vdwg.mxu0
    %v2747 = vmul.f32 %v2036, %v2739
    %v2748 = vmul.f32 %v2037, %v2744
    %v2749 = vsel %vm381, %v2747, -inf
    %2750 = vmax.xlane.f32.xlu0 %v2749
    %v2751 = vpop.xlane.xlu0 %2750
    %v2752 = vsel %vm381, %v2748, -inf
    %2753 = vmax.xlane.f32.xlu0 %v2752
    %v2754 = vpop.xlane.xlu0 %2753
    %v2755 = vsub.f32 %v2747, %v2751
    %v2756 = vsub.f32 %v2748, %v2754
    %v2757 = vmul.f32 %v2755, 1.442695
    %v2758 = vpow.pop %v2757
    %v2759 = vmul.f32 %v2756, 1.442695
    %v2760 = vpow.pop %v2759
    %v2761 = vsel %vm381, %v2758, 0.0
    %2762 = vadd.xlane.f32.xlu0 %v2761
    %v2763 = vpop.xlane.xlu0 %2762
    %v2764 = vsel %vm381, %v2760, 0.0
    %2765 = vadd.xlane.f32.xlu0 %v2764
    %v2766 = vpop.xlane.xlu0 %2765
    %v2767 = vrcp.pop %v2763
    %v2768 = vrcp.pop %v2766
    %v2769 = vmul.f32 %v2763, %v2767
    %v2770 = vmul.f32 %v2766, %v2768
    %v2771 = vsub.f32 2.0, %v2769
    %v2772 = vsub.f32 2.0, %v2770
    %v2773 = vmul.f32 %v2767, %v2771
    %v2774 = vmul.f32 %v2768, %v2772
    %v2775 = vmul.f32 %v2758, %v2773
    %v2776 = vmul.f32 %v2760, %v2774
    %2779 = vrot.lane.b32.xlu0 %v219, 96
    %v2780 = vpop.permute.xlu0 %2779
    %2781 = vrot.lane.b32.xlu0 %v225, 96
    %v2782 = vpop.permute.xlu0 %2781
    %v2786 = vsel %vm381, %v2775, 0
    %v2789 = vsel %vm381, %v2776, 0
    %2791 = vmatprep.subr.mxu0 0.0
    %2792 = vmatpush1.msra.mxu0 0.0
    %2793 = vmatprep.subr.mxu0 0.0
    %2794 = vmatpush1.msra.mxu0 0.0
    %2795 = vmatprep.subr.mxu0 0.0
    %2796 = vmatpush1.msra.mxu0 0.0
    %2797 = vmatprep.subr.mxu0 0.0
    %2798 = vmatpush1.msra.mxu0 0.0
    %2799 = vmatprep.subr.mxu0 0.0
    %2800 = vmatpush1.msra.mxu0 0.0
    %2801 = vmatprep.subr.mxu0 0.0
    %2802 = vmatpush1.msra.mxu0 0.0
    %2803 = vmatprep.subr.mxu0 0.0
    %2804 = vmatpush1.msra.mxu0 0.0
    %2805 = vmatprep.subr.mxu0 0.0
    %2806 = vmatpush1.msra.mxu0 0.0
    %2807 = vmatprep.subr.mxu0 0.0
    %2808 = vmatpush1.msra.mxu0 0.0
    %2809 = vmatprep.subr.mxu0 0.0
    %2810 = vmatpush1.msra.mxu0 0.0
    %2811 = vmatprep.subr.mxu0 0.0
    %2812 = vmatpush1.msra.mxu0 0.0
    %2813 = vmatprep.subr.mxu0 0.0
    %2814 = vmatpush1.msra.mxu0 0.0
    %2815 = vmatprep.subr.mxu0 0.0
    %2816 = vmatpush1.msra.mxu0 0.0
    %2817 = vmatprep.subr.mxu0 0.0
    %2818 = vmatpush1.msra.mxu0 0.0
    %2819 = vmatprep.subr.mxu0 0.0
    %2820 = vmatpush1.msra.mxu0 %v2782
    %2821 = vmatprep.subr.mxu0 0.0
    %2822 = vmatpush1.msra.mxu0 %v2780
    %2823 = vmatprep.subr.mxu0 0.0
    %2824 = vmatpush2.msra.mxu0 0.0
    %2825 = vmatprep.subr.mxu0 0.0
    %2826 = vmatpush2.msra.mxu0 0.0
    %2827 = vmatprep.subr.mxu0 0.0
    %2828 = vmatpush2.msra.mxu0 0.0
    %2829 = vmatprep.subr.mxu0 0.0
    %2830 = vmatpush2.msra.mxu0 0.0
    %2831 = vmatprep.subr.mxu0 0.0
    %2832 = vmatpush2.msra.mxu0 0.0
    %2833 = vmatprep.subr.mxu0 0.0
    %2834 = vmatpush2.msra.mxu0 0.0
    %2835 = vmatprep.subr.mxu0 0.0
    %2836 = vmatpush2.msra.mxu0 0.0
    %2837 = vmatprep.subr.mxu0 0.0
    %2838 = vmatpush2.msra.mxu0 0.0
    %2839 = vmatprep.subr.mxu0 0.0
    %2840 = vmatpush2.msra.mxu0 0.0
    %2841 = vmatprep.subr.mxu0 0.0
    %2842 = vmatpush2.msra.mxu0 0.0
    %2843 = vmatprep.subr.mxu0 0.0
    %2844 = vmatpush2.msra.mxu0 0.0
    %2845 = vmatprep.subr.mxu0 0.0
    %2846 = vmatpush2.msra.mxu0 0.0
    %2847 = vmatprep.subr.mxu0 0.0
    %2848 = vmatpush2.msra.mxu0 0.0
    %2849 = vmatprep.subr.mxu0 0.0
    %2850 = vmatpush2.msra.mxu0 0.0
    %2851 = vmatprep.subr.mxu0 0.0
    %2852 = vmatpush2.msra.mxu0 0.0
    %2853 = vmatprep.subr.mxu0 0.0
    %2854 = vmatpush2.msra.mxu0 0.0
    %2855 = vmatprep.mubr.f32.mxu0 0.0
    %2856 = vmatmul.mubr.f32.gmra.mxu0 %v2786
    %v2857 = vpop.f32.mrf.mxu0
    %v2858 = vadd.f32 0.0, %v2857
    %v2859 = vpop.f32.mrf.mxu0
    %2860 = vmatprep.mubr.f32.mxu0 0.0
    %2861 = vmatmul.mubr.f32.gmra.mxu0 %v2789
    %v2862 = vpop.f32.mrf.mxu0
    %v2863 = vadd.f32 0.0, %v2862
    %v2864 = vpop.f32.mrf.mxu0
    %2865 = vdwg.mxu0
    %v2866 = vadd.f32 %v2654, %v2858
    %v2867 = vadd.f32 %v2655, %v2863
    %v2868 = vadd.f32 %v2866, %v56
    %v2869 = vadd.f32 %v2867, %v57
    %v2870 = vsel %vm77, %v2868, 0.0
    %v2871 = vsel %vm77, %v2869, 0.0
    %v2872 = vadd.f32 %v2870, %v2871
    %v2873 = vrot.slane %v2872, 4
    %v2874 = vadd.f32 %v2872, %v2873
    %v2875 = vrot.slane %v2874, 2
    %v2876 = vadd.f32 %v2874, %v2875
    %v2877 = vrot.slane %v2876, 1
    %v2878 = vadd.f32 %v2876, %v2877
    %v2879 = vmul.f32 %v2878, %v1132
    %v2880 = vmul.f32 %v2868, %v2868
    %v2881 = vmul.f32 %v2869, %v2869
    %v2882 = vsel %vm77, %v2880, 0.0
    %v2883 = vsel %vm77, %v2881, 0.0
    %v2884 = vadd.f32 %v2882, %v2883
    %v2885 = vrot.slane %v2884, 4
    %v2886 = vadd.f32 %v2884, %v2885
    %v2887 = vrot.slane %v2886, 2
    %v2888 = vadd.f32 %v2886, %v2887
    %v2889 = vrot.slane %v2888, 1
    %v2890 = vadd.f32 %v2888, %v2889
    %v2891 = vmul.f32 %v2890, %v1132
    %v2892 = vmul.f32 %v2879, %v2879
    %v2893 = vsub.f32 %v2891, %v2892
    %v2894 = vsub.f32 %v2868, %v2879
    %v2895 = vsub.f32 %v2869, %v2879
    %v2896 = vadd.f32 %v2893, 1e-05
    %v2897 = vrsqrt.pop %v2896
    %v2898 = vmul.f32 %v2894, %v2897
    %v2899 = vmul.f32 %v2895, %v2897
    %v2900 = vmul.f32 %v2898, %v1157
    %v2901 = vmul.f32 %v2899, %v1157
    %v2902 = vadd.f32 %v2900, %v1163
    %v2903 = vadd.f32 %v2901, %v1163
    %s2904 = scalar_lea.vmem [#allocation2], 48
    %v2905 = vld [vmem:[%s2904] sm:$0xff]
    %v2906 = vld [vmem:[%s2904 + $0x8] sm:$0xff]
    %2909 = vrot.lane.b32.xlu0 %v229, 96
    %v2910 = vpop.permute.xlu0 %2909
    %2911 = vrot.lane.b32.xlu0 %v235, 96
    %v2912 = vpop.permute.xlu0 %2911
    %v2913 = vsel %vm295, %v229, 0
    %v2915 = vsel %vm295, %v235, 0
    %v2917 = vsel %vm295, %v2910, 0
    %v2919 = vsel %vm295, %v2912, 0
    %2921 = vmatprep.subr.mxu0 0.0
    %2922 = vmatpush1.xpose.msra.mxu0 0.0
    %2923 = vmatprep.subr.mxu0 0.0
    %2924 = vmatpush1.xpose.msra.mxu0 0.0
    %2925 = vmatprep.subr.mxu0 0.0
    %2926 = vmatpush1.xpose.msra.mxu0 0.0
    %2927 = vmatprep.subr.mxu0 0.0
    %2928 = vmatpush1.xpose.msra.mxu0 0.0
    %2929 = vmatprep.subr.mxu0 0.0
    %2930 = vmatpush1.xpose.msra.mxu0 0.0
    %2931 = vmatprep.subr.mxu0 0.0
    %2932 = vmatpush1.xpose.msra.mxu0 0.0
    %2933 = vmatprep.subr.mxu0 0.0
    %2934 = vmatpush1.xpose.msra.mxu0 0.0
    %2935 = vmatprep.subr.mxu0 0.0
    %2936 = vmatpush1.xpose.msra.mxu0 0.0
    %2937 = vmatprep.subr.mxu0 0.0
    %2938 = vmatpush1.xpose.msra.mxu0 0.0
    %2939 = vmatprep.subr.mxu0 0.0
    %2940 = vmatpush1.xpose.msra.mxu0 0.0
    %2941 = vmatprep.subr.mxu0 0.0
    %2942 = vmatpush1.xpose.msra.mxu0 0.0
    %2943 = vmatprep.subr.mxu0 0.0
    %2944 = vmatpush1.xpose.msra.mxu0 0.0
    %2945 = vmatprep.subr.mxu0 0.0
    %2946 = vmatpush1.xpose.msra.mxu0 0.0
    %2947 = vmatprep.subr.mxu0 0.0
    %2948 = vmatpush1.xpose.msra.mxu0 0.0
    %2949 = vmatprep.subr.mxu0 0.0
    %2950 = vmatpush1.xpose.msra.mxu0 %v2919
    %2951 = vmatprep.subr.mxu0 0.0
    %2952 = vmatpush1.xpose.msra.mxu0 %v2917
    %2953 = vmatprep.subr.mxu0 0.0
    %2954 = vmatpush2.xpose.msra.mxu0 0.0
    %2955 = vmatprep.subr.mxu0 0.0
    %2956 = vmatpush2.xpose.msra.mxu0 0.0
    %2957 = vmatprep.subr.mxu0 0.0
    %2958 = vmatpush2.xpose.msra.mxu0 0.0
    %2959 = vmatprep.subr.mxu0 0.0
    %2960 = vmatpush2.xpose.msra.mxu0 0.0
    %2961 = vmatprep.subr.mxu0 0.0
    %2962 = vmatpush2.xpose.msra.mxu0 0.0
    %2963 = vmatprep.subr.mxu0 0.0
    %2964 = vmatpush2.xpose.msra.mxu0 0.0
    %2965 = vmatprep.subr.mxu0 0.0
    %2966 = vmatpush2.xpose.msra.mxu0 0.0
    %2967 = vmatprep.subr.mxu0 0.0
    %2968 = vmatpush2.xpose.msra.mxu0 0.0
    %2969 = vmatprep.subr.mxu0 0.0
    %2970 = vmatpush2.xpose.msra.mxu0 0.0
    %2971 = vmatprep.subr.mxu0 0.0
    %2972 = vmatpush2.xpose.msra.mxu0 0.0
    %2973 = vmatprep.subr.mxu0 0.0
    %2974 = vmatpush2.xpose.msra.mxu0 0.0
    %2975 = vmatprep.subr.mxu0 0.0
    %2976 = vmatpush2.xpose.msra.mxu0 0.0
    %2977 = vmatprep.subr.mxu0 0.0
    %2978 = vmatpush2.xpose.msra.mxu0 0.0
    %2979 = vmatprep.subr.mxu0 0.0
    %2980 = vmatpush2.xpose.msra.mxu0 0.0
    %2981 = vmatprep.subr.mxu0 0.0
    %2982 = vmatpush2.xpose.msra.mxu0 0.0
    %2983 = vmatprep.subr.mxu0 0.0
    %2984 = vmatpush2.xpose.msra.mxu0 0.0
    %2985 = vmatprep.mubr.f32.mxu0 0.0
    %2986 = vmatmul.mubr.f32.gmra.mxu0 %v2913
    %v2987 = vpop.f32.mrf.mxu0
    %v2988 = vadd.f32 0.0, %v2987
    %v2989 = vpop.f32.mrf.mxu0
    %2990 = vmatprep.mubr.f32.mxu0 0.0
    %2991 = vmatmul.mubr.f32.gmra.mxu0 %v2915
    %v2992 = vpop.f32.mrf.mxu0
    %v2993 = vadd.f32 0.0, %v2992
    %v2994 = vpop.f32.mrf.mxu0
    %2995 = vdwg.mxu0
    %v2996 = vmul.f32 %v2905, %v2988
    %v2997 = vmul.f32 %v2906, %v2993
    %v2998 = vsel %vm381, %v2996, -inf
    %2999 = vmax.xlane.f32.xlu0 %v2998
    %v3000 = vpop.xlane.xlu0 %2999
    %v3001 = vsel %vm381, %v2997, -inf
    %3002 = vmax.xlane.f32.xlu0 %v3001
    %v3003 = vpop.xlane.xlu0 %3002
    %v3004 = vsub.f32 %v2996, %v3000
    %v3005 = vsub.f32 %v2997, %v3003
    %v3006 = vmul.f32 %v3004, 1.442695
    %v3007 = vpow.pop %v3006
    %v3008 = vmul.f32 %v3005, 1.442695
    %v3009 = vpow.pop %v3008
    %v3010 = vsel %vm381, %v3007, 0.0
    %3011 = vadd.xlane.f32.xlu0 %v3010
    %v3012 = vpop.xlane.xlu0 %3011
    %v3013 = vsel %vm381, %v3009, 0.0
    %3014 = vadd.xlane.f32.xlu0 %v3013
    %v3015 = vpop.xlane.xlu0 %3014
    %v3016 = vrcp.pop %v3012
    %v3017 = vrcp.pop %v3015
    %v3018 = vmul.f32 %v3012, %v3016
    %v3019 = vmul.f32 %v3015, %v3017
    %v3020 = vsub.f32 2.0, %v3018
    %v3021 = vsub.f32 2.0, %v3019
    %v3022 = vmul.f32 %v3016, %v3020
    %v3023 = vmul.f32 %v3017, %v3021
    %v3024 = vmul.f32 %v3007, %v3022
    %v3025 = vmul.f32 %v3009, %v3023
    %3026 = vrot.lane.b32.xlu0 %v229, 120
    %v3027 = vpop.permute.xlu0 %3026
    %3028 = vrot.lane.b32.xlu0 %v235, 120
    %v3029 = vpop.permute.xlu0 %3028
    %3030 = vrot.lane.b32.xlu0 %v229, 88
    %v3031 = vpop.permute.xlu0 %3030
    %3032 = vrot.lane.b32.xlu0 %v235, 88
    %v3033 = vpop.permute.xlu0 %3032
    %v3034 = vsel %vm295, %v3027, 0
    %v3036 = vsel %vm295, %v3029, 0
    %v3038 = vsel %vm295, %v3031, 0
    %v3040 = vsel %vm295, %v3033, 0
    %3042 = vmatprep.subr.mxu0 0.0
    %3043 = vmatpush1.xpose.msra.mxu0 0.0
    %3044 = vmatprep.subr.mxu0 0.0
    %3045 = vmatpush1.xpose.msra.mxu0 0.0
    %3046 = vmatprep.subr.mxu0 0.0
    %3047 = vmatpush1.xpose.msra.mxu0 0.0
    %3048 = vmatprep.subr.mxu0 0.0
    %3049 = vmatpush1.xpose.msra.mxu0 0.0
    %3050 = vmatprep.subr.mxu0 0.0
    %3051 = vmatpush1.xpose.msra.mxu0 0.0
    %3052 = vmatprep.subr.mxu0 0.0
    %3053 = vmatpush1.xpose.msra.mxu0 0.0
    %3054 = vmatprep.subr.mxu0 0.0
    %3055 = vmatpush1.xpose.msra.mxu0 0.0
    %3056 = vmatprep.subr.mxu0 0.0
    %3057 = vmatpush1.xpose.msra.mxu0 0.0
    %3058 = vmatprep.subr.mxu0 0.0
    %3059 = vmatpush1.xpose.msra.mxu0 0.0
    %3060 = vmatprep.subr.mxu0 0.0
    %3061 = vmatpush1.xpose.msra.mxu0 0.0
    %3062 = vmatprep.subr.mxu0 0.0
    %3063 = vmatpush1.xpose.msra.mxu0 0.0
    %3064 = vmatprep.subr.mxu0 0.0
    %3065 = vmatpush1.xpose.msra.mxu0 0.0
    %3066 = vmatprep.subr.mxu0 0.0
    %3067 = vmatpush1.xpose.msra.mxu0 0.0
    %3068 = vmatprep.subr.mxu0 0.0
    %3069 = vmatpush1.xpose.msra.mxu0 0.0
    %3070 = vmatprep.subr.mxu0 0.0
    %3071 = vmatpush1.xpose.msra.mxu0 %v3040
    %3072 = vmatprep.subr.mxu0 0.0
    %3073 = vmatpush1.xpose.msra.mxu0 %v3038
    %3074 = vmatprep.subr.mxu0 0.0
    %3075 = vmatpush2.xpose.msra.mxu0 0.0
    %3076 = vmatprep.subr.mxu0 0.0
    %3077 = vmatpush2.xpose.msra.mxu0 0.0
    %3078 = vmatprep.subr.mxu0 0.0
    %3079 = vmatpush2.xpose.msra.mxu0 0.0
    %3080 = vmatprep.subr.mxu0 0.0
    %3081 = vmatpush2.xpose.msra.mxu0 0.0
    %3082 = vmatprep.subr.mxu0 0.0
    %3083 = vmatpush2.xpose.msra.mxu0 0.0
    %3084 = vmatprep.subr.mxu0 0.0
    %3085 = vmatpush2.xpose.msra.mxu0 0.0
    %3086 = vmatprep.subr.mxu0 0.0
    %3087 = vmatpush2.xpose.msra.mxu0 0.0
    %3088 = vmatprep.subr.mxu0 0.0
    %3089 = vmatpush2.xpose.msra.mxu0 0.0
    %3090 = vmatprep.subr.mxu0 0.0
    %3091 = vmatpush2.xpose.msra.mxu0 0.0
    %3092 = vmatprep.subr.mxu0 0.0
    %3093 = vmatpush2.xpose.msra.mxu0 0.0
    %3094 = vmatprep.subr.mxu0 0.0
    %3095 = vmatpush2.xpose.msra.mxu0 0.0
    %3096 = vmatprep.subr.mxu0 0.0
    %3097 = vmatpush2.xpose.msra.mxu0 0.0
    %3098 = vmatprep.subr.mxu0 0.0
    %3099 = vmatpush2.xpose.msra.mxu0 0.0
    %3100 = vmatprep.subr.mxu0 0.0
    %3101 = vmatpush2.xpose.msra.mxu0 0.0
    %3102 = vmatprep.subr.mxu0 0.0
    %3103 = vmatpush2.xpose.msra.mxu0 0.0
    %3104 = vmatprep.subr.mxu0 0.0
    %3105 = vmatpush2.xpose.msra.mxu0 0.0
    %3106 = vmatprep.mubr.f32.mxu0 0.0
    %3107 = vmatmul.mubr.f32.gmra.mxu0 %v3034
    %v3108 = vpop.f32.mrf.mxu0
    %v3109 = vadd.f32 0.0, %v3108
    %v3110 = vpop.f32.mrf.mxu0
    %3111 = vmatprep.mubr.f32.mxu0 0.0
    %3112 = vmatmul.mubr.f32.gmra.mxu0 %v3036
    %v3113 = vpop.f32.mrf.mxu0
    %v3114 = vadd.f32 0.0, %v3113
    %v3115 = vpop.f32.mrf.mxu0
    %3116 = vdwg.mxu0
    %v3117 = vmul.f32 %v2905, %v3109
    %v3118 = vmul.f32 %v2906, %v3114
    %v3119 = vsel %vm381, %v3117, -inf
    %3120 = vmax.xlane.f32.xlu0 %v3119
    %v3121 = vpop.xlane.xlu0 %3120
    %v3122 = vsel %vm381, %v3118, -inf
    %3123 = vmax.xlane.f32.xlu0 %v3122
    %v3124 = vpop.xlane.xlu0 %3123
    %v3125 = vsub.f32 %v3117, %v3121
    %v3126 = vsub.f32 %v3118, %v3124
    %v3127 = vmul.f32 %v3125, 1.442695
    %v3128 = vpow.pop %v3127
    %v3129 = vmul.f32 %v3126, 1.442695
    %v3130 = vpow.pop %v3129
    %v3131 = vsel %vm381, %v3128, 0.0
    %3132 = vadd.xlane.f32.xlu0 %v3131
    %v3133 = vpop.xlane.xlu0 %3132
    %v3134 = vsel %vm381, %v3130, 0.0
    %3135 = vadd.xlane.f32.xlu0 %v3134
    %v3136 = vpop.xlane.xlu0 %3135
    %v3137 = vrcp.pop %v3133
    %v3138 = vrcp.pop %v3136
    %v3139 = vmul.f32 %v3133, %v3137
    %v3140 = vmul.f32 %v3136, %v3138
    %v3141 = vsub.f32 2.0, %v3139
    %v3142 = vsub.f32 2.0, %v3140
    %v3143 = vmul.f32 %v3137, %v3141
    %v3144 = vmul.f32 %v3138, %v3142
    %v3145 = vmul.f32 %v3128, %v3143
    %v3146 = vmul.f32 %v3130, %v3144
    %3147 = vrot.lane.b32.xlu0 %v229, 32
    %v3148 = vpop.permute.xlu0 %3147
    %3149 = vrot.lane.b32.xlu0 %v235, 32
    %v3150 = vpop.permute.xlu0 %3149
    %v3154 = vsel %vm381, %v3145, 0
    %v3157 = vsel %vm381, %v3146, 0
    %3159 = vmatprep.subr.mxu0 0.0
    %3160 = vmatpush1.msra.mxu0 0.0
    %3161 = vmatprep.subr.mxu0 0.0
    %3162 = vmatpush1.msra.mxu0 0.0
    %3163 = vmatprep.subr.mxu0 0.0
    %3164 = vmatpush1.msra.mxu0 0.0
    %3165 = vmatprep.subr.mxu0 0.0
    %3166 = vmatpush1.msra.mxu0 0.0
    %3167 = vmatprep.subr.mxu0 0.0
    %3168 = vmatpush1.msra.mxu0 0.0
    %3169 = vmatprep.subr.mxu0 0.0
    %3170 = vmatpush1.msra.mxu0 0.0
    %3171 = vmatprep.subr.mxu0 0.0
    %3172 = vmatpush1.msra.mxu0 0.0
    %3173 = vmatprep.subr.mxu0 0.0
    %3174 = vmatpush1.msra.mxu0 0.0
    %3175 = vmatprep.subr.mxu0 0.0
    %3176 = vmatpush1.msra.mxu0 0.0
    %3177 = vmatprep.subr.mxu0 0.0
    %3178 = vmatpush1.msra.mxu0 0.0
    %3179 = vmatprep.subr.mxu0 0.0
    %3180 = vmatpush1.msra.mxu0 0.0
    %3181 = vmatprep.subr.mxu0 0.0
    %3182 = vmatpush1.msra.mxu0 0.0
    %3183 = vmatprep.subr.mxu0 0.0
    %3184 = vmatpush1.msra.mxu0 0.0
    %3185 = vmatprep.subr.mxu0 0.0
    %3186 = vmatpush1.msra.mxu0 0.0
    %3187 = vmatprep.subr.mxu0 0.0
    %3188 = vmatpush1.msra.mxu0 %v3150
    %3189 = vmatprep.subr.mxu0 0.0
    %3190 = vmatpush1.msra.mxu0 %v3148
    %3191 = vmatprep.subr.mxu0 0.0
    %3192 = vmatpush2.msra.mxu0 0.0
    %3193 = vmatprep.subr.mxu0 0.0
    %3194 = vmatpush2.msra.mxu0 0.0
    %3195 = vmatprep.subr.mxu0 0.0
    %3196 = vmatpush2.msra.mxu0 0.0
    %3197 = vmatprep.subr.mxu0 0.0
    %3198 = vmatpush2.msra.mxu0 0.0
    %3199 = vmatprep.subr.mxu0 0.0
    %3200 = vmatpush2.msra.mxu0 0.0
    %3201 = vmatprep.subr.mxu0 0.0
    %3202 = vmatpush2.msra.mxu0 0.0
    %3203 = vmatprep.subr.mxu0 0.0
    %3204 = vmatpush2.msra.mxu0 0.0
    %3205 = vmatprep.subr.mxu0 0.0
    %3206 = vmatpush2.msra.mxu0 0.0
    %3207 = vmatprep.subr.mxu0 0.0
    %3208 = vmatpush2.msra.mxu0 0.0
    %3209 = vmatprep.subr.mxu0 0.0
    %3210 = vmatpush2.msra.mxu0 0.0
    %3211 = vmatprep.subr.mxu0 0.0
    %3212 = vmatpush2.msra.mxu0 0.0
    %3213 = vmatprep.subr.mxu0 0.0
    %3214 = vmatpush2.msra.mxu0 0.0
    %3215 = vmatprep.subr.mxu0 0.0
    %3216 = vmatpush2.msra.mxu0 0.0
    %3217 = vmatprep.subr.mxu0 0.0
    %3218 = vmatpush2.msra.mxu0 0.0
    %3219 = vmatprep.subr.mxu0 0.0
    %3220 = vmatpush2.msra.mxu0 0.0
    %3221 = vmatprep.subr.mxu0 0.0
    %3222 = vmatpush2.msra.mxu0 0.0
    %3223 = vmatprep.mubr.f32.mxu0 0.0
    %3224 = vmatmul.mubr.f32.gmra.mxu0 %v3154
    %v3225 = vpop.f32.mrf.mxu0
    %v3226 = vadd.f32 0.0, %v3225
    %v3227 = vpop.f32.mrf.mxu0
    %3228 = vmatprep.mubr.f32.mxu0 0.0
    %3229 = vmatmul.mubr.f32.gmra.mxu0 %v3157
    %v3230 = vpop.f32.mrf.mxu0
    %v3231 = vadd.f32 0.0, %v3230
    %v3232 = vpop.f32.mrf.mxu0
    %3233 = vdwg.mxu0
    %3234 = vrot.lane.b32.xlu0 %v229, 64
    %v3235 = vpop.permute.xlu0 %3234
    %3236 = vrot.lane.b32.xlu0 %v235, 64
    %v3237 = vpop.permute.xlu0 %3236
    %v3241 = vsel %vm381, %v3024, 0
    %v3244 = vsel %vm381, %v3025, 0
    %3246 = vmatprep.subr.mxu0 0.0
    %3247 = vmatpush1.msra.mxu0 0.0
    %3248 = vmatprep.subr.mxu0 0.0
    %3249 = vmatpush1.msra.mxu0 0.0
    %3250 = vmatprep.subr.mxu0 0.0
    %3251 = vmatpush1.msra.mxu0 0.0
    %3252 = vmatprep.subr.mxu0 0.0
    %3253 = vmatpush1.msra.mxu0 0.0
    %3254 = vmatprep.subr.mxu0 0.0
    %3255 = vmatpush1.msra.mxu0 0.0
    %3256 = vmatprep.subr.mxu0 0.0
    %3257 = vmatpush1.msra.mxu0 0.0
    %3258 = vmatprep.subr.mxu0 0.0
    %3259 = vmatpush1.msra.mxu0 0.0
    %3260 = vmatprep.subr.mxu0 0.0
    %3261 = vmatpush1.msra.mxu0 0.0
    %3262 = vmatprep.subr.mxu0 0.0
    %3263 = vmatpush1.msra.mxu0 0.0
    %3264 = vmatprep.subr.mxu0 0.0
    %3265 = vmatpush1.msra.mxu0 0.0
    %3266 = vmatprep.subr.mxu0 0.0
    %3267 = vmatpush1.msra.mxu0 0.0
    %3268 = vmatprep.subr.mxu0 0.0
    %3269 = vmatpush1.msra.mxu0 0.0
    %3270 = vmatprep.subr.mxu0 0.0
    %3271 = vmatpush1.msra.mxu0 0.0
    %3272 = vmatprep.subr.mxu0 0.0
    %3273 = vmatpush1.msra.mxu0 0.0
    %3274 = vmatprep.subr.mxu0 0.0
    %3275 = vmatpush1.msra.mxu0 %v3237
    %3276 = vmatprep.subr.mxu0 0.0
    %3277 = vmatpush1.msra.mxu0 %v3235
    %3278 = vmatprep.subr.mxu0 0.0
    %3279 = vmatpush2.msra.mxu0 0.0
    %3280 = vmatprep.subr.mxu0 0.0
    %3281 = vmatpush2.msra.mxu0 0.0
    %3282 = vmatprep.subr.mxu0 0.0
    %3283 = vmatpush2.msra.mxu0 0.0
    %3284 = vmatprep.subr.mxu0 0.0
    %3285 = vmatpush2.msra.mxu0 0.0
    %3286 = vmatprep.subr.mxu0 0.0
    %3287 = vmatpush2.msra.mxu0 0.0
    %3288 = vmatprep.subr.mxu0 0.0
    %3289 = vmatpush2.msra.mxu0 0.0
    %3290 = vmatprep.subr.mxu0 0.0
    %3291 = vmatpush2.msra.mxu0 0.0
    %3292 = vmatprep.subr.mxu0 0.0
    %3293 = vmatpush2.msra.mxu0 0.0
    %3294 = vmatprep.subr.mxu0 0.0
    %3295 = vmatpush2.msra.mxu0 0.0
    %3296 = vmatprep.subr.mxu0 0.0
    %3297 = vmatpush2.msra.mxu0 0.0
    %3298 = vmatprep.subr.mxu0 0.0
    %3299 = vmatpush2.msra.mxu0 0.0
    %3300 = vmatprep.subr.mxu0 0.0
    %3301 = vmatpush2.msra.mxu0 0.0
    %3302 = vmatprep.subr.mxu0 0.0
    %3303 = vmatpush2.msra.mxu0 0.0
    %3304 = vmatprep.subr.mxu0 0.0
    %3305 = vmatpush2.msra.mxu0 0.0
    %3306 = vmatprep.subr.mxu0 0.0
    %3307 = vmatpush2.msra.mxu0 0.0
    %3308 = vmatprep.subr.mxu0 0.0
    %3309 = vmatpush2.msra.mxu0 0.0
    %3310 = vmatprep.mubr.f32.mxu0 0.0
    %3311 = vmatmul.mubr.f32.gmra.mxu0 %v3241
    %v3312 = vpop.f32.mrf.mxu0
    %v3313 = vadd.f32 %v3226, %v3312
    %v3314 = vpop.f32.mrf.mxu0
    %3315 = vmatprep.mubr.f32.mxu0 0.0
    %3316 = vmatmul.mubr.f32.gmra.mxu0 %v3244
    %v3317 = vpop.f32.mrf.mxu0
    %v3318 = vadd.f32 %v3231, %v3317
    %v3319 = vpop.f32.mrf.mxu0
    %3320 = vdwg.mxu0
    %3321 = vrot.lane.b32.xlu0 %v229, 112
    %v3322 = vpop.permute.xlu0 %3321
    %3323 = vrot.lane.b32.xlu0 %v235, 112
    %v3324 = vpop.permute.xlu0 %3323
    %3325 = vrot.lane.b32.xlu0 %v229, 80
    %v3326 = vpop.permute.xlu0 %3325
    %3327 = vrot.lane.b32.xlu0 %v235, 80
    %v3328 = vpop.permute.xlu0 %3327
    %v3329 = vsel %vm295, %v3322, 0
    %v3331 = vsel %vm295, %v3324, 0
    %v3333 = vsel %vm295, %v3326, 0
    %v3335 = vsel %vm295, %v3328, 0
    %3337 = vmatprep.subr.mxu0 0.0
    %3338 = vmatpush1.xpose.msra.mxu0 0.0
    %3339 = vmatprep.subr.mxu0 0.0
    %3340 = vmatpush1.xpose.msra.mxu0 0.0
    %3341 = vmatprep.subr.mxu0 0.0
    %3342 = vmatpush1.xpose.msra.mxu0 0.0
    %3343 = vmatprep.subr.mxu0 0.0
    %3344 = vmatpush1.xpose.msra.mxu0 0.0
    %3345 = vmatprep.subr.mxu0 0.0
    %3346 = vmatpush1.xpose.msra.mxu0 0.0
    %3347 = vmatprep.subr.mxu0 0.0
    %3348 = vmatpush1.xpose.msra.mxu0 0.0
    %3349 = vmatprep.subr.mxu0 0.0
    %3350 = vmatpush1.xpose.msra.mxu0 0.0
    %3351 = vmatprep.subr.mxu0 0.0
    %3352 = vmatpush1.xpose.msra.mxu0 0.0
    %3353 = vmatprep.subr.mxu0 0.0
    %3354 = vmatpush1.xpose.msra.mxu0 0.0
    %3355 = vmatprep.subr.mxu0 0.0
    %3356 = vmatpush1.xpose.msra.mxu0 0.0
    %3357 = vmatprep.subr.mxu0 0.0
    %3358 = vmatpush1.xpose.msra.mxu0 0.0
    %3359 = vmatprep.subr.mxu0 0.0
    %3360 = vmatpush1.xpose.msra.mxu0 0.0
    %3361 = vmatprep.subr.mxu0 0.0
    %3362 = vmatpush1.xpose.msra.mxu0 0.0
    %3363 = vmatprep.subr.mxu0 0.0
    %3364 = vmatpush1.xpose.msra.mxu0 0.0
    %3365 = vmatprep.subr.mxu0 0.0
    %3366 = vmatpush1.xpose.msra.mxu0 %v3335
    %3367 = vmatprep.subr.mxu0 0.0
    %3368 = vmatpush1.xpose.msra.mxu0 %v3333
    %3369 = vmatprep.subr.mxu0 0.0
    %3370 = vmatpush2.xpose.msra.mxu0 0.0
    %3371 = vmatprep.subr.mxu0 0.0
    %3372 = vmatpush2.xpose.msra.mxu0 0.0
    %3373 = vmatprep.subr.mxu0 0.0
    %3374 = vmatpush2.xpose.msra.mxu0 0.0
    %3375 = vmatprep.subr.mxu0 0.0
    %3376 = vmatpush2.xpose.msra.mxu0 0.0
    %3377 = vmatprep.subr.mxu0 0.0
    %3378 = vmatpush2.xpose.msra.mxu0 0.0
    %3379 = vmatprep.subr.mxu0 0.0
    %3380 = vmatpush2.xpose.msra.mxu0 0.0
    %3381 = vmatprep.subr.mxu0 0.0
    %3382 = vmatpush2.xpose.msra.mxu0 0.0
    %3383 = vmatprep.subr.mxu0 0.0
    %3384 = vmatpush2.xpose.msra.mxu0 0.0
    %3385 = vmatprep.subr.mxu0 0.0
    %3386 = vmatpush2.xpose.msra.mxu0 0.0
    %3387 = vmatprep.subr.mxu0 0.0
    %3388 = vmatpush2.xpose.msra.mxu0 0.0
    %3389 = vmatprep.subr.mxu0 0.0
    %3390 = vmatpush2.xpose.msra.mxu0 0.0
    %3391 = vmatprep.subr.mxu0 0.0
    %3392 = vmatpush2.xpose.msra.mxu0 0.0
    %3393 = vmatprep.subr.mxu0 0.0
    %3394 = vmatpush2.xpose.msra.mxu0 0.0
    %3395 = vmatprep.subr.mxu0 0.0
    %3396 = vmatpush2.xpose.msra.mxu0 0.0
    %3397 = vmatprep.subr.mxu0 0.0
    %3398 = vmatpush2.xpose.msra.mxu0 0.0
    %3399 = vmatprep.subr.mxu0 0.0
    %3400 = vmatpush2.xpose.msra.mxu0 0.0
    %3401 = vmatprep.mubr.f32.mxu0 0.0
    %3402 = vmatmul.mubr.f32.gmra.mxu0 %v3329
    %v3403 = vpop.f32.mrf.mxu0
    %v3404 = vadd.f32 0.0, %v3403
    %v3405 = vpop.f32.mrf.mxu0
    %3406 = vmatprep.mubr.f32.mxu0 0.0
    %3407 = vmatmul.mubr.f32.gmra.mxu0 %v3331
    %v3408 = vpop.f32.mrf.mxu0
    %v3409 = vadd.f32 0.0, %v3408
    %v3410 = vpop.f32.mrf.mxu0
    %3411 = vdwg.mxu0
    %v3412 = vmul.f32 %v2905, %v3404
    %v3413 = vmul.f32 %v2906, %v3409
    %v3414 = vsel %vm381, %v3412, -inf
    %3415 = vmax.xlane.f32.xlu0 %v3414
    %v3416 = vpop.xlane.xlu0 %3415
    %v3417 = vsel %vm381, %v3413, -inf
    %3418 = vmax.xlane.f32.xlu0 %v3417
    %v3419 = vpop.xlane.xlu0 %3418
    %v3420 = vsub.f32 %v3412, %v3416
    %v3421 = vsub.f32 %v3413, %v3419
    %v3422 = vmul.f32 %v3420, 1.442695
    %v3423 = vpow.pop %v3422
    %v3424 = vmul.f32 %v3421, 1.442695
    %v3425 = vpow.pop %v3424
    %v3426 = vsel %vm381, %v3423, 0.0
    %3427 = vadd.xlane.f32.xlu0 %v3426
    %v3428 = vpop.xlane.xlu0 %3427
    %v3429 = vsel %vm381, %v3425, 0.0
    %3430 = vadd.xlane.f32.xlu0 %v3429
    %v3431 = vpop.xlane.xlu0 %3430
    %v3432 = vrcp.pop %v3428
    %v3433 = vrcp.pop %v3431
    %v3434 = vmul.f32 %v3428, %v3432
    %v3435 = vmul.f32 %v3431, %v3433
    %v3436 = vsub.f32 2.0, %v3434
    %v3437 = vsub.f32 2.0, %v3435
    %v3438 = vmul.f32 %v3432, %v3436
    %v3439 = vmul.f32 %v3433, %v3437
    %v3440 = vmul.f32 %v3423, %v3438
    %v3441 = vmul.f32 %v3425, %v3439
    %v3443 = vsel %vm381, %v3440, 0
    %v3446 = vsel %vm381, %v3441, 0
    %3448 = vmatprep.subr.mxu0 0.0
    %3449 = vmatpush1.msra.mxu0 0.0
    %3450 = vmatprep.subr.mxu0 0.0
    %3451 = vmatpush1.msra.mxu0 0.0
    %3452 = vmatprep.subr.mxu0 0.0
    %3453 = vmatpush1.msra.mxu0 0.0
    %3454 = vmatprep.subr.mxu0 0.0
    %3455 = vmatpush1.msra.mxu0 0.0
    %3456 = vmatprep.subr.mxu0 0.0
    %3457 = vmatpush1.msra.mxu0 0.0
    %3458 = vmatprep.subr.mxu0 0.0
    %3459 = vmatpush1.msra.mxu0 0.0
    %3460 = vmatprep.subr.mxu0 0.0
    %3461 = vmatpush1.msra.mxu0 0.0
    %3462 = vmatprep.subr.mxu0 0.0
    %3463 = vmatpush1.msra.mxu0 0.0
    %3464 = vmatprep.subr.mxu0 0.0
    %3465 = vmatpush1.msra.mxu0 0.0
    %3466 = vmatprep.subr.mxu0 0.0
    %3467 = vmatpush1.msra.mxu0 0.0
    %3468 = vmatprep.subr.mxu0 0.0
    %3469 = vmatpush1.msra.mxu0 0.0
    %3470 = vmatprep.subr.mxu0 0.0
    %3471 = vmatpush1.msra.mxu0 0.0
    %3472 = vmatprep.subr.mxu0 0.0
    %3473 = vmatpush1.msra.mxu0 0.0
    %3474 = vmatprep.subr.mxu0 0.0
    %3475 = vmatpush1.msra.mxu0 0.0
    %3476 = vmatprep.subr.mxu0 0.0
    %3477 = vmatpush1.msra.mxu0 %v237
    %3478 = vmatprep.subr.mxu0 0.0
    %3479 = vmatpush1.msra.mxu0 %v231
    %3480 = vmatprep.subr.mxu0 0.0
    %3481 = vmatpush2.msra.mxu0 0.0
    %3482 = vmatprep.subr.mxu0 0.0
    %3483 = vmatpush2.msra.mxu0 0.0
    %3484 = vmatprep.subr.mxu0 0.0
    %3485 = vmatpush2.msra.mxu0 0.0
    %3486 = vmatprep.subr.mxu0 0.0
    %3487 = vmatpush2.msra.mxu0 0.0
    %3488 = vmatprep.subr.mxu0 0.0
    %3489 = vmatpush2.msra.mxu0 0.0
    %3490 = vmatprep.subr.mxu0 0.0
    %3491 = vmatpush2.msra.mxu0 0.0
    %3492 = vmatprep.subr.mxu0 0.0
    %3493 = vmatpush2.msra.mxu0 0.0
    %3494 = vmatprep.subr.mxu0 0.0
    %3495 = vmatpush2.msra.mxu0 0.0
    %3496 = vmatprep.subr.mxu0 0.0
    %3497 = vmatpush2.msra.mxu0 0.0
    %3498 = vmatprep.subr.mxu0 0.0
    %3499 = vmatpush2.msra.mxu0 0.0
    %3500 = vmatprep.subr.mxu0 0.0
    %3501 = vmatpush2.msra.mxu0 0.0
    %3502 = vmatprep.subr.mxu0 0.0
    %3503 = vmatpush2.msra.mxu0 0.0
    %3504 = vmatprep.subr.mxu0 0.0
    %3505 = vmatpush2.msra.mxu0 0.0
    %3506 = vmatprep.subr.mxu0 0.0
    %3507 = vmatpush2.msra.mxu0 0.0
    %3508 = vmatprep.subr.mxu0 0.0
    %3509 = vmatpush2.msra.mxu0 0.0
    %3510 = vmatprep.subr.mxu0 0.0
    %3511 = vmatpush2.msra.mxu0 0.0
    %3512 = vmatprep.mubr.f32.mxu0 0.0
    %3513 = vmatmul.mubr.f32.gmra.mxu0 %v3443
    %v3514 = vpop.f32.mrf.mxu0
    %v3515 = vadd.f32 0.0, %v3514
    %v3516 = vpop.f32.mrf.mxu0
    %3517 = vmatprep.mubr.f32.mxu0 0.0
    %3518 = vmatmul.mubr.f32.gmra.mxu0 %v3446
    %v3519 = vpop.f32.mrf.mxu0
    %v3520 = vadd.f32 0.0, %v3519
    %v3521 = vpop.f32.mrf.mxu0
    %3522 = vdwg.mxu0
    %v3523 = vadd.f32 %v3313, %v3515
    %v3524 = vadd.f32 %v3318, %v3520
    %3525 = vrot.lane.b32.xlu0 %v229, 104
    %v3526 = vpop.permute.xlu0 %3525
    %3527 = vrot.lane.b32.xlu0 %v235, 104
    %v3528 = vpop.permute.xlu0 %3527
    %3529 = vrot.lane.b32.xlu0 %v229, 72
    %v3530 = vpop.permute.xlu0 %3529
    %3531 = vrot.lane.b32.xlu0 %v235, 72
    %v3532 = vpop.permute.xlu0 %3531
    %v3533 = vsel %vm295, %v3526, 0
    %v3535 = vsel %vm295, %v3528, 0
    %v3537 = vsel %vm295, %v3530, 0
    %v3539 = vsel %vm295, %v3532, 0
    %3541 = vmatprep.subr.mxu0 0.0
    %3542 = vmatpush1.xpose.msra.mxu0 0.0
    %3543 = vmatprep.subr.mxu0 0.0
    %3544 = vmatpush1.xpose.msra.mxu0 0.0
    %3545 = vmatprep.subr.mxu0 0.0
    %3546 = vmatpush1.xpose.msra.mxu0 0.0
    %3547 = vmatprep.subr.mxu0 0.0
    %3548 = vmatpush1.xpose.msra.mxu0 0.0
    %3549 = vmatprep.subr.mxu0 0.0
    %3550 = vmatpush1.xpose.msra.mxu0 0.0
    %3551 = vmatprep.subr.mxu0 0.0
    %3552 = vmatpush1.xpose.msra.mxu0 0.0
    %3553 = vmatprep.subr.mxu0 0.0
    %3554 = vmatpush1.xpose.msra.mxu0 0.0
    %3555 = vmatprep.subr.mxu0 0.0
    %3556 = vmatpush1.xpose.msra.mxu0 0.0
    %3557 = vmatprep.subr.mxu0 0.0
    %3558 = vmatpush1.xpose.msra.mxu0 0.0
    %3559 = vmatprep.subr.mxu0 0.0
    %3560 = vmatpush1.xpose.msra.mxu0 0.0
    %3561 = vmatprep.subr.mxu0 0.0
    %3562 = vmatpush1.xpose.msra.mxu0 0.0
    %3563 = vmatprep.subr.mxu0 0.0
    %3564 = vmatpush1.xpose.msra.mxu0 0.0
    %3565 = vmatprep.subr.mxu0 0.0
    %3566 = vmatpush1.xpose.msra.mxu0 0.0
    %3567 = vmatprep.subr.mxu0 0.0
    %3568 = vmatpush1.xpose.msra.mxu0 0.0
    %3569 = vmatprep.subr.mxu0 0.0
    %3570 = vmatpush1.xpose.msra.mxu0 %v3539
    %3571 = vmatprep.subr.mxu0 0.0
    %3572 = vmatpush1.xpose.msra.mxu0 %v3537
    %3573 = vmatprep.subr.mxu0 0.0
    %3574 = vmatpush2.xpose.msra.mxu0 0.0
    %3575 = vmatprep.subr.mxu0 0.0
    %3576 = vmatpush2.xpose.msra.mxu0 0.0
    %3577 = vmatprep.subr.mxu0 0.0
    %3578 = vmatpush2.xpose.msra.mxu0 0.0
    %3579 = vmatprep.subr.mxu0 0.0
    %3580 = vmatpush2.xpose.msra.mxu0 0.0
    %3581 = vmatprep.subr.mxu0 0.0
    %3582 = vmatpush2.xpose.msra.mxu0 0.0
    %3583 = vmatprep.subr.mxu0 0.0
    %3584 = vmatpush2.xpose.msra.mxu0 0.0
    %3585 = vmatprep.subr.mxu0 0.0
    %3586 = vmatpush2.xpose.msra.mxu0 0.0
    %3587 = vmatprep.subr.mxu0 0.0
    %3588 = vmatpush2.xpose.msra.mxu0 0.0
    %3589 = vmatprep.subr.mxu0 0.0
    %3590 = vmatpush2.xpose.msra.mxu0 0.0
    %3591 = vmatprep.subr.mxu0 0.0
    %3592 = vmatpush2.xpose.msra.mxu0 0.0
    %3593 = vmatprep.subr.mxu0 0.0
    %3594 = vmatpush2.xpose.msra.mxu0 0.0
    %3595 = vmatprep.subr.mxu0 0.0
    %3596 = vmatpush2.xpose.msra.mxu0 0.0
    %3597 = vmatprep.subr.mxu0 0.0
    %3598 = vmatpush2.xpose.msra.mxu0 0.0
    %3599 = vmatprep.subr.mxu0 0.0
    %3600 = vmatpush2.xpose.msra.mxu0 0.0
    %3601 = vmatprep.subr.mxu0 0.0
    %3602 = vmatpush2.xpose.msra.mxu0 0.0
    %3603 = vmatprep.subr.mxu0 0.0
    %3604 = vmatpush2.xpose.msra.mxu0 0.0
    %3605 = vmatprep.mubr.f32.mxu0 0.0
    %3606 = vmatmul.mubr.f32.gmra.mxu0 %v3533
    %v3607 = vpop.f32.mrf.mxu0
    %v3608 = vadd.f32 0.0, %v3607
    %v3609 = vpop.f32.mrf.mxu0
    %3610 = vmatprep.mubr.f32.mxu0 0.0
    %3611 = vmatmul.mubr.f32.gmra.mxu0 %v3535
    %v3612 = vpop.f32.mrf.mxu0
    %v3613 = vadd.f32 0.0, %v3612
    %v3614 = vpop.f32.mrf.mxu0
    %3615 = vdwg.mxu0
    %v3616 = vmul.f32 %v2905, %v3608
    %v3617 = vmul.f32 %v2906, %v3613
    %v3618 = vsel %vm381, %v3616, -inf
    %3619 = vmax.xlane.f32.xlu0 %v3618
    %v3620 = vpop.xlane.xlu0 %3619
    %v3621 = vsel %vm381, %v3617, -inf
    %3622 = vmax.xlane.f32.xlu0 %v3621
    %v3623 = vpop.xlane.xlu0 %3622
    %v3624 = vsub.f32 %v3616, %v3620
    %v3625 = vsub.f32 %v3617, %v3623
    %v3626 = vmul.f32 %v3624, 1.442695
    %v3627 = vpow.pop %v3626
    %v3628 = vmul.f32 %v3625, 1.442695
    %v3629 = vpow.pop %v3628
    %v3630 = vsel %vm381, %v3627, 0.0
    %3631 = vadd.xlane.f32.xlu0 %v3630
    %v3632 = vpop.xlane.xlu0 %3631
    %v3633 = vsel %vm381, %v3629, 0.0
    %3634 = vadd.xlane.f32.xlu0 %v3633
    %v3635 = vpop.xlane.xlu0 %3634
    %v3636 = vrcp.pop %v3632
    %v3637 = vrcp.pop %v3635
    %v3638 = vmul.f32 %v3632, %v3636
    %v3639 = vmul.f32 %v3635, %v3637
    %v3640 = vsub.f32 2.0, %v3638
    %v3641 = vsub.f32 2.0, %v3639
    %v3642 = vmul.f32 %v3636, %v3640
    %v3643 = vmul.f32 %v3637, %v3641
    %v3644 = vmul.f32 %v3627, %v3642
    %v3645 = vmul.f32 %v3629, %v3643
    %3648 = vrot.lane.b32.xlu0 %v231, 96
    %v3649 = vpop.permute.xlu0 %3648
    %3650 = vrot.lane.b32.xlu0 %v237, 96
    %v3651 = vpop.permute.xlu0 %3650
    %v3655 = vsel %vm381, %v3644, 0
    %v3658 = vsel %vm381, %v3645, 0
    %3660 = vmatprep.subr.mxu0 0.0
    %3661 = vmatpush1.msra.mxu0 0.0
    %3662 = vmatprep.subr.mxu0 0.0
    %3663 = vmatpush1.msra.mxu0 0.0
    %3664 = vmatprep.subr.mxu0 0.0
    %3665 = vmatpush1.msra.mxu0 0.0
    %3666 = vmatprep.subr.mxu0 0.0
    %3667 = vmatpush1.msra.mxu0 0.0
    %3668 = vmatprep.subr.mxu0 0.0
    %3669 = vmatpush1.msra.mxu0 0.0
    %3670 = vmatprep.subr.mxu0 0.0
    %3671 = vmatpush1.msra.mxu0 0.0
    %3672 = vmatprep.subr.mxu0 0.0
    %3673 = vmatpush1.msra.mxu0 0.0
    %3674 = vmatprep.subr.mxu0 0.0
    %3675 = vmatpush1.msra.mxu0 0.0
    %3676 = vmatprep.subr.mxu0 0.0
    %3677 = vmatpush1.msra.mxu0 0.0
    %3678 = vmatprep.subr.mxu0 0.0
    %3679 = vmatpush1.msra.mxu0 0.0
    %3680 = vmatprep.subr.mxu0 0.0
    %3681 = vmatpush1.msra.mxu0 0.0
    %3682 = vmatprep.subr.mxu0 0.0
    %3683 = vmatpush1.msra.mxu0 0.0
    %3684 = vmatprep.subr.mxu0 0.0
    %3685 = vmatpush1.msra.mxu0 0.0
    %3686 = vmatprep.subr.mxu0 0.0
    %3687 = vmatpush1.msra.mxu0 0.0
    %3688 = vmatprep.subr.mxu0 0.0
    %3689 = vmatpush1.msra.mxu0 %v3651
    %3690 = vmatprep.subr.mxu0 0.0
    %3691 = vmatpush1.msra.mxu0 %v3649
    %3692 = vmatprep.subr.mxu0 0.0
    %3693 = vmatpush2.msra.mxu0 0.0
    %3694 = vmatprep.subr.mxu0 0.0
    %3695 = vmatpush2.msra.mxu0 0.0
    %3696 = vmatprep.subr.mxu0 0.0
    %3697 = vmatpush2.msra.mxu0 0.0
    %3698 = vmatprep.subr.mxu0 0.0
    %3699 = vmatpush2.msra.mxu0 0.0
    %3700 = vmatprep.subr.mxu0 0.0
    %3701 = vmatpush2.msra.mxu0 0.0
    %3702 = vmatprep.subr.mxu0 0.0
    %3703 = vmatpush2.msra.mxu0 0.0
    %3704 = vmatprep.subr.mxu0 0.0
    %3705 = vmatpush2.msra.mxu0 0.0
    %3706 = vmatprep.subr.mxu0 0.0
    %3707 = vmatpush2.msra.mxu0 0.0
    %3708 = vmatprep.subr.mxu0 0.0
    %3709 = vmatpush2.msra.mxu0 0.0
    %3710 = vmatprep.subr.mxu0 0.0
    %3711 = vmatpush2.msra.mxu0 0.0
    %3712 = vmatprep.subr.mxu0 0.0
    %3713 = vmatpush2.msra.mxu0 0.0
    %3714 = vmatprep.subr.mxu0 0.0
    %3715 = vmatpush2.msra.mxu0 0.0
    %3716 = vmatprep.subr.mxu0 0.0
    %3717 = vmatpush2.msra.mxu0 0.0
    %3718 = vmatprep.subr.mxu0 0.0
    %3719 = vmatpush2.msra.mxu0 0.0
    %3720 = vmatprep.subr.mxu0 0.0
    %3721 = vmatpush2.msra.mxu0 0.0
    %3722 = vmatprep.subr.mxu0 0.0
    %3723 = vmatpush2.msra.mxu0 0.0
    %3724 = vmatprep.mubr.f32.mxu0 0.0
    %3725 = vmatmul.mubr.f32.gmra.mxu0 %v3655
    %v3726 = vpop.f32.mrf.mxu0
    %v3727 = vadd.f32 0.0, %v3726
    %v3728 = vpop.f32.mrf.mxu0
    %3729 = vmatprep.mubr.f32.mxu0 0.0
    %3730 = vmatmul.mubr.f32.gmra.mxu0 %v3658
    %v3731 = vpop.f32.mrf.mxu0
    %v3732 = vadd.f32 0.0, %v3731
    %v3733 = vpop.f32.mrf.mxu0
    %3734 = vdwg.mxu0
    %v3735 = vadd.f32 %v3523, %v3727
    %v3736 = vadd.f32 %v3524, %v3732
    %v3737 = vadd.f32 %v3735, %v58
    %v3738 = vadd.f32 %v3736, %v59
    %v3739 = vsel %vm77, %v3737, 0.0
    %v3740 = vsel %vm77, %v3738, 0.0
    %v3741 = vadd.f32 %v3739, %v3740
    %v3742 = vrot.slane %v3741, 4
    %v3743 = vadd.f32 %v3741, %v3742
    %v3744 = vrot.slane %v3743, 2
    %v3745 = vadd.f32 %v3743, %v3744
    %v3746 = vrot.slane %v3745, 1
    %v3747 = vadd.f32 %v3745, %v3746
    %v3748 = vmul.f32 %v3747, %v1132
    %v3749 = vmul.f32 %v3737, %v3737
    %v3750 = vmul.f32 %v3738, %v3738
    %v3751 = vsel %vm77, %v3749, 0.0
    %v3752 = vsel %vm77, %v3750, 0.0
    %v3753 = vadd.f32 %v3751, %v3752
    %v3754 = vrot.slane %v3753, 4
    %v3755 = vadd.f32 %v3753, %v3754
    %v3756 = vrot.slane %v3755, 2
    %v3757 = vadd.f32 %v3755, %v3756
    %v3758 = vrot.slane %v3757, 1
    %v3759 = vadd.f32 %v3757, %v3758
    %v3760 = vmul.f32 %v3759, %v1132
    %v3761 = vmul.f32 %v3748, %v3748
    %v3762 = vsub.f32 %v3760, %v3761
    %v3763 = vsub.f32 %v3737, %v3748
    %v3764 = vsub.f32 %v3738, %v3748
    %v3765 = vadd.f32 %v3762, 1e-05
    %v3766 = vrsqrt.pop %v3765
    %v3767 = vmul.f32 %v3763, %v3766
    %v3768 = vmul.f32 %v3764, %v3766
    %v3769 = vmul.f32 %v3767, %v1157
    %v3770 = vmul.f32 %v3768, %v1157
    %v3771 = vadd.f32 %v3769, %v1163
    %v3772 = vadd.f32 %v3770, %v1163
    %s3773 = scalar_lea.vmem [#allocation2], 64
    %v3774 = vld [vmem:[%s3773] sm:$0xff]
    %v3775 = vld [vmem:[%s3773 + $0x8] sm:$0xff]
    %3778 = vrot.lane.b32.xlu0 %v241, 96
    %v3779 = vpop.permute.xlu0 %3778
    %3780 = vrot.lane.b32.xlu0 %v247, 96
    %v3781 = vpop.permute.xlu0 %3780
    %v3782 = vsel %vm295, %v241, 0
    %v3784 = vsel %vm295, %v247, 0
    %v3786 = vsel %vm295, %v3779, 0
    %v3788 = vsel %vm295, %v3781, 0
    %3790 = vmatprep.subr.mxu0 0.0
    %3791 = vmatpush1.xpose.msra.mxu0 0.0
    %3792 = vmatprep.subr.mxu0 0.0
    %3793 = vmatpush1.xpose.msra.mxu0 0.0
    %3794 = vmatprep.subr.mxu0 0.0
    %3795 = vmatpush1.xpose.msra.mxu0 0.0
    %3796 = vmatprep.subr.mxu0 0.0
    %3797 = vmatpush1.xpose.msra.mxu0 0.0
    %3798 = vmatprep.subr.mxu0 0.0
    %3799 = vmatpush1.xpose.msra.mxu0 0.0
    %3800 = vmatprep.subr.mxu0 0.0
    %3801 = vmatpush1.xpose.msra.mxu0 0.0
    %3802 = vmatprep.subr.mxu0 0.0
    %3803 = vmatpush1.xpose.msra.mxu0 0.0
    %3804 = vmatprep.subr.mxu0 0.0
    %3805 = vmatpush1.xpose.msra.mxu0 0.0
    %3806 = vmatprep.subr.mxu0 0.0
    %3807 = vmatpush1.xpose.msra.mxu0 0.0
    %3808 = vmatprep.subr.mxu0 0.0
    %3809 = vmatpush1.xpose.msra.mxu0 0.0
    %3810 = vmatprep.subr.mxu0 0.0
    %3811 = vmatpush1.xpose.msra.mxu0 0.0
    %3812 = vmatprep.subr.mxu0 0.0
    %3813 = vmatpush1.xpose.msra.mxu0 0.0
    %3814 = vmatprep.subr.mxu0 0.0
    %3815 = vmatpush1.xpose.msra.mxu0 0.0
    %3816 = vmatprep.subr.mxu0 0.0
    %3817 = vmatpush1.xpose.msra.mxu0 0.0
    %3818 = vmatprep.subr.mxu0 0.0
    %3819 = vmatpush1.xpose.msra.mxu0 %v3788
    %3820 = vmatprep.subr.mxu0 0.0
    %3821 = vmatpush1.xpose.msra.mxu0 %v3786
    %3822 = vmatprep.subr.mxu0 0.0
    %3823 = vmatpush2.xpose.msra.mxu0 0.0
    %3824 = vmatprep.subr.mxu0 0.0
    %3825 = vmatpush2.xpose.msra.mxu0 0.0
    %3826 = vmatprep.subr.mxu0 0.0
    %3827 = vmatpush2.xpose.msra.mxu0 0.0
    %3828 = vmatprep.subr.mxu0 0.0
    %3829 = vmatpush2.xpose.msra.mxu0 0.0
    %3830 = vmatprep.subr.mxu0 0.0
    %3831 = vmatpush2.xpose.msra.mxu0 0.0
    %3832 = vmatprep.subr.mxu0 0.0
    %3833 = vmatpush2.xpose.msra.mxu0 0.0
    %3834 = vmatprep.subr.mxu0 0.0
    %3835 = vmatpush2.xpose.msra.mxu0 0.0
    %3836 = vmatprep.subr.mxu0 0.0
    %3837 = vmatpush2.xpose.msra.mxu0 0.0
    %3838 = vmatprep.subr.mxu0 0.0
    %3839 = vmatpush2.xpose.msra.mxu0 0.0
    %3840 = vmatprep.subr.mxu0 0.0
    %3841 = vmatpush2.xpose.msra.mxu0 0.0
    %3842 = vmatprep.subr.mxu0 0.0
    %3843 = vmatpush2.xpose.msra.mxu0 0.0
    %3844 = vmatprep.subr.mxu0 0.0
    %3845 = vmatpush2.xpose.msra.mxu0 0.0
    %3846 = vmatprep.subr.mxu0 0.0
    %3847 = vmatpush2.xpose.msra.mxu0 0.0
    %3848 = vmatprep.subr.mxu0 0.0
    %3849 = vmatpush2.xpose.msra.mxu0 0.0
    %3850 = vmatprep.subr.mxu0 0.0
    %3851 = vmatpush2.xpose.msra.mxu0 0.0
    %3852 = vmatprep.subr.mxu0 0.0
    %3853 = vmatpush2.xpose.msra.mxu0 0.0
    %3854 = vmatprep.mubr.f32.mxu0 0.0
    %3855 = vmatmul.mubr.f32.gmra.mxu0 %v3782
    %v3856 = vpop.f32.mrf.mxu0
    %v3857 = vadd.f32 0.0, %v3856
    %v3858 = vpop.f32.mrf.mxu0
    %3859 = vmatprep.mubr.f32.mxu0 0.0
    %3860 = vmatmul.mubr.f32.gmra.mxu0 %v3784
    %v3861 = vpop.f32.mrf.mxu0
    %v3862 = vadd.f32 0.0, %v3861
    %v3863 = vpop.f32.mrf.mxu0
    %3864 = vdwg.mxu0
    %v3865 = vmul.f32 %v3774, %v3857
    %v3866 = vmul.f32 %v3775, %v3862
    %v3867 = vsel %vm381, %v3865, -inf
    %3868 = vmax.xlane.f32.xlu0 %v3867
    %v3869 = vpop.xlane.xlu0 %3868
    %v3870 = vsel %vm381, %v3866, -inf
    %3871 = vmax.xlane.f32.xlu0 %v3870
    %v3872 = vpop.xlane.xlu0 %3871
    %v3873 = vsub.f32 %v3865, %v3869
    %v3874 = vsub.f32 %v3866, %v3872
    %v3875 = vmul.f32 %v3873, 1.442695
    %v3876 = vpow.pop %v3875
    %v3877 = vmul.f32 %v3874, 1.442695
    %v3878 = vpow.pop %v3877
    %v3879 = vsel %vm381, %v3876, 0.0
    %3880 = vadd.xlane.f32.xlu0 %v3879
    %v3881 = vpop.xlane.xlu0 %3880
    %v3882 = vsel %vm381, %v3878, 0.0
    %3883 = vadd.xlane.f32.xlu0 %v3882
    %v3884 = vpop.xlane.xlu0 %3883
    %v3885 = vrcp.pop %v3881
    %v3886 = vrcp.pop %v3884
    %v3887 = vmul.f32 %v3881, %v3885
    %v3888 = vmul.f32 %v3884, %v3886
    %v3889 = vsub.f32 2.0, %v3887
    %v3890 = vsub.f32 2.0, %v3888
    %v3891 = vmul.f32 %v3885, %v3889
    %v3892 = vmul.f32 %v3886, %v3890
    %v3893 = vmul.f32 %v3876, %v3891
    %v3894 = vmul.f32 %v3878, %v3892
    %3895 = vrot.lane.b32.xlu0 %v241, 120
    %v3896 = vpop.permute.xlu0 %3895
    %3897 = vrot.lane.b32.xlu0 %v247, 120
    %v3898 = vpop.permute.xlu0 %3897
    %3899 = vrot.lane.b32.xlu0 %v241, 88
    %v3900 = vpop.permute.xlu0 %3899
    %3901 = vrot.lane.b32.xlu0 %v247, 88
    %v3902 = vpop.permute.xlu0 %3901
    %v3903 = vsel %vm295, %v3896, 0
    %v3905 = vsel %vm295, %v3898, 0
    %v3907 = vsel %vm295, %v3900, 0
    %v3909 = vsel %vm295, %v3902, 0
    %3911 = vmatprep.subr.mxu0 0.0
    %3912 = vmatpush1.xpose.msra.mxu0 0.0
    %3913 = vmatprep.subr.mxu0 0.0
    %3914 = vmatpush1.xpose.msra.mxu0 0.0
    %3915 = vmatprep.subr.mxu0 0.0
    %3916 = vmatpush1.xpose.msra.mxu0 0.0
    %3917 = vmatprep.subr.mxu0 0.0
    %3918 = vmatpush1.xpose.msra.mxu0 0.0
    %3919 = vmatprep.subr.mxu0 0.0
    %3920 = vmatpush1.xpose.msra.mxu0 0.0
    %3921 = vmatprep.subr.mxu0 0.0
    %3922 = vmatpush1.xpose.msra.mxu0 0.0
    %3923 = vmatprep.subr.mxu0 0.0
    %3924 = vmatpush1.xpose.msra.mxu0 0.0
    %3925 = vmatprep.subr.mxu0 0.0
    %3926 = vmatpush1.xpose.msra.mxu0 0.0
    %3927 = vmatprep.subr.mxu0 0.0
    %3928 = vmatpush1.xpose.msra.mxu0 0.0
    %3929 = vmatprep.subr.mxu0 0.0
    %3930 = vmatpush1.xpose.msra.mxu0 0.0
    %3931 = vmatprep.subr.mxu0 0.0
    %3932 = vmatpush1.xpose.msra.mxu0 0.0
    %3933 = vmatprep.subr.mxu0 0.0
    %3934 = vmatpush1.xpose.msra.mxu0 0.0
    %3935 = vmatprep.subr.mxu0 0.0
    %3936 = vmatpush1.xpose.msra.mxu0 0.0
    %3937 = vmatprep.subr.mxu0 0.0
    %3938 = vmatpush1.xpose.msra.mxu0 0.0
    %3939 = vmatprep.subr.mxu0 0.0
    %3940 = vmatpush1.xpose.msra.mxu0 %v3909
    %3941 = vmatprep.subr.mxu0 0.0
    %3942 = vmatpush1.xpose.msra.mxu0 %v3907
    %3943 = vmatprep.subr.mxu0 0.0
    %3944 = vmatpush2.xpose.msra.mxu0 0.0
    %3945 = vmatprep.subr.mxu0 0.0
    %3946 = vmatpush2.xpose.msra.mxu0 0.0
    %3947 = vmatprep.subr.mxu0 0.0
    %3948 = vmatpush2.xpose.msra.mxu0 0.0
    %3949 = vmatprep.subr.mxu0 0.0
    %3950 = vmatpush2.xpose.msra.mxu0 0.0
    %3951 = vmatprep.subr.mxu0 0.0
    %3952 = vmatpush2.xpose.msra.mxu0 0.0
    %3953 = vmatprep.subr.mxu0 0.0
    %3954 = vmatpush2.xpose.msra.mxu0 0.0
    %3955 = vmatprep.subr.mxu0 0.0
    %3956 = vmatpush2.xpose.msra.mxu0 0.0
    %3957 = vmatprep.subr.mxu0 0.0
    %3958 = vmatpush2.xpose.msra.mxu0 0.0
    %3959 = vmatprep.subr.mxu0 0.0
    %3960 = vmatpush2.xpose.msra.mxu0 0.0
    %3961 = vmatprep.subr.mxu0 0.0
    %3962 = vmatpush2.xpose.msra.mxu0 0.0
    %3963 = vmatprep.subr.mxu0 0.0
    %3964 = vmatpush2.xpose.msra.mxu0 0.0
    %3965 = vmatprep.subr.mxu0 0.0
    %3966 = vmatpush2.xpose.msra.mxu0 0.0
    %3967 = vmatprep.subr.mxu0 0.0
    %3968 = vmatpush2.xpose.msra.mxu0 0.0
    %3969 = vmatprep.subr.mxu0 0.0
    %3970 = vmatpush2.xpose.msra.mxu0 0.0
    %3971 = vmatprep.subr.mxu0 0.0
    %3972 = vmatpush2.xpose.msra.mxu0 0.0
    %3973 = vmatprep.subr.mxu0 0.0
    %3974 = vmatpush2.xpose.msra.mxu0 0.0
    %3975 = vmatprep.mubr.f32.mxu0 0.0
    %3976 = vmatmul.mubr.f32.gmra.mxu0 %v3903
    %v3977 = vpop.f32.mrf.mxu0
    %v3978 = vadd.f32 0.0, %v3977
    %v3979 = vpop.f32.mrf.mxu0
    %3980 = vmatprep.mubr.f32.mxu0 0.0
    %3981 = vmatmul.mubr.f32.gmra.mxu0 %v3905
    %v3982 = vpop.f32.mrf.mxu0
    %v3983 = vadd.f32 0.0, %v3982
    %v3984 = vpop.f32.mrf.mxu0
    %3985 = vdwg.mxu0
    %v3986 = vmul.f32 %v3774, %v3978
    %v3987 = vmul.f32 %v3775, %v3983
    %v3988 = vsel %vm381, %v3986, -inf
    %3989 = vmax.xlane.f32.xlu0 %v3988
    %v3990 = vpop.xlane.xlu0 %3989
    %v3991 = vsel %vm381, %v3987, -inf
    %3992 = vmax.xlane.f32.xlu0 %v3991
    %v3993 = vpop.xlane.xlu0 %3992
    %v3994 = vsub.f32 %v3986, %v3990
    %v3995 = vsub.f32 %v3987, %v3993
    %v3996 = vmul.f32 %v3994, 1.442695
    %v3997 = vpow.pop %v3996
    %v3998 = vmul.f32 %v3995, 1.442695
    %v3999 = vpow.pop %v3998
    %v4000 = vsel %vm381, %v3997, 0.0
    %4001 = vadd.xlane.f32.xlu0 %v4000
    %v4002 = vpop.xlane.xlu0 %4001
    %v4003 = vsel %vm381, %v3999, 0.0
    %4004 = vadd.xlane.f32.xlu0 %v4003
    %v4005 = vpop.xlane.xlu0 %4004
    %v4006 = vrcp.pop %v4002
    %v4007 = vrcp.pop %v4005
    %v4008 = vmul.f32 %v4002, %v4006
    %v4009 = vmul.f32 %v4005, %v4007
    %v4010 = vsub.f32 2.0, %v4008
    %v4011 = vsub.f32 2.0, %v4009
    %v4012 = vmul.f32 %v4006, %v4010
    %v4013 = vmul.f32 %v4007, %v4011
    %v4014 = vmul.f32 %v3997, %v4012
    %v4015 = vmul.f32 %v3999, %v4013
    %4016 = vrot.lane.b32.xlu0 %v241, 32
    %v4017 = vpop.permute.xlu0 %4016
    %4018 = vrot.lane.b32.xlu0 %v247, 32
    %v4019 = vpop.permute.xlu0 %4018
    %v4023 = vsel %vm381, %v4014, 0
    %v4026 = vsel %vm381, %v4015, 0
    %4028 = vmatprep.subr.mxu0 0.0
    %4029 = vmatpush1.msra.mxu0 0.0
    %4030 = vmatprep.subr.mxu0 0.0
    %4031 = vmatpush1.msra.mxu0 0.0
    %4032 = vmatprep.subr.mxu0 0.0
    %4033 = vmatpush1.msra.mxu0 0.0
    %4034 = vmatprep.subr.mxu0 0.0
    %4035 = vmatpush1.msra.mxu0 0.0
    %4036 = vmatprep.subr.mxu0 0.0
    %4037 = vmatpush1.msra.mxu0 0.0
    %4038 = vmatprep.subr.mxu0 0.0
    %4039 = vmatpush1.msra.mxu0 0.0
    %4040 = vmatprep.subr.mxu0 0.0
    %4041 = vmatpush1.msra.mxu0 0.0
    %4042 = vmatprep.subr.mxu0 0.0
    %4043 = vmatpush1.msra.mxu0 0.0
    %4044 = vmatprep.subr.mxu0 0.0
    %4045 = vmatpush1.msra.mxu0 0.0
    %4046 = vmatprep.subr.mxu0 0.0
    %4047 = vmatpush1.msra.mxu0 0.0
    %4048 = vmatprep.subr.mxu0 0.0
    %4049 = vmatpush1.msra.mxu0 0.0
    %4050 = vmatprep.subr.mxu0 0.0
    %4051 = vmatpush1.msra.mxu0 0.0
    %4052 = vmatprep.subr.mxu0 0.0
    %4053 = vmatpush1.msra.mxu0 0.0
    %4054 = vmatprep.subr.mxu0 0.0
    %4055 = vmatpush1.msra.mxu0 0.0
    %4056 = vmatprep.subr.mxu0 0.0
    %4057 = vmatpush1.msra.mxu0 %v4019
    %4058 = vmatprep.subr.mxu0 0.0
    %4059 = vmatpush1.msra.mxu0 %v4017
    %4060 = vmatprep.subr.mxu0 0.0
    %4061 = vmatpush2.msra.mxu0 0.0
    %4062 = vmatprep.subr.mxu0 0.0
    %4063 = vmatpush2.msra.mxu0 0.0
    %4064 = vmatprep.subr.mxu0 0.0
    %4065 = vmatpush2.msra.mxu0 0.0
    %4066 = vmatprep.subr.mxu0 0.0
    %4067 = vmatpush2.msra.mxu0 0.0
    %4068 = vmatprep.subr.mxu0 0.0
    %4069 = vmatpush2.msra.mxu0 0.0
    %4070 = vmatprep.subr.mxu0 0.0
    %4071 = vmatpush2.msra.mxu0 0.0
    %4072 = vmatprep.subr.mxu0 0.0
    %4073 = vmatpush2.msra.mxu0 0.0
    %4074 = vmatprep.subr.mxu0 0.0
    %4075 = vmatpush2.msra.mxu0 0.0
    %4076 = vmatprep.subr.mxu0 0.0
    %4077 = vmatpush2.msra.mxu0 0.0
    %4078 = vmatprep.subr.mxu0 0.0
    %4079 = vmatpush2.msra.mxu0 0.0
    %4080 = vmatprep.subr.mxu0 0.0
    %4081 = vmatpush2.msra.mxu0 0.0
    %4082 = vmatprep.subr.mxu0 0.0
    %4083 = vmatpush2.msra.mxu0 0.0
    %4084 = vmatprep.subr.mxu0 0.0
    %4085 = vmatpush2.msra.mxu0 0.0
    %4086 = vmatprep.subr.mxu0 0.0
    %4087 = vmatpush2.msra.mxu0 0.0
    %4088 = vmatprep.subr.mxu0 0.0
    %4089 = vmatpush2.msra.mxu0 0.0
    %4090 = vmatprep.subr.mxu0 0.0
    %4091 = vmatpush2.msra.mxu0 0.0
    %4092 = vmatprep.mubr.f32.mxu0 0.0
    %4093 = vmatmul.mubr.f32.gmra.mxu0 %v4023
    %v4094 = vpop.f32.mrf.mxu0
    %v4095 = vadd.f32 0.0, %v4094
    %v4096 = vpop.f32.mrf.mxu0
    %4097 = vmatprep.mubr.f32.mxu0 0.0
    %4098 = vmatmul.mubr.f32.gmra.mxu0 %v4026
    %v4099 = vpop.f32.mrf.mxu0
    %v4100 = vadd.f32 0.0, %v4099
    %v4101 = vpop.f32.mrf.mxu0
    %4102 = vdwg.mxu0
    %4103 = vrot.lane.b32.xlu0 %v241, 64
    %v4104 = vpop.permute.xlu0 %4103
    %4105 = vrot.lane.b32.xlu0 %v247, 64
    %v4106 = vpop.permute.xlu0 %4105
    %v4110 = vsel %vm381, %v3893, 0
    %v4113 = vsel %vm381, %v3894, 0
    %4115 = vmatprep.subr.mxu0 0.0
    %4116 = vmatpush1.msra.mxu0 0.0
    %4117 = vmatprep.subr.mxu0 0.0
    %4118 = vmatpush1.msra.mxu0 0.0
    %4119 = vmatprep.subr.mxu0 0.0
    %4120 = vmatpush1.msra.mxu0 0.0
    %4121 = vmatprep.subr.mxu0 0.0
    %4122 = vmatpush1.msra.mxu0 0.0
    %4123 = vmatprep.subr.mxu0 0.0
    %4124 = vmatpush1.msra.mxu0 0.0
    %4125 = vmatprep.subr.mxu0 0.0
    %4126 = vmatpush1.msra.mxu0 0.0
    %4127 = vmatprep.subr.mxu0 0.0
    %4128 = vmatpush1.msra.mxu0 0.0
    %4129 = vmatprep.subr.mxu0 0.0
    %4130 = vmatpush1.msra.mxu0 0.0
    %4131 = vmatprep.subr.mxu0 0.0
    %4132 = vmatpush1.msra.mxu0 0.0
    %4133 = vmatprep.subr.mxu0 0.0
    %4134 = vmatpush1.msra.mxu0 0.0
    %4135 = vmatprep.subr.mxu0 0.0
    %4136 = vmatpush1.msra.mxu0 0.0
    %4137 = vmatprep.subr.mxu0 0.0
    %4138 = vmatpush1.msra.mxu0 0.0
    %4139 = vmatprep.subr.mxu0 0.0
    %4140 = vmatpush1.msra.mxu0 0.0
    %4141 = vmatprep.subr.mxu0 0.0
    %4142 = vmatpush1.msra.mxu0 0.0
    %4143 = vmatprep.subr.mxu0 0.0
    %4144 = vmatpush1.msra.mxu0 %v4106
    %4145 = vmatprep.subr.mxu0 0.0
    %4146 = vmatpush1.msra.mxu0 %v4104
    %4147 = vmatprep.subr.mxu0 0.0
    %4148 = vmatpush2.msra.mxu0 0.0
    %4149 = vmatprep.subr.mxu0 0.0
    %4150 = vmatpush2.msra.mxu0 0.0
    %4151 = vmatprep.subr.mxu0 0.0
    %4152 = vmatpush2.msra.mxu0 0.0
    %4153 = vmatprep.subr.mxu0 0.0
    %4154 = vmatpush2.msra.mxu0 0.0
    %4155 = vmatprep.subr.mxu0 0.0
    %4156 = vmatpush2.msra.mxu0 0.0
    %4157 = vmatprep.subr.mxu0 0.0
    %4158 = vmatpush2.msra.mxu0 0.0
    %4159 = vmatprep.subr.mxu0 0.0
    %4160 = vmatpush2.msra.mxu0 0.0
    %4161 = vmatprep.subr.mxu0 0.0
    %4162 = vmatpush2.msra.mxu0 0.0
    %4163 = vmatprep.subr.mxu0 0.0
    %4164 = vmatpush2.msra.mxu0 0.0
    %4165 = vmatprep.subr.mxu0 0.0
    %4166 = vmatpush2.msra.mxu0 0.0
    %4167 = vmatprep.subr.mxu0 0.0
    %4168 = vmatpush2.msra.mxu0 0.0
    %4169 = vmatprep.subr.mxu0 0.0
    %4170 = vmatpush2.msra.mxu0 0.0
    %4171 = vmatprep.subr.mxu0 0.0
    %4172 = vmatpush2.msra.mxu0 0.0
    %4173 = vmatprep.subr.mxu0 0.0
    %4174 = vmatpush2.msra.mxu0 0.0
    %4175 = vmatprep.subr.mxu0 0.0
    %4176 = vmatpush2.msra.mxu0 0.0
    %4177 = vmatprep.subr.mxu0 0.0
    %4178 = vmatpush2.msra.mxu0 0.0
    %4179 = vmatprep.mubr.f32.mxu0 0.0
    %4180 = vmatmul.mubr.f32.gmra.mxu0 %v4110
    %v4181 = vpop.f32.mrf.mxu0
    %v4182 = vadd.f32 %v4095, %v4181
    %v4183 = vpop.f32.mrf.mxu0
    %4184 = vmatprep.mubr.f32.mxu0 0.0
    %4185 = vmatmul.mubr.f32.gmra.mxu0 %v4113
    %v4186 = vpop.f32.mrf.mxu0
    %v4187 = vadd.f32 %v4100, %v4186
    %v4188 = vpop.f32.mrf.mxu0
    %4189 = vdwg.mxu0
    %4190 = vrot.lane.b32.xlu0 %v241, 112
    %v4191 = vpop.permute.xlu0 %4190
    %4192 = vrot.lane.b32.xlu0 %v247, 112
    %v4193 = vpop.permute.xlu0 %4192
    %4194 = vrot.lane.b32.xlu0 %v241, 80
    %v4195 = vpop.permute.xlu0 %4194
    %4196 = vrot.lane.b32.xlu0 %v247, 80
    %v4197 = vpop.permute.xlu0 %4196
    %v4198 = vsel %vm295, %v4191, 0
    %v4200 = vsel %vm295, %v4193, 0
    %v4202 = vsel %vm295, %v4195, 0
    %v4204 = vsel %vm295, %v4197, 0
    %4206 = vmatprep.subr.mxu0 0.0
    %4207 = vmatpush1.xpose.msra.mxu0 0.0
    %4208 = vmatprep.subr.mxu0 0.0
    %4209 = vmatpush1.xpose.msra.mxu0 0.0
    %4210 = vmatprep.subr.mxu0 0.0
    %4211 = vmatpush1.xpose.msra.mxu0 0.0
    %4212 = vmatprep.subr.mxu0 0.0
    %4213 = vmatpush1.xpose.msra.mxu0 0.0
    %4214 = vmatprep.subr.mxu0 0.0
    %4215 = vmatpush1.xpose.msra.mxu0 0.0
    %4216 = vmatprep.subr.mxu0 0.0
    %4217 = vmatpush1.xpose.msra.mxu0 0.0
    %4218 = vmatprep.subr.mxu0 0.0
    %4219 = vmatpush1.xpose.msra.mxu0 0.0
    %4220 = vmatprep.subr.mxu0 0.0
    %4221 = vmatpush1.xpose.msra.mxu0 0.0
    %4222 = vmatprep.subr.mxu0 0.0
    %4223 = vmatpush1.xpose.msra.mxu0 0.0
    %4224 = vmatprep.subr.mxu0 0.0
    %4225 = vmatpush1.xpose.msra.mxu0 0.0
    %4226 = vmatprep.subr.mxu0 0.0
    %4227 = vmatpush1.xpose.msra.mxu0 0.0
    %4228 = vmatprep.subr.mxu0 0.0
    %4229 = vmatpush1.xpose.msra.mxu0 0.0
    %4230 = vmatprep.subr.mxu0 0.0
    %4231 = vmatpush1.xpose.msra.mxu0 0.0
    %4232 = vmatprep.subr.mxu0 0.0
    %4233 = vmatpush1.xpose.msra.mxu0 0.0
    %4234 = vmatprep.subr.mxu0 0.0
    %4235 = vmatpush1.xpose.msra.mxu0 %v4204
    %4236 = vmatprep.subr.mxu0 0.0
    %4237 = vmatpush1.xpose.msra.mxu0 %v4202
    %4238 = vmatprep.subr.mxu0 0.0
    %4239 = vmatpush2.xpose.msra.mxu0 0.0
    %4240 = vmatprep.subr.mxu0 0.0
    %4241 = vmatpush2.xpose.msra.mxu0 0.0
    %4242 = vmatprep.subr.mxu0 0.0
    %4243 = vmatpush2.xpose.msra.mxu0 0.0
    %4244 = vmatprep.subr.mxu0 0.0
    %4245 = vmatpush2.xpose.msra.mxu0 0.0
    %4246 = vmatprep.subr.mxu0 0.0
    %4247 = vmatpush2.xpose.msra.mxu0 0.0
    %4248 = vmatprep.subr.mxu0 0.0
    %4249 = vmatpush2.xpose.msra.mxu0 0.0
    %4250 = vmatprep.subr.mxu0 0.0
    %4251 = vmatpush2.xpose.msra.mxu0 0.0
    %4252 = vmatprep.subr.mxu0 0.0
    %4253 = vmatpush2.xpose.msra.mxu0 0.0
    %4254 = vmatprep.subr.mxu0 0.0
    %4255 = vmatpush2.xpose.msra.mxu0 0.0
    %4256 = vmatprep.subr.mxu0 0.0
    %4257 = vmatpush2.xpose.msra.mxu0 0.0
    %4258 = vmatprep.subr.mxu0 0.0
    %4259 = vmatpush2.xpose.msra.mxu0 0.0
    %4260 = vmatprep.subr.mxu0 0.0
    %4261 = vmatpush2.xpose.msra.mxu0 0.0
    %4262 = vmatprep.subr.mxu0 0.0
    %4263 = vmatpush2.xpose.msra.mxu0 0.0
    %4264 = vmatprep.subr.mxu0 0.0
    %4265 = vmatpush2.xpose.msra.mxu0 0.0
    %4266 = vmatprep.subr.mxu0 0.0
    %4267 = vmatpush2.xpose.msra.mxu0 0.0
    %4268 = vmatprep.subr.mxu0 0.0
    %4269 = vmatpush2.xpose.msra.mxu0 0.0
    %4270 = vmatprep.mubr.f32.mxu0 0.0
    %4271 = vmatmul.mubr.f32.gmra.mxu0 %v4198
    %v4272 = vpop.f32.mrf.mxu0
    %v4273 = vadd.f32 0.0, %v4272
    %v4274 = vpop.f32.mrf.mxu0
    %4275 = vmatprep.mubr.f32.mxu0 0.0
    %4276 = vmatmul.mubr.f32.gmra.mxu0 %v4200
    %v4277 = vpop.f32.mrf.mxu0
    %v4278 = vadd.f32 0.0, %v4277
    %v4279 = vpop.f32.mrf.mxu0
    %4280 = vdwg.mxu0
    %v4281 = vmul.f32 %v3774, %v4273
    %v4282 = vmul.f32 %v3775, %v4278
    %v4283 = vsel %vm381, %v4281, -inf
    %4284 = vmax.xlane.f32.xlu0 %v4283
    %v4285 = vpop.xlane.xlu0 %4284
    %v4286 = vsel %vm381, %v4282, -inf
    %4287 = vmax.xlane.f32.xlu0 %v4286
    %v4288 = vpop.xlane.xlu0 %4287
    %v4289 = vsub.f32 %v4281, %v4285
    %v4290 = vsub.f32 %v4282, %v4288
    %v4291 = vmul.f32 %v4289, 1.442695
    %v4292 = vpow.pop %v4291
    %v4293 = vmul.f32 %v4290, 1.442695
    %v4294 = vpow.pop %v4293
    %v4295 = vsel %vm381, %v4292, 0.0
    %4296 = vadd.xlane.f32.xlu0 %v4295
    %v4297 = vpop.xlane.xlu0 %4296
    %v4298 = vsel %vm381, %v4294, 0.0
    %4299 = vadd.xlane.f32.xlu0 %v4298
    %v4300 = vpop.xlane.xlu0 %4299
    %v4301 = vrcp.pop %v4297
    %v4302 = vrcp.pop %v4300
    %v4303 = vmul.f32 %v4297, %v4301
    %v4304 = vmul.f32 %v4300, %v4302
    %v4305 = vsub.f32 2.0, %v4303
    %v4306 = vsub.f32 2.0, %v4304
    %v4307 = vmul.f32 %v4301, %v4305
    %v4308 = vmul.f32 %v4302, %v4306
    %v4309 = vmul.f32 %v4292, %v4307
    %v4310 = vmul.f32 %v4294, %v4308
    %v4312 = vsel %vm381, %v4309, 0
    %v4315 = vsel %vm381, %v4310, 0
    %4317 = vmatprep.subr.mxu0 0.0
    %4318 = vmatpush1.msra.mxu0 0.0
    %4319 = vmatprep.subr.mxu0 0.0
    %4320 = vmatpush1.msra.mxu0 0.0
    %4321 = vmatprep.subr.mxu0 0.0
    %4322 = vmatpush1.msra.mxu0 0.0
    %4323 = vmatprep.subr.mxu0 0.0
    %4324 = vmatpush1.msra.mxu0 0.0
    %4325 = vmatprep.subr.mxu0 0.0
    %4326 = vmatpush1.msra.mxu0 0.0
    %4327 = vmatprep.subr.mxu0 0.0
    %4328 = vmatpush1.msra.mxu0 0.0
    %4329 = vmatprep.subr.mxu0 0.0
    %4330 = vmatpush1.msra.mxu0 0.0
    %4331 = vmatprep.subr.mxu0 0.0
    %4332 = vmatpush1.msra.mxu0 0.0
    %4333 = vmatprep.subr.mxu0 0.0
    %4334 = vmatpush1.msra.mxu0 0.0
    %4335 = vmatprep.subr.mxu0 0.0
    %4336 = vmatpush1.msra.mxu0 0.0
    %4337 = vmatprep.subr.mxu0 0.0
    %4338 = vmatpush1.msra.mxu0 0.0
    %4339 = vmatprep.subr.mxu0 0.0
    %4340 = vmatpush1.msra.mxu0 0.0
    %4341 = vmatprep.subr.mxu0 0.0
    %4342 = vmatpush1.msra.mxu0 0.0
    %4343 = vmatprep.subr.mxu0 0.0
    %4344 = vmatpush1.msra.mxu0 0.0
    %4345 = vmatprep.subr.mxu0 0.0
    %4346 = vmatpush1.msra.mxu0 %v249
    %4347 = vmatprep.subr.mxu0 0.0
    %4348 = vmatpush1.msra.mxu0 %v243
    %4349 = vmatprep.subr.mxu0 0.0
    %4350 = vmatpush2.msra.mxu0 0.0
    %4351 = vmatprep.subr.mxu0 0.0
    %4352 = vmatpush2.msra.mxu0 0.0
    %4353 = vmatprep.subr.mxu0 0.0
    %4354 = vmatpush2.msra.mxu0 0.0
    %4355 = vmatprep.subr.mxu0 0.0
    %4356 = vmatpush2.msra.mxu0 0.0
    %4357 = vmatprep.subr.mxu0 0.0
    %4358 = vmatpush2.msra.mxu0 0.0
    %4359 = vmatprep.subr.mxu0 0.0
    %4360 = vmatpush2.msra.mxu0 0.0
    %4361 = vmatprep.subr.mxu0 0.0
    %4362 = vmatpush2.msra.mxu0 0.0
    %4363 = vmatprep.subr.mxu0 0.0
    %4364 = vmatpush2.msra.mxu0 0.0
    %4365 = vmatprep.subr.mxu0 0.0
    %4366 = vmatpush2.msra.mxu0 0.0
    %4367 = vmatprep.subr.mxu0 0.0
    %4368 = vmatpush2.msra.mxu0 0.0
    %4369 = vmatprep.subr.mxu0 0.0
    %4370 = vmatpush2.msra.mxu0 0.0
    %4371 = vmatprep.subr.mxu0 0.0
    %4372 = vmatpush2.msra.mxu0 0.0
    %4373 = vmatprep.subr.mxu0 0.0
    %4374 = vmatpush2.msra.mxu0 0.0
    %4375 = vmatprep.subr.mxu0 0.0
    %4376 = vmatpush2.msra.mxu0 0.0
    %4377 = vmatprep.subr.mxu0 0.0
    %4378 = vmatpush2.msra.mxu0 0.0
    %4379 = vmatprep.subr.mxu0 0.0
    %4380 = vmatpush2.msra.mxu0 0.0
    %4381 = vmatprep.mubr.f32.mxu0 0.0
    %4382 = vmatmul.mubr.f32.gmra.mxu0 %v4312
    %v4383 = vpop.f32.mrf.mxu0
    %v4384 = vadd.f32 0.0, %v4383
    %v4385 = vpop.f32.mrf.mxu0
    %4386 = vmatprep.mubr.f32.mxu0 0.0
    %4387 = vmatmul.mubr.f32.gmra.mxu0 %v4315
    %v4388 = vpop.f32.mrf.mxu0
    %v4389 = vadd.f32 0.0, %v4388
    %v4390 = vpop.f32.mrf.mxu0
    %4391 = vdwg.mxu0
    %v4392 = vadd.f32 %v4182, %v4384
    %v4393 = vadd.f32 %v4187, %v4389
    %4394 = vrot.lane.b32.xlu0 %v241, 104
    %v4395 = vpop.permute.xlu0 %4394
    %4396 = vrot.lane.b32.xlu0 %v247, 104
    %v4397 = vpop.permute.xlu0 %4396
    %4398 = vrot.lane.b32.xlu0 %v241, 72
    %v4399 = vpop.permute.xlu0 %4398
    %4400 = vrot.lane.b32.xlu0 %v247, 72
    %v4401 = vpop.permute.xlu0 %4400
    %v4402 = vsel %vm295, %v4395, 0
    %v4404 = vsel %vm295, %v4397, 0
    %v4406 = vsel %vm295, %v4399, 0
    %v4408 = vsel %vm295, %v4401, 0
    %4410 = vmatprep.subr.mxu0 0.0
    %4411 = vmatpush1.xpose.msra.mxu0 0.0
    %4412 = vmatprep.subr.mxu0 0.0
    %4413 = vmatpush1.xpose.msra.mxu0 0.0
    %4414 = vmatprep.subr.mxu0 0.0
    %4415 = vmatpush1.xpose.msra.mxu0 0.0
    %4416 = vmatprep.subr.mxu0 0.0
    %4417 = vmatpush1.xpose.msra.mxu0 0.0
    %4418 = vmatprep.subr.mxu0 0.0
    %4419 = vmatpush1.xpose.msra.mxu0 0.0
    %4420 = vmatprep.subr.mxu0 0.0
    %4421 = vmatpush1.xpose.msra.mxu0 0.0
    %4422 = vmatprep.subr.mxu0 0.0
    %4423 = vmatpush1.xpose.msra.mxu0 0.0
    %4424 = vmatprep.subr.mxu0 0.0
    %4425 = vmatpush1.xpose.msra.mxu0 0.0
    %4426 = vmatprep.subr.mxu0 0.0
    %4427 = vmatpush1.xpose.msra.mxu0 0.0
    %4428 = vmatprep.subr.mxu0 0.0
    %4429 = vmatpush1.xpose.msra.mxu0 0.0
    %4430 = vmatprep.subr.mxu0 0.0
    %4431 = vmatpush1.xpose.msra.mxu0 0.0
    %4432 = vmatprep.subr.mxu0 0.0
    %4433 = vmatpush1.xpose.msra.mxu0 0.0
    %4434 = vmatprep.subr.mxu0 0.0
    %4435 = vmatpush1.xpose.msra.mxu0 0.0
    %4436 = vmatprep.subr.mxu0 0.0
    %4437 = vmatpush1.xpose.msra.mxu0 0.0
    %4438 = vmatprep.subr.mxu0 0.0
    %4439 = vmatpush1.xpose.msra.mxu0 %v4408
    %4440 = vmatprep.subr.mxu0 0.0
    %4441 = vmatpush1.xpose.msra.mxu0 %v4406
    %4442 = vmatprep.subr.mxu0 0.0
    %4443 = vmatpush2.xpose.msra.mxu0 0.0
    %4444 = vmatprep.subr.mxu0 0.0
    %4445 = vmatpush2.xpose.msra.mxu0 0.0
    %4446 = vmatprep.subr.mxu0 0.0
    %4447 = vmatpush2.xpose.msra.mxu0 0.0
    %4448 = vmatprep.subr.mxu0 0.0
    %4449 = vmatpush2.xpose.msra.mxu0 0.0
    %4450 = vmatprep.subr.mxu0 0.0
    %4451 = vmatpush2.xpose.msra.mxu0 0.0
    %4452 = vmatprep.subr.mxu0 0.0
    %4453 = vmatpush2.xpose.msra.mxu0 0.0
    %4454 = vmatprep.subr.mxu0 0.0
    %4455 = vmatpush2.xpose.msra.mxu0 0.0
    %4456 = vmatprep.subr.mxu0 0.0
    %4457 = vmatpush2.xpose.msra.mxu0 0.0
    %4458 = vmatprep.subr.mxu0 0.0
    %4459 = vmatpush2.xpose.msra.mxu0 0.0
    %4460 = vmatprep.subr.mxu0 0.0
    %4461 = vmatpush2.xpose.msra.mxu0 0.0
    %4462 = vmatprep.subr.mxu0 0.0
    %4463 = vmatpush2.xpose.msra.mxu0 0.0
    %4464 = vmatprep.subr.mxu0 0.0
    %4465 = vmatpush2.xpose.msra.mxu0 0.0
    %4466 = vmatprep.subr.mxu0 0.0
    %4467 = vmatpush2.xpose.msra.mxu0 0.0
    %4468 = vmatprep.subr.mxu0 0.0
    %4469 = vmatpush2.xpose.msra.mxu0 0.0
    %4470 = vmatprep.subr.mxu0 0.0
    %4471 = vmatpush2.xpose.msra.mxu0 0.0
    %4472 = vmatprep.subr.mxu0 0.0
    %4473 = vmatpush2.xpose.msra.mxu0 0.0
    %4474 = vmatprep.mubr.f32.mxu0 0.0
    %4475 = vmatmul.mubr.f32.gmra.mxu0 %v4402
    %v4476 = vpop.f32.mrf.mxu0
    %v4477 = vadd.f32 0.0, %v4476
    %v4478 = vpop.f32.mrf.mxu0
    %4479 = vmatprep.mubr.f32.mxu0 0.0
    %4480 = vmatmul.mubr.f32.gmra.mxu0 %v4404
    %v4481 = vpop.f32.mrf.mxu0
    %v4482 = vadd.f32 0.0, %v4481
    %v4483 = vpop.f32.mrf.mxu0
    %4484 = vdwg.mxu0
    %v4485 = vmul.f32 %v3774, %v4477
    %v4486 = vmul.f32 %v3775, %v4482
    %v4487 = vsel %vm381, %v4485, -inf
    %4488 = vmax.xlane.f32.xlu0 %v4487
    %v4489 = vpop.xlane.xlu0 %4488
    %v4490 = vsel %vm381, %v4486, -inf
    %4491 = vmax.xlane.f32.xlu0 %v4490
    %v4492 = vpop.xlane.xlu0 %4491
    %v4493 = vsub.f32 %v4485, %v4489
    %v4494 = vsub.f32 %v4486, %v4492
    %v4495 = vmul.f32 %v4493, 1.442695
    %v4496 = vpow.pop %v4495
    %v4497 = vmul.f32 %v4494, 1.442695
    %v4498 = vpow.pop %v4497
    %v4499 = vsel %vm381, %v4496, 0.0
    %4500 = vadd.xlane.f32.xlu0 %v4499
    %v4501 = vpop.xlane.xlu0 %4500
    %v4502 = vsel %vm381, %v4498, 0.0
    %4503 = vadd.xlane.f32.xlu0 %v4502
    %v4504 = vpop.xlane.xlu0 %4503
    %v4505 = vrcp.pop %v4501
    %v4506 = vrcp.pop %v4504
    %v4507 = vmul.f32 %v4501, %v4505
    %v4508 = vmul.f32 %v4504, %v4506
    %v4509 = vsub.f32 2.0, %v4507
    %v4510 = vsub.f32 2.0, %v4508
    %v4511 = vmul.f32 %v4505, %v4509
    %v4512 = vmul.f32 %v4506, %v4510
    %v4513 = vmul.f32 %v4496, %v4511
    %v4514 = vmul.f32 %v4498, %v4512
    %4517 = vrot.lane.b32.xlu0 %v243, 96
    %v4518 = vpop.permute.xlu0 %4517
    %4519 = vrot.lane.b32.xlu0 %v249, 96
    %v4520 = vpop.permute.xlu0 %4519
    %v4524 = vsel %vm381, %v4513, 0
    %v4527 = vsel %vm381, %v4514, 0
    %4529 = vmatprep.subr.mxu0 0.0
    %4530 = vmatpush1.msra.mxu0 0.0
    %4531 = vmatprep.subr.mxu0 0.0
    %4532 = vmatpush1.msra.mxu0 0.0
    %4533 = vmatprep.subr.mxu0 0.0
    %4534 = vmatpush1.msra.mxu0 0.0
    %4535 = vmatprep.subr.mxu0 0.0
    %4536 = vmatpush1.msra.mxu0 0.0
    %4537 = vmatprep.subr.mxu0 0.0
    %4538 = vmatpush1.msra.mxu0 0.0
    %4539 = vmatprep.subr.mxu0 0.0
    %4540 = vmatpush1.msra.mxu0 0.0
    %4541 = vmatprep.subr.mxu0 0.0
    %4542 = vmatpush1.msra.mxu0 0.0
    %4543 = vmatprep.subr.mxu0 0.0
    %4544 = vmatpush1.msra.mxu0 0.0
    %4545 = vmatprep.subr.mxu0 0.0
    %4546 = vmatpush1.msra.mxu0 0.0
    %4547 = vmatprep.subr.mxu0 0.0
    %4548 = vmatpush1.msra.mxu0 0.0
    %4549 = vmatprep.subr.mxu0 0.0
    %4550 = vmatpush1.msra.mxu0 0.0
    %4551 = vmatprep.subr.mxu0 0.0
    %4552 = vmatpush1.msra.mxu0 0.0
    %4553 = vmatprep.subr.mxu0 0.0
    %4554 = vmatpush1.msra.mxu0 0.0
    %4555 = vmatprep.subr.mxu0 0.0
    %4556 = vmatpush1.msra.mxu0 0.0
    %4557 = vmatprep.subr.mxu0 0.0
    %4558 = vmatpush1.msra.mxu0 %v4520
    %4559 = vmatprep.subr.mxu0 0.0
    %4560 = vmatpush1.msra.mxu0 %v4518
    %4561 = vmatprep.subr.mxu0 0.0
    %4562 = vmatpush2.msra.mxu0 0.0
    %4563 = vmatprep.subr.mxu0 0.0
    %4564 = vmatpush2.msra.mxu0 0.0
    %4565 = vmatprep.subr.mxu0 0.0
    %4566 = vmatpush2.msra.mxu0 0.0
    %4567 = vmatprep.subr.mxu0 0.0
    %4568 = vmatpush2.msra.mxu0 0.0
    %4569 = vmatprep.subr.mxu0 0.0
    %4570 = vmatpush2.msra.mxu0 0.0
    %4571 = vmatprep.subr.mxu0 0.0
    %4572 = vmatpush2.msra.mxu0 0.0
    %4573 = vmatprep.subr.mxu0 0.0
    %4574 = vmatpush2.msra.mxu0 0.0
    %4575 = vmatprep.subr.mxu0 0.0
    %4576 = vmatpush2.msra.mxu0 0.0
    %4577 = vmatprep.subr.mxu0 0.0
    %4578 = vmatpush2.msra.mxu0 0.0
    %4579 = vmatprep.subr.mxu0 0.0
    %4580 = vmatpush2.msra.mxu0 0.0
    %4581 = vmatprep.subr.mxu0 0.0
    %4582 = vmatpush2.msra.mxu0 0.0
    %4583 = vmatprep.subr.mxu0 0.0
    %4584 = vmatpush2.msra.mxu0 0.0
    %4585 = vmatprep.subr.mxu0 0.0
    %4586 = vmatpush2.msra.mxu0 0.0
    %4587 = vmatprep.subr.mxu0 0.0
    %4588 = vmatpush2.msra.mxu0 0.0
    %4589 = vmatprep.subr.mxu0 0.0
    %4590 = vmatpush2.msra.mxu0 0.0
    %4591 = vmatprep.subr.mxu0 0.0
    %4592 = vmatpush2.msra.mxu0 0.0
    %4593 = vmatprep.mubr.f32.mxu0 0.0
    %4594 = vmatmul.mubr.f32.gmra.mxu0 %v4524
    %v4595 = vpop.f32.mrf.mxu0
    %v4596 = vadd.f32 0.0, %v4595
    %v4597 = vpop.f32.mrf.mxu0
    %4598 = vmatprep.mubr.f32.mxu0 0.0
    %4599 = vmatmul.mubr.f32.gmra.mxu0 %v4527
    %v4600 = vpop.f32.mrf.mxu0
    %v4601 = vadd.f32 0.0, %v4600
    %v4602 = vpop.f32.mrf.mxu0
    %4603 = vdwg.mxu0
    %v4604 = vadd.f32 %v4392, %v4596
    %v4605 = vadd.f32 %v4393, %v4601
    %v4606 = vadd.f32 %v4604, %v60
    %v4607 = vadd.f32 %v4605, %v61
    %v4608 = vsel %vm77, %v4606, 0.0
    %v4609 = vsel %vm77, %v4607, 0.0
    %v4610 = vadd.f32 %v4608, %v4609
    %v4611 = vrot.slane %v4610, 4
    %v4612 = vadd.f32 %v4610, %v4611
    %v4613 = vrot.slane %v4612, 2
    %v4614 = vadd.f32 %v4612, %v4613
    %v4615 = vrot.slane %v4614, 1
    %v4616 = vadd.f32 %v4614, %v4615
    %v4617 = vmul.f32 %v4616, %v1132
    %v4618 = vmul.f32 %v4606, %v4606
    %v4619 = vmul.f32 %v4607, %v4607
    %v4620 = vsel %vm77, %v4618, 0.0
    %v4621 = vsel %vm77, %v4619, 0.0
    %v4622 = vadd.f32 %v4620, %v4621
    %v4623 = vrot.slane %v4622, 4
    %v4624 = vadd.f32 %v4622, %v4623
    %v4625 = vrot.slane %v4624, 2
    %v4626 = vadd.f32 %v4624, %v4625
    %v4627 = vrot.slane %v4626, 1
    %v4628 = vadd.f32 %v4626, %v4627
    %v4629 = vmul.f32 %v4628, %v1132
    %v4630 = vmul.f32 %v4617, %v4617
    %v4631 = vsub.f32 %v4629, %v4630
    %v4632 = vsub.f32 %v4606, %v4617
    %v4633 = vsub.f32 %v4607, %v4617
    %v4634 = vadd.f32 %v4631, 1e-05
    %v4635 = vrsqrt.pop %v4634
    %v4636 = vmul.f32 %v4632, %v4635
    %v4637 = vmul.f32 %v4633, %v4635
    %v4638 = vmul.f32 %v4636, %v1157
    %v4639 = vmul.f32 %v4637, %v1157
    %v4640 = vadd.f32 %v4638, %v1163
    %v4641 = vadd.f32 %v4639, %v1163
    %s4642 = scalar_lea.vmem [#allocation2], 80
    %v4643 = vld [vmem:[%s4642] sm:$0xff]
    %v4644 = vld [vmem:[%s4642 + $0x8] sm:$0xff]
    %4647 = vrot.lane.b32.xlu0 %v253, 96
    %v4648 = vpop.permute.xlu0 %4647
    %4649 = vrot.lane.b32.xlu0 %v259, 96
    %v4650 = vpop.permute.xlu0 %4649
    %v4651 = vsel %vm295, %v253, 0
    %v4653 = vsel %vm295, %v259, 0
    %v4655 = vsel %vm295, %v4648, 0
    %v4657 = vsel %vm295, %v4650, 0
    %4659 = vmatprep.subr.mxu0 0.0
    %4660 = vmatpush1.xpose.msra.mxu0 0.0
    %4661 = vmatprep.subr.mxu0 0.0
    %4662 = vmatpush1.xpose.msra.mxu0 0.0
    %4663 = vmatprep.subr.mxu0 0.0
    %4664 = vmatpush1.xpose.msra.mxu0 0.0
    %4665 = vmatprep.subr.mxu0 0.0
    %4666 = vmatpush1.xpose.msra.mxu0 0.0
    %4667 = vmatprep.subr.mxu0 0.0
    %4668 = vmatpush1.xpose.msra.mxu0 0.0
    %4669 = vmatprep.subr.mxu0 0.0
    %4670 = vmatpush1.xpose.msra.mxu0 0.0
    %4671 = vmatprep.subr.mxu0 0.0
    %4672 = vmatpush1.xpose.msra.mxu0 0.0
    %4673 = vmatprep.subr.mxu0 0.0
    %4674 = vmatpush1.xpose.msra.mxu0 0.0
    %4675 = vmatprep.subr.mxu0 0.0
    %4676 = vmatpush1.xpose.msra.mxu0 0.0
    %4677 = vmatprep.subr.mxu0 0.0
    %4678 = vmatpush1.xpose.msra.mxu0 0.0
    %4679 = vmatprep.subr.mxu0 0.0
    %4680 = vmatpush1.xpose.msra.mxu0 0.0
    %4681 = vmatprep.subr.mxu0 0.0
    %4682 = vmatpush1.xpose.msra.mxu0 0.0
    %4683 = vmatprep.subr.mxu0 0.0
    %4684 = vmatpush1.xpose.msra.mxu0 0.0
    %4685 = vmatprep.subr.mxu0 0.0
    %4686 = vmatpush1.xpose.msra.mxu0 0.0
    %4687 = vmatprep.subr.mxu0 0.0
    %4688 = vmatpush1.xpose.msra.mxu0 %v4657
    %4689 = vmatprep.subr.mxu0 0.0
    %4690 = vmatpush1.xpose.msra.mxu0 %v4655
    %4691 = vmatprep.subr.mxu0 0.0
    %4692 = vmatpush2.xpose.msra.mxu0 0.0
    %4693 = vmatprep.subr.mxu0 0.0
    %4694 = vmatpush2.xpose.msra.mxu0 0.0
    %4695 = vmatprep.subr.mxu0 0.0
    %4696 = vmatpush2.xpose.msra.mxu0 0.0
    %4697 = vmatprep.subr.mxu0 0.0
    %4698 = vmatpush2.xpose.msra.mxu0 0.0
    %4699 = vmatprep.subr.mxu0 0.0
    %4700 = vmatpush2.xpose.msra.mxu0 0.0
    %4701 = vmatprep.subr.mxu0 0.0
    %4702 = vmatpush2.xpose.msra.mxu0 0.0
    %4703 = vmatprep.subr.mxu0 0.0
    %4704 = vmatpush2.xpose.msra.mxu0 0.0
    %4705 = vmatprep.subr.mxu0 0.0
    %4706 = vmatpush2.xpose.msra.mxu0 0.0
    %4707 = vmatprep.subr.mxu0 0.0
    %4708 = vmatpush2.xpose.msra.mxu0 0.0
    %4709 = vmatprep.subr.mxu0 0.0
    %4710 = vmatpush2.xpose.msra.mxu0 0.0
    %4711 = vmatprep.subr.mxu0 0.0
    %4712 = vmatpush2.xpose.msra.mxu0 0.0
    %4713 = vmatprep.subr.mxu0 0.0
    %4714 = vmatpush2.xpose.msra.mxu0 0.0
    %4715 = vmatprep.subr.mxu0 0.0
    %4716 = vmatpush2.xpose.msra.mxu0 0.0
    %4717 = vmatprep.subr.mxu0 0.0
    %4718 = vmatpush2.xpose.msra.mxu0 0.0
    %4719 = vmatprep.subr.mxu0 0.0
    %4720 = vmatpush2.xpose.msra.mxu0 0.0
    %4721 = vmatprep.subr.mxu0 0.0
    %4722 = vmatpush2.xpose.msra.mxu0 0.0
    %4723 = vmatprep.mubr.f32.mxu0 0.0
    %4724 = vmatmul.mubr.f32.gmra.mxu0 %v4651
    %v4725 = vpop.f32.mrf.mxu0
    %v4726 = vadd.f32 0.0, %v4725
    %v4727 = vpop.f32.mrf.mxu0
    %4728 = vmatprep.mubr.f32.mxu0 0.0
    %4729 = vmatmul.mubr.f32.gmra.mxu0 %v4653
    %v4730 = vpop.f32.mrf.mxu0
    %v4731 = vadd.f32 0.0, %v4730
    %v4732 = vpop.f32.mrf.mxu0
    %4733 = vdwg.mxu0
    %v4734 = vmul.f32 %v4643, %v4726
    %v4735 = vmul.f32 %v4644, %v4731
    %v4736 = vsel %vm381, %v4734, -inf
    %4737 = vmax.xlane.f32.xlu0 %v4736
    %v4738 = vpop.xlane.xlu0 %4737
    %v4739 = vsel %vm381, %v4735, -inf
    %4740 = vmax.xlane.f32.xlu0 %v4739
    %v4741 = vpop.xlane.xlu0 %4740
    %v4742 = vsub.f32 %v4734, %v4738
    %v4743 = vsub.f32 %v4735, %v4741
    %v4744 = vmul.f32 %v4742, 1.442695
    %v4745 = vpow.pop %v4744
    %v4746 = vmul.f32 %v4743, 1.442695
    %v4747 = vpow.pop %v4746
    %v4748 = vsel %vm381, %v4745, 0.0
    %4749 = vadd.xlane.f32.xlu0 %v4748
    %v4750 = vpop.xlane.xlu0 %4749
    %v4751 = vsel %vm381, %v4747, 0.0
    %4752 = vadd.xlane.f32.xlu0 %v4751
    %v4753 = vpop.xlane.xlu0 %4752
    %v4754 = vrcp.pop %v4750
    %v4755 = vrcp.pop %v4753
    %v4756 = vmul.f32 %v4750, %v4754
    %v4757 = vmul.f32 %v4753, %v4755
    %v4758 = vsub.f32 2.0, %v4756
    %v4759 = vsub.f32 2.0, %v4757
    %v4760 = vmul.f32 %v4754, %v4758
    %v4761 = vmul.f32 %v4755, %v4759
    %v4762 = vmul.f32 %v4745, %v4760
    %v4763 = vmul.f32 %v4747, %v4761
    %4764 = vrot.lane.b32.xlu0 %v253, 120
    %v4765 = vpop.permute.xlu0 %4764
    %4766 = vrot.lane.b32.xlu0 %v259, 120
    %v4767 = vpop.permute.xlu0 %4766
    %4768 = vrot.lane.b32.xlu0 %v253, 88
    %v4769 = vpop.permute.xlu0 %4768
    %4770 = vrot.lane.b32.xlu0 %v259, 88
    %v4771 = vpop.permute.xlu0 %4770
    %v4772 = vsel %vm295, %v4765, 0
    %v4774 = vsel %vm295, %v4767, 0
    %v4776 = vsel %vm295, %v4769, 0
    %v4778 = vsel %vm295, %v4771, 0
    %4780 = vmatprep.subr.mxu0 0.0
    %4781 = vmatpush1.xpose.msra.mxu0 0.0
    %4782 = vmatprep.subr.mxu0 0.0
    %4783 = vmatpush1.xpose.msra.mxu0 0.0
    %4784 = vmatprep.subr.mxu0 0.0
    %4785 = vmatpush1.xpose.msra.mxu0 0.0
    %4786 = vmatprep.subr.mxu0 0.0
    %4787 = vmatpush1.xpose.msra.mxu0 0.0
    %4788 = vmatprep.subr.mxu0 0.0
    %4789 = vmatpush1.xpose.msra.mxu0 0.0
    %4790 = vmatprep.subr.mxu0 0.0
    %4791 = vmatpush1.xpose.msra.mxu0 0.0
    %4792 = vmatprep.subr.mxu0 0.0
    %4793 = vmatpush1.xpose.msra.mxu0 0.0
    %4794 = vmatprep.subr.mxu0 0.0
    %4795 = vmatpush1.xpose.msra.mxu0 0.0
    %4796 = vmatprep.subr.mxu0 0.0
    %4797 = vmatpush1.xpose.msra.mxu0 0.0
    %4798 = vmatprep.subr.mxu0 0.0
    %4799 = vmatpush1.xpose.msra.mxu0 0.0
    %4800 = vmatprep.subr.mxu0 0.0
    %4801 = vmatpush1.xpose.msra.mxu0 0.0
    %4802 = vmatprep.subr.mxu0 0.0
    %4803 = vmatpush1.xpose.msra.mxu0 0.0
    %4804 = vmatprep.subr.mxu0 0.0
    %4805 = vmatpush1.xpose.msra.mxu0 0.0
    %4806 = vmatprep.subr.mxu0 0.0
    %4807 = vmatpush1.xpose.msra.mxu0 0.0
    %4808 = vmatprep.subr.mxu0 0.0
    %4809 = vmatpush1.xpose.msra.mxu0 %v4778
    %4810 = vmatprep.subr.mxu0 0.0
    %4811 = vmatpush1.xpose.msra.mxu0 %v4776
    %4812 = vmatprep.subr.mxu0 0.0
    %4813 = vmatpush2.xpose.msra.mxu0 0.0
    %4814 = vmatprep.subr.mxu0 0.0
    %4815 = vmatpush2.xpose.msra.mxu0 0.0
    %4816 = vmatprep.subr.mxu0 0.0
    %4817 = vmatpush2.xpose.msra.mxu0 0.0
    %4818 = vmatprep.subr.mxu0 0.0
    %4819 = vmatpush2.xpose.msra.mxu0 0.0
    %4820 = vmatprep.subr.mxu0 0.0
    %4821 = vmatpush2.xpose.msra.mxu0 0.0
    %4822 = vmatprep.subr.mxu0 0.0
    %4823 = vmatpush2.xpose.msra.mxu0 0.0
    %4824 = vmatprep.subr.mxu0 0.0
    %4825 = vmatpush2.xpose.msra.mxu0 0.0
    %4826 = vmatprep.subr.mxu0 0.0
    %4827 = vmatpush2.xpose.msra.mxu0 0.0
    %4828 = vmatprep.subr.mxu0 0.0
    %4829 = vmatpush2.xpose.msra.mxu0 0.0
    %4830 = vmatprep.subr.mxu0 0.0
    %4831 = vmatpush2.xpose.msra.mxu0 0.0
    %4832 = vmatprep.subr.mxu0 0.0
    %4833 = vmatpush2.xpose.msra.mxu0 0.0
    %4834 = vmatprep.subr.mxu0 0.0
    %4835 = vmatpush2.xpose.msra.mxu0 0.0
    %4836 = vmatprep.subr.mxu0 0.0
    %4837 = vmatpush2.xpose.msra.mxu0 0.0
    %4838 = vmatprep.subr.mxu0 0.0
    %4839 = vmatpush2.xpose.msra.mxu0 0.0
    %4840 = vmatprep.subr.mxu0 0.0
    %4841 = vmatpush2.xpose.msra.mxu0 0.0
    %4842 = vmatprep.subr.mxu0 0.0
    %4843 = vmatpush2.xpose.msra.mxu0 0.0
    %4844 = vmatprep.mubr.f32.mxu0 0.0
    %4845 = vmatmul.mubr.f32.gmra.mxu0 %v4772
    %v4846 = vpop.f32.mrf.mxu0
    %v4847 = vadd.f32 0.0, %v4846
    %v4848 = vpop.f32.mrf.mxu0
    %4849 = vmatprep.mubr.f32.mxu0 0.0
    %4850 = vmatmul.mubr.f32.gmra.mxu0 %v4774
    %v4851 = vpop.f32.mrf.mxu0
    %v4852 = vadd.f32 0.0, %v4851
    %v4853 = vpop.f32.mrf.mxu0
    %4854 = vdwg.mxu0
    %v4855 = vmul.f32 %v4643, %v4847
    %v4856 = vmul.f32 %v4644, %v4852
    %v4857 = vsel %vm381, %v4855, -inf
    %4858 = vmax.xlane.f32.xlu0 %v4857
    %v4859 = vpop.xlane.xlu0 %4858
    %v4860 = vsel %vm381, %v4856, -inf
    %4861 = vmax.xlane.f32.xlu0 %v4860
    %v4862 = vpop.xlane.xlu0 %4861
    %v4863 = vsub.f32 %v4855, %v4859
    %v4864 = vsub.f32 %v4856, %v4862
    %v4865 = vmul.f32 %v4863, 1.442695
    %v4866 = vpow.pop %v4865
    %v4867 = vmul.f32 %v4864, 1.442695
    %v4868 = vpow.pop %v4867
    %v4869 = vsel %vm381, %v4866, 0.0
    %4870 = vadd.xlane.f32.xlu0 %v4869
    %v4871 = vpop.xlane.xlu0 %4870
    %v4872 = vsel %vm381, %v4868, 0.0
    %4873 = vadd.xlane.f32.xlu0 %v4872
    %v4874 = vpop.xlane.xlu0 %4873
    %v4875 = vrcp.pop %v4871
    %v4876 = vrcp.pop %v4874
    %v4877 = vmul.f32 %v4871, %v4875
    %v4878 = vmul.f32 %v4874, %v4876
    %v4879 = vsub.f32 2.0, %v4877
    %v4880 = vsub.f32 2.0, %v4878
    %v4881 = vmul.f32 %v4875, %v4879
    %v4882 = vmul.f32 %v4876, %v4880
    %v4883 = vmul.f32 %v4866, %v4881
    %v4884 = vmul.f32 %v4868, %v4882
    %4885 = vrot.lane.b32.xlu0 %v253, 32
    %v4886 = vpop.permute.xlu0 %4885
    %4887 = vrot.lane.b32.xlu0 %v259, 32
    %v4888 = vpop.permute.xlu0 %4887
    %v4892 = vsel %vm381, %v4883, 0
    %v4895 = vsel %vm381, %v4884, 0
    %4897 = vmatprep.subr.mxu0 0.0
    %4898 = vmatpush1.msra.mxu0 0.0
    %4899 = vmatprep.subr.mxu0 0.0
    %4900 = vmatpush1.msra.mxu0 0.0
    %4901 = vmatprep.subr.mxu0 0.0
    %4902 = vmatpush1.msra.mxu0 0.0
    %4903 = vmatprep.subr.mxu0 0.0
    %4904 = vmatpush1.msra.mxu0 0.0
    %4905 = vmatprep.subr.mxu0 0.0
    %4906 = vmatpush1.msra.mxu0 0.0
    %4907 = vmatprep.subr.mxu0 0.0
    %4908 = vmatpush1.msra.mxu0 0.0
    %4909 = vmatprep.subr.mxu0 0.0
    %4910 = vmatpush1.msra.mxu0 0.0
    %4911 = vmatprep.subr.mxu0 0.0
    %4912 = vmatpush1.msra.mxu0 0.0
    %4913 = vmatprep.subr.mxu0 0.0
    %4914 = vmatpush1.msra.mxu0 0.0
    %4915 = vmatprep.subr.mxu0 0.0
    %4916 = vmatpush1.msra.mxu0 0.0
    %4917 = vmatprep.subr.mxu0 0.0
    %4918 = vmatpush1.msra.mxu0 0.0
    %4919 = vmatprep.subr.mxu0 0.0
    %4920 = vmatpush1.msra.mxu0 0.0
    %4921 = vmatprep.subr.mxu0 0.0
    %4922 = vmatpush1.msra.mxu0 0.0
    %4923 = vmatprep.subr.mxu0 0.0
    %4924 = vmatpush1.msra.mxu0 0.0
    %4925 = vmatprep.subr.mxu0 0.0
    %4926 = vmatpush1.msra.mxu0 %v4888
    %4927 = vmatprep.subr.mxu0 0.0
    %4928 = vmatpush1.msra.mxu0 %v4886
    %4929 = vmatprep.subr.mxu0 0.0
    %4930 = vmatpush2.msra.mxu0 0.0
    %4931 = vmatprep.subr.mxu0 0.0
    %4932 = vmatpush2.msra.mxu0 0.0
    %4933 = vmatprep.subr.mxu0 0.0
    %4934 = vmatpush2.msra.mxu0 0.0
    %4935 = vmatprep.subr.mxu0 0.0
    %4936 = vmatpush2.msra.mxu0 0.0
    %4937 = vmatprep.subr.mxu0 0.0
    %4938 = vmatpush2.msra.mxu0 0.0
    %4939 = vmatprep.subr.mxu0 0.0
    %4940 = vmatpush2.msra.mxu0 0.0
    %4941 = vmatprep.subr.mxu0 0.0
    %4942 = vmatpush2.msra.mxu0 0.0
    %4943 = vmatprep.subr.mxu0 0.0
    %4944 = vmatpush2.msra.mxu0 0.0
    %4945 = vmatprep.subr.mxu0 0.0
    %4946 = vmatpush2.msra.mxu0 0.0
    %4947 = vmatprep.subr.mxu0 0.0
    %4948 = vmatpush2.msra.mxu0 0.0
    %4949 = vmatprep.subr.mxu0 0.0
    %4950 = vmatpush2.msra.mxu0 0.0
    %4951 = vmatprep.subr.mxu0 0.0
    %4952 = vmatpush2.msra.mxu0 0.0
    %4953 = vmatprep.subr.mxu0 0.0
    %4954 = vmatpush2.msra.mxu0 0.0
    %4955 = vmatprep.subr.mxu0 0.0
    %4956 = vmatpush2.msra.mxu0 0.0
    %4957 = vmatprep.subr.mxu0 0.0
    %4958 = vmatpush2.msra.mxu0 0.0
    %4959 = vmatprep.subr.mxu0 0.0
    %4960 = vmatpush2.msra.mxu0 0.0
    %4961 = vmatprep.mubr.f32.mxu0 0.0
    %4962 = vmatmul.mubr.f32.gmra.mxu0 %v4892
    %v4963 = vpop.f32.mrf.mxu0
    %v4964 = vadd.f32 0.0, %v4963
    %v4965 = vpop.f32.mrf.mxu0
    %4966 = vmatprep.mubr.f32.mxu0 0.0
    %4967 = vmatmul.mubr.f32.gmra.mxu0 %v4895
    %v4968 = vpop.f32.mrf.mxu0
    %v4969 = vadd.f32 0.0, %v4968
    %v4970 = vpop.f32.mrf.mxu0
    %4971 = vdwg.mxu0
    %4972 = vrot.lane.b32.xlu0 %v253, 64
    %v4973 = vpop.permute.xlu0 %4972
    %4974 = vrot.lane.b32.xlu0 %v259, 64
    %v4975 = vpop.permute.xlu0 %4974
    %v4979 = vsel %vm381, %v4762, 0
    %v4982 = vsel %vm381, %v4763, 0
    %4984 = vmatprep.subr.mxu0 0.0
    %4985 = vmatpush1.msra.mxu0 0.0
    %4986 = vmatprep.subr.mxu0 0.0
    %4987 = vmatpush1.msra.mxu0 0.0
    %4988 = vmatprep.subr.mxu0 0.0
    %4989 = vmatpush1.msra.mxu0 0.0
    %4990 = vmatprep.subr.mxu0 0.0
    %4991 = vmatpush1.msra.mxu0 0.0
    %4992 = vmatprep.subr.mxu0 0.0
    %4993 = vmatpush1.msra.mxu0 0.0
    %4994 = vmatprep.subr.mxu0 0.0
    %4995 = vmatpush1.msra.mxu0 0.0
    %4996 = vmatprep.subr.mxu0 0.0
    %4997 = vmatpush1.msra.mxu0 0.0
    %4998 = vmatprep.subr.mxu0 0.0
    %4999 = vmatpush1.msra.mxu0 0.0
    %5000 = vmatprep.subr.mxu0 0.0
    %5001 = vmatpush1.msra.mxu0 0.0
    %5002 = vmatprep.subr.mxu0 0.0
    %5003 = vmatpush1.msra.mxu0 0.0
    %5004 = vmatprep.subr.mxu0 0.0
    %5005 = vmatpush1.msra.mxu0 0.0
    %5006 = vmatprep.subr.mxu0 0.0
    %5007 = vmatpush1.msra.mxu0 0.0
    %5008 = vmatprep.subr.mxu0 0.0
    %5009 = vmatpush1.msra.mxu0 0.0
    %5010 = vmatprep.subr.mxu0 0.0
    %5011 = vmatpush1.msra.mxu0 0.0
    %5012 = vmatprep.subr.mxu0 0.0
    %5013 = vmatpush1.msra.mxu0 %v4975
    %5014 = vmatprep.subr.mxu0 0.0
    %5015 = vmatpush1.msra.mxu0 %v4973
    %5016 = vmatprep.subr.mxu0 0.0
    %5017 = vmatpush2.msra.mxu0 0.0
    %5018 = vmatprep.subr.mxu0 0.0
    %5019 = vmatpush2.msra.mxu0 0.0
    %5020 = vmatprep.subr.mxu0 0.0
    %5021 = vmatpush2.msra.mxu0 0.0
    %5022 = vmatprep.subr.mxu0 0.0
    %5023 = vmatpush2.msra.mxu0 0.0
    %5024 = vmatprep.subr.mxu0 0.0
    %5025 = vmatpush2.msra.mxu0 0.0
    %5026 = vmatprep.subr.mxu0 0.0
    %5027 = vmatpush2.msra.mxu0 0.0
    %5028 = vmatprep.subr.mxu0 0.0
    %5029 = vmatpush2.msra.mxu0 0.0
    %5030 = vmatprep.subr.mxu0 0.0
    %5031 = vmatpush2.msra.mxu0 0.0
    %5032 = vmatprep.subr.mxu0 0.0
    %5033 = vmatpush2.msra.mxu0 0.0
    %5034 = vmatprep.subr.mxu0 0.0
    %5035 = vmatpush2.msra.mxu0 0.0
    %5036 = vmatprep.subr.mxu0 0.0
    %5037 = vmatpush2.msra.mxu0 0.0
    %5038 = vmatprep.subr.mxu0 0.0
    %5039 = vmatpush2.msra.mxu0 0.0
    %5040 = vmatprep.subr.mxu0 0.0
    %5041 = vmatpush2.msra.mxu0 0.0
    %5042 = vmatprep.subr.mxu0 0.0
    %5043 = vmatpush2.msra.mxu0 0.0
    %5044 = vmatprep.subr.mxu0 0.0
    %5045 = vmatpush2.msra.mxu0 0.0
    %5046 = vmatprep.subr.mxu0 0.0
    %5047 = vmatpush2.msra.mxu0 0.0
    %5048 = vmatprep.mubr.f32.mxu0 0.0
    %5049 = vmatmul.mubr.f32.gmra.mxu0 %v4979
    %v5050 = vpop.f32.mrf.mxu0
    %v5051 = vadd.f32 %v4964, %v5050
    %v5052 = vpop.f32.mrf.mxu0
    %5053 = vmatprep.mubr.f32.mxu0 0.0
    %5054 = vmatmul.mubr.f32.gmra.mxu0 %v4982
    %v5055 = vpop.f32.mrf.mxu0
    %v5056 = vadd.f32 %v4969, %v5055
    %v5057 = vpop.f32.mrf.mxu0
    %5058 = vdwg.mxu0
    %5059 = vrot.lane.b32.xlu0 %v253, 112
    %v5060 = vpop.permute.xlu0 %5059
    %5061 = vrot.lane.b32.xlu0 %v259, 112
    %v5062 = vpop.permute.xlu0 %5061
    %5063 = vrot.lane.b32.xlu0 %v253, 80
    %v5064 = vpop.permute.xlu0 %5063
    %5065 = vrot.lane.b32.xlu0 %v259, 80
    %v5066 = vpop.permute.xlu0 %5065
    %v5067 = vsel %vm295, %v5060, 0
    %v5069 = vsel %vm295, %v5062, 0
    %v5071 = vsel %vm295, %v5064, 0
    %v5073 = vsel %vm295, %v5066, 0
    %5075 = vmatprep.subr.mxu0 0.0
    %5076 = vmatpush1.xpose.msra.mxu0 0.0
    %5077 = vmatprep.subr.mxu0 0.0
    %5078 = vmatpush1.xpose.msra.mxu0 0.0
    %5079 = vmatprep.subr.mxu0 0.0
    %5080 = vmatpush1.xpose.msra.mxu0 0.0
    %5081 = vmatprep.subr.mxu0 0.0
    %5082 = vmatpush1.xpose.msra.mxu0 0.0
    %5083 = vmatprep.subr.mxu0 0.0
    %5084 = vmatpush1.xpose.msra.mxu0 0.0
    %5085 = vmatprep.subr.mxu0 0.0
    %5086 = vmatpush1.xpose.msra.mxu0 0.0
    %5087 = vmatprep.subr.mxu0 0.0
    %5088 = vmatpush1.xpose.msra.mxu0 0.0
    %5089 = vmatprep.subr.mxu0 0.0
    %5090 = vmatpush1.xpose.msra.mxu0 0.0
    %5091 = vmatprep.subr.mxu0 0.0
    %5092 = vmatpush1.xpose.msra.mxu0 0.0
    %5093 = vmatprep.subr.mxu0 0.0
    %5094 = vmatpush1.xpose.msra.mxu0 0.0
    %5095 = vmatprep.subr.mxu0 0.0
    %5096 = vmatpush1.xpose.msra.mxu0 0.0
    %5097 = vmatprep.subr.mxu0 0.0
    %5098 = vmatpush1.xpose.msra.mxu0 0.0
    %5099 = vmatprep.subr.mxu0 0.0
    %5100 = vmatpush1.xpose.msra.mxu0 0.0
    %5101 = vmatprep.subr.mxu0 0.0
    %5102 = vmatpush1.xpose.msra.mxu0 0.0
    %5103 = vmatprep.subr.mxu0 0.0
    %5104 = vmatpush1.xpose.msra.mxu0 %v5073
    %5105 = vmatprep.subr.mxu0 0.0
    %5106 = vmatpush1.xpose.msra.mxu0 %v5071
    %5107 = vmatprep.subr.mxu0 0.0
    %5108 = vmatpush2.xpose.msra.mxu0 0.0
    %5109 = vmatprep.subr.mxu0 0.0
    %5110 = vmatpush2.xpose.msra.mxu0 0.0
    %5111 = vmatprep.subr.mxu0 0.0
    %5112 = vmatpush2.xpose.msra.mxu0 0.0
    %5113 = vmatprep.subr.mxu0 0.0
    %5114 = vmatpush2.xpose.msra.mxu0 0.0
    %5115 = vmatprep.subr.mxu0 0.0
    %5116 = vmatpush2.xpose.msra.mxu0 0.0
    %5117 = vmatprep.subr.mxu0 0.0
    %5118 = vmatpush2.xpose.msra.mxu0 0.0
    %5119 = vmatprep.subr.mxu0 0.0
    %5120 = vmatpush2.xpose.msra.mxu0 0.0
    %5121 = vmatprep.subr.mxu0 0.0
    %5122 = vmatpush2.xpose.msra.mxu0 0.0
    %5123 = vmatprep.subr.mxu0 0.0
    %5124 = vmatpush2.xpose.msra.mxu0 0.0
    %5125 = vmatprep.subr.mxu0 0.0
    %5126 = vmatpush2.xpose.msra.mxu0 0.0
    %5127 = vmatprep.subr.mxu0 0.0
    %5128 = vmatpush2.xpose.msra.mxu0 0.0
    %5129 = vmatprep.subr.mxu0 0.0
    %5130 = vmatpush2.xpose.msra.mxu0 0.0
    %5131 = vmatprep.subr.mxu0 0.0
    %5132 = vmatpush2.xpose.msra.mxu0 0.0
    %5133 = vmatprep.subr.mxu0 0.0
    %5134 = vmatpush2.xpose.msra.mxu0 0.0
    %5135 = vmatprep.subr.mxu0 0.0
    %5136 = vmatpush2.xpose.msra.mxu0 0.0
    %5137 = vmatprep.subr.mxu0 0.0
    %5138 = vmatpush2.xpose.msra.mxu0 0.0
    %5139 = vmatprep.mubr.f32.mxu0 0.0
    %5140 = vmatmul.mubr.f32.gmra.mxu0 %v5067
    %v5141 = vpop.f32.mrf.mxu0
    %v5142 = vadd.f32 0.0, %v5141
    %v5143 = vpop.f32.mrf.mxu0
    %5144 = vmatprep.mubr.f32.mxu0 0.0
    %5145 = vmatmul.mubr.f32.gmra.mxu0 %v5069
    %v5146 = vpop.f32.mrf.mxu0
    %v5147 = vadd.f32 0.0, %v5146
    %v5148 = vpop.f32.mrf.mxu0
    %5149 = vdwg.mxu0
    %v5150 = vmul.f32 %v4643, %v5142
    %v5151 = vmul.f32 %v4644, %v5147
    %v5152 = vsel %vm381, %v5150, -inf
    %5153 = vmax.xlane.f32.xlu0 %v5152
    %v5154 = vpop.xlane.xlu0 %5153
    %v5155 = vsel %vm381, %v5151, -inf
    %5156 = vmax.xlane.f32.xlu0 %v5155
    %v5157 = vpop.xlane.xlu0 %5156
    %v5158 = vsub.f32 %v5150, %v5154
    %v5159 = vsub.f32 %v5151, %v5157
    %v5160 = vmul.f32 %v5158, 1.442695
    %v5161 = vpow.pop %v5160
    %v5162 = vmul.f32 %v5159, 1.442695
    %v5163 = vpow.pop %v5162
    %v5164 = vsel %vm381, %v5161, 0.0
    %5165 = vadd.xlane.f32.xlu0 %v5164
    %v5166 = vpop.xlane.xlu0 %5165
    %v5167 = vsel %vm381, %v5163, 0.0
    %5168 = vadd.xlane.f32.xlu0 %v5167
    %v5169 = vpop.xlane.xlu0 %5168
    %v5170 = vrcp.pop %v5166
    %v5171 = vrcp.pop %v5169
    %v5172 = vmul.f32 %v5166, %v5170
    %v5173 = vmul.f32 %v5169, %v5171
    %v5174 = vsub.f32 2.0, %v5172
    %v5175 = vsub.f32 2.0, %v5173
    %v5176 = vmul.f32 %v5170, %v5174
    %v5177 = vmul.f32 %v5171, %v5175
    %v5178 = vmul.f32 %v5161, %v5176
    %v5179 = vmul.f32 %v5163, %v5177
    %v5181 = vsel %vm381, %v5178, 0
    %v5184 = vsel %vm381, %v5179, 0
    %5186 = vmatprep.subr.mxu0 0.0
    %5187 = vmatpush1.msra.mxu0 0.0
    %5188 = vmatprep.subr.mxu0 0.0
    %5189 = vmatpush1.msra.mxu0 0.0
    %5190 = vmatprep.subr.mxu0 0.0
    %5191 = vmatpush1.msra.mxu0 0.0
    %5192 = vmatprep.subr.mxu0 0.0
    %5193 = vmatpush1.msra.mxu0 0.0
    %5194 = vmatprep.subr.mxu0 0.0
    %5195 = vmatpush1.msra.mxu0 0.0
    %5196 = vmatprep.subr.mxu0 0.0
    %5197 = vmatpush1.msra.mxu0 0.0
    %5198 = vmatprep.subr.mxu0 0.0
    %5199 = vmatpush1.msra.mxu0 0.0
    %5200 = vmatprep.subr.mxu0 0.0
    %5201 = vmatpush1.msra.mxu0 0.0
    %5202 = vmatprep.subr.mxu0 0.0
    %5203 = vmatpush1.msra.mxu0 0.0
    %5204 = vmatprep.subr.mxu0 0.0
    %5205 = vmatpush1.msra.mxu0 0.0
    %5206 = vmatprep.subr.mxu0 0.0
    %5207 = vmatpush1.msra.mxu0 0.0
    %5208 = vmatprep.subr.mxu0 0.0
    %5209 = vmatpush1.msra.mxu0 0.0
    %5210 = vmatprep.subr.mxu0 0.0
    %5211 = vmatpush1.msra.mxu0 0.0
    %5212 = vmatprep.subr.mxu0 0.0
    %5213 = vmatpush1.msra.mxu0 0.0
    %5214 = vmatprep.subr.mxu0 0.0
    %5215 = vmatpush1.msra.mxu0 %v261
    %5216 = vmatprep.subr.mxu0 0.0
    %5217 = vmatpush1.msra.mxu0 %v255
    %5218 = vmatprep.subr.mxu0 0.0
    %5219 = vmatpush2.msra.mxu0 0.0
    %5220 = vmatprep.subr.mxu0 0.0
    %5221 = vmatpush2.msra.mxu0 0.0
    %5222 = vmatprep.subr.mxu0 0.0
    %5223 = vmatpush2.msra.mxu0 0.0
    %5224 = vmatprep.subr.mxu0 0.0
    %5225 = vmatpush2.msra.mxu0 0.0
    %5226 = vmatprep.subr.mxu0 0.0
    %5227 = vmatpush2.msra.mxu0 0.0
    %5228 = vmatprep.subr.mxu0 0.0
    %5229 = vmatpush2.msra.mxu0 0.0
    %5230 = vmatprep.subr.mxu0 0.0
    %5231 = vmatpush2.msra.mxu0 0.0
    %5232 = vmatprep.subr.mxu0 0.0
    %5233 = vmatpush2.msra.mxu0 0.0
    %5234 = vmatprep.subr.mxu0 0.0
    %5235 = vmatpush2.msra.mxu0 0.0
    %5236 = vmatprep.subr.mxu0 0.0
    %5237 = vmatpush2.msra.mxu0 0.0
    %5238 = vmatprep.subr.mxu0 0.0
    %5239 = vmatpush2.msra.mxu0 0.0
    %5240 = vmatprep.subr.mxu0 0.0
    %5241 = vmatpush2.msra.mxu0 0.0
    %5242 = vmatprep.subr.mxu0 0.0
    %5243 = vmatpush2.msra.mxu0 0.0
    %5244 = vmatprep.subr.mxu0 0.0
    %5245 = vmatpush2.msra.mxu0 0.0
    %5246 = vmatprep.subr.mxu0 0.0
    %5247 = vmatpush2.msra.mxu0 0.0
    %5248 = vmatprep.subr.mxu0 0.0
    %5249 = vmatpush2.msra.mxu0 0.0
    %5250 = vmatprep.mubr.f32.mxu0 0.0
    %5251 = vmatmul.mubr.f32.gmra.mxu0 %v5181
    %v5252 = vpop.f32.mrf.mxu0
    %v5253 = vadd.f32 0.0, %v5252
    %v5254 = vpop.f32.mrf.mxu0
    %5255 = vmatprep.mubr.f32.mxu0 0.0
    %5256 = vmatmul.mubr.f32.gmra.mxu0 %v5184
    %v5257 = vpop.f32.mrf.mxu0
    %v5258 = vadd.f32 0.0, %v5257
    %v5259 = vpop.f32.mrf.mxu0
    %5260 = vdwg.mxu0
    %v5261 = vadd.f32 %v5051, %v5253
    %v5262 = vadd.f32 %v5056, %v5258
    %5263 = vrot.lane.b32.xlu0 %v253, 104
    %v5264 = vpop.permute.xlu0 %5263
    %5265 = vrot.lane.b32.xlu0 %v259, 104
    %v5266 = vpop.permute.xlu0 %5265
    %5267 = vrot.lane.b32.xlu0 %v253, 72
    %v5268 = vpop.permute.xlu0 %5267
    %5269 = vrot.lane.b32.xlu0 %v259, 72
    %v5270 = vpop.permute.xlu0 %5269
    %v5271 = vsel %vm295, %v5264, 0
    %v5273 = vsel %vm295, %v5266, 0
    %v5275 = vsel %vm295, %v5268, 0
    %v5277 = vsel %vm295, %v5270, 0
    %5279 = vmatprep.subr.mxu0 0.0
    %5280 = vmatpush1.xpose.msra.mxu0 0.0
    %5281 = vmatprep.subr.mxu0 0.0
    %5282 = vmatpush1.xpose.msra.mxu0 0.0
    %5283 = vmatprep.subr.mxu0 0.0
    %5284 = vmatpush1.xpose.msra.mxu0 0.0
    %5285 = vmatprep.subr.mxu0 0.0
    %5286 = vmatpush1.xpose.msra.mxu0 0.0
    %5287 = vmatprep.subr.mxu0 0.0
    %5288 = vmatpush1.xpose.msra.mxu0 0.0
    %5289 = vmatprep.subr.mxu0 0.0
    %5290 = vmatpush1.xpose.msra.mxu0 0.0
    %5291 = vmatprep.subr.mxu0 0.0
    %5292 = vmatpush1.xpose.msra.mxu0 0.0
    %5293 = vmatprep.subr.mxu0 0.0
    %5294 = vmatpush1.xpose.msra.mxu0 0.0
    %5295 = vmatprep.subr.mxu0 0.0
    %5296 = vmatpush1.xpose.msra.mxu0 0.0
    %5297 = vmatprep.subr.mxu0 0.0
    %5298 = vmatpush1.xpose.msra.mxu0 0.0
    %5299 = vmatprep.subr.mxu0 0.0
    %5300 = vmatpush1.xpose.msra.mxu0 0.0
    %5301 = vmatprep.subr.mxu0 0.0
    %5302 = vmatpush1.xpose.msra.mxu0 0.0
    %5303 = vmatprep.subr.mxu0 0.0
    %5304 = vmatpush1.xpose.msra.mxu0 0.0
    %5305 = vmatprep.subr.mxu0 0.0
    %5306 = vmatpush1.xpose.msra.mxu0 0.0
    %5307 = vmatprep.subr.mxu0 0.0
    %5308 = vmatpush1.xpose.msra.mxu0 %v5277
    %5309 = vmatprep.subr.mxu0 0.0
    %5310 = vmatpush1.xpose.msra.mxu0 %v5275
    %5311 = vmatprep.subr.mxu0 0.0
    %5312 = vmatpush2.xpose.msra.mxu0 0.0
    %5313 = vmatprep.subr.mxu0 0.0
    %5314 = vmatpush2.xpose.msra.mxu0 0.0
    %5315 = vmatprep.subr.mxu0 0.0
    %5316 = vmatpush2.xpose.msra.mxu0 0.0
    %5317 = vmatprep.subr.mxu0 0.0
    %5318 = vmatpush2.xpose.msra.mxu0 0.0
    %5319 = vmatprep.subr.mxu0 0.0
    %5320 = vmatpush2.xpose.msra.mxu0 0.0
    %5321 = vmatprep.subr.mxu0 0.0
    %5322 = vmatpush2.xpose.msra.mxu0 0.0
    %5323 = vmatprep.subr.mxu0 0.0
    %5324 = vmatpush2.xpose.msra.mxu0 0.0
    %5325 = vmatprep.subr.mxu0 0.0
    %5326 = vmatpush2.xpose.msra.mxu0 0.0
    %5327 = vmatprep.subr.mxu0 0.0
    %5328 = vmatpush2.xpose.msra.mxu0 0.0
    %5329 = vmatprep.subr.mxu0 0.0
    %5330 = vmatpush2.xpose.msra.mxu0 0.0
    %5331 = vmatprep.subr.mxu0 0.0
    %5332 = vmatpush2.xpose.msra.mxu0 0.0
    %5333 = vmatprep.subr.mxu0 0.0
    %5334 = vmatpush2.xpose.msra.mxu0 0.0
    %5335 = vmatprep.subr.mxu0 0.0
    %5336 = vmatpush2.xpose.msra.mxu0 0.0
    %5337 = vmatprep.subr.mxu0 0.0
    %5338 = vmatpush2.xpose.msra.mxu0 0.0
    %5339 = vmatprep.subr.mxu0 0.0
    %5340 = vmatpush2.xpose.msra.mxu0 0.0
    %5341 = vmatprep.subr.mxu0 0.0
    %5342 = vmatpush2.xpose.msra.mxu0 0.0
    %5343 = vmatprep.mubr.f32.mxu0 0.0
    %5344 = vmatmul.mubr.f32.gmra.mxu0 %v5271
    %v5345 = vpop.f32.mrf.mxu0
    %v5346 = vadd.f32 0.0, %v5345
    %v5347 = vpop.f32.mrf.mxu0
    %5348 = vmatprep.mubr.f32.mxu0 0.0
    %5349 = vmatmul.mubr.f32.gmra.mxu0 %v5273
    %v5350 = vpop.f32.mrf.mxu0
    %v5351 = vadd.f32 0.0, %v5350
    %v5352 = vpop.f32.mrf.mxu0
    %5353 = vdwg.mxu0
    %v5354 = vmul.f32 %v4643, %v5346
    %v5355 = vmul.f32 %v4644, %v5351
    %v5356 = vsel %vm381, %v5354, -inf
    %5357 = vmax.xlane.f32.xlu0 %v5356
    %v5358 = vpop.xlane.xlu0 %5357
    %v5359 = vsel %vm381, %v5355, -inf
    %5360 = vmax.xlane.f32.xlu0 %v5359
    %v5361 = vpop.xlane.xlu0 %5360
    %v5362 = vsub.f32 %v5354, %v5358
    %v5363 = vsub.f32 %v5355, %v5361
    %v5364 = vmul.f32 %v5362, 1.442695
    %v5365 = vpow.pop %v5364
    %v5366 = vmul.f32 %v5363, 1.442695
    %v5367 = vpow.pop %v5366
    %v5368 = vsel %vm381, %v5365, 0.0
    %5369 = vadd.xlane.f32.xlu0 %v5368
    %v5370 = vpop.xlane.xlu0 %5369
    %v5371 = vsel %vm381, %v5367, 0.0
    %5372 = vadd.xlane.f32.xlu0 %v5371
    %v5373 = vpop.xlane.xlu0 %5372
    %v5374 = vrcp.pop %v5370
    %v5375 = vrcp.pop %v5373
    %v5376 = vmul.f32 %v5370, %v5374
    %v5377 = vmul.f32 %v5373, %v5375
    %v5378 = vsub.f32 2.0, %v5376
    %v5379 = vsub.f32 2.0, %v5377
    %v5380 = vmul.f32 %v5374, %v5378
    %v5381 = vmul.f32 %v5375, %v5379
    %v5382 = vmul.f32 %v5365, %v5380
    %v5383 = vmul.f32 %v5367, %v5381
    %5386 = vrot.lane.b32.xlu0 %v255, 96
    %v5387 = vpop.permute.xlu0 %5386
    %5388 = vrot.lane.b32.xlu0 %v261, 96
    %v5389 = vpop.permute.xlu0 %5388
    %v5393 = vsel %vm381, %v5382, 0
    %v5396 = vsel %vm381, %v5383, 0
    %5398 = vmatprep.subr.mxu0 0.0
    %5399 = vmatpush1.msra.mxu0 0.0
    %5400 = vmatprep.subr.mxu0 0.0
    %5401 = vmatpush1.msra.mxu0 0.0
    %5402 = vmatprep.subr.mxu0 0.0
    %5403 = vmatpush1.msra.mxu0 0.0
    %5404 = vmatprep.subr.mxu0 0.0
    %5405 = vmatpush1.msra.mxu0 0.0
    %5406 = vmatprep.subr.mxu0 0.0
    %5407 = vmatpush1.msra.mxu0 0.0
    %5408 = vmatprep.subr.mxu0 0.0
    %5409 = vmatpush1.msra.mxu0 0.0
    %5410 = vmatprep.subr.mxu0 0.0
    %5411 = vmatpush1.msra.mxu0 0.0
    %5412 = vmatprep.subr.mxu0 0.0
    %5413 = vmatpush1.msra.mxu0 0.0
    %5414 = vmatprep.subr.mxu0 0.0
    %5415 = vmatpush1.msra.mxu0 0.0
    %5416 = vmatprep.subr.mxu0 0.0
    %5417 = vmatpush1.msra.mxu0 0.0
    %5418 = vmatprep.subr.mxu0 0.0
    %5419 = vmatpush1.msra.mxu0 0.0
    %5420 = vmatprep.subr.mxu0 0.0
    %5421 = vmatpush1.msra.mxu0 0.0
    %5422 = vmatprep.subr.mxu0 0.0
    %5423 = vmatpush1.msra.mxu0 0.0
    %5424 = vmatprep.subr.mxu0 0.0
    %5425 = vmatpush1.msra.mxu0 0.0
    %5426 = vmatprep.subr.mxu0 0.0
    %5427 = vmatpush1.msra.mxu0 %v5389
    %5428 = vmatprep.subr.mxu0 0.0
    %5429 = vmatpush1.msra.mxu0 %v5387
    %5430 = vmatprep.subr.mxu0 0.0
    %5431 = vmatpush2.msra.mxu0 0.0
    %5432 = vmatprep.subr.mxu0 0.0
    %5433 = vmatpush2.msra.mxu0 0.0
    %5434 = vmatprep.subr.mxu0 0.0
    %5435 = vmatpush2.msra.mxu0 0.0
    %5436 = vmatprep.subr.mxu0 0.0
    %5437 = vmatpush2.msra.mxu0 0.0
    %5438 = vmatprep.subr.mxu0 0.0
    %5439 = vmatpush2.msra.mxu0 0.0
    %5440 = vmatprep.subr.mxu0 0.0
    %5441 = vmatpush2.msra.mxu0 0.0
    %5442 = vmatprep.subr.mxu0 0.0
    %5443 = vmatpush2.msra.mxu0 0.0
    %5444 = vmatprep.subr.mxu0 0.0
    %5445 = vmatpush2.msra.mxu0 0.0
    %5446 = vmatprep.subr.mxu0 0.0
    %5447 = vmatpush2.msra.mxu0 0.0
    %5448 = vmatprep.subr.mxu0 0.0
    %5449 = vmatpush2.msra.mxu0 0.0
    %5450 = vmatprep.subr.mxu0 0.0
    %5451 = vmatpush2.msra.mxu0 0.0
    %5452 = vmatprep.subr.mxu0 0.0
    %5453 = vmatpush2.msra.mxu0 0.0
    %5454 = vmatprep.subr.mxu0 0.0
    %5455 = vmatpush2.msra.mxu0 0.0
    %5456 = vmatprep.subr.mxu0 0.0
    %5457 = vmatpush2.msra.mxu0 0.0
    %5458 = vmatprep.subr.mxu0 0.0
    %5459 = vmatpush2.msra.mxu0 0.0
    %5460 = vmatprep.subr.mxu0 0.0
    %5461 = vmatpush2.msra.mxu0 0.0
    %5462 = vmatprep.mubr.f32.mxu0 0.0
    %5463 = vmatmul.mubr.f32.gmra.mxu0 %v5393
    %v5464 = vpop.f32.mrf.mxu0
    %v5465 = vadd.f32 0.0, %v5464
    %v5466 = vpop.f32.mrf.mxu0
    %5467 = vmatprep.mubr.f32.mxu0 0.0
    %5468 = vmatmul.mubr.f32.gmra.mxu0 %v5396
    %v5469 = vpop.f32.mrf.mxu0
    %v5470 = vadd.f32 0.0, %v5469
    %v5471 = vpop.f32.mrf.mxu0
    %5472 = vdwg.mxu0
    %v5473 = vadd.f32 %v5261, %v5465
    %v5474 = vadd.f32 %v5262, %v5470
    %v5475 = vadd.f32 %v5473, %v62
    %v5476 = vadd.f32 %v5474, %v63
    %v5477 = vsel %vm77, %v5475, 0.0
    %v5478 = vsel %vm77, %v5476, 0.0
    %v5479 = vadd.f32 %v5477, %v5478
    %v5480 = vrot.slane %v5479, 4
    %v5481 = vadd.f32 %v5479, %v5480
    %v5482 = vrot.slane %v5481, 2
    %v5483 = vadd.f32 %v5481, %v5482
    %v5484 = vrot.slane %v5483, 1
    %v5485 = vadd.f32 %v5483, %v5484
    %v5486 = vmul.f32 %v5485, %v1132
    %v5487 = vmul.f32 %v5475, %v5475
    %v5488 = vmul.f32 %v5476, %v5476
    %v5489 = vsel %vm77, %v5487, 0.0
    %v5490 = vsel %vm77, %v5488, 0.0
    %v5491 = vadd.f32 %v5489, %v5490
    %v5492 = vrot.slane %v5491, 4
    %v5493 = vadd.f32 %v5491, %v5492
    %v5494 = vrot.slane %v5493, 2
    %v5495 = vadd.f32 %v5493, %v5494
    %v5496 = vrot.slane %v5495, 1
    %v5497 = vadd.f32 %v5495, %v5496
    %v5498 = vmul.f32 %v5497, %v1132
    %v5499 = vmul.f32 %v5486, %v5486
    %v5500 = vsub.f32 %v5498, %v5499
    %v5501 = vsub.f32 %v5475, %v5486
    %v5502 = vsub.f32 %v5476, %v5486
    %v5503 = vadd.f32 %v5500, 1e-05
    %v5504 = vrsqrt.pop %v5503
    %v5505 = vmul.f32 %v5501, %v5504
    %v5506 = vmul.f32 %v5502, %v5504
    %v5507 = vmul.f32 %v5505, %v1157
    %v5508 = vmul.f32 %v5506, %v1157
    %v5509 = vadd.f32 %v5507, %v1163
    %v5510 = vadd.f32 %v5508, %v1163
    %s5511 = scalar_lea.vmem [#allocation2], 96
    %v5512 = vld [vmem:[%s5511] sm:$0xff]
    %v5513 = vld [vmem:[%s5511 + $0x8] sm:$0xff]
    %5516 = vrot.lane.b32.xlu0 %v265, 96
    %v5517 = vpop.permute.xlu0 %5516
    %5518 = vrot.lane.b32.xlu0 %v271, 96
    %v5519 = vpop.permute.xlu0 %5518
    %v5520 = vsel %vm295, %v265, 0
    %v5522 = vsel %vm295, %v271, 0
    %v5524 = vsel %vm295, %v5517, 0
    %v5526 = vsel %vm295, %v5519, 0
    %5528 = vmatprep.subr.mxu0 0.0
    %5529 = vmatpush1.xpose.msra.mxu0 0.0
    %5530 = vmatprep.subr.mxu0 0.0
    %5531 = vmatpush1.xpose.msra.mxu0 0.0
    %5532 = vmatprep.subr.mxu0 0.0
    %5533 = vmatpush1.xpose.msra.mxu0 0.0
    %5534 = vmatprep.subr.mxu0 0.0
    %5535 = vmatpush1.xpose.msra.mxu0 0.0
    %5536 = vmatprep.subr.mxu0 0.0
    %5537 = vmatpush1.xpose.msra.mxu0 0.0
    %5538 = vmatprep.subr.mxu0 0.0
    %5539 = vmatpush1.xpose.msra.mxu0 0.0
    %5540 = vmatprep.subr.mxu0 0.0
    %5541 = vmatpush1.xpose.msra.mxu0 0.0
    %5542 = vmatprep.subr.mxu0 0.0
    %5543 = vmatpush1.xpose.msra.mxu0 0.0
    %5544 = vmatprep.subr.mxu0 0.0
    %5545 = vmatpush1.xpose.msra.mxu0 0.0
    %5546 = vmatprep.subr.mxu0 0.0
    %5547 = vmatpush1.xpose.msra.mxu0 0.0
    %5548 = vmatprep.subr.mxu0 0.0
    %5549 = vmatpush1.xpose.msra.mxu0 0.0
    %5550 = vmatprep.subr.mxu0 0.0
    %5551 = vmatpush1.xpose.msra.mxu0 0.0
    %5552 = vmatprep.subr.mxu0 0.0
    %5553 = vmatpush1.xpose.msra.mxu0 0.0
    %5554 = vmatprep.subr.mxu0 0.0
    %5555 = vmatpush1.xpose.msra.mxu0 0.0
    %5556 = vmatprep.subr.mxu0 0.0
    %5557 = vmatpush1.xpose.msra.mxu0 %v5526
    %5558 = vmatprep.subr.mxu0 0.0
    %5559 = vmatpush1.xpose.msra.mxu0 %v5524
    %5560 = vmatprep.subr.mxu0 0.0
    %5561 = vmatpush2.xpose.msra.mxu0 0.0
    %5562 = vmatprep.subr.mxu0 0.0
    %5563 = vmatpush2.xpose.msra.mxu0 0.0
    %5564 = vmatprep.subr.mxu0 0.0
    %5565 = vmatpush2.xpose.msra.mxu0 0.0
    %5566 = vmatprep.subr.mxu0 0.0
    %5567 = vmatpush2.xpose.msra.mxu0 0.0
    %5568 = vmatprep.subr.mxu0 0.0
    %5569 = vmatpush2.xpose.msra.mxu0 0.0
    %5570 = vmatprep.subr.mxu0 0.0
    %5571 = vmatpush2.xpose.msra.mxu0 0.0
    %5572 = vmatprep.subr.mxu0 0.0
    %5573 = vmatpush2.xpose.msra.mxu0 0.0
    %5574 = vmatprep.subr.mxu0 0.0
    %5575 = vmatpush2.xpose.msra.mxu0 0.0
    %5576 = vmatprep.subr.mxu0 0.0
    %5577 = vmatpush2.xpose.msra.mxu0 0.0
    %5578 = vmatprep.subr.mxu0 0.0
    %5579 = vmatpush2.xpose.msra.mxu0 0.0
    %5580 = vmatprep.subr.mxu0 0.0
    %5581 = vmatpush2.xpose.msra.mxu0 0.0
    %5582 = vmatprep.subr.mxu0 0.0
    %5583 = vmatpush2.xpose.msra.mxu0 0.0
    %5584 = vmatprep.subr.mxu0 0.0
    %5585 = vmatpush2.xpose.msra.mxu0 0.0
    %5586 = vmatprep.subr.mxu0 0.0
    %5587 = vmatpush2.xpose.msra.mxu0 0.0
    %5588 = vmatprep.subr.mxu0 0.0
    %5589 = vmatpush2.xpose.msra.mxu0 0.0
    %5590 = vmatprep.subr.mxu0 0.0
    %5591 = vmatpush2.xpose.msra.mxu0 0.0
    %5592 = vmatprep.mubr.f32.mxu0 0.0
    %5593 = vmatmul.mubr.f32.gmra.mxu0 %v5520
    %v5594 = vpop.f32.mrf.mxu0
    %v5595 = vadd.f32 0.0, %v5594
    %v5596 = vpop.f32.mrf.mxu0
    %5597 = vmatprep.mubr.f32.mxu0 0.0
    %5598 = vmatmul.mubr.f32.gmra.mxu0 %v5522
    %v5599 = vpop.f32.mrf.mxu0
    %v5600 = vadd.f32 0.0, %v5599
    %v5601 = vpop.f32.mrf.mxu0
    %5602 = vdwg.mxu0
    %v5603 = vmul.f32 %v5512, %v5595
    %v5604 = vmul.f32 %v5513, %v5600
    %v5605 = vsel %vm381, %v5603, -inf
    %5606 = vmax.xlane.f32.xlu0 %v5605
    %v5607 = vpop.xlane.xlu0 %5606
    %v5608 = vsel %vm381, %v5604, -inf
    %5609 = vmax.xlane.f32.xlu0 %v5608
    %v5610 = vpop.xlane.xlu0 %5609
    %v5611 = vsub.f32 %v5603, %v5607
    %v5612 = vsub.f32 %v5604, %v5610
    %v5613 = vmul.f32 %v5611, 1.442695
    %v5614 = vpow.pop %v5613
    %v5615 = vmul.f32 %v5612, 1.442695
    %v5616 = vpow.pop %v5615
    %v5617 = vsel %vm381, %v5614, 0.0
    %5618 = vadd.xlane.f32.xlu0 %v5617
    %v5619 = vpop.xlane.xlu0 %5618
    %v5620 = vsel %vm381, %v5616, 0.0
    %5621 = vadd.xlane.f32.xlu0 %v5620
    %v5622 = vpop.xlane.xlu0 %5621
    %v5623 = vrcp.pop %v5619
    %v5624 = vrcp.pop %v5622
    %v5625 = vmul.f32 %v5619, %v5623
    %v5626 = vmul.f32 %v5622, %v5624
    %v5627 = vsub.f32 2.0, %v5625
    %v5628 = vsub.f32 2.0, %v5626
    %v5629 = vmul.f32 %v5623, %v5627
    %v5630 = vmul.f32 %v5624, %v5628
    %v5631 = vmul.f32 %v5614, %v5629
    %v5632 = vmul.f32 %v5616, %v5630
    %5633 = vrot.lane.b32.xlu0 %v265, 120
    %v5634 = vpop.permute.xlu0 %5633
    %5635 = vrot.lane.b32.xlu0 %v271, 120
    %v5636 = vpop.permute.xlu0 %5635
    %5637 = vrot.lane.b32.xlu0 %v265, 88
    %v5638 = vpop.permute.xlu0 %5637
    %5639 = vrot.lane.b32.xlu0 %v271, 88
    %v5640 = vpop.permute.xlu0 %5639
    %v5641 = vsel %vm295, %v5634, 0
    %v5643 = vsel %vm295, %v5636, 0
    %v5645 = vsel %vm295, %v5638, 0
    %v5647 = vsel %vm295, %v5640, 0
    %5649 = vmatprep.subr.mxu0 0.0
    %5650 = vmatpush1.xpose.msra.mxu0 0.0
    %5651 = vmatprep.subr.mxu0 0.0
    %5652 = vmatpush1.xpose.msra.mxu0 0.0
    %5653 = vmatprep.subr.mxu0 0.0
    %5654 = vmatpush1.xpose.msra.mxu0 0.0
    %5655 = vmatprep.subr.mxu0 0.0
    %5656 = vmatpush1.xpose.msra.mxu0 0.0
    %5657 = vmatprep.subr.mxu0 0.0
    %5658 = vmatpush1.xpose.msra.mxu0 0.0
    %5659 = vmatprep.subr.mxu0 0.0
    %5660 = vmatpush1.xpose.msra.mxu0 0.0
    %5661 = vmatprep.subr.mxu0 0.0
    %5662 = vmatpush1.xpose.msra.mxu0 0.0
    %5663 = vmatprep.subr.mxu0 0.0
    %5664 = vmatpush1.xpose.msra.mxu0 0.0
    %5665 = vmatprep.subr.mxu0 0.0
    %5666 = vmatpush1.xpose.msra.mxu0 0.0
    %5667 = vmatprep.subr.mxu0 0.0
    %5668 = vmatpush1.xpose.msra.mxu0 0.0
    %5669 = vmatprep.subr.mxu0 0.0
    %5670 = vmatpush1.xpose.msra.mxu0 0.0
    %5671 = vmatprep.subr.mxu0 0.0
    %5672 = vmatpush1.xpose.msra.mxu0 0.0
    %5673 = vmatprep.subr.mxu0 0.0
    %5674 = vmatpush1.xpose.msra.mxu0 0.0
    %5675 = vmatprep.subr.mxu0 0.0
    %5676 = vmatpush1.xpose.msra.mxu0 0.0
    %5677 = vmatprep.subr.mxu0 0.0
    %5678 = vmatpush1.xpose.msra.mxu0 %v5647
    %5679 = vmatprep.subr.mxu0 0.0
    %5680 = vmatpush1.xpose.msra.mxu0 %v5645
    %5681 = vmatprep.subr.mxu0 0.0
    %5682 = vmatpush2.xpose.msra.mxu0 0.0
    %5683 = vmatprep.subr.mxu0 0.0
    %5684 = vmatpush2.xpose.msra.mxu0 0.0
    %5685 = vmatprep.subr.mxu0 0.0
    %5686 = vmatpush2.xpose.msra.mxu0 0.0
    %5687 = vmatprep.subr.mxu0 0.0
    %5688 = vmatpush2.xpose.msra.mxu0 0.0
    %5689 = vmatprep.subr.mxu0 0.0
    %5690 = vmatpush2.xpose.msra.mxu0 0.0
    %5691 = vmatprep.subr.mxu0 0.0
    %5692 = vmatpush2.xpose.msra.mxu0 0.0
    %5693 = vmatprep.subr.mxu0 0.0
    %5694 = vmatpush2.xpose.msra.mxu0 0.0
    %5695 = vmatprep.subr.mxu0 0.0
    %5696 = vmatpush2.xpose.msra.mxu0 0.0
    %5697 = vmatprep.subr.mxu0 0.0
    %5698 = vmatpush2.xpose.msra.mxu0 0.0
    %5699 = vmatprep.subr.mxu0 0.0
    %5700 = vmatpush2.xpose.msra.mxu0 0.0
    %5701 = vmatprep.subr.mxu0 0.0
    %5702 = vmatpush2.xpose.msra.mxu0 0.0
    %5703 = vmatprep.subr.mxu0 0.0
    %5704 = vmatpush2.xpose.msra.mxu0 0.0
    %5705 = vmatprep.subr.mxu0 0.0
    %5706 = vmatpush2.xpose.msra.mxu0 0.0
    %5707 = vmatprep.subr.mxu0 0.0
    %5708 = vmatpush2.xpose.msra.mxu0 0.0
    %5709 = vmatprep.subr.mxu0 0.0
    %5710 = vmatpush2.xpose.msra.mxu0 0.0
    %5711 = vmatprep.subr.mxu0 0.0
    %5712 = vmatpush2.xpose.msra.mxu0 0.0
    %5713 = vmatprep.mubr.f32.mxu0 0.0
    %5714 = vmatmul.mubr.f32.gmra.mxu0 %v5641
    %v5715 = vpop.f32.mrf.mxu0
    %v5716 = vadd.f32 0.0, %v5715
    %v5717 = vpop.f32.mrf.mxu0
    %5718 = vmatprep.mubr.f32.mxu0 0.0
    %5719 = vmatmul.mubr.f32.gmra.mxu0 %v5643
    %v5720 = vpop.f32.mrf.mxu0
    %v5721 = vadd.f32 0.0, %v5720
    %v5722 = vpop.f32.mrf.mxu0
    %5723 = vdwg.mxu0
    %v5724 = vmul.f32 %v5512, %v5716
    %v5725 = vmul.f32 %v5513, %v5721
    %v5726 = vsel %vm381, %v5724, -inf
    %5727 = vmax.xlane.f32.xlu0 %v5726
    %v5728 = vpop.xlane.xlu0 %5727
    %v5729 = vsel %vm381, %v5725, -inf
    %5730 = vmax.xlane.f32.xlu0 %v5729
    %v5731 = vpop.xlane.xlu0 %5730
    %v5732 = vsub.f32 %v5724, %v5728
    %v5733 = vsub.f32 %v5725, %v5731
    %v5734 = vmul.f32 %v5732, 1.442695
    %v5735 = vpow.pop %v5734
    %v5736 = vmul.f32 %v5733, 1.442695
    %v5737 = vpow.pop %v5736
    %v5738 = vsel %vm381, %v5735, 0.0
    %5739 = vadd.xlane.f32.xlu0 %v5738
    %v5740 = vpop.xlane.xlu0 %5739
    %v5741 = vsel %vm381, %v5737, 0.0
    %5742 = vadd.xlane.f32.xlu0 %v5741
    %v5743 = vpop.xlane.xlu0 %5742
    %v5744 = vrcp.pop %v5740
    %v5745 = vrcp.pop %v5743
    %v5746 = vmul.f32 %v5740, %v5744
    %v5747 = vmul.f32 %v5743, %v5745
    %v5748 = vsub.f32 2.0, %v5746
    %v5749 = vsub.f32 2.0, %v5747
    %v5750 = vmul.f32 %v5744, %v5748
    %v5751 = vmul.f32 %v5745, %v5749
    %v5752 = vmul.f32 %v5735, %v5750
    %v5753 = vmul.f32 %v5737, %v5751
    %5754 = vrot.lane.b32.xlu0 %v265, 32
    %v5755 = vpop.permute.xlu0 %5754
    %5756 = vrot.lane.b32.xlu0 %v271, 32
    %v5757 = vpop.permute.xlu0 %5756
    %v5761 = vsel %vm381, %v5752, 0
    %v5764 = vsel %vm381, %v5753, 0
    %5766 = vmatprep.subr.mxu0 0.0
    %5767 = vmatpush1.msra.mxu0 0.0
    %5768 = vmatprep.subr.mxu0 0.0
    %5769 = vmatpush1.msra.mxu0 0.0
    %5770 = vmatprep.subr.mxu0 0.0
    %5771 = vmatpush1.msra.mxu0 0.0
    %5772 = vmatprep.subr.mxu0 0.0
    %5773 = vmatpush1.msra.mxu0 0.0
    %5774 = vmatprep.subr.mxu0 0.0
    %5775 = vmatpush1.msra.mxu0 0.0
    %5776 = vmatprep.subr.mxu0 0.0
    %5777 = vmatpush1.msra.mxu0 0.0
    %5778 = vmatprep.subr.mxu0 0.0
    %5779 = vmatpush1.msra.mxu0 0.0
    %5780 = vmatprep.subr.mxu0 0.0
    %5781 = vmatpush1.msra.mxu0 0.0
    %5782 = vmatprep.subr.mxu0 0.0
    %5783 = vmatpush1.msra.mxu0 0.0
    %5784 = vmatprep.subr.mxu0 0.0
    %5785 = vmatpush1.msra.mxu0 0.0
    %5786 = vmatprep.subr.mxu0 0.0
    %5787 = vmatpush1.msra.mxu0 0.0
    %5788 = vmatprep.subr.mxu0 0.0
    %5789 = vmatpush1.msra.mxu0 0.0
    %5790 = vmatprep.subr.mxu0 0.0
    %5791 = vmatpush1.msra.mxu0 0.0
    %5792 = vmatprep.subr.mxu0 0.0
    %5793 = vmatpush1.msra.mxu0 0.0
    %5794 = vmatprep.subr.mxu0 0.0
    %5795 = vmatpush1.msra.mxu0 %v5757
    %5796 = vmatprep.subr.mxu0 0.0
    %5797 = vmatpush1.msra.mxu0 %v5755
    %5798 = vmatprep.subr.mxu0 0.0
    %5799 = vmatpush2.msra.mxu0 0.0
    %5800 = vmatprep.subr.mxu0 0.0
    %5801 = vmatpush2.msra.mxu0 0.0
    %5802 = vmatprep.subr.mxu0 0.0
    %5803 = vmatpush2.msra.mxu0 0.0
    %5804 = vmatprep.subr.mxu0 0.0
    %5805 = vmatpush2.msra.mxu0 0.0
    %5806 = vmatprep.subr.mxu0 0.0
    %5807 = vmatpush2.msra.mxu0 0.0
    %5808 = vmatprep.subr.mxu0 0.0
    %5809 = vmatpush2.msra.mxu0 0.0
    %5810 = vmatprep.subr.mxu0 0.0
    %5811 = vmatpush2.msra.mxu0 0.0
    %5812 = vmatprep.subr.mxu0 0.0
    %5813 = vmatpush2.msra.mxu0 0.0
    %5814 = vmatprep.subr.mxu0 0.0
    %5815 = vmatpush2.msra.mxu0 0.0
    %5816 = vmatprep.subr.mxu0 0.0
    %5817 = vmatpush2.msra.mxu0 0.0
    %5818 = vmatprep.subr.mxu0 0.0
    %5819 = vmatpush2.msra.mxu0 0.0
    %5820 = vmatprep.subr.mxu0 0.0
    %5821 = vmatpush2.msra.mxu0 0.0
    %5822 = vmatprep.subr.mxu0 0.0
    %5823 = vmatpush2.msra.mxu0 0.0
    %5824 = vmatprep.subr.mxu0 0.0
    %5825 = vmatpush2.msra.mxu0 0.0
    %5826 = vmatprep.subr.mxu0 0.0
    %5827 = vmatpush2.msra.mxu0 0.0
    %5828 = vmatprep.subr.mxu0 0.0
    %5829 = vmatpush2.msra.mxu0 0.0
    %5830 = vmatprep.mubr.f32.mxu0 0.0
    %5831 = vmatmul.mubr.f32.gmra.mxu0 %v5761
    %v5832 = vpop.f32.mrf.mxu0
    %v5833 = vadd.f32 0.0, %v5832
    %v5834 = vpop.f32.mrf.mxu0
    %5835 = vmatprep.mubr.f32.mxu0 0.0
    %5836 = vmatmul.mubr.f32.gmra.mxu0 %v5764
    %v5837 = vpop.f32.mrf.mxu0
    %v5838 = vadd.f32 0.0, %v5837
    %v5839 = vpop.f32.mrf.mxu0
    %5840 = vdwg.mxu0
    %5841 = vrot.lane.b32.xlu0 %v265, 64
    %v5842 = vpop.permute.xlu0 %5841
    %5843 = vrot.lane.b32.xlu0 %v271, 64
    %v5844 = vpop.permute.xlu0 %5843
    %v5848 = vsel %vm381, %v5631, 0
    %v5851 = vsel %vm381, %v5632, 0
    %5853 = vmatprep.subr.mxu0 0.0
    %5854 = vmatpush1.msra.mxu0 0.0
    %5855 = vmatprep.subr.mxu0 0.0
    %5856 = vmatpush1.msra.mxu0 0.0
    %5857 = vmatprep.subr.mxu0 0.0
    %5858 = vmatpush1.msra.mxu0 0.0
    %5859 = vmatprep.subr.mxu0 0.0
    %5860 = vmatpush1.msra.mxu0 0.0
    %5861 = vmatprep.subr.mxu0 0.0
    %5862 = vmatpush1.msra.mxu0 0.0
    %5863 = vmatprep.subr.mxu0 0.0
    %5864 = vmatpush1.msra.mxu0 0.0
    %5865 = vmatprep.subr.mxu0 0.0
    %5866 = vmatpush1.msra.mxu0 0.0
    %5867 = vmatprep.subr.mxu0 0.0
    %5868 = vmatpush1.msra.mxu0 0.0
    %5869 = vmatprep.subr.mxu0 0.0
    %5870 = vmatpush1.msra.mxu0 0.0
    %5871 = vmatprep.subr.mxu0 0.0
    %5872 = vmatpush1.msra.mxu0 0.0
    %5873 = vmatprep.subr.mxu0 0.0
    %5874 = vmatpush1.msra.mxu0 0.0
    %5875 = vmatprep.subr.mxu0 0.0
    %5876 = vmatpush1.msra.mxu0 0.0
    %5877 = vmatprep.subr.mxu0 0.0
    %5878 = vmatpush1.msra.mxu0 0.0
    %5879 = vmatprep.subr.mxu0 0.0
    %5880 = vmatpush1.msra.mxu0 0.0
    %5881 = vmatprep.subr.mxu0 0.0
    %5882 = vmatpush1.msra.mxu0 %v5844
    %5883 = vmatprep.subr.mxu0 0.0
    %5884 = vmatpush1.msra.mxu0 %v5842
    %5885 = vmatprep.subr.mxu0 0.0
    %5886 = vmatpush2.msra.mxu0 0.0
    %5887 = vmatprep.subr.mxu0 0.0
    %5888 = vmatpush2.msra.mxu0 0.0
    %5889 = vmatprep.subr.mxu0 0.0
    %5890 = vmatpush2.msra.mxu0 0.0
    %5891 = vmatprep.subr.mxu0 0.0
    %5892 = vmatpush2.msra.mxu0 0.0
    %5893 = vmatprep.subr.mxu0 0.0
    %5894 = vmatpush2.msra.mxu0 0.0
    %5895 = vmatprep.subr.mxu0 0.0
    %5896 = vmatpush2.msra.mxu0 0.0
    %5897 = vmatprep.subr.mxu0 0.0
    %5898 = vmatpush2.msra.mxu0 0.0
    %5899 = vmatprep.subr.mxu0 0.0
    %5900 = vmatpush2.msra.mxu0 0.0
    %5901 = vmatprep.subr.mxu0 0.0
    %5902 = vmatpush2.msra.mxu0 0.0
    %5903 = vmatprep.subr.mxu0 0.0
    %5904 = vmatpush2.msra.mxu0 0.0
    %5905 = vmatprep.subr.mxu0 0.0
    %5906 = vmatpush2.msra.mxu0 0.0
    %5907 = vmatprep.subr.mxu0 0.0
    %5908 = vmatpush2.msra.mxu0 0.0
    %5909 = vmatprep.subr.mxu0 0.0
    %5910 = vmatpush2.msra.mxu0 0.0
    %5911 = vmatprep.subr.mxu0 0.0
    %5912 = vmatpush2.msra.mxu0 0.0
    %5913 = vmatprep.subr.mxu0 0.0
    %5914 = vmatpush2.msra.mxu0 0.0
    %5915 = vmatprep.subr.mxu0 0.0
    %5916 = vmatpush2.msra.mxu0 0.0
    %5917 = vmatprep.mubr.f32.mxu0 0.0
    %5918 = vmatmul.mubr.f32.gmra.mxu0 %v5848
    %v5919 = vpop.f32.mrf.mxu0
    %v5920 = vadd.f32 %v5833, %v5919
    %v5921 = vpop.f32.mrf.mxu0
    %5922 = vmatprep.mubr.f32.mxu0 0.0
    %5923 = vmatmul.mubr.f32.gmra.mxu0 %v5851
    %v5924 = vpop.f32.mrf.mxu0
    %v5925 = vadd.f32 %v5838, %v5924
    %v5926 = vpop.f32.mrf.mxu0
    %5927 = vdwg.mxu0
    %5928 = vrot.lane.b32.xlu0 %v265, 112
    %v5929 = vpop.permute.xlu0 %5928
    %5930 = vrot.lane.b32.xlu0 %v271, 112
    %v5931 = vpop.permute.xlu0 %5930
    %5932 = vrot.lane.b32.xlu0 %v265, 80
    %v5933 = vpop.permute.xlu0 %5932
    %5934 = vrot.lane.b32.xlu0 %v271, 80
    %v5935 = vpop.permute.xlu0 %5934
    %v5936 = vsel %vm295, %v5929, 0
    %v5938 = vsel %vm295, %v5931, 0
    %v5940 = vsel %vm295, %v5933, 0
    %v5942 = vsel %vm295, %v5935, 0
    %5944 = vmatprep.subr.mxu0 0.0
    %5945 = vmatpush1.xpose.msra.mxu0 0.0
    %5946 = vmatprep.subr.mxu0 0.0
    %5947 = vmatpush1.xpose.msra.mxu0 0.0
    %5948 = vmatprep.subr.mxu0 0.0
    %5949 = vmatpush1.xpose.msra.mxu0 0.0
    %5950 = vmatprep.subr.mxu0 0.0
    %5951 = vmatpush1.xpose.msra.mxu0 0.0
    %5952 = vmatprep.subr.mxu0 0.0
    %5953 = vmatpush1.xpose.msra.mxu0 0.0
    %5954 = vmatprep.subr.mxu0 0.0
    %5955 = vmatpush1.xpose.msra.mxu0 0.0
    %5956 = vmatprep.subr.mxu0 0.0
    %5957 = vmatpush1.xpose.msra.mxu0 0.0
    %5958 = vmatprep.subr.mxu0 0.0
    %5959 = vmatpush1.xpose.msra.mxu0 0.0
    %5960 = vmatprep.subr.mxu0 0.0
    %5961 = vmatpush1.xpose.msra.mxu0 0.0
    %5962 = vmatprep.subr.mxu0 0.0
    %5963 = vmatpush1.xpose.msra.mxu0 0.0
    %5964 = vmatprep.subr.mxu0 0.0
    %5965 = vmatpush1.xpose.msra.mxu0 0.0
    %5966 = vmatprep.subr.mxu0 0.0
    %5967 = vmatpush1.xpose.msra.mxu0 0.0
    %5968 = vmatprep.subr.mxu0 0.0
    %5969 = vmatpush1.xpose.msra.mxu0 0.0
    %5970 = vmatprep.subr.mxu0 0.0
    %5971 = vmatpush1.xpose.msra.mxu0 0.0
    %5972 = vmatprep.subr.mxu0 0.0
    %5973 = vmatpush1.xpose.msra.mxu0 %v5942
    %5974 = vmatprep.subr.mxu0 0.0
    %5975 = vmatpush1.xpose.msra.mxu0 %v5940
    %5976 = vmatprep.subr.mxu0 0.0
    %5977 = vmatpush2.xpose.msra.mxu0 0.0
    %5978 = vmatprep.subr.mxu0 0.0
    %5979 = vmatpush2.xpose.msra.mxu0 0.0
    %5980 = vmatprep.subr.mxu0 0.0
    %5981 = vmatpush2.xpose.msra.mxu0 0.0
    %5982 = vmatprep.subr.mxu0 0.0
    %5983 = vmatpush2.xpose.msra.mxu0 0.0
    %5984 = vmatprep.subr.mxu0 0.0
    %5985 = vmatpush2.xpose.msra.mxu0 0.0
    %5986 = vmatprep.subr.mxu0 0.0
    %5987 = vmatpush2.xpose.msra.mxu0 0.0
    %5988 = vmatprep.subr.mxu0 0.0
    %5989 = vmatpush2.xpose.msra.mxu0 0.0
    %5990 = vmatprep.subr.mxu0 0.0
    %5991 = vmatpush2.xpose.msra.mxu0 0.0
    %5992 = vmatprep.subr.mxu0 0.0
    %5993 = vmatpush2.xpose.msra.mxu0 0.0
    %5994 = vmatprep.subr.mxu0 0.0
    %5995 = vmatpush2.xpose.msra.mxu0 0.0
    %5996 = vmatprep.subr.mxu0 0.0
    %5997 = vmatpush2.xpose.msra.mxu0 0.0
    %5998 = vmatprep.subr.mxu0 0.0
    %5999 = vmatpush2.xpose.msra.mxu0 0.0
    %6000 = vmatprep.subr.mxu0 0.0
    %6001 = vmatpush2.xpose.msra.mxu0 0.0
    %6002 = vmatprep.subr.mxu0 0.0
    %6003 = vmatpush2.xpose.msra.mxu0 0.0
    %6004 = vmatprep.subr.mxu0 0.0
    %6005 = vmatpush2.xpose.msra.mxu0 0.0
    %6006 = vmatprep.subr.mxu0 0.0
    %6007 = vmatpush2.xpose.msra.mxu0 0.0
    %6008 = vmatprep.mubr.f32.mxu0 0.0
    %6009 = vmatmul.mubr.f32.gmra.mxu0 %v5936
    %v6010 = vpop.f32.mrf.mxu0
    %v6011 = vadd.f32 0.0, %v6010
    %v6012 = vpop.f32.mrf.mxu0
    %6013 = vmatprep.mubr.f32.mxu0 0.0
    %6014 = vmatmul.mubr.f32.gmra.mxu0 %v5938
    %v6015 = vpop.f32.mrf.mxu0
    %v6016 = vadd.f32 0.0, %v6015
    %v6017 = vpop.f32.mrf.mxu0
    %6018 = vdwg.mxu0
    %v6019 = vmul.f32 %v5512, %v6011
    %v6020 = vmul.f32 %v5513, %v6016
    %v6021 = vsel %vm381, %v6019, -inf
    %6022 = vmax.xlane.f32.xlu0 %v6021
    %v6023 = vpop.xlane.xlu0 %6022
    %v6024 = vsel %vm381, %v6020, -inf
    %6025 = vmax.xlane.f32.xlu0 %v6024
    %v6026 = vpop.xlane.xlu0 %6025
    %v6027 = vsub.f32 %v6019, %v6023
    %v6028 = vsub.f32 %v6020, %v6026
    %v6029 = vmul.f32 %v6027, 1.442695
    %v6030 = vpow.pop %v6029
    %v6031 = vmul.f32 %v6028, 1.442695
    %v6032 = vpow.pop %v6031
    %v6033 = vsel %vm381, %v6030, 0.0
    %6034 = vadd.xlane.f32.xlu0 %v6033
    %v6035 = vpop.xlane.xlu0 %6034
    %v6036 = vsel %vm381, %v6032, 0.0
    %6037 = vadd.xlane.f32.xlu0 %v6036
    %v6038 = vpop.xlane.xlu0 %6037
    %v6039 = vrcp.pop %v6035
    %v6040 = vrcp.pop %v6038
    %v6041 = vmul.f32 %v6035, %v6039
    %v6042 = vmul.f32 %v6038, %v6040
    %v6043 = vsub.f32 2.0, %v6041
    %v6044 = vsub.f32 2.0, %v6042
    %v6045 = vmul.f32 %v6039, %v6043
    %v6046 = vmul.f32 %v6040, %v6044
    %v6047 = vmul.f32 %v6030, %v6045
    %v6048 = vmul.f32 %v6032, %v6046
    %v6050 = vsel %vm381, %v6047, 0
    %v6053 = vsel %vm381, %v6048, 0
    %6055 = vmatprep.subr.mxu0 0.0
    %6056 = vmatpush1.msra.mxu0 0.0
    %6057 = vmatprep.subr.mxu0 0.0
    %6058 = vmatpush1.msra.mxu0 0.0
    %6059 = vmatprep.subr.mxu0 0.0
    %6060 = vmatpush1.msra.mxu0 0.0
    %6061 = vmatprep.subr.mxu0 0.0
    %6062 = vmatpush1.msra.mxu0 0.0
    %6063 = vmatprep.subr.mxu0 0.0
    %6064 = vmatpush1.msra.mxu0 0.0
    %6065 = vmatprep.subr.mxu0 0.0
    %6066 = vmatpush1.msra.mxu0 0.0
    %6067 = vmatprep.subr.mxu0 0.0
    %6068 = vmatpush1.msra.mxu0 0.0
    %6069 = vmatprep.subr.mxu0 0.0
    %6070 = vmatpush1.msra.mxu0 0.0
    %6071 = vmatprep.subr.mxu0 0.0
    %6072 = vmatpush1.msra.mxu0 0.0
    %6073 = vmatprep.subr.mxu0 0.0
    %6074 = vmatpush1.msra.mxu0 0.0
    %6075 = vmatprep.subr.mxu0 0.0
    %6076 = vmatpush1.msra.mxu0 0.0
    %6077 = vmatprep.subr.mxu0 0.0
    %6078 = vmatpush1.msra.mxu0 0.0
    %6079 = vmatprep.subr.mxu0 0.0
    %6080 = vmatpush1.msra.mxu0 0.0
    %6081 = vmatprep.subr.mxu0 0.0
    %6082 = vmatpush1.msra.mxu0 0.0
    %6083 = vmatprep.subr.mxu0 0.0
    %6084 = vmatpush1.msra.mxu0 %v273
    %6085 = vmatprep.subr.mxu0 0.0
    %6086 = vmatpush1.msra.mxu0 %v267
    %6087 = vmatprep.subr.mxu0 0.0
    %6088 = vmatpush2.msra.mxu0 0.0
    %6089 = vmatprep.subr.mxu0 0.0
    %6090 = vmatpush2.msra.mxu0 0.0
    %6091 = vmatprep.subr.mxu0 0.0
    %6092 = vmatpush2.msra.mxu0 0.0
    %6093 = vmatprep.subr.mxu0 0.0
    %6094 = vmatpush2.msra.mxu0 0.0
    %6095 = vmatprep.subr.mxu0 0.0
    %6096 = vmatpush2.msra.mxu0 0.0
    %6097 = vmatprep.subr.mxu0 0.0
    %6098 = vmatpush2.msra.mxu0 0.0
    %6099 = vmatprep.subr.mxu0 0.0
    %6100 = vmatpush2.msra.mxu0 0.0
    %6101 = vmatprep.subr.mxu0 0.0
    %6102 = vmatpush2.msra.mxu0 0.0
    %6103 = vmatprep.subr.mxu0 0.0
    %6104 = vmatpush2.msra.mxu0 0.0
    %6105 = vmatprep.subr.mxu0 0.0
    %6106 = vmatpush2.msra.mxu0 0.0
    %6107 = vmatprep.subr.mxu0 0.0
    %6108 = vmatpush2.msra.mxu0 0.0
    %6109 = vmatprep.subr.mxu0 0.0
    %6110 = vmatpush2.msra.mxu0 0.0
    %6111 = vmatprep.subr.mxu0 0.0
    %6112 = vmatpush2.msra.mxu0 0.0
    %6113 = vmatprep.subr.mxu0 0.0
    %6114 = vmatpush2.msra.mxu0 0.0
    %6115 = vmatprep.subr.mxu0 0.0
    %6116 = vmatpush2.msra.mxu0 0.0
    %6117 = vmatprep.subr.mxu0 0.0
    %6118 = vmatpush2.msra.mxu0 0.0
    %6119 = vmatprep.mubr.f32.mxu0 0.0
    %6120 = vmatmul.mubr.f32.gmra.mxu0 %v6050
    %v6121 = vpop.f32.mrf.mxu0
    %v6122 = vadd.f32 0.0, %v6121
    %v6123 = vpop.f32.mrf.mxu0
    %6124 = vmatprep.mubr.f32.mxu0 0.0
    %6125 = vmatmul.mubr.f32.gmra.mxu0 %v6053
    %v6126 = vpop.f32.mrf.mxu0
    %v6127 = vadd.f32 0.0, %v6126
    %v6128 = vpop.f32.mrf.mxu0
    %6129 = vdwg.mxu0
    %v6130 = vadd.f32 %v5920, %v6122
    %v6131 = vadd.f32 %v5925, %v6127
    %6132 = vrot.lane.b32.xlu0 %v265, 104
    %v6133 = vpop.permute.xlu0 %6132
    %6134 = vrot.lane.b32.xlu0 %v271, 104
    %v6135 = vpop.permute.xlu0 %6134
    %6136 = vrot.lane.b32.xlu0 %v265, 72
    %v6137 = vpop.permute.xlu0 %6136
    %6138 = vrot.lane.b32.xlu0 %v271, 72
    %v6139 = vpop.permute.xlu0 %6138
    %v6140 = vsel %vm295, %v6133, 0
    %v6142 = vsel %vm295, %v6135, 0
    %v6144 = vsel %vm295, %v6137, 0
    %v6146 = vsel %vm295, %v6139, 0
    %6148 = vmatprep.subr.mxu0 0.0
    %6149 = vmatpush1.xpose.msra.mxu0 0.0
    %6150 = vmatprep.subr.mxu0 0.0
    %6151 = vmatpush1.xpose.msra.mxu0 0.0
    %6152 = vmatprep.subr.mxu0 0.0
    %6153 = vmatpush1.xpose.msra.mxu0 0.0
    %6154 = vmatprep.subr.mxu0 0.0
    %6155 = vmatpush1.xpose.msra.mxu0 0.0
    %6156 = vmatprep.subr.mxu0 0.0
    %6157 = vmatpush1.xpose.msra.mxu0 0.0
    %6158 = vmatprep.subr.mxu0 0.0
    %6159 = vmatpush1.xpose.msra.mxu0 0.0
    %6160 = vmatprep.subr.mxu0 0.0
    %6161 = vmatpush1.xpose.msra.mxu0 0.0
    %6162 = vmatprep.subr.mxu0 0.0
    %6163 = vmatpush1.xpose.msra.mxu0 0.0
    %6164 = vmatprep.subr.mxu0 0.0
    %6165 = vmatpush1.xpose.msra.mxu0 0.0
    %6166 = vmatprep.subr.mxu0 0.0
    %6167 = vmatpush1.xpose.msra.mxu0 0.0
    %6168 = vmatprep.subr.mxu0 0.0
    %6169 = vmatpush1.xpose.msra.mxu0 0.0
    %6170 = vmatprep.subr.mxu0 0.0
    %6171 = vmatpush1.xpose.msra.mxu0 0.0
    %6172 = vmatprep.subr.mxu0 0.0
    %6173 = vmatpush1.xpose.msra.mxu0 0.0
    %6174 = vmatprep.subr.mxu0 0.0
    %6175 = vmatpush1.xpose.msra.mxu0 0.0
    %6176 = vmatprep.subr.mxu0 0.0
    %6177 = vmatpush1.xpose.msra.mxu0 %v6146
    %6178 = vmatprep.subr.mxu0 0.0
    %6179 = vmatpush1.xpose.msra.mxu0 %v6144
    %6180 = vmatprep.subr.mxu0 0.0
    %6181 = vmatpush2.xpose.msra.mxu0 0.0
    %6182 = vmatprep.subr.mxu0 0.0
    %6183 = vmatpush2.xpose.msra.mxu0 0.0
    %6184 = vmatprep.subr.mxu0 0.0
    %6185 = vmatpush2.xpose.msra.mxu0 0.0
    %6186 = vmatprep.subr.mxu0 0.0
    %6187 = vmatpush2.xpose.msra.mxu0 0.0
    %6188 = vmatprep.subr.mxu0 0.0
    %6189 = vmatpush2.xpose.msra.mxu0 0.0
    %6190 = vmatprep.subr.mxu0 0.0
    %6191 = vmatpush2.xpose.msra.mxu0 0.0
    %6192 = vmatprep.subr.mxu0 0.0
    %6193 = vmatpush2.xpose.msra.mxu0 0.0
    %6194 = vmatprep.subr.mxu0 0.0
    %6195 = vmatpush2.xpose.msra.mxu0 0.0
    %6196 = vmatprep.subr.mxu0 0.0
    %6197 = vmatpush2.xpose.msra.mxu0 0.0
    %6198 = vmatprep.subr.mxu0 0.0
    %6199 = vmatpush2.xpose.msra.mxu0 0.0
    %6200 = vmatprep.subr.mxu0 0.0
    %6201 = vmatpush2.xpose.msra.mxu0 0.0
    %6202 = vmatprep.subr.mxu0 0.0
    %6203 = vmatpush2.xpose.msra.mxu0 0.0
    %6204 = vmatprep.subr.mxu0 0.0
    %6205 = vmatpush2.xpose.msra.mxu0 0.0
    %6206 = vmatprep.subr.mxu0 0.0
    %6207 = vmatpush2.xpose.msra.mxu0 0.0
    %6208 = vmatprep.subr.mxu0 0.0
    %6209 = vmatpush2.xpose.msra.mxu0 0.0
    %6210 = vmatprep.subr.mxu0 0.0
    %6211 = vmatpush2.xpose.msra.mxu0 0.0
    %6212 = vmatprep.mubr.f32.mxu0 0.0
    %6213 = vmatmul.mubr.f32.gmra.mxu0 %v6140
    %v6214 = vpop.f32.mrf.mxu0
    %v6215 = vadd.f32 0.0, %v6214
    %v6216 = vpop.f32.mrf.mxu0
    %6217 = vmatprep.mubr.f32.mxu0 0.0
    %6218 = vmatmul.mubr.f32.gmra.mxu0 %v6142
    %v6219 = vpop.f32.mrf.mxu0
    %v6220 = vadd.f32 0.0, %v6219
    %v6221 = vpop.f32.mrf.mxu0
    %6222 = vdwg.mxu0
    %v6223 = vmul.f32 %v5512, %v6215
    %v6224 = vmul.f32 %v5513, %v6220
    %v6225 = vsel %vm381, %v6223, -inf
    %6226 = vmax.xlane.f32.xlu0 %v6225
    %v6227 = vpop.xlane.xlu0 %6226
    %v6228 = vsel %vm381, %v6224, -inf
    %6229 = vmax.xlane.f32.xlu0 %v6228
    %v6230 = vpop.xlane.xlu0 %6229
    %v6231 = vsub.f32 %v6223, %v6227
    %v6232 = vsub.f32 %v6224, %v6230
    %v6233 = vmul.f32 %v6231, 1.442695
    %v6234 = vpow.pop %v6233
    %v6235 = vmul.f32 %v6232, 1.442695
    %v6236 = vpow.pop %v6235
    %v6237 = vsel %vm381, %v6234, 0.0
    %6238 = vadd.xlane.f32.xlu0 %v6237
    %v6239 = vpop.xlane.xlu0 %6238
    %v6240 = vsel %vm381, %v6236, 0.0
    %6241 = vadd.xlane.f32.xlu0 %v6240
    %v6242 = vpop.xlane.xlu0 %6241
    %v6243 = vrcp.pop %v6239
    %v6244 = vrcp.pop %v6242
    %v6245 = vmul.f32 %v6239, %v6243
    %v6246 = vmul.f32 %v6242, %v6244
    %v6247 = vsub.f32 2.0, %v6245
    %v6248 = vsub.f32 2.0, %v6246
    %v6249 = vmul.f32 %v6243, %v6247
    %v6250 = vmul.f32 %v6244, %v6248
    %v6251 = vmul.f32 %v6234, %v6249
    %v6252 = vmul.f32 %v6236, %v6250
    %6255 = vrot.lane.b32.xlu0 %v267, 96
    %v6256 = vpop.permute.xlu0 %6255
    %6257 = vrot.lane.b32.xlu0 %v273, 96
    %v6258 = vpop.permute.xlu0 %6257
    %v6262 = vsel %vm381, %v6251, 0
    %v6265 = vsel %vm381, %v6252, 0
    %6267 = vmatprep.subr.mxu0 0.0
    %6268 = vmatpush1.msra.mxu0 0.0
    %6269 = vmatprep.subr.mxu0 0.0
    %6270 = vmatpush1.msra.mxu0 0.0
    %6271 = vmatprep.subr.mxu0 0.0
    %6272 = vmatpush1.msra.mxu0 0.0
    %6273 = vmatprep.subr.mxu0 0.0
    %6274 = vmatpush1.msra.mxu0 0.0
    %6275 = vmatprep.subr.mxu0 0.0
    %6276 = vmatpush1.msra.mxu0 0.0
    %6277 = vmatprep.subr.mxu0 0.0
    %6278 = vmatpush1.msra.mxu0 0.0
    %6279 = vmatprep.subr.mxu0 0.0
    %6280 = vmatpush1.msra.mxu0 0.0
    %6281 = vmatprep.subr.mxu0 0.0
    %6282 = vmatpush1.msra.mxu0 0.0
    %6283 = vmatprep.subr.mxu0 0.0
    %6284 = vmatpush1.msra.mxu0 0.0
    %6285 = vmatprep.subr.mxu0 0.0
    %6286 = vmatpush1.msra.mxu0 0.0
    %6287 = vmatprep.subr.mxu0 0.0
    %6288 = vmatpush1.msra.mxu0 0.0
    %6289 = vmatprep.subr.mxu0 0.0
    %6290 = vmatpush1.msra.mxu0 0.0
    %6291 = vmatprep.subr.mxu0 0.0
    %6292 = vmatpush1.msra.mxu0 0.0
    %6293 = vmatprep.subr.mxu0 0.0
    %6294 = vmatpush1.msra.mxu0 0.0
    %6295 = vmatprep.subr.mxu0 0.0
    %6296 = vmatpush1.msra.mxu0 %v6258
    %6297 = vmatprep.subr.mxu0 0.0
    %6298 = vmatpush1.msra.mxu0 %v6256
    %6299 = vmatprep.subr.mxu0 0.0
    %6300 = vmatpush2.msra.mxu0 0.0
    %6301 = vmatprep.subr.mxu0 0.0
    %6302 = vmatpush2.msra.mxu0 0.0
    %6303 = vmatprep.subr.mxu0 0.0
    %6304 = vmatpush2.msra.mxu0 0.0
    %6305 = vmatprep.subr.mxu0 0.0
    %6306 = vmatpush2.msra.mxu0 0.0
    %6307 = vmatprep.subr.mxu0 0.0
    %6308 = vmatpush2.msra.mxu0 0.0
    %6309 = vmatprep.subr.mxu0 0.0
    %6310 = vmatpush2.msra.mxu0 0.0
    %6311 = vmatprep.subr.mxu0 0.0
    %6312 = vmatpush2.msra.mxu0 0.0
    %6313 = vmatprep.subr.mxu0 0.0
    %6314 = vmatpush2.msra.mxu0 0.0
    %6315 = vmatprep.subr.mxu0 0.0
    %6316 = vmatpush2.msra.mxu0 0.0
    %6317 = vmatprep.subr.mxu0 0.0
    %6318 = vmatpush2.msra.mxu0 0.0
    %6319 = vmatprep.subr.mxu0 0.0
    %6320 = vmatpush2.msra.mxu0 0.0
    %6321 = vmatprep.subr.mxu0 0.0
    %6322 = vmatpush2.msra.mxu0 0.0
    %6323 = vmatprep.subr.mxu0 0.0
    %6324 = vmatpush2.msra.mxu0 0.0
    %6325 = vmatprep.subr.mxu0 0.0
    %6326 = vmatpush2.msra.mxu0 0.0
    %6327 = vmatprep.subr.mxu0 0.0
    %6328 = vmatpush2.msra.mxu0 0.0
    %6329 = vmatprep.subr.mxu0 0.0
    %6330 = vmatpush2.msra.mxu0 0.0
    %6331 = vmatprep.mubr.f32.mxu0 0.0
    %6332 = vmatmul.mubr.f32.gmra.mxu0 %v6262
    %v6333 = vpop.f32.mrf.mxu0
    %v6334 = vadd.f32 0.0, %v6333
    %v6335 = vpop.f32.mrf.mxu0
    %6336 = vmatprep.mubr.f32.mxu0 0.0
    %6337 = vmatmul.mubr.f32.gmra.mxu0 %v6265
    %v6338 = vpop.f32.mrf.mxu0
    %v6339 = vadd.f32 0.0, %v6338
    %v6340 = vpop.f32.mrf.mxu0
    %6341 = vdwg.mxu0
    %v6342 = vadd.f32 %v6130, %v6334
    %v6343 = vadd.f32 %v6131, %v6339
    %v6344 = vadd.f32 %v6342, %v64
    %v6345 = vadd.f32 %v6343, %v65
    %v6346 = vsel %vm77, %v6344, 0.0
    %v6347 = vsel %vm77, %v6345, 0.0
    %v6348 = vadd.f32 %v6346, %v6347
    %v6349 = vrot.slane %v6348, 4
    %v6350 = vadd.f32 %v6348, %v6349
    %v6351 = vrot.slane %v6350, 2
    %v6352 = vadd.f32 %v6350, %v6351
    %v6353 = vrot.slane %v6352, 1
    %v6354 = vadd.f32 %v6352, %v6353
    %v6355 = vmul.f32 %v6354, %v1132
    %v6356 = vmul.f32 %v6344, %v6344
    %v6357 = vmul.f32 %v6345, %v6345
    %v6358 = vsel %vm77, %v6356, 0.0
    %v6359 = vsel %vm77, %v6357, 0.0
    %v6360 = vadd.f32 %v6358, %v6359
    %v6361 = vrot.slane %v6360, 4
    %v6362 = vadd.f32 %v6360, %v6361
    %v6363 = vrot.slane %v6362, 2
    %v6364 = vadd.f32 %v6362, %v6363
    %v6365 = vrot.slane %v6364, 1
    %v6366 = vadd.f32 %v6364, %v6365
    %v6367 = vmul.f32 %v6366, %v1132
    %v6368 = vmul.f32 %v6355, %v6355
    %v6369 = vsub.f32 %v6367, %v6368
    %v6370 = vsub.f32 %v6344, %v6355
    %v6371 = vsub.f32 %v6345, %v6355
    %v6372 = vadd.f32 %v6369, 1e-05
    %v6373 = vrsqrt.pop %v6372
    %v6374 = vmul.f32 %v6370, %v6373
    %v6375 = vmul.f32 %v6371, %v6373
    %v6376 = vmul.f32 %v6374, %v1157
    %v6377 = vmul.f32 %v6375, %v1157
    %v6378 = vadd.f32 %v6376, %v1163
    %v6379 = vadd.f32 %v6377, %v1163
    %s6380 = scalar_lea.vmem [#allocation2], 112
    %v6381 = vld [vmem:[%s6380] sm:$0xff]
    %v6382 = vld [vmem:[%s6380 + $0x8] sm:$0xff]
    %6385 = vrot.lane.b32.xlu0 %v277, 96
    %v6386 = vpop.permute.xlu0 %6385
    %6387 = vrot.lane.b32.xlu0 %v283, 96
    %v6388 = vpop.permute.xlu0 %6387
    %v6389 = vsel %vm295, %v277, 0
    %v6391 = vsel %vm295, %v283, 0
    %v6393 = vsel %vm295, %v6386, 0
    %v6395 = vsel %vm295, %v6388, 0
    %6397 = vmatprep.subr.mxu0 0.0
    %6398 = vmatpush1.xpose.msra.mxu0 0.0
    %6399 = vmatprep.subr.mxu0 0.0
    %6400 = vmatpush1.xpose.msra.mxu0 0.0
    %6401 = vmatprep.subr.mxu0 0.0
    %6402 = vmatpush1.xpose.msra.mxu0 0.0
    %6403 = vmatprep.subr.mxu0 0.0
    %6404 = vmatpush1.xpose.msra.mxu0 0.0
    %6405 = vmatprep.subr.mxu0 0.0
    %6406 = vmatpush1.xpose.msra.mxu0 0.0
    %6407 = vmatprep.subr.mxu0 0.0
    %6408 = vmatpush1.xpose.msra.mxu0 0.0
    %6409 = vmatprep.subr.mxu0 0.0
    %6410 = vmatpush1.xpose.msra.mxu0 0.0
    %6411 = vmatprep.subr.mxu0 0.0
    %6412 = vmatpush1.xpose.msra.mxu0 0.0
    %6413 = vmatprep.subr.mxu0 0.0
    %6414 = vmatpush1.xpose.msra.mxu0 0.0
    %6415 = vmatprep.subr.mxu0 0.0
    %6416 = vmatpush1.xpose.msra.mxu0 0.0
    %6417 = vmatprep.subr.mxu0 0.0
    %6418 = vmatpush1.xpose.msra.mxu0 0.0
    %6419 = vmatprep.subr.mxu0 0.0
    %6420 = vmatpush1.xpose.msra.mxu0 0.0
    %6421 = vmatprep.subr.mxu0 0.0
    %6422 = vmatpush1.xpose.msra.mxu0 0.0
    %6423 = vmatprep.subr.mxu0 0.0
    %6424 = vmatpush1.xpose.msra.mxu0 0.0
    %6425 = vmatprep.subr.mxu0 0.0
    %6426 = vmatpush1.xpose.msra.mxu0 %v6395
    %6427 = vmatprep.subr.mxu0 0.0
    %6428 = vmatpush1.xpose.msra.mxu0 %v6393
    %6429 = vmatprep.subr.mxu0 0.0
    %6430 = vmatpush2.xpose.msra.mxu0 0.0
    %6431 = vmatprep.subr.mxu0 0.0
    %6432 = vmatpush2.xpose.msra.mxu0 0.0
    %6433 = vmatprep.subr.mxu0 0.0
    %6434 = vmatpush2.xpose.msra.mxu0 0.0
    %6435 = vmatprep.subr.mxu0 0.0
    %6436 = vmatpush2.xpose.msra.mxu0 0.0
    %6437 = vmatprep.subr.mxu0 0.0
    %6438 = vmatpush2.xpose.msra.mxu0 0.0
    %6439 = vmatprep.subr.mxu0 0.0
    %6440 = vmatpush2.xpose.msra.mxu0 0.0
    %6441 = vmatprep.subr.mxu0 0.0
    %6442 = vmatpush2.xpose.msra.mxu0 0.0
    %6443 = vmatprep.subr.mxu0 0.0
    %6444 = vmatpush2.xpose.msra.mxu0 0.0
    %6445 = vmatprep.subr.mxu0 0.0
    %6446 = vmatpush2.xpose.msra.mxu0 0.0
    %6447 = vmatprep.subr.mxu0 0.0
    %6448 = vmatpush2.xpose.msra.mxu0 0.0
    %6449 = vmatprep.subr.mxu0 0.0
    %6450 = vmatpush2.xpose.msra.mxu0 0.0
    %6451 = vmatprep.subr.mxu0 0.0
    %6452 = vmatpush2.xpose.msra.mxu0 0.0
    %6453 = vmatprep.subr.mxu0 0.0
    %6454 = vmatpush2.xpose.msra.mxu0 0.0
    %6455 = vmatprep.subr.mxu0 0.0
    %6456 = vmatpush2.xpose.msra.mxu0 0.0
    %6457 = vmatprep.subr.mxu0 0.0
    %6458 = vmatpush2.xpose.msra.mxu0 0.0
    %6459 = vmatprep.subr.mxu0 0.0
    %6460 = vmatpush2.xpose.msra.mxu0 0.0
    %6461 = vmatprep.mubr.f32.mxu0 0.0
    %6462 = vmatmul.mubr.f32.gmra.mxu0 %v6389
    %v6463 = vpop.f32.mrf.mxu0
    %v6464 = vadd.f32 0.0, %v6463
    %v6465 = vpop.f32.mrf.mxu0
    %6466 = vmatprep.mubr.f32.mxu0 0.0
    %6467 = vmatmul.mubr.f32.gmra.mxu0 %v6391
    %v6468 = vpop.f32.mrf.mxu0
    %v6469 = vadd.f32 0.0, %v6468
    %v6470 = vpop.f32.mrf.mxu0
    %6471 = vdwg.mxu0
    %v6472 = vmul.f32 %v6381, %v6464
    %v6473 = vmul.f32 %v6382, %v6469
    %v6474 = vsel %vm381, %v6472, -inf
    %6475 = vmax.xlane.f32.xlu0 %v6474
    %v6476 = vpop.xlane.xlu0 %6475
    %v6477 = vsel %vm381, %v6473, -inf
    %6478 = vmax.xlane.f32.xlu0 %v6477
    %v6479 = vpop.xlane.xlu0 %6478
    %v6480 = vsub.f32 %v6472, %v6476
    %v6481 = vsub.f32 %v6473, %v6479
    %v6482 = vmul.f32 %v6480, 1.442695
    %v6483 = vpow.pop %v6482
    %v6484 = vmul.f32 %v6481, 1.442695
    %v6485 = vpow.pop %v6484
    %v6486 = vsel %vm381, %v6483, 0.0
    %6487 = vadd.xlane.f32.xlu0 %v6486
    %v6488 = vpop.xlane.xlu0 %6487
    %v6489 = vsel %vm381, %v6485, 0.0
    %6490 = vadd.xlane.f32.xlu0 %v6489
    %v6491 = vpop.xlane.xlu0 %6490
    %v6492 = vrcp.pop %v6488
    %v6493 = vrcp.pop %v6491
    %v6494 = vmul.f32 %v6488, %v6492
    %v6495 = vmul.f32 %v6491, %v6493
    %v6496 = vsub.f32 2.0, %v6494
    %v6497 = vsub.f32 2.0, %v6495
    %v6498 = vmul.f32 %v6492, %v6496
    %v6499 = vmul.f32 %v6493, %v6497
    %v6500 = vmul.f32 %v6483, %v6498
    %v6501 = vmul.f32 %v6485, %v6499
    %6502 = vrot.lane.b32.xlu0 %v277, 120
    %v6503 = vpop.permute.xlu0 %6502
    %6504 = vrot.lane.b32.xlu0 %v283, 120
    %v6505 = vpop.permute.xlu0 %6504
    %6506 = vrot.lane.b32.xlu0 %v277, 88
    %v6507 = vpop.permute.xlu0 %6506
    %6508 = vrot.lane.b32.xlu0 %v283, 88
    %v6509 = vpop.permute.xlu0 %6508
    %v6510 = vsel %vm295, %v6503, 0
    %v6512 = vsel %vm295, %v6505, 0
    %v6514 = vsel %vm295, %v6507, 0
    %v6516 = vsel %vm295, %v6509, 0
    %6518 = vmatprep.subr.mxu0 0.0
    %6519 = vmatpush1.xpose.msra.mxu0 0.0
    %6520 = vmatprep.subr.mxu0 0.0
    %6521 = vmatpush1.xpose.msra.mxu0 0.0
    %6522 = vmatprep.subr.mxu0 0.0
    %6523 = vmatpush1.xpose.msra.mxu0 0.0
    %6524 = vmatprep.subr.mxu0 0.0
    %6525 = vmatpush1.xpose.msra.mxu0 0.0
    %6526 = vmatprep.subr.mxu0 0.0
    %6527 = vmatpush1.xpose.msra.mxu0 0.0
    %6528 = vmatprep.subr.mxu0 0.0
    %6529 = vmatpush1.xpose.msra.mxu0 0.0
    %6530 = vmatprep.subr.mxu0 0.0
    %6531 = vmatpush1.xpose.msra.mxu0 0.0
    %6532 = vmatprep.subr.mxu0 0.0
    %6533 = vmatpush1.xpose.msra.mxu0 0.0
    %6534 = vmatprep.subr.mxu0 0.0
    %6535 = vmatpush1.xpose.msra.mxu0 0.0
    %6536 = vmatprep.subr.mxu0 0.0
    %6537 = vmatpush1.xpose.msra.mxu0 0.0
    %6538 = vmatprep.subr.mxu0 0.0
    %6539 = vmatpush1.xpose.msra.mxu0 0.0
    %6540 = vmatprep.subr.mxu0 0.0
    %6541 = vmatpush1.xpose.msra.mxu0 0.0
    %6542 = vmatprep.subr.mxu0 0.0
    %6543 = vmatpush1.xpose.msra.mxu0 0.0
    %6544 = vmatprep.subr.mxu0 0.0
    %6545 = vmatpush1.xpose.msra.mxu0 0.0
    %6546 = vmatprep.subr.mxu0 0.0
    %6547 = vmatpush1.xpose.msra.mxu0 %v6516
    %6548 = vmatprep.subr.mxu0 0.0
    %6549 = vmatpush1.xpose.msra.mxu0 %v6514
    %6550 = vmatprep.subr.mxu0 0.0
    %6551 = vmatpush2.xpose.msra.mxu0 0.0
    %6552 = vmatprep.subr.mxu0 0.0
    %6553 = vmatpush2.xpose.msra.mxu0 0.0
    %6554 = vmatprep.subr.mxu0 0.0
    %6555 = vmatpush2.xpose.msra.mxu0 0.0
    %6556 = vmatprep.subr.mxu0 0.0
    %6557 = vmatpush2.xpose.msra.mxu0 0.0
    %6558 = vmatprep.subr.mxu0 0.0
    %6559 = vmatpush2.xpose.msra.mxu0 0.0
    %6560 = vmatprep.subr.mxu0 0.0
    %6561 = vmatpush2.xpose.msra.mxu0 0.0
    %6562 = vmatprep.subr.mxu0 0.0
    %6563 = vmatpush2.xpose.msra.mxu0 0.0
    %6564 = vmatprep.subr.mxu0 0.0
    %6565 = vmatpush2.xpose.msra.mxu0 0.0
    %6566 = vmatprep.subr.mxu0 0.0
    %6567 = vmatpush2.xpose.msra.mxu0 0.0
    %6568 = vmatprep.subr.mxu0 0.0
    %6569 = vmatpush2.xpose.msra.mxu0 0.0
    %6570 = vmatprep.subr.mxu0 0.0
    %6571 = vmatpush2.xpose.msra.mxu0 0.0
    %6572 = vmatprep.subr.mxu0 0.0
    %6573 = vmatpush2.xpose.msra.mxu0 0.0
    %6574 = vmatprep.subr.mxu0 0.0
    %6575 = vmatpush2.xpose.msra.mxu0 0.0
    %6576 = vmatprep.subr.mxu0 0.0
    %6577 = vmatpush2.xpose.msra.mxu0 0.0
    %6578 = vmatprep.subr.mxu0 0.0
    %6579 = vmatpush2.xpose.msra.mxu0 0.0
    %6580 = vmatprep.subr.mxu0 0.0
    %6581 = vmatpush2.xpose.msra.mxu0 0.0
    %6582 = vmatprep.mubr.f32.mxu0 0.0
    %6583 = vmatmul.mubr.f32.gmra.mxu0 %v6510
    %v6584 = vpop.f32.mrf.mxu0
    %v6585 = vadd.f32 0.0, %v6584
    %v6586 = vpop.f32.mrf.mxu0
    %6587 = vmatprep.mubr.f32.mxu0 0.0
    %6588 = vmatmul.mubr.f32.gmra.mxu0 %v6512
    %v6589 = vpop.f32.mrf.mxu0
    %v6590 = vadd.f32 0.0, %v6589
    %v6591 = vpop.f32.mrf.mxu0
    %6592 = vdwg.mxu0
    %v6593 = vmul.f32 %v6381, %v6585
    %v6594 = vmul.f32 %v6382, %v6590
    %v6595 = vsel %vm381, %v6593, -inf
    %6596 = vmax.xlane.f32.xlu0 %v6595
    %v6597 = vpop.xlane.xlu0 %6596
    %v6598 = vsel %vm381, %v6594, -inf
    %6599 = vmax.xlane.f32.xlu0 %v6598
    %v6600 = vpop.xlane.xlu0 %6599
    %v6601 = vsub.f32 %v6593, %v6597
    %v6602 = vsub.f32 %v6594, %v6600
    %v6603 = vmul.f32 %v6601, 1.442695
    %v6604 = vpow.pop %v6603
    %v6605 = vmul.f32 %v6602, 1.442695
    %v6606 = vpow.pop %v6605
    %v6607 = vsel %vm381, %v6604, 0.0
    %6608 = vadd.xlane.f32.xlu0 %v6607
    %v6609 = vpop.xlane.xlu0 %6608
    %v6610 = vsel %vm381, %v6606, 0.0
    %6611 = vadd.xlane.f32.xlu0 %v6610
    %v6612 = vpop.xlane.xlu0 %6611
    %v6613 = vrcp.pop %v6609
    %v6614 = vrcp.pop %v6612
    %v6615 = vmul.f32 %v6609, %v6613
    %v6616 = vmul.f32 %v6612, %v6614
    %v6617 = vsub.f32 2.0, %v6615
    %v6618 = vsub.f32 2.0, %v6616
    %v6619 = vmul.f32 %v6613, %v6617
    %v6620 = vmul.f32 %v6614, %v6618
    %v6621 = vmul.f32 %v6604, %v6619
    %v6622 = vmul.f32 %v6606, %v6620
    %6623 = vrot.lane.b32.xlu0 %v277, 32
    %v6624 = vpop.permute.xlu0 %6623
    %6625 = vrot.lane.b32.xlu0 %v283, 32
    %v6626 = vpop.permute.xlu0 %6625
    %v6630 = vsel %vm381, %v6621, 0
    %v6633 = vsel %vm381, %v6622, 0
    %6635 = vmatprep.subr.mxu0 0.0
    %6636 = vmatpush1.msra.mxu0 0.0
    %6637 = vmatprep.subr.mxu0 0.0
    %6638 = vmatpush1.msra.mxu0 0.0
    %6639 = vmatprep.subr.mxu0 0.0
    %6640 = vmatpush1.msra.mxu0 0.0
    %6641 = vmatprep.subr.mxu0 0.0
    %6642 = vmatpush1.msra.mxu0 0.0
    %6643 = vmatprep.subr.mxu0 0.0
    %6644 = vmatpush1.msra.mxu0 0.0
    %6645 = vmatprep.subr.mxu0 0.0
    %6646 = vmatpush1.msra.mxu0 0.0
    %6647 = vmatprep.subr.mxu0 0.0
    %6648 = vmatpush1.msra.mxu0 0.0
    %6649 = vmatprep.subr.mxu0 0.0
    %6650 = vmatpush1.msra.mxu0 0.0
    %6651 = vmatprep.subr.mxu0 0.0
    %6652 = vmatpush1.msra.mxu0 0.0
    %6653 = vmatprep.subr.mxu0 0.0
    %6654 = vmatpush1.msra.mxu0 0.0
    %6655 = vmatprep.subr.mxu0 0.0
    %6656 = vmatpush1.msra.mxu0 0.0
    %6657 = vmatprep.subr.mxu0 0.0
    %6658 = vmatpush1.msra.mxu0 0.0
    %6659 = vmatprep.subr.mxu0 0.0
    %6660 = vmatpush1.msra.mxu0 0.0
    %6661 = vmatprep.subr.mxu0 0.0
    %6662 = vmatpush1.msra.mxu0 0.0
    %6663 = vmatprep.subr.mxu0 0.0
    %6664 = vmatpush1.msra.mxu0 %v6626
    %6665 = vmatprep.subr.mxu0 0.0
    %6666 = vmatpush1.msra.mxu0 %v6624
    %6667 = vmatprep.subr.mxu0 0.0
    %6668 = vmatpush2.msra.mxu0 0.0
    %6669 = vmatprep.subr.mxu0 0.0
    %6670 = vmatpush2.msra.mxu0 0.0
    %6671 = vmatprep.subr.mxu0 0.0
    %6672 = vmatpush2.msra.mxu0 0.0
    %6673 = vmatprep.subr.mxu0 0.0
    %6674 = vmatpush2.msra.mxu0 0.0
    %6675 = vmatprep.subr.mxu0 0.0
    %6676 = vmatpush2.msra.mxu0 0.0
    %6677 = vmatprep.subr.mxu0 0.0
    %6678 = vmatpush2.msra.mxu0 0.0
    %6679 = vmatprep.subr.mxu0 0.0
    %6680 = vmatpush2.msra.mxu0 0.0
    %6681 = vmatprep.subr.mxu0 0.0
    %6682 = vmatpush2.msra.mxu0 0.0
    %6683 = vmatprep.subr.mxu0 0.0
    %6684 = vmatpush2.msra.mxu0 0.0
    %6685 = vmatprep.subr.mxu0 0.0
    %6686 = vmatpush2.msra.mxu0 0.0
    %6687 = vmatprep.subr.mxu0 0.0
    %6688 = vmatpush2.msra.mxu0 0.0
    %6689 = vmatprep.subr.mxu0 0.0
    %6690 = vmatpush2.msra.mxu0 0.0
    %6691 = vmatprep.subr.mxu0 0.0
    %6692 = vmatpush2.msra.mxu0 0.0
    %6693 = vmatprep.subr.mxu0 0.0
    %6694 = vmatpush2.msra.mxu0 0.0
    %6695 = vmatprep.subr.mxu0 0.0
    %6696 = vmatpush2.msra.mxu0 0.0
    %6697 = vmatprep.subr.mxu0 0.0
    %6698 = vmatpush2.msra.mxu0 0.0
    %6699 = vmatprep.mubr.f32.mxu0 0.0
    %6700 = vmatmul.mubr.f32.gmra.mxu0 %v6630
    %v6701 = vpop.f32.mrf.mxu0
    %v6702 = vadd.f32 0.0, %v6701
    %v6703 = vpop.f32.mrf.mxu0
    %6704 = vmatprep.mubr.f32.mxu0 0.0
    %6705 = vmatmul.mubr.f32.gmra.mxu0 %v6633
    %v6706 = vpop.f32.mrf.mxu0
    %v6707 = vadd.f32 0.0, %v6706
    %v6708 = vpop.f32.mrf.mxu0
    %6709 = vdwg.mxu0
    %6710 = vrot.lane.b32.xlu0 %v277, 64
    %v6711 = vpop.permute.xlu0 %6710
    %6712 = vrot.lane.b32.xlu0 %v283, 64
    %v6713 = vpop.permute.xlu0 %6712
    %v6717 = vsel %vm381, %v6500, 0
    %v6720 = vsel %vm381, %v6501, 0
    %6722 = vmatprep.subr.mxu0 0.0
    %6723 = vmatpush1.msra.mxu0 0.0
    %6724 = vmatprep.subr.mxu0 0.0
    %6725 = vmatpush1.msra.mxu0 0.0
    %6726 = vmatprep.subr.mxu0 0.0
    %6727 = vmatpush1.msra.mxu0 0.0
    %6728 = vmatprep.subr.mxu0 0.0
    %6729 = vmatpush1.msra.mxu0 0.0
    %6730 = vmatprep.subr.mxu0 0.0
    %6731 = vmatpush1.msra.mxu0 0.0
    %6732 = vmatprep.subr.mxu0 0.0
    %6733 = vmatpush1.msra.mxu0 0.0
    %6734 = vmatprep.subr.mxu0 0.0
    %6735 = vmatpush1.msra.mxu0 0.0
    %6736 = vmatprep.subr.mxu0 0.0
    %6737 = vmatpush1.msra.mxu0 0.0
    %6738 = vmatprep.subr.mxu0 0.0
    %6739 = vmatpush1.msra.mxu0 0.0
    %6740 = vmatprep.subr.mxu0 0.0
    %6741 = vmatpush1.msra.mxu0 0.0
    %6742 = vmatprep.subr.mxu0 0.0
    %6743 = vmatpush1.msra.mxu0 0.0
    %6744 = vmatprep.subr.mxu0 0.0
    %6745 = vmatpush1.msra.mxu0 0.0
    %6746 = vmatprep.subr.mxu0 0.0
    %6747 = vmatpush1.msra.mxu0 0.0
    %6748 = vmatprep.subr.mxu0 0.0
    %6749 = vmatpush1.msra.mxu0 0.0
    %6750 = vmatprep.subr.mxu0 0.0
    %6751 = vmatpush1.msra.mxu0 %v6713
    %6752 = vmatprep.subr.mxu0 0.0
    %6753 = vmatpush1.msra.mxu0 %v6711
    %6754 = vmatprep.subr.mxu0 0.0
    %6755 = vmatpush2.msra.mxu0 0.0
    %6756 = vmatprep.subr.mxu0 0.0
    %6757 = vmatpush2.msra.mxu0 0.0
    %6758 = vmatprep.subr.mxu0 0.0
    %6759 = vmatpush2.msra.mxu0 0.0
    %6760 = vmatprep.subr.mxu0 0.0
    %6761 = vmatpush2.msra.mxu0 0.0
    %6762 = vmatprep.subr.mxu0 0.0
    %6763 = vmatpush2.msra.mxu0 0.0
    %6764 = vmatprep.subr.mxu0 0.0
    %6765 = vmatpush2.msra.mxu0 0.0
    %6766 = vmatprep.subr.mxu0 0.0
    %6767 = vmatpush2.msra.mxu0 0.0
    %6768 = vmatprep.subr.mxu0 0.0
    %6769 = vmatpush2.msra.mxu0 0.0
    %6770 = vmatprep.subr.mxu0 0.0
    %6771 = vmatpush2.msra.mxu0 0.0
    %6772 = vmatprep.subr.mxu0 0.0
    %6773 = vmatpush2.msra.mxu0 0.0
    %6774 = vmatprep.subr.mxu0 0.0
    %6775 = vmatpush2.msra.mxu0 0.0
    %6776 = vmatprep.subr.mxu0 0.0
    %6777 = vmatpush2.msra.mxu0 0.0
    %6778 = vmatprep.subr.mxu0 0.0
    %6779 = vmatpush2.msra.mxu0 0.0
    %6780 = vmatprep.subr.mxu0 0.0
    %6781 = vmatpush2.msra.mxu0 0.0
    %6782 = vmatprep.subr.mxu0 0.0
    %6783 = vmatpush2.msra.mxu0 0.0
    %6784 = vmatprep.subr.mxu0 0.0
    %6785 = vmatpush2.msra.mxu0 0.0
    %6786 = vmatprep.mubr.f32.mxu0 0.0
    %6787 = vmatmul.mubr.f32.gmra.mxu0 %v6717
    %v6788 = vpop.f32.mrf.mxu0
    %v6789 = vadd.f32 %v6702, %v6788
    %v6790 = vpop.f32.mrf.mxu0
    %6791 = vmatprep.mubr.f32.mxu0 0.0
    %6792 = vmatmul.mubr.f32.gmra.mxu0 %v6720
    %v6793 = vpop.f32.mrf.mxu0
    %v6794 = vadd.f32 %v6707, %v6793
    %v6795 = vpop.f32.mrf.mxu0
    %6796 = vdwg.mxu0
    %6797 = vrot.lane.b32.xlu0 %v277, 112
    %v6798 = vpop.permute.xlu0 %6797
    %6799 = vrot.lane.b32.xlu0 %v283, 112
    %v6800 = vpop.permute.xlu0 %6799
    %6801 = vrot.lane.b32.xlu0 %v277, 80
    %v6802 = vpop.permute.xlu0 %6801
    %6803 = vrot.lane.b32.xlu0 %v283, 80
    %v6804 = vpop.permute.xlu0 %6803
    %v6805 = vsel %vm295, %v6798, 0
    %v6807 = vsel %vm295, %v6800, 0
    %v6809 = vsel %vm295, %v6802, 0
    %v6811 = vsel %vm295, %v6804, 0
    %6813 = vmatprep.subr.mxu0 0.0
    %6814 = vmatpush1.xpose.msra.mxu0 0.0
    %6815 = vmatprep.subr.mxu0 0.0
    %6816 = vmatpush1.xpose.msra.mxu0 0.0
    %6817 = vmatprep.subr.mxu0 0.0
    %6818 = vmatpush1.xpose.msra.mxu0 0.0
    %6819 = vmatprep.subr.mxu0 0.0
    %6820 = vmatpush1.xpose.msra.mxu0 0.0
    %6821 = vmatprep.subr.mxu0 0.0
    %6822 = vmatpush1.xpose.msra.mxu0 0.0
    %6823 = vmatprep.subr.mxu0 0.0
    %6824 = vmatpush1.xpose.msra.mxu0 0.0
    %6825 = vmatprep.subr.mxu0 0.0
    %6826 = vmatpush1.xpose.msra.mxu0 0.0
    %6827 = vmatprep.subr.mxu0 0.0
    %6828 = vmatpush1.xpose.msra.mxu0 0.0
    %6829 = vmatprep.subr.mxu0 0.0
    %6830 = vmatpush1.xpose.msra.mxu0 0.0
    %6831 = vmatprep.subr.mxu0 0.0
    %6832 = vmatpush1.xpose.msra.mxu0 0.0
    %6833 = vmatprep.subr.mxu0 0.0
    %6834 = vmatpush1.xpose.msra.mxu0 0.0
    %6835 = vmatprep.subr.mxu0 0.0
    %6836 = vmatpush1.xpose.msra.mxu0 0.0
    %6837 = vmatprep.subr.mxu0 0.0
    %6838 = vmatpush1.xpose.msra.mxu0 0.0
    %6839 = vmatprep.subr.mxu0 0.0
    %6840 = vmatpush1.xpose.msra.mxu0 0.0
    %6841 = vmatprep.subr.mxu0 0.0
    %6842 = vmatpush1.xpose.msra.mxu0 %v6811
    %6843 = vmatprep.subr.mxu0 0.0
    %6844 = vmatpush1.xpose.msra.mxu0 %v6809
    %6845 = vmatprep.subr.mxu0 0.0
    %6846 = vmatpush2.xpose.msra.mxu0 0.0
    %6847 = vmatprep.subr.mxu0 0.0
    %6848 = vmatpush2.xpose.msra.mxu0 0.0
    %6849 = vmatprep.subr.mxu0 0.0
    %6850 = vmatpush2.xpose.msra.mxu0 0.0
    %6851 = vmatprep.subr.mxu0 0.0
    %6852 = vmatpush2.xpose.msra.mxu0 0.0
    %6853 = vmatprep.subr.mxu0 0.0
    %6854 = vmatpush2.xpose.msra.mxu0 0.0
    %6855 = vmatprep.subr.mxu0 0.0
    %6856 = vmatpush2.xpose.msra.mxu0 0.0
    %6857 = vmatprep.subr.mxu0 0.0
    %6858 = vmatpush2.xpose.msra.mxu0 0.0
    %6859 = vmatprep.subr.mxu0 0.0
    %6860 = vmatpush2.xpose.msra.mxu0 0.0
    %6861 = vmatprep.subr.mxu0 0.0
    %6862 = vmatpush2.xpose.msra.mxu0 0.0
    %6863 = vmatprep.subr.mxu0 0.0
    %6864 = vmatpush2.xpose.msra.mxu0 0.0
    %6865 = vmatprep.subr.mxu0 0.0
    %6866 = vmatpush2.xpose.msra.mxu0 0.0
    %6867 = vmatprep.subr.mxu0 0.0
    %6868 = vmatpush2.xpose.msra.mxu0 0.0
    %6869 = vmatprep.subr.mxu0 0.0
    %6870 = vmatpush2.xpose.msra.mxu0 0.0
    %6871 = vmatprep.subr.mxu0 0.0
    %6872 = vmatpush2.xpose.msra.mxu0 0.0
    %6873 = vmatprep.subr.mxu0 0.0
    %6874 = vmatpush2.xpose.msra.mxu0 0.0
    %6875 = vmatprep.subr.mxu0 0.0
    %6876 = vmatpush2.xpose.msra.mxu0 0.0
    %6877 = vmatprep.mubr.f32.mxu0 0.0
    %6878 = vmatmul.mubr.f32.gmra.mxu0 %v6805
    %v6879 = vpop.f32.mrf.mxu0
    %v6880 = vadd.f32 0.0, %v6879
    %v6881 = vpop.f32.mrf.mxu0
    %6882 = vmatprep.mubr.f32.mxu0 0.0
    %6883 = vmatmul.mubr.f32.gmra.mxu0 %v6807
    %v6884 = vpop.f32.mrf.mxu0
    %v6885 = vadd.f32 0.0, %v6884
    %v6886 = vpop.f32.mrf.mxu0
    %6887 = vdwg.mxu0
    %v6888 = vmul.f32 %v6381, %v6880
    %v6889 = vmul.f32 %v6382, %v6885
    %v6890 = vsel %vm381, %v6888, -inf
    %6891 = vmax.xlane.f32.xlu0 %v6890
    %v6892 = vpop.xlane.xlu0 %6891
    %v6893 = vsel %vm381, %v6889, -inf
    %6894 = vmax.xlane.f32.xlu0 %v6893
    %v6895 = vpop.xlane.xlu0 %6894
    %v6896 = vsub.f32 %v6888, %v6892
    %v6897 = vsub.f32 %v6889, %v6895
    %v6898 = vmul.f32 %v6896, 1.442695
    %v6899 = vpow.pop %v6898
    %v6900 = vmul.f32 %v6897, 1.442695
    %v6901 = vpow.pop %v6900
    %v6902 = vsel %vm381, %v6899, 0.0
    %6903 = vadd.xlane.f32.xlu0 %v6902
    %v6904 = vpop.xlane.xlu0 %6903
    %v6905 = vsel %vm381, %v6901, 0.0
    %6906 = vadd.xlane.f32.xlu0 %v6905
    %v6907 = vpop.xlane.xlu0 %6906
    %v6908 = vrcp.pop %v6904
    %v6909 = vrcp.pop %v6907
    %v6910 = vmul.f32 %v6904, %v6908
    %v6911 = vmul.f32 %v6907, %v6909
    %v6912 = vsub.f32 2.0, %v6910
    %v6913 = vsub.f32 2.0, %v6911
    %v6914 = vmul.f32 %v6908, %v6912
    %v6915 = vmul.f32 %v6909, %v6913
    %v6916 = vmul.f32 %v6899, %v6914
    %v6917 = vmul.f32 %v6901, %v6915
    %v6919 = vsel %vm381, %v6916, 0
    %v6922 = vsel %vm381, %v6917, 0
    %6924 = vmatprep.subr.mxu0 0.0
    %6925 = vmatpush1.msra.mxu0 0.0
    %6926 = vmatprep.subr.mxu0 0.0
    %6927 = vmatpush1.msra.mxu0 0.0
    %6928 = vmatprep.subr.mxu0 0.0
    %6929 = vmatpush1.msra.mxu0 0.0
    %6930 = vmatprep.subr.mxu0 0.0
    %6931 = vmatpush1.msra.mxu0 0.0
    %6932 = vmatprep.subr.mxu0 0.0
    %6933 = vmatpush1.msra.mxu0 0.0
    %6934 = vmatprep.subr.mxu0 0.0
    %6935 = vmatpush1.msra.mxu0 0.0
    %6936 = vmatprep.subr.mxu0 0.0
    %6937 = vmatpush1.msra.mxu0 0.0
    %6938 = vmatprep.subr.mxu0 0.0
    %6939 = vmatpush1.msra.mxu0 0.0
    %6940 = vmatprep.subr.mxu0 0.0
    %6941 = vmatpush1.msra.mxu0 0.0
    %6942 = vmatprep.subr.mxu0 0.0
    %6943 = vmatpush1.msra.mxu0 0.0
    %6944 = vmatprep.subr.mxu0 0.0
    %6945 = vmatpush1.msra.mxu0 0.0
    %6946 = vmatprep.subr.mxu0 0.0
    %6947 = vmatpush1.msra.mxu0 0.0
    %6948 = vmatprep.subr.mxu0 0.0
    %6949 = vmatpush1.msra.mxu0 0.0
    %6950 = vmatprep.subr.mxu0 0.0
    %6951 = vmatpush1.msra.mxu0 0.0
    %6952 = vmatprep.subr.mxu0 0.0
    %6953 = vmatpush1.msra.mxu0 %v285
    %6954 = vmatprep.subr.mxu0 0.0
    %6955 = vmatpush1.msra.mxu0 %v279
    %6956 = vmatprep.subr.mxu0 0.0
    %6957 = vmatpush2.msra.mxu0 0.0
    %6958 = vmatprep.subr.mxu0 0.0
    %6959 = vmatpush2.msra.mxu0 0.0
    %6960 = vmatprep.subr.mxu0 0.0
    %6961 = vmatpush2.msra.mxu0 0.0
    %6962 = vmatprep.subr.mxu0 0.0
    %6963 = vmatpush2.msra.mxu0 0.0
    %6964 = vmatprep.subr.mxu0 0.0
    %6965 = vmatpush2.msra.mxu0 0.0
    %6966 = vmatprep.subr.mxu0 0.0
    %6967 = vmatpush2.msra.mxu0 0.0
    %6968 = vmatprep.subr.mxu0 0.0
    %6969 = vmatpush2.msra.mxu0 0.0
    %6970 = vmatprep.subr.mxu0 0.0
    %6971 = vmatpush2.msra.mxu0 0.0
    %6972 = vmatprep.subr.mxu0 0.0
    %6973 = vmatpush2.msra.mxu0 0.0
    %6974 = vmatprep.subr.mxu0 0.0
    %6975 = vmatpush2.msra.mxu0 0.0
    %6976 = vmatprep.subr.mxu0 0.0
    %6977 = vmatpush2.msra.mxu0 0.0
    %6978 = vmatprep.subr.mxu0 0.0
    %6979 = vmatpush2.msra.mxu0 0.0
    %6980 = vmatprep.subr.mxu0 0.0
    %6981 = vmatpush2.msra.mxu0 0.0
    %6982 = vmatprep.subr.mxu0 0.0
    %6983 = vmatpush2.msra.mxu0 0.0
    %6984 = vmatprep.subr.mxu0 0.0
    %6985 = vmatpush2.msra.mxu0 0.0
    %6986 = vmatprep.subr.mxu0 0.0
    %6987 = vmatpush2.msra.mxu0 0.0
    %6988 = vmatprep.mubr.f32.mxu0 0.0
    %6989 = vmatmul.mubr.f32.gmra.mxu0 %v6919
    %v6990 = vpop.f32.mrf.mxu0
    %v6991 = vadd.f32 0.0, %v6990
    %v6992 = vpop.f32.mrf.mxu0
    %6993 = vmatprep.mubr.f32.mxu0 0.0
    %6994 = vmatmul.mubr.f32.gmra.mxu0 %v6922
    %v6995 = vpop.f32.mrf.mxu0
    %v6996 = vadd.f32 0.0, %v6995
    %v6997 = vpop.f32.mrf.mxu0
    %6998 = vdwg.mxu0
    %v6999 = vadd.f32 %v6789, %v6991
    %v7000 = vadd.f32 %v6794, %v6996
    %7001 = vrot.lane.b32.xlu0 %v277, 104
    %v7002 = vpop.permute.xlu0 %7001
    %7003 = vrot.lane.b32.xlu0 %v283, 104
    %v7004 = vpop.permute.xlu0 %7003
    %7005 = vrot.lane.b32.xlu0 %v277, 72
    %v7006 = vpop.permute.xlu0 %7005
    %7007 = vrot.lane.b32.xlu0 %v283, 72
    %v7008 = vpop.permute.xlu0 %7007
    %v7009 = vsel %vm295, %v7002, 0
    %v7011 = vsel %vm295, %v7004, 0
    %v7013 = vsel %vm295, %v7006, 0
    %v7015 = vsel %vm295, %v7008, 0
    %7017 = vmatprep.subr.mxu0 0.0
    %7018 = vmatpush1.xpose.msra.mxu0 0.0
    %7019 = vmatprep.subr.mxu0 0.0
    %7020 = vmatpush1.xpose.msra.mxu0 0.0
    %7021 = vmatprep.subr.mxu0 0.0
    %7022 = vmatpush1.xpose.msra.mxu0 0.0
    %7023 = vmatprep.subr.mxu0 0.0
    %7024 = vmatpush1.xpose.msra.mxu0 0.0
    %7025 = vmatprep.subr.mxu0 0.0
    %7026 = vmatpush1.xpose.msra.mxu0 0.0
    %7027 = vmatprep.subr.mxu0 0.0
    %7028 = vmatpush1.xpose.msra.mxu0 0.0
    %7029 = vmatprep.subr.mxu0 0.0
    %7030 = vmatpush1.xpose.msra.mxu0 0.0
    %7031 = vmatprep.subr.mxu0 0.0
    %7032 = vmatpush1.xpose.msra.mxu0 0.0
    %7033 = vmatprep.subr.mxu0 0.0
    %7034 = vmatpush1.xpose.msra.mxu0 0.0
    %7035 = vmatprep.subr.mxu0 0.0
    %7036 = vmatpush1.xpose.msra.mxu0 0.0
    %7037 = vmatprep.subr.mxu0 0.0
    %7038 = vmatpush1.xpose.msra.mxu0 0.0
    %7039 = vmatprep.subr.mxu0 0.0
    %7040 = vmatpush1.xpose.msra.mxu0 0.0
    %7041 = vmatprep.subr.mxu0 0.0
    %7042 = vmatpush1.xpose.msra.mxu0 0.0
    %7043 = vmatprep.subr.mxu0 0.0
    %7044 = vmatpush1.xpose.msra.mxu0 0.0
    %7045 = vmatprep.subr.mxu0 0.0
    %7046 = vmatpush1.xpose.msra.mxu0 %v7015
    %7047 = vmatprep.subr.mxu0 0.0
    %7048 = vmatpush1.xpose.msra.mxu0 %v7013
    %7049 = vmatprep.subr.mxu0 0.0
    %7050 = vmatpush2.xpose.msra.mxu0 0.0
    %7051 = vmatprep.subr.mxu0 0.0
    %7052 = vmatpush2.xpose.msra.mxu0 0.0
    %7053 = vmatprep.subr.mxu0 0.0
    %7054 = vmatpush2.xpose.msra.mxu0 0.0
    %7055 = vmatprep.subr.mxu0 0.0
    %7056 = vmatpush2.xpose.msra.mxu0 0.0
    %7057 = vmatprep.subr.mxu0 0.0
    %7058 = vmatpush2.xpose.msra.mxu0 0.0
    %7059 = vmatprep.subr.mxu0 0.0
    %7060 = vmatpush2.xpose.msra.mxu0 0.0
    %7061 = vmatprep.subr.mxu0 0.0
    %7062 = vmatpush2.xpose.msra.mxu0 0.0
    %7063 = vmatprep.subr.mxu0 0.0
    %7064 = vmatpush2.xpose.msra.mxu0 0.0
    %7065 = vmatprep.subr.mxu0 0.0
    %7066 = vmatpush2.xpose.msra.mxu0 0.0
    %7067 = vmatprep.subr.mxu0 0.0
    %7068 = vmatpush2.xpose.msra.mxu0 0.0
    %7069 = vmatprep.subr.mxu0 0.0
    %7070 = vmatpush2.xpose.msra.mxu0 0.0
    %7071 = vmatprep.subr.mxu0 0.0
    %7072 = vmatpush2.xpose.msra.mxu0 0.0
    %7073 = vmatprep.subr.mxu0 0.0
    %7074 = vmatpush2.xpose.msra.mxu0 0.0
    %7075 = vmatprep.subr.mxu0 0.0
    %7076 = vmatpush2.xpose.msra.mxu0 0.0
    %7077 = vmatprep.subr.mxu0 0.0
    %7078 = vmatpush2.xpose.msra.mxu0 0.0
    %7079 = vmatprep.subr.mxu0 0.0
    %7080 = vmatpush2.xpose.msra.mxu0 0.0
    %7081 = vmatprep.mubr.f32.mxu0 0.0
    %7082 = vmatmul.mubr.f32.gmra.mxu0 %v7009
    %v7083 = vpop.f32.mrf.mxu0
    %v7084 = vadd.f32 0.0, %v7083
    %v7085 = vpop.f32.mrf.mxu0
    %7086 = vmatprep.mubr.f32.mxu0 0.0
    %7087 = vmatmul.mubr.f32.gmra.mxu0 %v7011
    %v7088 = vpop.f32.mrf.mxu0
    %v7089 = vadd.f32 0.0, %v7088
    %v7090 = vpop.f32.mrf.mxu0
    %7091 = vdwg.mxu0
    %v7092 = vmul.f32 %v6381, %v7084
    %v7093 = vmul.f32 %v6382, %v7089
    %v7094 = vsel %vm381, %v7092, -inf
    %7095 = vmax.xlane.f32.xlu0 %v7094
    %v7096 = vpop.xlane.xlu0 %7095
    %v7097 = vsel %vm381, %v7093, -inf
    %7098 = vmax.xlane.f32.xlu0 %v7097
    %v7099 = vpop.xlane.xlu0 %7098
    %v7100 = vsub.f32 %v7092, %v7096
    %v7101 = vsub.f32 %v7093, %v7099
    %v7102 = vmul.f32 %v7100, 1.442695
    %v7103 = vpow.pop %v7102
    %v7104 = vmul.f32 %v7101, 1.442695
    %v7105 = vpow.pop %v7104
    %v7106 = vsel %vm381, %v7103, 0.0
    %7107 = vadd.xlane.f32.xlu0 %v7106
    %v7108 = vpop.xlane.xlu0 %7107
    %v7109 = vsel %vm381, %v7105, 0.0
    %7110 = vadd.xlane.f32.xlu0 %v7109
    %v7111 = vpop.xlane.xlu0 %7110
    %v7112 = vrcp.pop %v7108
    %v7113 = vrcp.pop %v7111
    %v7114 = vmul.f32 %v7108, %v7112
    %v7115 = vmul.f32 %v7111, %v7113
    %v7116 = vsub.f32 2.0, %v7114
    %v7117 = vsub.f32 2.0, %v7115
    %v7118 = vmul.f32 %v7112, %v7116
    %v7119 = vmul.f32 %v7113, %v7117
    %v7120 = vmul.f32 %v7103, %v7118
    %v7121 = vmul.f32 %v7105, %v7119
    %7124 = vrot.lane.b32.xlu0 %v279, 96
    %v7125 = vpop.permute.xlu0 %7124
    %7126 = vrot.lane.b32.xlu0 %v285, 96
    %v7127 = vpop.permute.xlu0 %7126
    %v7131 = vsel %vm381, %v7120, 0
    %v7134 = vsel %vm381, %v7121, 0
    %7136 = vmatprep.subr.mxu0 0.0
    %7137 = vmatpush1.msra.mxu0 0.0
    %7138 = vmatprep.subr.mxu0 0.0
    %7139 = vmatpush1.msra.mxu0 0.0
    %7140 = vmatprep.subr.mxu0 0.0
    %7141 = vmatpush1.msra.mxu0 0.0
    %7142 = vmatprep.subr.mxu0 0.0
    %7143 = vmatpush1.msra.mxu0 0.0
    %7144 = vmatprep.subr.mxu0 0.0
    %7145 = vmatpush1.msra.mxu0 0.0
    %7146 = vmatprep.subr.mxu0 0.0
    %7147 = vmatpush1.msra.mxu0 0.0
    %7148 = vmatprep.subr.mxu0 0.0
    %7149 = vmatpush1.msra.mxu0 0.0
    %7150 = vmatprep.subr.mxu0 0.0
    %7151 = vmatpush1.msra.mxu0 0.0
    %7152 = vmatprep.subr.mxu0 0.0
    %7153 = vmatpush1.msra.mxu0 0.0
    %7154 = vmatprep.subr.mxu0 0.0
    %7155 = vmatpush1.msra.mxu0 0.0
    %7156 = vmatprep.subr.mxu0 0.0
    %7157 = vmatpush1.msra.mxu0 0.0
    %7158 = vmatprep.subr.mxu0 0.0
    %7159 = vmatpush1.msra.mxu0 0.0
    %7160 = vmatprep.subr.mxu0 0.0
    %7161 = vmatpush1.msra.mxu0 0.0
    %7162 = vmatprep.subr.mxu0 0.0
    %7163 = vmatpush1.msra.mxu0 0.0
    %7164 = vmatprep.subr.mxu0 0.0
    %7165 = vmatpush1.msra.mxu0 %v7127
    %7166 = vmatprep.subr.mxu0 0.0
    %7167 = vmatpush1.msra.mxu0 %v7125
    %7168 = vmatprep.subr.mxu0 0.0
    %7169 = vmatpush2.msra.mxu0 0.0
    %7170 = vmatprep.subr.mxu0 0.0
    %7171 = vmatpush2.msra.mxu0 0.0
    %7172 = vmatprep.subr.mxu0 0.0
    %7173 = vmatpush2.msra.mxu0 0.0
    %7174 = vmatprep.subr.mxu0 0.0
    %7175 = vmatpush2.msra.mxu0 0.0
    %7176 = vmatprep.subr.mxu0 0.0
    %7177 = vmatpush2.msra.mxu0 0.0
    %7178 = vmatprep.subr.mxu0 0.0
    %7179 = vmatpush2.msra.mxu0 0.0
    %7180 = vmatprep.subr.mxu0 0.0
    %7181 = vmatpush2.msra.mxu0 0.0
    %7182 = vmatprep.subr.mxu0 0.0
    %7183 = vmatpush2.msra.mxu0 0.0
    %7184 = vmatprep.subr.mxu0 0.0
    %7185 = vmatpush2.msra.mxu0 0.0
    %7186 = vmatprep.subr.mxu0 0.0
    %7187 = vmatpush2.msra.mxu0 0.0
    %7188 = vmatprep.subr.mxu0 0.0
    %7189 = vmatpush2.msra.mxu0 0.0
    %7190 = vmatprep.subr.mxu0 0.0
    %7191 = vmatpush2.msra.mxu0 0.0
    %7192 = vmatprep.subr.mxu0 0.0
    %7193 = vmatpush2.msra.mxu0 0.0
    %7194 = vmatprep.subr.mxu0 0.0
    %7195 = vmatpush2.msra.mxu0 0.0
    %7196 = vmatprep.subr.mxu0 0.0
    %7197 = vmatpush2.msra.mxu0 0.0
    %7198 = vmatprep.subr.mxu0 0.0
    %7199 = vmatpush2.msra.mxu0 0.0
    %7200 = vmatprep.mubr.f32.mxu0 0.0
    %7201 = vmatmul.mubr.f32.gmra.mxu0 %v7131
    %v7202 = vpop.f32.mrf.mxu0
    %v7203 = vadd.f32 0.0, %v7202
    %v7204 = vpop.f32.mrf.mxu0
    %7205 = vmatprep.mubr.f32.mxu0 0.0
    %7206 = vmatmul.mubr.f32.gmra.mxu0 %v7134
    %v7207 = vpop.f32.mrf.mxu0
    %v7208 = vadd.f32 0.0, %v7207
    %v7209 = vpop.f32.mrf.mxu0
    %7210 = vdwg.mxu0
    %v7211 = vadd.f32 %v6999, %v7203
    %v7212 = vadd.f32 %v7000, %v7208
    %v7213 = vadd.f32 %v7211, %v66
    %v7214 = vadd.f32 %v7212, %v67
    %v7215 = vsel %vm77, %v7213, 0.0
    %v7216 = vsel %vm77, %v7214, 0.0
    %v7217 = vadd.f32 %v7215, %v7216
    %v7218 = vrot.slane %v7217, 4
    %v7219 = vadd.f32 %v7217, %v7218
    %v7220 = vrot.slane %v7219, 2
    %v7221 = vadd.f32 %v7219, %v7220
    %v7222 = vrot.slane %v7221, 1
    %v7223 = vadd.f32 %v7221, %v7222
    %v7224 = vmul.f32 %v7223, %v1132
    %v7225 = vmul.f32 %v7213, %v7213
    %v7226 = vmul.f32 %v7214, %v7214
    %v7227 = vsel %vm77, %v7225, 0.0
    %v7228 = vsel %vm77, %v7226, 0.0
    %v7229 = vadd.f32 %v7227, %v7228
    %v7230 = vrot.slane %v7229, 4
    %v7231 = vadd.f32 %v7229, %v7230
    %v7232 = vrot.slane %v7231, 2
    %v7233 = vadd.f32 %v7231, %v7232
    %v7234 = vrot.slane %v7233, 1
    %v7235 = vadd.f32 %v7233, %v7234
    %v7236 = vmul.f32 %v7235, %v1132
    %v7237 = vmul.f32 %v7224, %v7224
    %v7238 = vsub.f32 %v7236, %v7237
    %v7239 = vsub.f32 %v7213, %v7224
    %v7240 = vsub.f32 %v7214, %v7224
    %v7241 = vadd.f32 %v7238, 1e-05
    %v7242 = vrsqrt.pop %v7241
    %v7243 = vmul.f32 %v7239, %v7242
    %v7244 = vmul.f32 %v7240, %v7242
    %v7245 = vmul.f32 %v7243, %v1157
    %v7246 = vmul.f32 %v7244, %v1157
    %v7247 = vadd.f32 %v7245, %v1163
    %v7248 = vadd.f32 %v7246, %v1163
    %v7249 = vld [vmem:[%s3] sm:$0xff]
    %v7250 = vld [vmem:[%s3 + $0x8] sm:$0xff]
    %v7251 = vld [vmem:[%s3 + $0x10] sm:$0xff]
    %v7252 = vld [vmem:[%s3 + $0x18] sm:$0xff]
    %v7254 = vsel %vm77, %v1164, 0
    %v7257 = vsel %vm77, %v1165, 0
    %v7260 = vsel %vm77, %v2033, 0
    %v7263 = vsel %vm77, %v2034, 0
    %v7266 = vsel %vm77, %v2902, 0
    %v7269 = vsel %vm77, %v2903, 0
    %v7272 = vsel %vm77, %v3771, 0
    %v7275 = vsel %vm77, %v3772, 0
    %v7278 = vsel %vm77, %v4640, 0
    %v7281 = vsel %vm77, %v4641, 0
    %v7284 = vsel %vm77, %v5509, 0
    %v7287 = vsel %vm77, %v5510, 0
    %v7290 = vsel %vm77, %v6378, 0
    %v7293 = vsel %vm77, %v6379, 0
    %v7296 = vsel %vm77, %v7247, 0
    %v7299 = vsel %vm77, %v7248, 0
    %7301 = vmatprep.subr.mxu0 0.0
    %7302 = vmatpush1.msra.mxu0 0.0
    %7303 = vmatprep.subr.mxu0 0.0
    %7304 = vmatpush1.msra.mxu0 0.0
    %7305 = vmatprep.subr.mxu0 0.0
    %7306 = vmatpush1.msra.mxu0 0.0
    %7307 = vmatprep.subr.mxu0 0.0
    %7308 = vmatpush1.msra.mxu0 0.0
    %7309 = vmatprep.subr.mxu0 0.0
    %7310 = vmatpush1.msra.mxu0 0.0
    %7311 = vmatprep.subr.mxu0 0.0
    %7312 = vmatpush1.msra.mxu0 0.0
    %7313 = vmatprep.subr.mxu0 0.0
    %7314 = vmatpush1.msra.mxu0 0.0
    %7315 = vmatprep.subr.mxu0 0.0
    %7316 = vmatpush1.msra.mxu0 0.0
    %7317 = vmatprep.subr.mxu0 0.0
    %7318 = vmatpush1.msra.mxu0 0.0
    %7319 = vmatprep.subr.mxu0 0.0
    %7320 = vmatpush1.msra.mxu0 0.0
    %7321 = vmatprep.subr.mxu0 0.0
    %7322 = vmatpush1.msra.mxu0 0.0
    %7323 = vmatprep.subr.mxu0 0.0
    %7324 = vmatpush1.msra.mxu0 0.0
    %7325 = vmatprep.subr.mxu0 0.0
    %7326 = vmatpush1.msra.mxu0 %v7252
    %7327 = vmatprep.subr.mxu0 0.0
    %7328 = vmatpush1.msra.mxu0 %v7251
    %7329 = vmatprep.subr.mxu0 0.0
    %7330 = vmatpush1.msra.mxu0 %v7250
    %7331 = vmatprep.subr.mxu0 0.0
    %7332 = vmatpush1.msra.mxu0 %v7249
    %7333 = vmatprep.subr.mxu0 0.0
    %7334 = vmatpush2.msra.mxu0 0.0
    %7335 = vmatprep.subr.mxu0 0.0
    %7336 = vmatpush2.msra.mxu0 0.0
    %7337 = vmatprep.subr.mxu0 0.0
    %7338 = vmatpush2.msra.mxu0 0.0
    %7339 = vmatprep.subr.mxu0 0.0
    %7340 = vmatpush2.msra.mxu0 0.0
    %7341 = vmatprep.subr.mxu0 0.0
    %7342 = vmatpush2.msra.mxu0 0.0
    %7343 = vmatprep.subr.mxu0 0.0
    %7344 = vmatpush2.msra.mxu0 0.0
    %7345 = vmatprep.subr.mxu0 0.0
    %7346 = vmatpush2.msra.mxu0 0.0
    %7347 = vmatprep.subr.mxu0 0.0
    %7348 = vmatpush2.msra.mxu0 0.0
    %7349 = vmatprep.subr.mxu0 0.0
    %7350 = vmatpush2.msra.mxu0 0.0
    %7351 = vmatprep.subr.mxu0 0.0
    %7352 = vmatpush2.msra.mxu0 0.0
    %7353 = vmatprep.subr.mxu0 0.0
    %7354 = vmatpush2.msra.mxu0 0.0
    %7355 = vmatprep.subr.mxu0 0.0
    %7356 = vmatpush2.msra.mxu0 0.0
    %7357 = vmatprep.subr.mxu0 0.0
    %7358 = vmatpush2.msra.mxu0 0.0
    %7359 = vmatprep.subr.mxu0 0.0
    %7360 = vmatpush2.msra.mxu0 0.0
    %7361 = vmatprep.subr.mxu0 0.0
    %7362 = vmatpush2.msra.mxu0 0.0
    %7363 = vmatprep.subr.mxu0 0.0
    %7364 = vmatpush2.msra.mxu0 0.0
    %7365 = vmatprep.mubr.f32.mxu0 0.0
    %7366 = vmatmul.mubr.f32.gmra.mxu0 %v7254
    %v7367 = vpop.f32.mrf.mxu0
    %v7368 = vadd.f32 0.0, %v7367
    %v7369 = vpop.f32.mrf.mxu0
    %7370 = vmatprep.mubr.f32.mxu0 0.0
    %7371 = vmatmul.mubr.f32.gmra.mxu0 %v7257
    %v7372 = vpop.f32.mrf.mxu0
    %v7373 = vadd.f32 0.0, %v7372
    %v7374 = vpop.f32.mrf.mxu0
    %7375 = vmatprep.mubr.f32.mxu0 0.0
    %7376 = vmatmul.mubr.f32.gmra.mxu0 %v7260
    %v7377 = vpop.f32.mrf.mxu0
    %v7378 = vadd.f32 0.0, %v7377
    %v7379 = vpop.f32.mrf.mxu0
    %7380 = vmatprep.mubr.f32.mxu0 0.0
    %7381 = vmatmul.mubr.f32.gmra.mxu0 %v7263
    %v7382 = vpop.f32.mrf.mxu0
    %v7383 = vadd.f32 0.0, %v7382
    %v7384 = vpop.f32.mrf.mxu0
    %7385 = vmatprep.mubr.f32.mxu0 0.0
    %7386 = vmatmul.mubr.f32.gmra.mxu0 %v7266
    %v7387 = vpop.f32.mrf.mxu0
    %v7388 = vadd.f32 0.0, %v7387
    %v7389 = vpop.f32.mrf.mxu0
    %7390 = vmatprep.mubr.f32.mxu0 0.0
    %7391 = vmatmul.mubr.f32.gmra.mxu0 %v7269
    %v7392 = vpop.f32.mrf.mxu0
    %v7393 = vadd.f32 0.0, %v7392
    %v7394 = vpop.f32.mrf.mxu0
    %7395 = vmatprep.mubr.f32.mxu0 0.0
    %7396 = vmatmul.mubr.f32.gmra.mxu0 %v7272
    %v7397 = vpop.f32.mrf.mxu0
    %v7398 = vadd.f32 0.0, %v7397
    %v7399 = vpop.f32.mrf.mxu0
    %7400 = vmatprep.mubr.f32.mxu0 0.0
    %7401 = vmatmul.mubr.f32.gmra.mxu0 %v7275
    %v7402 = vpop.f32.mrf.mxu0
    %v7403 = vadd.f32 0.0, %v7402
    %v7404 = vpop.f32.mrf.mxu0
    %7405 = vmatprep.mubr.f32.mxu0 0.0
    %7406 = vmatmul.mubr.f32.gmra.mxu0 %v7278
    %v7407 = vpop.f32.mrf.mxu0
    %v7408 = vadd.f32 0.0, %v7407
    %v7409 = vpop.f32.mrf.mxu0
    %7410 = vmatprep.mubr.f32.mxu0 0.0
    %7411 = vmatmul.mubr.f32.gmra.mxu0 %v7281
    %v7412 = vpop.f32.mrf.mxu0
    %v7413 = vadd.f32 0.0, %v7412
    %v7414 = vpop.f32.mrf.mxu0
    %7415 = vmatprep.mubr.f32.mxu0 0.0
    %7416 = vmatmul.mubr.f32.gmra.mxu0 %v7284
    %v7417 = vpop.f32.mrf.mxu0
    %v7418 = vadd.f32 0.0, %v7417
    %v7419 = vpop.f32.mrf.mxu0
    %7420 = vmatprep.mubr.f32.mxu0 0.0
    %7421 = vmatmul.mubr.f32.gmra.mxu0 %v7287
    %v7422 = vpop.f32.mrf.mxu0
    %v7423 = vadd.f32 0.0, %v7422
    %v7424 = vpop.f32.mrf.mxu0
    %7425 = vmatprep.mubr.f32.mxu0 0.0
    %7426 = vmatmul.mubr.f32.gmra.mxu0 %v7290
    %v7427 = vpop.f32.mrf.mxu0
    %v7428 = vadd.f32 0.0, %v7427
    %v7429 = vpop.f32.mrf.mxu0
    %7430 = vmatprep.mubr.f32.mxu0 0.0
    %7431 = vmatmul.mubr.f32.gmra.mxu0 %v7293
    %v7432 = vpop.f32.mrf.mxu0
    %v7433 = vadd.f32 0.0, %v7432
    %v7434 = vpop.f32.mrf.mxu0
    %7435 = vmatprep.mubr.f32.mxu0 0.0
    %7436 = vmatmul.mubr.f32.gmra.mxu0 %v7296
    %v7437 = vpop.f32.mrf.mxu0
    %v7438 = vadd.f32 0.0, %v7437
    %v7439 = vpop.f32.mrf.mxu0
    %7440 = vmatprep.mubr.f32.mxu0 0.0
    %7441 = vmatmul.mubr.f32.gmra.mxu0 %v7299
    %v7442 = vpop.f32.mrf.mxu0
    %v7443 = vadd.f32 0.0, %v7442
    %v7444 = vpop.f32.mrf.mxu0
    %7445 = vdwg.mxu0
    %v7446 = vmax.f32 %v7368, 0.0
    %v7447 = vmax.f32 %v7373, 0.0
    %v7448 = vmax.f32 %v7378, 0.0
    %v7449 = vmax.f32 %v7383, 0.0
    %v7450 = vmax.f32 %v7388, 0.0
    %v7451 = vmax.f32 %v7393, 0.0
    %v7452 = vmax.f32 %v7398, 0.0
    %v7453 = vmax.f32 %v7403, 0.0
    %v7454 = vmax.f32 %v7408, 0.0
    %v7455 = vmax.f32 %v7413, 0.0
    %v7456 = vmax.f32 %v7418, 0.0
    %v7457 = vmax.f32 %v7423, 0.0
    %v7458 = vmax.f32 %v7428, 0.0
    %v7459 = vmax.f32 %v7433, 0.0
    %v7460 = vmax.f32 %v7438, 0.0
    %v7461 = vmax.f32 %v7443, 0.0
    %v7462 = vld [vmem:[%s4] sm:$0xff]
    %v7463 = vld [vmem:[%s4 + $0x8] sm:$0xff]
    %v7464 = vld [vmem:[%s4 + $0x10] sm:$0xff]
    %v7465 = vld [vmem:[%s4 + $0x18] sm:$0xff]
    %v7466 = vld [vmem:[%s4 + $0x20] sm:$0xff]
    %v7467 = vld [vmem:[%s4 + $0x28] sm:$0xff]
    %v7468 = vld [vmem:[%s4 + $0x30] sm:$0xff]
    %v7469 = vld [vmem:[%s4 + $0x38] sm:$0xff]
    %vm7470 = vcmask 523264
    %v7472 = vsel %vm7470, %v7446, 0
    %v7475 = vsel %vm7470, %v7447, 0
    %v7478 = vsel %vm7470, %v7448, 0
    %v7481 = vsel %vm7470, %v7449, 0
    %v7484 = vsel %vm7470, %v7450, 0
    %v7487 = vsel %vm7470, %v7451, 0
    %v7490 = vsel %vm7470, %v7452, 0
    %v7493 = vsel %vm7470, %v7453, 0
    %v7496 = vsel %vm7470, %v7454, 0
    %v7499 = vsel %vm7470, %v7455, 0
    %v7502 = vsel %vm7470, %v7456, 0
    %v7505 = vsel %vm7470, %v7457, 0
    %v7508 = vsel %vm7470, %v7458, 0
    %v7511 = vsel %vm7470, %v7459, 0
    %v7514 = vsel %vm7470, %v7460, 0
    %v7517 = vsel %vm7470, %v7461, 0
    %7519 = vmatprep.subr.mxu0 0.0
    %7520 = vmatpush1.msra.mxu0 0.0
    %7521 = vmatprep.subr.mxu0 0.0
    %7522 = vmatpush1.msra.mxu0 0.0
    %7523 = vmatprep.subr.mxu0 0.0
    %7524 = vmatpush1.msra.mxu0 0.0
    %7525 = vmatprep.subr.mxu0 0.0
    %7526 = vmatpush1.msra.mxu0 0.0
    %7527 = vmatprep.subr.mxu0 0.0
    %7528 = vmatpush1.msra.mxu0 0.0
    %7529 = vmatprep.subr.mxu0 0.0
    %7530 = vmatpush1.msra.mxu0 0.0
    %7531 = vmatprep.subr.mxu0 0.0
    %7532 = vmatpush1.msra.mxu0 0.0
    %7533 = vmatprep.subr.mxu0 0.0
    %7534 = vmatpush1.msra.mxu0 0.0
    %7535 = vmatprep.subr.mxu0 0.0
    %7536 = vmatpush1.msra.mxu0 %v7469
    %7537 = vmatprep.subr.mxu0 0.0
    %7538 = vmatpush1.msra.mxu0 %v7468
    %7539 = vmatprep.subr.mxu0 0.0
    %7540 = vmatpush1.msra.mxu0 %v7467
    %7541 = vmatprep.subr.mxu0 0.0
    %7542 = vmatpush1.msra.mxu0 %v7466
    %7543 = vmatprep.subr.mxu0 0.0
    %7544 = vmatpush1.msra.mxu0 %v7465
    %7545 = vmatprep.subr.mxu0 0.0
    %7546 = vmatpush1.msra.mxu0 %v7464
    %7547 = vmatprep.subr.mxu0 0.0
    %7548 = vmatpush1.msra.mxu0 %v7463
    %7549 = vmatprep.subr.mxu0 0.0
    %7550 = vmatpush1.msra.mxu0 %v7462
    %7551 = vmatprep.subr.mxu0 0.0
    %7552 = vmatpush2.msra.mxu0 0.0
    %7553 = vmatprep.subr.mxu0 0.0
    %7554 = vmatpush2.msra.mxu0 0.0
    %7555 = vmatprep.subr.mxu0 0.0
    %7556 = vmatpush2.msra.mxu0 0.0
    %7557 = vmatprep.subr.mxu0 0.0
    %7558 = vmatpush2.msra.mxu0 0.0
    %7559 = vmatprep.subr.mxu0 0.0
    %7560 = vmatpush2.msra.mxu0 0.0
    %7561 = vmatprep.subr.mxu0 0.0
    %7562 = vmatpush2.msra.mxu0 0.0
    %7563 = vmatprep.subr.mxu0 0.0
    %7564 = vmatpush2.msra.mxu0 0.0
    %7565 = vmatprep.subr.mxu0 0.0
    %7566 = vmatpush2.msra.mxu0 0.0
    %7567 = vmatprep.subr.mxu0 0.0
    %7568 = vmatpush2.msra.mxu0 0.0
    %7569 = vmatprep.subr.mxu0 0.0
    %7570 = vmatpush2.msra.mxu0 0.0
    %7571 = vmatprep.subr.mxu0 0.0
    %7572 = vmatpush2.msra.mxu0 0.0
    %7573 = vmatprep.subr.mxu0 0.0
    %7574 = vmatpush2.msra.mxu0 0.0
    %7575 = vmatprep.subr.mxu0 0.0
    %7576 = vmatpush2.msra.mxu0 0.0
    %7577 = vmatprep.subr.mxu0 0.0
    %7578 = vmatpush2.msra.mxu0 0.0
    %7579 = vmatprep.subr.mxu0 0.0
    %7580 = vmatpush2.msra.mxu0 0.0
    %7581 = vmatprep.subr.mxu0 0.0
    %7582 = vmatpush2.msra.mxu0 0.0
    %7583 = vmatprep.mubr.f32.mxu0 0.0
    %7584 = vmatmul.mubr.f32.gmra.mxu0 %v7472
    %v7585 = vpop.f32.mrf.mxu0
    %v7586 = vadd.f32 0.0, %v7585
    %v7587 = vpop.f32.mrf.mxu0
    %7588 = vmatprep.mubr.f32.mxu0 0.0
    %7589 = vmatmul.mubr.f32.gmra.mxu0 %v7475
    %v7590 = vpop.f32.mrf.mxu0
    %v7591 = vadd.f32 0.0, %v7590
    %v7592 = vpop.f32.mrf.mxu0
    %7593 = vmatprep.mubr.f32.mxu0 0.0
    %7594 = vmatmul.mubr.f32.gmra.mxu0 %v7478
    %v7595 = vpop.f32.mrf.mxu0
    %v7596 = vadd.f32 0.0, %v7595
    %v7597 = vpop.f32.mrf.mxu0
    %7598 = vmatprep.mubr.f32.mxu0 0.0
    %7599 = vmatmul.mubr.f32.gmra.mxu0 %v7481
    %v7600 = vpop.f32.mrf.mxu0
    %v7601 = vadd.f32 0.0, %v7600
    %v7602 = vpop.f32.mrf.mxu0
    %7603 = vmatprep.mubr.f32.mxu0 0.0
    %7604 = vmatmul.mubr.f32.gmra.mxu0 %v7484
    %v7605 = vpop.f32.mrf.mxu0
    %v7606 = vadd.f32 0.0, %v7605
    %v7607 = vpop.f32.mrf.mxu0
    %7608 = vmatprep.mubr.f32.mxu0 0.0
    %7609 = vmatmul.mubr.f32.gmra.mxu0 %v7487
    %v7610 = vpop.f32.mrf.mxu0
    %v7611 = vadd.f32 0.0, %v7610
    %v7612 = vpop.f32.mrf.mxu0
    %7613 = vmatprep.mubr.f32.mxu0 0.0
    %7614 = vmatmul.mubr.f32.gmra.mxu0 %v7490
    %v7615 = vpop.f32.mrf.mxu0
    %v7616 = vadd.f32 0.0, %v7615
    %v7617 = vpop.f32.mrf.mxu0
    %7618 = vmatprep.mubr.f32.mxu0 0.0
    %7619 = vmatmul.mubr.f32.gmra.mxu0 %v7493
    %v7620 = vpop.f32.mrf.mxu0
    %v7621 = vadd.f32 0.0, %v7620
    %v7622 = vpop.f32.mrf.mxu0
    %7623 = vmatprep.mubr.f32.mxu0 0.0
    %7624 = vmatmul.mubr.f32.gmra.mxu0 %v7496
    %v7625 = vpop.f32.mrf.mxu0
    %v7626 = vadd.f32 0.0, %v7625
    %v7627 = vpop.f32.mrf.mxu0
    %7628 = vmatprep.mubr.f32.mxu0 0.0
    %7629 = vmatmul.mubr.f32.gmra.mxu0 %v7499
    %v7630 = vpop.f32.mrf.mxu0
    %v7631 = vadd.f32 0.0, %v7630
    %v7632 = vpop.f32.mrf.mxu0
    %7633 = vmatprep.mubr.f32.mxu0 0.0
    %7634 = vmatmul.mubr.f32.gmra.mxu0 %v7502
    %v7635 = vpop.f32.mrf.mxu0
    %v7636 = vadd.f32 0.0, %v7635
    %v7637 = vpop.f32.mrf.mxu0
    %7638 = vmatprep.mubr.f32.mxu0 0.0
    %7639 = vmatmul.mubr.f32.gmra.mxu0 %v7505
    %v7640 = vpop.f32.mrf.mxu0
    %v7641 = vadd.f32 0.0, %v7640
    %v7642 = vpop.f32.mrf.mxu0
    %7643 = vmatprep.mubr.f32.mxu0 0.0
    %7644 = vmatmul.mubr.f32.gmra.mxu0 %v7508
    %v7645 = vpop.f32.mrf.mxu0
    %v7646 = vadd.f32 0.0, %v7645
    %v7647 = vpop.f32.mrf.mxu0
    %7648 = vmatprep.mubr.f32.mxu0 0.0
    %7649 = vmatmul.mubr.f32.gmra.mxu0 %v7511
    %v7650 = vpop.f32.mrf.mxu0
    %v7651 = vadd.f32 0.0, %v7650
    %v7652 = vpop.f32.mrf.mxu0
    %7653 = vmatprep.mubr.f32.mxu0 0.0
    %7654 = vmatmul.mubr.f32.gmra.mxu0 %v7514
    %v7655 = vpop.f32.mrf.mxu0
    %v7656 = vadd.f32 0.0, %v7655
    %v7657 = vpop.f32.mrf.mxu0
    %7658 = vmatprep.mubr.f32.mxu0 0.0
    %7659 = vmatmul.mubr.f32.gmra.mxu0 %v7517
    %v7660 = vpop.f32.mrf.mxu0
    %v7661 = vadd.f32 0.0, %v7660
    %v7662 = vpop.f32.mrf.mxu0
    %7663 = vdwg.mxu0
    %v7664 = vadd.f32 %v1164, %v7586
    %v7665 = vadd.f32 %v1165, %v7591
    %v7666 = vadd.f32 %v2033, %v7596
    %v7667 = vadd.f32 %v2034, %v7601
    %v7668 = vadd.f32 %v2902, %v7606
    %v7669 = vadd.f32 %v2903, %v7611
    %v7670 = vadd.f32 %v3771, %v7616
    %v7671 = vadd.f32 %v3772, %v7621
    %v7672 = vadd.f32 %v4640, %v7626
    %v7673 = vadd.f32 %v4641, %v7631
    %v7674 = vadd.f32 %v5509, %v7636
    %v7675 = vadd.f32 %v5510, %v7641
    %v7676 = vadd.f32 %v6378, %v7646
    %v7677 = vadd.f32 %v6379, %v7651
    %v7678 = vadd.f32 %v7247, %v7656
    %v7679 = vadd.f32 %v7248, %v7661
    %v7680 = vsel %vm77, %v7664, 0.0
    %v7681 = vsel %vm77, %v7665, 0.0
    %v7682 = vadd.f32 %v7680, %v7681
    %v7683 = vrot.slane %v7682, 4
    %v7684 = vadd.f32 %v7682, %v7683
    %v7685 = vrot.slane %v7684, 2
    %v7686 = vadd.f32 %v7684, %v7685
    %v7687 = vrot.slane %v7686, 1
    %v7688 = vadd.f32 %v7686, %v7687
    %v7689 = vmul.f32 %v7688, %v1132
    %v7690 = vmul.f32 %v7664, %v7664
    %v7691 = vmul.f32 %v7665, %v7665
    %v7692 = vsel %vm77, %v7690, 0.0
    %v7693 = vsel %vm77, %v7691, 0.0
    %v7694 = vadd.f32 %v7692, %v7693
    %v7695 = vrot.slane %v7694, 4
    %v7696 = vadd.f32 %v7694, %v7695
    %v7697 = vrot.slane %v7696, 2
    %v7698 = vadd.f32 %v7696, %v7697
    %v7699 = vrot.slane %v7698, 1
    %v7700 = vadd.f32 %v7698, %v7699
    %v7701 = vmul.f32 %v7700, %v1132
    %v7702 = vmul.f32 %v7689, %v7689
    %v7703 = vsub.f32 %v7701, %v7702
    %v7704 = vsub.f32 %v7664, %v7689
    %v7705 = vsub.f32 %v7665, %v7689
    %v7706 = vadd.f32 %v7703, 1e-05
    %v7707 = vrsqrt.pop %v7706
    %v7708 = vmul.f32 %v7704, %v7707
    %v7709 = vmul.f32 %v7705, %v7707
    %v7710 = vlaneseq
    %v7711 = vshrl.u32 %v7710, 7
    %v7712 = vsub.s32 2, %v7711
    %v7713 = vrot.slane %v68, %v7712
    %v7714 = vmul.f32 %v7708, %v7713
    %v7715 = vmul.f32 %v7709, %v7713
    %v7716 = vlaneseq
    %v7717 = vshrl.u32 %v7716, 7
    %v7718 = vsub.s32 3, %v7717
    %v7719 = vrot.slane %v68, %v7718
    %v7720 = vadd.f32 %v7714, %v7719
    %v7721 = vadd.f32 %v7715, %v7719
    %v7722 = vsel %vm77, %v7666, 0.0
    %v7723 = vsel %vm77, %v7667, 0.0
    %v7724 = vadd.f32 %v7722, %v7723
    %v7725 = vrot.slane %v7724, 4
    %v7726 = vadd.f32 %v7724, %v7725
    %v7727 = vrot.slane %v7726, 2
    %v7728 = vadd.f32 %v7726, %v7727
    %v7729 = vrot.slane %v7728, 1
    %v7730 = vadd.f32 %v7728, %v7729
    %v7731 = vmul.f32 %v7730, %v1132
    %v7732 = vmul.f32 %v7666, %v7666
    %v7733 = vmul.f32 %v7667, %v7667
    %v7734 = vsel %vm77, %v7732, 0.0
    %v7735 = vsel %vm77, %v7733, 0.0
    %v7736 = vadd.f32 %v7734, %v7735
    %v7737 = vrot.slane %v7736, 4
    %v7738 = vadd.f32 %v7736, %v7737
    %v7739 = vrot.slane %v7738, 2
    %v7740 = vadd.f32 %v7738, %v7739
    %v7741 = vrot.slane %v7740, 1
    %v7742 = vadd.f32 %v7740, %v7741
    %v7743 = vmul.f32 %v7742, %v1132
    %v7744 = vmul.f32 %v7731, %v7731
    %v7745 = vsub.f32 %v7743, %v7744
    %v7746 = vsub.f32 %v7666, %v7731
    %v7747 = vsub.f32 %v7667, %v7731
    %v7748 = vadd.f32 %v7745, 1e-05
    %v7749 = vrsqrt.pop %v7748
    %v7750 = vmul.f32 %v7746, %v7749
    %v7751 = vmul.f32 %v7747, %v7749
    %v7752 = vmul.f32 %v7750, %v7713
    %v7753 = vmul.f32 %v7751, %v7713
    %v7754 = vadd.f32 %v7752, %v7719
    %v7755 = vadd.f32 %v7753, %v7719
    %v7756 = vsel %vm77, %v7668, 0.0
    %v7757 = vsel %vm77, %v7669, 0.0
    %v7758 = vadd.f32 %v7756, %v7757
    %v7759 = vrot.slane %v7758, 4
    %v7760 = vadd.f32 %v7758, %v7759
    %v7761 = vrot.slane %v7760, 2
    %v7762 = vadd.f32 %v7760, %v7761
    %v7763 = vrot.slane %v7762, 1
    %v7764 = vadd.f32 %v7762, %v7763
    %v7765 = vmul.f32 %v7764, %v1132
    %v7766 = vmul.f32 %v7668, %v7668
    %v7767 = vmul.f32 %v7669, %v7669
    %v7768 = vsel %vm77, %v7766, 0.0
    %v7769 = vsel %vm77, %v7767, 0.0
    %v7770 = vadd.f32 %v7768, %v7769
    %v7771 = vrot.slane %v7770, 4
    %v7772 = vadd.f32 %v7770, %v7771
    %v7773 = vrot.slane %v7772, 2
    %v7774 = vadd.f32 %v7772, %v7773
    %v7775 = vrot.slane %v7774, 1
    %v7776 = vadd.f32 %v7774, %v7775
    %v7777 = vmul.f32 %v7776, %v1132
    %v7778 = vmul.f32 %v7765, %v7765
    %v7779 = vsub.f32 %v7777, %v7778
    %v7780 = vsub.f32 %v7668, %v7765
    %v7781 = vsub.f32 %v7669, %v7765
    %v7782 = vadd.f32 %v7779, 1e-05
    %v7783 = vrsqrt.pop %v7782
    %v7784 = vmul.f32 %v7780, %v7783
    %v7785 = vmul.f32 %v7781, %v7783
    %v7786 = vmul.f32 %v7784, %v7713
    %v7787 = vmul.f32 %v7785, %v7713
    %v7788 = vadd.f32 %v7786, %v7719
    %v7789 = vadd.f32 %v7787, %v7719
    %v7790 = vsel %vm77, %v7670, 0.0
    %v7791 = vsel %vm77, %v7671, 0.0
    %v7792 = vadd.f32 %v7790, %v7791
    %v7793 = vrot.slane %v7792, 4
    %v7794 = vadd.f32 %v7792, %v7793
    %v7795 = vrot.slane %v7794, 2
    %v7796 = vadd.f32 %v7794, %v7795
    %v7797 = vrot.slane %v7796, 1
    %v7798 = vadd.f32 %v7796, %v7797
    %v7799 = vmul.f32 %v7798, %v1132
    %v7800 = vmul.f32 %v7670, %v7670
    %v7801 = vmul.f32 %v7671, %v7671
    %v7802 = vsel %vm77, %v7800, 0.0
    %v7803 = vsel %vm77, %v7801, 0.0
    %v7804 = vadd.f32 %v7802, %v7803
    %v7805 = vrot.slane %v7804, 4
    %v7806 = vadd.f32 %v7804, %v7805
    %v7807 = vrot.slane %v7806, 2
    %v7808 = vadd.f32 %v7806, %v7807
    %v7809 = vrot.slane %v7808, 1
    %v7810 = vadd.f32 %v7808, %v7809
    %v7811 = vmul.f32 %v7810, %v1132
    %v7812 = vmul.f32 %v7799, %v7799
    %v7813 = vsub.f32 %v7811, %v7812
    %v7814 = vsub.f32 %v7670, %v7799
    %v7815 = vsub.f32 %v7671, %v7799
    %v7816 = vadd.f32 %v7813, 1e-05
    %v7817 = vrsqrt.pop %v7816
    %v7818 = vmul.f32 %v7814, %v7817
    %v7819 = vmul.f32 %v7815, %v7817
    %v7820 = vmul.f32 %v7818, %v7713
    %v7821 = vmul.f32 %v7819, %v7713
    %v7822 = vadd.f32 %v7820, %v7719
    %v7823 = vadd.f32 %v7821, %v7719
    %v7824 = vsel %vm77, %v7672, 0.0
    %v7825 = vsel %vm77, %v7673, 0.0
    %v7826 = vadd.f32 %v7824, %v7825
    %v7827 = vrot.slane %v7826, 4
    %v7828 = vadd.f32 %v7826, %v7827
    %v7829 = vrot.slane %v7828, 2
    %v7830 = vadd.f32 %v7828, %v7829
    %v7831 = vrot.slane %v7830, 1
    %v7832 = vadd.f32 %v7830, %v7831
    %v7833 = vmul.f32 %v7832, %v1132
    %v7834 = vmul.f32 %v7672, %v7672
    %v7835 = vmul.f32 %v7673, %v7673
    %v7836 = vsel %vm77, %v7834, 0.0
    %v7837 = vsel %vm77, %v7835, 0.0
    %v7838 = vadd.f32 %v7836, %v7837
    %v7839 = vrot.slane %v7838, 4
    %v7840 = vadd.f32 %v7838, %v7839
    %v7841 = vrot.slane %v7840, 2
    %v7842 = vadd.f32 %v7840, %v7841
    %v7843 = vrot.slane %v7842, 1
    %v7844 = vadd.f32 %v7842, %v7843
    %v7845 = vmul.f32 %v7844, %v1132
    %v7846 = vmul.f32 %v7833, %v7833
    %v7847 = vsub.f32 %v7845, %v7846
    %v7848 = vsub.f32 %v7672, %v7833
    %v7849 = vsub.f32 %v7673, %v7833
    %v7850 = vadd.f32 %v7847, 1e-05
    %v7851 = vrsqrt.pop %v7850
    %v7852 = vmul.f32 %v7848, %v7851
    %v7853 = vmul.f32 %v7849, %v7851
    %v7854 = vmul.f32 %v7852, %v7713
    %v7855 = vmul.f32 %v7853, %v7713
    %v7856 = vadd.f32 %v7854, %v7719
    %v7857 = vadd.f32 %v7855, %v7719
    %v7858 = vsel %vm77, %v7674, 0.0
    %v7859 = vsel %vm77, %v7675, 0.0
    %v7860 = vadd.f32 %v7858, %v7859
    %v7861 = vrot.slane %v7860, 4
    %v7862 = vadd.f32 %v7860, %v7861
    %v7863 = vrot.slane %v7862, 2
    %v7864 = vadd.f32 %v7862, %v7863
    %v7865 = vrot.slane %v7864, 1
    %v7866 = vadd.f32 %v7864, %v7865
    %v7867 = vmul.f32 %v7866, %v1132
    %v7868 = vmul.f32 %v7674, %v7674
    %v7869 = vmul.f32 %v7675, %v7675
    %v7870 = vsel %vm77, %v7868, 0.0
    %v7871 = vsel %vm77, %v7869, 0.0
    %v7872 = vadd.f32 %v7870, %v7871
    %v7873 = vrot.slane %v7872, 4
    %v7874 = vadd.f32 %v7872, %v7873
    %v7875 = vrot.slane %v7874, 2
    %v7876 = vadd.f32 %v7874, %v7875
    %v7877 = vrot.slane %v7876, 1
    %v7878 = vadd.f32 %v7876, %v7877
    %v7879 = vmul.f32 %v7878, %v1132
    %v7880 = vmul.f32 %v7867, %v7867
    %v7881 = vsub.f32 %v7879, %v7880
    %v7882 = vsub.f32 %v7674, %v7867
    %v7883 = vsub.f32 %v7675, %v7867
    %v7884 = vadd.f32 %v7881, 1e-05
    %v7885 = vrsqrt.pop %v7884
    %v7886 = vmul.f32 %v7882, %v7885
    %v7887 = vmul.f32 %v7883, %v7885
    %v7888 = vmul.f32 %v7886, %v7713
    %v7889 = vmul.f32 %v7887, %v7713
    %v7890 = vadd.f32 %v7888, %v7719
    %v7891 = vadd.f32 %v7889, %v7719
    %v7892 = vsel %vm77, %v7676, 0.0
    %v7893 = vsel %vm77, %v7677, 0.0
    %v7894 = vadd.f32 %v7892, %v7893
    %v7895 = vrot.slane %v7894, 4
    %v7896 = vadd.f32 %v7894, %v7895
    %v7897 = vrot.slane %v7896, 2
    %v7898 = vadd.f32 %v7896, %v7897
    %v7899 = vrot.slane %v7898, 1
    %v7900 = vadd.f32 %v7898, %v7899
    %v7901 = vmul.f32 %v7900, %v1132
    %v7902 = vmul.f32 %v7676, %v7676
    %v7903 = vmul.f32 %v7677, %v7677
    %v7904 = vsel %vm77, %v7902, 0.0
    %v7905 = vsel %vm77, %v7903, 0.0
    %v7906 = vadd.f32 %v7904, %v7905
    %v7907 = vrot.slane %v7906, 4
    %v7908 = vadd.f32 %v7906, %v7907
    %v7909 = vrot.slane %v7908, 2
    %v7910 = vadd.f32 %v7908, %v7909
    %v7911 = vrot.slane %v7910, 1
    %v7912 = vadd.f32 %v7910, %v7911
    %v7913 = vmul.f32 %v7912, %v1132
    %v7914 = vmul.f32 %v7901, %v7901
    %v7915 = vsub.f32 %v7913, %v7914
    %v7916 = vsub.f32 %v7676, %v7901
    %v7917 = vsub.f32 %v7677, %v7901
    %v7918 = vadd.f32 %v7915, 1e-05
    %v7919 = vrsqrt.pop %v7918
    %v7920 = vmul.f32 %v7916, %v7919
    %v7921 = vmul.f32 %v7917, %v7919
    %v7922 = vmul.f32 %v7920, %v7713
    %v7923 = vmul.f32 %v7921, %v7713
    %v7924 = vadd.f32 %v7922, %v7719
    %v7925 = vadd.f32 %v7923, %v7719
    %v7926 = vsel %vm77, %v7678, 0.0
    %v7927 = vsel %vm77, %v7679, 0.0
    %v7928 = vadd.f32 %v7926, %v7927
    %v7929 = vrot.slane %v7928, 4
    %v7930 = vadd.f32 %v7928, %v7929
    %v7931 = vrot.slane %v7930, 2
    %v7932 = vadd.f32 %v7930, %v7931
    %v7933 = vrot.slane %v7932, 1
    %v7934 = vadd.f32 %v7932, %v7933
    %v7935 = vmul.f32 %v7934, %v1132
    %v7936 = vmul.f32 %v7678, %v7678
    %v7937 = vmul.f32 %v7679, %v7679
    %v7938 = vsel %vm77, %v7936, 0.0
    %v7939 = vsel %vm77, %v7937, 0.0
    %v7940 = vadd.f32 %v7938, %v7939
    %v7941 = vrot.slane %v7940, 4
    %v7942 = vadd.f32 %v7940, %v7941
    %v7943 = vrot.slane %v7942, 2
    %v7944 = vadd.f32 %v7942, %v7943
    %v7945 = vrot.slane %v7944, 1
    %v7946 = vadd.f32 %v7944, %v7945
    %v7947 = vmul.f32 %v7946, %v1132
    %v7948 = vmul.f32 %v7935, %v7935
    %v7949 = vsub.f32 %v7947, %v7948
    %v7950 = vsub.f32 %v7678, %v7935
    %v7951 = vsub.f32 %v7679, %v7935
    %v7952 = vadd.f32 %v7949, 1e-05
    %v7953 = vrsqrt.pop %v7952
    %v7954 = vmul.f32 %v7950, %v7953
    %v7955 = vmul.f32 %v7951, %v7953
    %v7956 = vmul.f32 %v7954, %v7713
    %v7957 = vmul.f32 %v7955, %v7713
    %v7958 = vadd.f32 %v7956, %v7719
    %v7959 = vadd.f32 %v7957, %v7719
    %7960 = vst.msk [vmem:[#allocation7] sm:$0xff] %vm77, %v7720
    %7961 = vst.msk [vmem:[#allocation7 + $0x8] sm:$0xff] %vm77, %v7721
    %7962 = vst.msk [vmem:[#allocation7 + $0x10] sm:$0xff] %vm77, %v7754
    %7963 = vst.msk [vmem:[#allocation7 + $0x18] sm:$0xff] %vm77, %v7755
    %7964 = vst.msk [vmem:[#allocation7 + $0x20] sm:$0xff] %vm77, %v7788
    %7965 = vst.msk [vmem:[#allocation7 + $0x28] sm:$0xff] %vm77, %v7789
    %7966 = vst.msk [vmem:[#allocation7 + $0x30] sm:$0xff] %vm77, %v7822
    %7967 = vst.msk [vmem:[#allocation7 + $0x38] sm:$0xff] %vm77, %v7823
    %7968 = vst.msk [vmem:[#allocation7 + $0x40] sm:$0xff] %vm77, %v7856
    %7969 = vst.msk [vmem:[#allocation7 + $0x48] sm:$0xff] %vm77, %v7857
    %7970 = vst.msk [vmem:[#allocation7 + $0x50] sm:$0xff] %vm77, %v7890
    %7971 = vst.msk [vmem:[#allocation7 + $0x58] sm:$0xff] %vm77, %v7891
    %7972 = vst.msk [vmem:[#allocation7 + $0x60] sm:$0xff] %vm77, %v7924
    %7973 = vst.msk [vmem:[#allocation7 + $0x68] sm:$0xff] %vm77, %v7925
    %7974 = vst.msk [vmem:[#allocation7 + $0x70] sm:$0xff] %vm77, %v7958
    %7975 = vst.msk [vmem:[#allocation7 + $0x78] sm:$0xff] %vm77, %v7959
    // Predicated region
    $region34: #{gt_layer.1} parent=1 // pred_check
      _
    $region35: #{gt_layer.1} parent=1 // pred_check_branch
      %7977 = sbr.rel (0) target = $region37
    $region36: #{gt_layer.1} parent=1 // pred_region
      %s7979 = ssub.s32 2048, 2048
      %7980 = vsyncadd [#allocation4], %s7979
      %s7981 = sshll.u32 [#allocation7], 4
      %s7982 = int_to_ptr.vmem [resolvable:$true] %s7981
      %7987 = dma.vmem_to_hbm [thread:$0]  %s7982, 2048, %s6, [#allocation4], 128, 128, 8
    $region37: #{gt_layer.1} parent=1 // pred_fallthru
      _
    // Predicated region
    $region38: #{gt_layer.1} parent=1 // pred_check
      _
    $region39: #{gt_layer.1} parent=1 // pred_check_branch
      %7989 = sbr.rel (0) target = $region41
    $region40: #{gt_layer.1} parent=1 // pred_region
      %7990 = dma.done [#allocation4], 2048
    $region41: #{gt_layer.1} parent=1 // pred_fallthru
      _
    %7991 = vsyncpa [#allocation3], 1
    %7992 = vsyncpa [#allocation6], 1
    %7993 = vsyncpa [#allocation4], 1

</llo_original>
